<compile_context>
chip_gen: v7x
topology: tpu7x:2x2x1
jax: 0.10.0
libtpu: 0.0.40
codegen_flags: <defaults>
</compile_context>

<pallas_src>
import jax
import jax.numpy as jnp
from jax.experimental import pallas as pl
from jax.experimental.pallas import tpu as pltpu

HIDDEN = (128, 1024, 512, 256, 128, 64)   # matches the nn.Sequential widths
BN_EPS = 1e-5
LANE = 128
SUBLANE = 8


def _round_up(n, m):
    return ((n + m - 1) // m) * m


# ----------------------------------------------------------------------------
# Kernel: fused 7-layer MLP on one (tile_b, in_pad) batch tile.
#   layers 1..6: bf16( ReLU( f32(h @ W) + b ) )   (BN already folded into W, b)
#   layer  7   : f32(h @ W) + b                   (no BN / ReLU)
# Weights are bf16, biases f32; matmuls accumulate in f32 on the MXU; the
# bias-add + ReLU stay f32 (no bf16 VALU on v5e); intermediates are stored
# bf16 to halve live VMEM between layers.
# ----------------------------------------------------------------------------
def _mlp_kernel(x_ref,
                w1, b1, w2, b2, w3, b3, w4, b4, w5, b5, w6, b6, w7, b7,
                o_ref):
    def hidden(h, w_ref, b_ref):
        acc = jnp.dot(h, w_ref[...], preferred_element_type=jnp.float32)
        return jnp.maximum(acc + b_ref[...], 0.0).astype(jnp.bfloat16)

    h = x_ref[...].astype(jnp.bfloat16)
    h = hidden(h, w1, b1)
    h = hidden(h, w2, b2)   # Dropout1d(0.1): identity (eval mode)
    h = hidden(h, w3, b3)   # Dropout1d(0.1): identity (eval mode)
    h = hidden(h, w4, b4)
    h = hidden(h, w5, b5)
    h = hidden(h, w6, b6)   # hidden width 64 zero-padded to 128 lanes
    o_ref[...] = (jnp.dot(h, w7[...], preferred_element_type=jnp.float32)
                  + b7[...])


# ----------------------------------------------------------------------------
# Tiling / generation heuristics
# ----------------------------------------------------------------------------
def _default_tile_b():
    """Bigger tiles amortize the ~0.35us/step overhead; v5e's 16 MiB scoped
    VMEM default argues for 512, v6e/v7x (32 MiB scoped) take 1024."""
    try:
        kind = jax.devices()[0].device_kind.lower()
    except Exception:
        return 512
    if ("v6" in kind) or ("v7" in kind) or ("tpu7" in kind):
        return 1024
    return 512


def _choose_tiling(batch, tile_b):
    """Pick (tile_b_eff, b_pad).  Guarantees >= 2 grid steps for batch > 8 (so
    the 'parallel' batch axis shards across both v7x TensorCores) and an even
    step count so the two cores get balanced work."""
    tile_b = max(SUBLANE, _round_up(tile_b, SUBLANE))
    steps = pl.cdiv(batch, tile_b)
    if batch > SUBLANE:
        steps = max(steps, 2)
    if steps > 1 and steps % 2:
        steps += 1
    tile = min(tile_b, _round_up(pl.cdiv(batch, steps), SUBLANE))
    b_pad = _round_up(batch, tile)
    return tile, b_pad


# ----------------------------------------------------------------------------
# Wrapper
# ----------------------------------------------------------------------------
def classifier_forward(x, prepared_params, out_features, *, tile_b=None):
    """x: [B, in_features] f32.
    prepared_params: 7 (W bf16 [K, N], b f32 [1, N]) pairs, already BN-folded
    and lane-padded (in_features -> mult of 128, hidden 64 -> 128,
    out_features -> mult of 128)."""
    B = x.shape[0]
    in_pad = prepared_params[0][0].shape[0]
    out_pad = prepared_params[-1][0].shape[1]

    if tile_b is None:
        tile_b = _default_tile_b()
    tile_b_eff, b_pad = _choose_tiling(B, tile_b)
    grid = (b_pad // tile_b_eff,)

    # lane-dense input block: pad features to the prepared (mult-of-128) width,
    # batch to a multiple of the tile (padded rows are sliced off at the end).
    x = jnp.pad(x, ((0, b_pad - B), (0, in_pad - x.shape[1])))

    flops = 2 * b_pad * sum(int(w.shape[0]) * int(w.shape[1])
                            for w, _ in prepared_params)
    param_bytes = sum(w.size * w.dtype.itemsize + b.size * b.dtype.itemsize
                      for w, b in prepared_params)
    bytes_accessed = x.size * 4 + param_bytes + b_pad * out_pad * 4
    widths = [int(w.shape[1]) for w, _ in prepared_params]

    def _vmem_limit(single_buffer):
        # resident params (+2x if double-buffered) + double-buffered x/out
        # tiles + generous bound on live intermediates (f32 acc + bf16 copy).
        est = (param_bytes * (1 if single_buffer else 2)
               + 2 * tile_b_eff * (in_pad + out_pad) * 4
               + tile_b_eff * sum(widths) * 6
               + (4 << 20))
        return int(min(max(est, 32 << 20), 64 << 20))

    def _run(single_buffer_params):
        # constant index_map -> params stay VMEM-resident across the grid;
        # Buffered(1) drops them to a single buffer (half the footprint).
        extra = ({"pipeline_mode": pl.Buffered(1)}
                 if single_buffer_params else {})
        in_specs = [pl.BlockSpec((tile_b_eff, in_pad), lambda i: (i, 0))]
        flat = [x]
        for w, b in prepared_params:
            in_specs.append(pl.BlockSpec(w.shape, lambda i: (0, 0), **extra))
            in_specs.append(pl.BlockSpec(b.shape, lambda i: (0, 0), **extra))
            flat.extend([w, b])
        return pl.pallas_call(
            _mlp_kernel,
            out_shape=jax.ShapeDtypeStruct((b_pad, out_pad), jnp.float32),
            grid=grid,
            in_specs=in_specs,
            out_specs=pl.BlockSpec((tile_b_eff, out_pad), lambda i: (i, 0)),
            compiler_params=pltpu.CompilerParams(
                dimension_semantics=("parallel",),
                vmem_limit_bytes=_vmem_limit(single_buffer_params)),
            cost_estimate=pl.CostEstimate(flops=flops, transcendentals=0,
                                          bytes_accessed=bytes_accessed),
        )(*flat)

    # TODO(synk): for latency-critical small batches, hide the one-time ~1.7 MB
    # parameter DMA with a cross-pallas_call semaphore/VMEM prefetch (P10)
    # instead of re-fetching the weights on every call.
    try:
        out = _run(single_buffer_params=True)
    except Exception:
        # pipeline_mode=pl.Buffered(1) not supported on this jax version:
        # fall back to default double-buffered resident params.
        out = _run(single_buffer_params=False)

    return out[:B, :out_features]


# ----------------------------------------------------------------------------
# Parameter construction (synthetic) + BN folding + lane padding + bf16 cast
# ----------------------------------------------------------------------------
def init_params(key, in_features, out_features):
    """Folded-BN params:  BN(x@W + b) = x @ (W*s) + (b*s + t),
    s = gamma / sqrt(var + eps),  t = beta - mean * s."""
    dims = (in_features,) + HIDDEN + (out_features,)
    n_layers = len(dims) - 1
    keys = jax.random.split(key, n_layers * 6)
    ki = 0
    params = []
    for li in range(n_layers):
        fan_in, fan_out = dims[li], dims[li + 1]
        bound = 1.0 / jnp.sqrt(fan_in)
        w = jax.random.uniform(keys[ki], (fan_in, fan_out), jnp.float32, -bound, bound); ki += 1
        b = jax.random.uniform(keys[ki], (1, fan_out), jnp.float32, -bound, bound); ki += 1
        if li < n_layers - 1:  # layers followed by BatchNorm1d
            gamma = 1.0 + 0.1 * jax.random.normal(keys[ki], (1, fan_out), jnp.float32); ki += 1
            beta = 0.1 * jax.random.normal(keys[ki], (1, fan_out), jnp.float32); ki += 1
            r_mean = 0.1 * jax.random.normal(keys[ki], (1, fan_out), jnp.float32); ki += 1
            r_var = jnp.abs(jax.random.normal(keys[ki], (1, fan_out), jnp.float32)) + 0.5; ki += 1
            s = gamma / jnp.sqrt(r_var + BN_EPS)
            t = beta - r_mean * s
            w = w * s
            b = b * s + t
        else:
            ki += 4
        params.append((w, b))
    return params


def prepare_params(params):
    """Zero-pad in_features to a multiple of 128 (W1 rows), the 64-wide hidden
    layer to 128 lanes, and the final output width to a multiple of 128
    (lane-dense loads/stores); cast weights to bf16 (documented precision
    decision), biases stay f32."""
    params = list(params)

    w1, b1 = params[0]                     # [in, 128]
    in_f = w1.shape[0]
    in_pad = _round_up(max(in_f, LANE), LANE)
    w1 = jnp.pad(w1, ((0, in_pad - in_f), (0, 0)))
    params[0] = (w1, b1)

    w6, b6 = params[5]                     # [128, 64], [1, 64]
    w7, b7 = params[6]                     # [64, out], [1, out]
    out_features = w7.shape[1]
    out_pad = _round_up(max(out_features, LANE), LANE)
    w6 = jnp.pad(w6, ((0, 0), (0, LANE - w6.shape[1])))
    b6 = jnp.pad(b6, ((0, 0), (0, LANE - b6.shape[1])))
    w7 = jnp.pad(w7, ((0, LANE - w7.shape[0]), (0, out_pad - out_features)))
    b7 = jnp.pad(b7, ((0, 0), (0, out_pad - out_features)))
    params[5] = (w6, b6)
    params[6] = (w7, b7)

    return [(w.astype(jnp.bfloat16), b.astype(jnp.float32)) for w, b in params]


def reference_forward(x, prepared_params, out_features):
    """Plain-JAX reference with identical padding / bf16-activation precision."""
    in_pad = prepared_params[0][0].shape[0]
    h = jnp.pad(x, ((0, 0), (0, in_pad - x.shape[1]))).astype(jnp.bfloat16)
    n = len(prepared_params)
    for i, (w, b) in enumerate(prepared_params):
        acc = jnp.dot(h, w, preferred_element_type=jnp.float32) + b
        if i < n - 1:
            h = jnp.maximum(acc, 0.0).astype(jnp.bfloat16)
        else:
            h = acc
    return h[:, :out_features]


if __name__ == "__main__":
    in_features, out_features = 32, 1
    key = jax.random.PRNGKey(0)
    k_x1, k_x2, k_p = jax.random.split(key, 3)

    params = init_params(k_p, in_features, out_features)
    prepared = prepare_params(params)

    # small batch: single tile (auto tile size)
    x1 = jax.random.normal(k_x1, (8, in_features), jnp.float32)
    out1 = jax.block_until_ready(
        classifier_forward(x1, prepared, out_features))
    ref1 = reference_forward(x1, prepared, out_features)
    assert out1.shape == (8, out_features)
    assert jnp.allclose(out1, ref1, atol=1e-2, rtol=1e-2)

    # batch that exercises a multi-step grid + non-divisible tail
    x2 = jax.random.normal(k_x2, (300, in_features), jnp.float32)
    out2 = jax.block_until_ready(
        classifier_forward(x2, prepared, out_features, tile_b=128))
    ref2 = reference_forward(x2, prepared, out_features)
    assert out2.shape == (300, out_features)
    assert jnp.allclose(out2, ref2, atol=1e-2, rtol=1e-2)

    print("KERNEL_OK")
</pallas_src>

<mosaic_0001>
module attributes {stable_mosaic.version = 11 : i64} {
  func.func @_mlp_kernel(%arg0: i32, %arg1: memref<8x128xf32, #tpu.memory_space<vmem>>, %arg2: memref<128x128xbf16, #tpu.memory_space<vmem>>, %arg3: memref<1x128xf32, #tpu.memory_space<vmem>>, %arg4: memref<128x1024xbf16, #tpu.memory_space<vmem>>, %arg5: memref<1x1024xf32, #tpu.memory_space<vmem>>, %arg6: memref<1024x512xbf16, #tpu.memory_space<vmem>>, %arg7: memref<1x512xf32, #tpu.memory_space<vmem>>, %arg8: memref<512x256xbf16, #tpu.memory_space<vmem>>, %arg9: memref<1x256xf32, #tpu.memory_space<vmem>>, %arg10: memref<256x128xbf16, #tpu.memory_space<vmem>>, %arg11: memref<1x128xf32, #tpu.memory_space<vmem>>, %arg12: memref<128x128xbf16, #tpu.memory_space<vmem>>, %arg13: memref<1x128xf32, #tpu.memory_space<vmem>>, %arg14: memref<128x128xbf16, #tpu.memory_space<vmem>>, %arg15: memref<1x128xf32, #tpu.memory_space<vmem>>, %arg16: memref<8x128xf32, #tpu.memory_space<vmem>>) attributes {dimension_semantics = [#tpu.dimension_semantics<parallel>], iteration_bounds = array<i64: 1>, scalar_prefetch = 0 : i64, scratch_operands = 0 : i64, tpu.core_type = #tpu.core_type<tc>, window_params = [{transform_indices = @transform_0, window_bounds = array<i64: 8, 128>}, {pipeline_mode = #tpu.pipeline_mode<synchronous>, transform_indices = @transform_1, window_bounds = array<i64: 128, 128>}, {pipeline_mode = #tpu.pipeline_mode<synchronous>, transform_indices = @transform_2, window_bounds = array<i64: 1, 128>}, {pipeline_mode = #tpu.pipeline_mode<synchronous>, transform_indices = @transform_3, window_bounds = array<i64: 128, 1024>}, {pipeline_mode = #tpu.pipeline_mode<synchronous>, transform_indices = @transform_4, window_bounds = array<i64: 1, 1024>}, {pipeline_mode = #tpu.pipeline_mode<synchronous>, transform_indices = @transform_5, window_bounds = array<i64: 1024, 512>}, {pipeline_mode = #tpu.pipeline_mode<synchronous>, transform_indices = @transform_6, window_bounds = array<i64: 1, 512>}, {pipeline_mode = #tpu.pipeline_mode<synchronous>, transform_indices = @transform_7, window_bounds = array<i64: 512, 256>}, {pipeline_mode = #tpu.pipeline_mode<synchronous>, transform_indices = @transform_8, window_bounds = array<i64: 1, 256>}, {pipeline_mode = #tpu.pipeline_mode<synchronous>, transform_indices = @transform_9, window_bounds = array<i64: 256, 128>}, {pipeline_mode = #tpu.pipeline_mode<synchronous>, transform_indices = @transform_10, window_bounds = array<i64: 1, 128>}, {pipeline_mode = #tpu.pipeline_mode<synchronous>, transform_indices = @transform_11, window_bounds = array<i64: 128, 128>}, {pipeline_mode = #tpu.pipeline_mode<synchronous>, transform_indices = @transform_12, window_bounds = array<i64: 1, 128>}, {pipeline_mode = #tpu.pipeline_mode<synchronous>, transform_indices = @transform_13, window_bounds = array<i64: 128, 128>}, {pipeline_mode = #tpu.pipeline_mode<synchronous>, transform_indices = @transform_14, window_bounds = array<i64: 1, 128>}, {transform_indices = @transform_15, window_bounds = array<i64: 8, 128>}]} {
    %c0 = arith.constant 0 : index
    %c0_0 = arith.constant 0 : index
    %0 = vector.load %arg1[%c0, %c0_0] : memref<8x128xf32, #tpu.memory_space<vmem>>, vector<8x128xf32>
    %1 = arith.truncf %0 : vector<8x128xf32> to vector<8x128xbf16>
    %c0_1 = arith.constant 0 : index
    %c0_2 = arith.constant 0 : index
    %2 = vector.load %arg2[%c0_1, %c0_2] : memref<128x128xbf16, #tpu.memory_space<vmem>>, vector<128x128xbf16>
    %cst = arith.constant dense<0.000000e+00> : vector<8x128xf32>
    %3 = tpu.matmul %1, %2, %cst {dimension_numbers = #tpu.dot_dimension_numbers<[1], [0], [0], [1], [0, 0, 1, 1], [], []>} : vector<8x128xbf16>, vector<128x128xbf16>, vector<8x128xf32> -> vector<8x128xf32>
    %c0_3 = arith.constant 0 : index
    %c0_4 = arith.constant 0 : index
    %4 = vector.load %arg3[%c0_3, %c0_4] : memref<1x128xf32, #tpu.memory_space<vmem>>, vector<1x128xf32>
    %5 = vector.broadcast %4 : vector<1x128xf32> to vector<8x128xf32>
    %6 = arith.addf %3, %5 : vector<8x128xf32>
    %cst_5 = arith.constant 0.000000e+00 : f32
    %7 = vector.broadcast %cst_5 : f32 to vector<8x128xf32>
    %8 = arith.maximumf %6, %7 : vector<8x128xf32>
    %9 = arith.truncf %8 : vector<8x128xf32> to vector<8x128xbf16>
    %c0_6 = arith.constant 0 : index
    %c0_7 = arith.constant 0 : index
    %10 = vector.load %arg4[%c0_6, %c0_7] : memref<128x1024xbf16, #tpu.memory_space<vmem>>, vector<128x1024xbf16>
    %cst_8 = arith.constant dense<0.000000e+00> : vector<8x1024xf32>
    %11 = tpu.matmul %9, %10, %cst_8 {dimension_numbers = #tpu.dot_dimension_numbers<[1], [0], [0], [1], [0, 0, 1, 1], [], []>} : vector<8x128xbf16>, vector<128x1024xbf16>, vector<8x1024xf32> -> vector<8x1024xf32>
    %c0_9 = arith.constant 0 : index
    %c0_10 = arith.constant 0 : index
    %12 = vector.load %arg5[%c0_9, %c0_10] : memref<1x1024xf32, #tpu.memory_space<vmem>>, vector<1x1024xf32>
    %13 = vector.broadcast %12 : vector<1x1024xf32> to vector<8x1024xf32>
    %14 = arith.addf %11, %13 : vector<8x1024xf32>
    %cst_11 = arith.constant 0.000000e+00 : f32
    %15 = vector.broadcast %cst_11 : f32 to vector<8x1024xf32>
    %16 = arith.maximumf %14, %15 : vector<8x1024xf32>
    %17 = arith.truncf %16 : vector<8x1024xf32> to vector<8x1024xbf16>
    %c0_12 = arith.constant 0 : index
    %c0_13 = arith.constant 0 : index
    %18 = vector.load %arg6[%c0_12, %c0_13] : memref<1024x512xbf16, #tpu.memory_space<vmem>>, vector<1024x512xbf16>
    %cst_14 = arith.constant dense<0.000000e+00> : vector<8x512xf32>
    %19 = tpu.matmul %17, %18, %cst_14 {dimension_numbers = #tpu.dot_dimension_numbers<[1], [0], [0], [1], [0, 0, 1, 1], [], []>} : vector<8x1024xbf16>, vector<1024x512xbf16>, vector<8x512xf32> -> vector<8x512xf32>
    %c0_15 = arith.constant 0 : index
    %c0_16 = arith.constant 0 : index
    %20 = vector.load %arg7[%c0_15, %c0_16] : memref<1x512xf32, #tpu.memory_space<vmem>>, vector<1x512xf32>
    %21 = vector.broadcast %20 : vector<1x512xf32> to vector<8x512xf32>
    %22 = arith.addf %19, %21 : vector<8x512xf32>
    %cst_17 = arith.constant 0.000000e+00 : f32
    %23 = vector.broadcast %cst_17 : f32 to vector<8x512xf32>
    %24 = arith.maximumf %22, %23 : vector<8x512xf32>
    %25 = arith.truncf %24 : vector<8x512xf32> to vector<8x512xbf16>
    %c0_18 = arith.constant 0 : index
    %c0_19 = arith.constant 0 : index
    %26 = vector.load %arg8[%c0_18, %c0_19] : memref<512x256xbf16, #tpu.memory_space<vmem>>, vector<512x256xbf16>
    %cst_20 = arith.constant dense<0.000000e+00> : vector<8x256xf32>
    %27 = tpu.matmul %25, %26, %cst_20 {dimension_numbers = #tpu.dot_dimension_numbers<[1], [0], [0], [1], [0, 0, 1, 1], [], []>} : vector<8x512xbf16>, vector<512x256xbf16>, vector<8x256xf32> -> vector<8x256xf32>
    %c0_21 = arith.constant 0 : index
    %c0_22 = arith.constant 0 : index
    %28 = vector.load %arg9[%c0_21, %c0_22] : memref<1x256xf32, #tpu.memory_space<vmem>>, vector<1x256xf32>
    %29 = vector.broadcast %28 : vector<1x256xf32> to vector<8x256xf32>
    %30 = arith.addf %27, %29 : vector<8x256xf32>
    %cst_23 = arith.constant 0.000000e+00 : f32
    %31 = vector.broadcast %cst_23 : f32 to vector<8x256xf32>
    %32 = arith.maximumf %30, %31 : vector<8x256xf32>
    %33 = arith.truncf %32 : vector<8x256xf32> to vector<8x256xbf16>
    %c0_24 = arith.constant 0 : index
    %c0_25 = arith.constant 0 : index
    %34 = vector.load %arg10[%c0_24, %c0_25] : memref<256x128xbf16, #tpu.memory_space<vmem>>, vector<256x128xbf16>
    %cst_26 = arith.constant dense<0.000000e+00> : vector<8x128xf32>
    %35 = tpu.matmul %33, %34, %cst_26 {dimension_numbers = #tpu.dot_dimension_numbers<[1], [0], [0], [1], [0, 0, 1, 1], [], []>} : vector<8x256xbf16>, vector<256x128xbf16>, vector<8x128xf32> -> vector<8x128xf32>
    %c0_27 = arith.constant 0 : index
    %c0_28 = arith.constant 0 : index
    %36 = vector.load %arg11[%c0_27, %c0_28] : memref<1x128xf32, #tpu.memory_space<vmem>>, vector<1x128xf32>
    %37 = vector.broadcast %36 : vector<1x128xf32> to vector<8x128xf32>
    %38 = arith.addf %35, %37 : vector<8x128xf32>
    %cst_29 = arith.constant 0.000000e+00 : f32
    %39 = vector.broadcast %cst_29 : f32 to vector<8x128xf32>
    %40 = arith.maximumf %38, %39 : vector<8x128xf32>
    %41 = arith.truncf %40 : vector<8x128xf32> to vector<8x128xbf16>
    %c0_30 = arith.constant 0 : index
    %c0_31 = arith.constant 0 : index
    %42 = vector.load %arg12[%c0_30, %c0_31] : memref<128x128xbf16, #tpu.memory_space<vmem>>, vector<128x128xbf16>
    %cst_32 = arith.constant dense<0.000000e+00> : vector<8x128xf32>
    %43 = tpu.matmul %41, %42, %cst_32 {dimension_numbers = #tpu.dot_dimension_numbers<[1], [0], [0], [1], [0, 0, 1, 1], [], []>} : vector<8x128xbf16>, vector<128x128xbf16>, vector<8x128xf32> -> vector<8x128xf32>
    %c0_33 = arith.constant 0 : index
    %c0_34 = arith.constant 0 : index
    %44 = vector.load %arg13[%c0_33, %c0_34] : memref<1x128xf32, #tpu.memory_space<vmem>>, vector<1x128xf32>
    %45 = vector.broadcast %44 : vector<1x128xf32> to vector<8x128xf32>
    %46 = arith.addf %43, %45 : vector<8x128xf32>
    %cst_35 = arith.constant 0.000000e+00 : f32
    %47 = vector.broadcast %cst_35 : f32 to vector<8x128xf32>
    %48 = arith.maximumf %46, %47 : vector<8x128xf32>
    %49 = arith.truncf %48 : vector<8x128xf32> to vector<8x128xbf16>
    %c0_36 = arith.constant 0 : index
    %c0_37 = arith.constant 0 : index
    %50 = vector.load %arg14[%c0_36, %c0_37] : memref<128x128xbf16, #tpu.memory_space<vmem>>, vector<128x128xbf16>
    %cst_38 = arith.constant dense<0.000000e+00> : vector<8x128xf32>
    %51 = tpu.matmul %49, %50, %cst_38 {dimension_numbers = #tpu.dot_dimension_numbers<[1], [0], [0], [1], [0, 0, 1, 1], [], []>} : vector<8x128xbf16>, vector<128x128xbf16>, vector<8x128xf32> -> vector<8x128xf32>
    %c0_39 = arith.constant 0 : index
    %c0_40 = arith.constant 0 : index
    %52 = vector.load %arg15[%c0_39, %c0_40] : memref<1x128xf32, #tpu.memory_space<vmem>>, vector<1x128xf32>
    %53 = vector.broadcast %52 : vector<1x128xf32> to vector<8x128xf32>
    %54 = arith.addf %51, %53 : vector<8x128xf32>
    %c0_41 = arith.constant 0 : index
    %c0_42 = arith.constant 0 : index
    %55 = vector.load %arg16[%c0_41, %c0_42] : memref<8x128xf32, #tpu.memory_space<vmem>>, vector<8x128xf32>
    tpu.vector_store %arg16[%c0_41, %c0_42], %54 {strides = array<i32>} : memref<8x128xf32, #tpu.memory_space<vmem>>, vector<8x128xf32>,
    return
  }
  func.func @transform_0(%arg0: i32) -> (i32, i32) {
    %c0_i32 = arith.constant 0 : i32
    %c0_i32_0 = arith.constant 0 : i32
    return %arg0, %c0_i32 : i32, i32
  }
  func.func @transform_1(%arg0: i32) -> (i32, i32) {
    %c0_i32 = arith.constant 0 : i32
    %c0_i32_0 = arith.constant 0 : i32
    %c0_i32_1 = arith.constant 0 : i32
    return %c0_i32, %c0_i32_0 : i32, i32
  }
  func.func @transform_2(%arg0: i32) -> (i32, i32) {
    %c0_i32 = arith.constant 0 : i32
    %c0_i32_0 = arith.constant 0 : i32
    %c0_i32_1 = arith.constant 0 : i32
    return %c0_i32, %c0_i32_0 : i32, i32
  }
  func.func @transform_3(%arg0: i32) -> (i32, i32) {
    %c0_i32 = arith.constant 0 : i32
    %c0_i32_0 = arith.constant 0 : i32
    %c0_i32_1 = arith.constant 0 : i32
    return %c0_i32, %c0_i32_0 : i32, i32
  }
  func.func @transform_4(%arg0: i32) -> (i32, i32) {
    %c0_i32 = arith.constant 0 : i32
    %c0_i32_0 = arith.constant 0 : i32
    %c0_i32_1 = arith.constant 0 : i32
    return %c0_i32, %c0_i32_0 : i32, i32
  }
  func.func @transform_5(%arg0: i32) -> (i32, i32) {
    %c0_i32 = arith.constant 0 : i32
    %c0_i32_0 = arith.constant 0 : i32
    %c0_i32_1 = arith.constant 0 : i32
    return %c0_i32, %c0_i32_0 : i32, i32
  }
  func.func @transform_6(%arg0: i32) -> (i32, i32) {
    %c0_i32 = arith.constant 0 : i32
    %c0_i32_0 = arith.constant 0 : i32
    %c0_i32_1 = arith.constant 0 : i32
    return %c0_i32, %c0_i32_0 : i32, i32
  }
  func.func @transform_7(%arg0: i32) -> (i32, i32) {
    %c0_i32 = arith.constant 0 : i32
    %c0_i32_0 = arith.constant 0 : i32
    %c0_i32_1 = arith.constant 0 : i32
    return %c0_i32, %c0_i32_0 : i32, i32
  }
  func.func @transform_8(%arg0: i32) -> (i32, i32) {
    %c0_i32 = arith.constant 0 : i32
    %c0_i32_0 = arith.constant 0 : i32
    %c0_i32_1 = arith.constant 0 : i32
    return %c0_i32, %c0_i32_0 : i32, i32
  }
  func.func @transform_9(%arg0: i32) -> (i32, i32) {
    %c0_i32 = arith.constant 0 : i32
    %c0_i32_0 = arith.constant 0 : i32
    %c0_i32_1 = arith.constant 0 : i32
    return %c0_i32, %c0_i32_0 : i32, i32
  }
  func.func @transform_10(%arg0: i32) -> (i32, i32) {
    %c0_i32 = arith.constant 0 : i32
    %c0_i32_0 = arith.constant 0 : i32
    %c0_i32_1 = arith.constant 0 : i32
    return %c0_i32, %c0_i32_0 : i32, i32
  }
  func.func @transform_11(%arg0: i32) -> (i32, i32) {
    %c0_i32 = arith.constant 0 : i32
    %c0_i32_0 = arith.constant 0 : i32
    %c0_i32_1 = arith.constant 0 : i32
    return %c0_i32, %c0_i32_0 : i32, i32
  }
  func.func @transform_12(%arg0: i32) -> (i32, i32) {
    %c0_i32 = arith.constant 0 : i32
    %c0_i32_0 = arith.constant 0 : i32
    %c0_i32_1 = arith.constant 0 : i32
    return %c0_i32, %c0_i32_0 : i32, i32
  }
  func.func @transform_13(%arg0: i32) -> (i32, i32) {
    %c0_i32 = arith.constant 0 : i32
    %c0_i32_0 = arith.constant 0 : i32
    %c0_i32_1 = arith.constant 0 : i32
    return %c0_i32, %c0_i32_0 : i32, i32
  }
  func.func @transform_14(%arg0: i32) -> (i32, i32) {
    %c0_i32 = arith.constant 0 : i32
    %c0_i32_0 = arith.constant 0 : i32
    %c0_i32_1 = arith.constant 0 : i32
    return %c0_i32, %c0_i32_0 : i32, i32
  }
  func.func @transform_15(%arg0: i32) -> (i32, i32) {
    %c0_i32 = arith.constant 0 : i32
    %c0_i32_0 = arith.constant 0 : i32
    return %arg0, %c0_i32 : i32, i32
  }
}

module attributes {stable_mosaic.version = 11 : i64} {
  func.func @_mlp_kernel(%arg0: i32, %arg1: memref<8x128xf32, #tpu.memory_space<vmem>>, %arg2: memref<128x128xbf16, #tpu.memory_space<vmem>>, %arg3: memref<1x128xf32, #tpu.memory_space<vmem>>, %arg4: memref<128x1024xbf16, #tpu.memory_space<vmem>>, %arg5: memref<1x1024xf32, #tpu.memory_space<vmem>>, %arg6: memref<1024x512xbf16, #tpu.memory_space<vmem>>, %arg7: memref<1x512xf32, #tpu.memory_space<vmem>>, %arg8: memref<512x256xbf16, #tpu.memory_space<vmem>>, %arg9: memref<1x256xf32, #tpu.memory_space<vmem>>, %arg10: memref<256x128xbf16, #tpu.memory_space<vmem>>, %arg11: memref<1x128xf32, #tpu.memory_space<vmem>>, %arg12: memref<128x128xbf16, #tpu.memory_space<vmem>>, %arg13: memref<1x128xf32, #tpu.memory_space<vmem>>, %arg14: memref<128x128xbf16, #tpu.memory_space<vmem>>, %arg15: memref<1x128xf32, #tpu.memory_space<vmem>>, %arg16: memref<8x128xf32, #tpu.memory_space<vmem>>) attributes {dimension_semantics = [#tpu.dimension_semantics<parallel>], iteration_bounds = array<i64: 1>, scalar_prefetch = 0 : i64, scratch_operands = 0 : i64, tpu.core_type = #tpu.core_type<tc>, window_params = [{transform_indices = @transform_0, window_bounds = array<i64: 8, 128>}, {pipeline_mode = #tpu.pipeline_mode<synchronous>, transform_indices = @transform_1, window_bounds = array<i64: 128, 128>}, {pipeline_mode = #tpu.pipeline_mode<synchronous>, transform_indices = @transform_2, window_bounds = array<i64: 1, 128>}, {pipeline_mode = #tpu.pipeline_mode<synchronous>, transform_indices = @transform_3, window_bounds = array<i64: 128, 1024>}, {pipeline_mode = #tpu.pipeline_mode<synchronous>, transform_indices = @transform_4, window_bounds = array<i64: 1, 1024>}, {pipeline_mode = #tpu.pipeline_mode<synchronous>, transform_indices = @transform_5, window_bounds = array<i64: 1024, 512>}, {pipeline_mode = #tpu.pipeline_mode<synchronous>, transform_indices = @transform_6, window_bounds = array<i64: 1, 512>}, {pipeline_mode = #tpu.pipeline_mode<synchronous>, transform_indices = @transform_7, window_bounds = array<i64: 512, 256>}, {pipeline_mode = #tpu.pipeline_mode<synchronous>, transform_indices = @transform_8, window_bounds = array<i64: 1, 256>}, {pipeline_mode = #tpu.pipeline_mode<synchronous>, transform_indices = @transform_9, window_bounds = array<i64: 256, 128>}, {pipeline_mode = #tpu.pipeline_mode<synchronous>, transform_indices = @transform_10, window_bounds = array<i64: 1, 128>}, {pipeline_mode = #tpu.pipeline_mode<synchronous>, transform_indices = @transform_11, window_bounds = array<i64: 128, 128>}, {pipeline_mode = #tpu.pipeline_mode<synchronous>, transform_indices = @transform_12, window_bounds = array<i64: 1, 128>}, {pipeline_mode = #tpu.pipeline_mode<synchronous>, transform_indices = @transform_13, window_bounds = array<i64: 128, 128>}, {pipeline_mode = #tpu.pipeline_mode<synchronous>, transform_indices = @transform_14, window_bounds = array<i64: 1, 128>}, {transform_indices = @transform_15, window_bounds = array<i64: 8, 128>}]} {
    %c0 = arith.constant 0 : index
    %c0_0 = arith.constant 0 : index
    %0 = vector.load %arg1[%c0, %c0_0] : memref<8x128xf32, #tpu.memory_space<vmem>>, vector<8x128xf32>
    %1 = arith.truncf %0 : vector<8x128xf32> to vector<8x128xbf16>
    %c0_1 = arith.constant 0 : index
    %c0_2 = arith.constant 0 : index
    %2 = vector.load %arg2[%c0_1, %c0_2] : memref<128x128xbf16, #tpu.memory_space<vmem>>, vector<128x128xbf16>
    %cst = arith.constant dense<0.000000e+00> : vector<8x128xf32>
    %3 = tpu.matmul %1, %2, %cst {dimension_numbers = #tpu.dot_dimension_numbers<[1], [0], [0], [1], [0, 0, 1, 1], [], []>} : vector<8x128xbf16>, vector<128x128xbf16>, vector<8x128xf32> -> vector<8x128xf32>
    %c0_3 = arith.constant 0 : index
    %c0_4 = arith.constant 0 : index
    %4 = vector.load %arg3[%c0_3, %c0_4] : memref<1x128xf32, #tpu.memory_space<vmem>>, vector<1x128xf32>
    %5 = vector.broadcast %4 : vector<1x128xf32> to vector<8x128xf32>
    %6 = arith.addf %3, %5 : vector<8x128xf32>
    %cst_5 = arith.constant 0.000000e+00 : f32
    %7 = vector.broadcast %cst_5 : f32 to vector<8x128xf32>
    %8 = arith.maximumf %6, %7 : vector<8x128xf32>
    %9 = arith.truncf %8 : vector<8x128xf32> to vector<8x128xbf16>
    %c0_6 = arith.constant 0 : index
    %c0_7 = arith.constant 0 : index
    %10 = vector.load %arg4[%c0_6, %c0_7] : memref<128x1024xbf16, #tpu.memory_space<vmem>>, vector<128x1024xbf16>
    %cst_8 = arith.constant dense<0.000000e+00> : vector<8x1024xf32>
    %11 = tpu.matmul %9, %10, %cst_8 {dimension_numbers = #tpu.dot_dimension_numbers<[1], [0], [0], [1], [0, 0, 1, 1], [], []>} : vector<8x128xbf16>, vector<128x1024xbf16>, vector<8x1024xf32> -> vector<8x1024xf32>
    %c0_9 = arith.constant 0 : index
    %c0_10 = arith.constant 0 : index
    %12 = vector.load %arg5[%c0_9, %c0_10] : memref<1x1024xf32, #tpu.memory_space<vmem>>, vector<1x1024xf32>
    %13 = vector.broadcast %12 : vector<1x1024xf32> to vector<8x1024xf32>
    %14 = arith.addf %11, %13 : vector<8x1024xf32>
    %cst_11 = arith.constant 0.000000e+00 : f32
    %15 = vector.broadcast %cst_11 : f32 to vector<8x1024xf32>
    %16 = arith.maximumf %14, %15 : vector<8x1024xf32>
    %17 = arith.truncf %16 : vector<8x1024xf32> to vector<8x1024xbf16>
    %c0_12 = arith.constant 0 : index
    %c0_13 = arith.constant 0 : index
    %18 = vector.load %arg6[%c0_12, %c0_13] : memref<1024x512xbf16, #tpu.memory_space<vmem>>, vector<1024x512xbf16>
    %cst_14 = arith.constant dense<0.000000e+00> : vector<8x512xf32>
    %19 = tpu.matmul %17, %18, %cst_14 {dimension_numbers = #tpu.dot_dimension_numbers<[1], [0], [0], [1], [0, 0, 1, 1], [], []>} : vector<8x1024xbf16>, vector<1024x512xbf16>, vector<8x512xf32> -> vector<8x512xf32>
    %c0_15 = arith.constant 0 : index
    %c0_16 = arith.constant 0 : index
    %20 = vector.load %arg7[%c0_15, %c0_16] : memref<1x512xf32, #tpu.memory_space<vmem>>, vector<1x512xf32>
    %21 = vector.broadcast %20 : vector<1x512xf32> to vector<8x512xf32>
    %22 = arith.addf %19, %21 : vector<8x512xf32>
    %cst_17 = arith.constant 0.000000e+00 : f32
    %23 = vector.broadcast %cst_17 : f32 to vector<8x512xf32>
    %24 = arith.maximumf %22, %23 : vector<8x512xf32>
    %25 = arith.truncf %24 : vector<8x512xf32> to vector<8x512xbf16>
    %c0_18 = arith.constant 0 : index
    %c0_19 = arith.constant 0 : index
    %26 = vector.load %arg8[%c0_18, %c0_19] : memref<512x256xbf16, #tpu.memory_space<vmem>>, vector<512x256xbf16>
    %cst_20 = arith.constant dense<0.000000e+00> : vector<8x256xf32>
    %27 = tpu.matmul %25, %26, %cst_20 {dimension_numbers = #tpu.dot_dimension_numbers<[1], [0], [0], [1], [0, 0, 1, 1], [], []>} : vector<8x512xbf16>, vector<512x256xbf16>, vector<8x256xf32> -> vector<8x256xf32>
    %c0_21 = arith.constant 0 : index
    %c0_22 = arith.constant 0 : index
    %28 = vector.load %arg9[%c0_21, %c0_22] : memref<1x256xf32, #tpu.memory_space<vmem>>, vector<1x256xf32>
    %29 = vector.broadcast %28 : vector<1x256xf32> to vector<8x256xf32>
    %30 = arith.addf %27, %29 : vector<8x256xf32>
    %cst_23 = arith.constant 0.000000e+00 : f32
    %31 = vector.broadcast %cst_23 : f32 to vector<8x256xf32>
    %32 = arith.maximumf %30, %31 : vector<8x256xf32>
    %33 = arith.truncf %32 : vector<8x256xf32> to vector<8x256xbf16>
    %c0_24 = arith.constant 0 : index
    %c0_25 = arith.constant 0 : index
    %34 = vector.load %arg10[%c0_24, %c0_25] : memref<256x128xbf16, #tpu.memory_space<vmem>>, vector<256x128xbf16>
    %cst_26 = arith.constant dense<0.000000e+00> : vector<8x128xf32>
    %35 = tpu.matmul %33, %34, %cst_26 {dimension_numbers = #tpu.dot_dimension_numbers<[1], [0], [0], [1], [0, 0, 1, 1], [], []>} : vector<8x256xbf16>, vector<256x128xbf16>, vector<8x128xf32> -> vector<8x128xf32>
    %c0_27 = arith.constant 0 : index
    %c0_28 = arith.constant 0 : index
    %36 = vector.load %arg11[%c0_27, %c0_28] : memref<1x128xf32, #tpu.memory_space<vmem>>, vector<1x128xf32>
    %37 = vector.broadcast %36 : vector<1x128xf32> to vector<8x128xf32>
    %38 = arith.addf %35, %37 : vector<8x128xf32>
    %cst_29 = arith.constant 0.000000e+00 : f32
    %39 = vector.broadcast %cst_29 : f32 to vector<8x128xf32>
    %40 = arith.maximumf %38, %39 : vector<8x128xf32>
    %41 = arith.truncf %40 : vector<8x128xf32> to vector<8x128xbf16>
    %c0_30 = arith.constant 0 : index
    %c0_31 = arith.constant 0 : index
    %42 = vector.load %arg12[%c0_30, %c0_31] : memref<128x128xbf16, #tpu.memory_space<vmem>>, vector<128x128xbf16>
    %cst_32 = arith.constant dense<0.000000e+00> : vector<8x128xf32>
    %43 = tpu.matmul %41, %42, %cst_32 {dimension_numbers = #tpu.dot_dimension_numbers<[1], [0], [0], [1], [0, 0, 1, 1], [], []>} : vector<8x128xbf16>, vector<128x128xbf16>, vector<8x128xf32> -> vector<8x128xf32>
    %c0_33 = arith.constant 0 : index
    %c0_34 = arith.constant 0 : index
    %44 = vector.load %arg13[%c0_33, %c0_34] : memref<1x128xf32, #tpu.memory_space<vmem>>, vector<1x128xf32>
    %45 = vector.broadcast %44 : vector<1x128xf32> to vector<8x128xf32>
    %46 = arith.addf %43, %45 : vector<8x128xf32>
    %cst_35 = arith.constant 0.000000e+00 : f32
    %47 = vector.broadcast %cst_35 : f32 to vector<8x128xf32>
    %48 = arith.maximumf %46, %47 : vector<8x128xf32>
    %49 = arith.truncf %48 : vector<8x128xf32> to vector<8x128xbf16>
    %c0_36 = arith.constant 0 : index
    %c0_37 = arith.constant 0 : index
    %50 = vector.load %arg14[%c0_36, %c0_37] : memref<128x128xbf16, #tpu.memory_space<vmem>>, vector<128x128xbf16>
    %cst_38 = arith.constant dense<0.000000e+00> : vector<8x128xf32>
    %51 = tpu.matmul %49, %50, %cst_38 {dimension_numbers = #tpu.dot_dimension_numbers<[1], [0], [0], [1], [0, 0, 1, 1], [], []>} : vector<8x128xbf16>, vector<128x128xbf16>, vector<8x128xf32> -> vector<8x128xf32>
    %c0_39 = arith.constant 0 : index
    %c0_40 = arith.constant 0 : index
    %52 = vector.load %arg15[%c0_39, %c0_40] : memref<1x128xf32, #tpu.memory_space<vmem>>, vector<1x128xf32>
    %53 = vector.broadcast %52 : vector<1x128xf32> to vector<8x128xf32>
    %54 = arith.addf %51, %53 : vector<8x128xf32>
    %c0_41 = arith.constant 0 : index
    %c0_42 = arith.constant 0 : index
    %55 = vector.load %arg16[%c0_41, %c0_42] : memref<8x128xf32, #tpu.memory_space<vmem>>, vector<8x128xf32>
    tpu.vector_store %arg16[%c0_41, %c0_42], %54 {strides = array<i32>} : memref<8x128xf32, #tpu.memory_space<vmem>>, vector<8x128xf32>,
    return
  }
  func.func @transform_0(%arg0: i32) -> (i32, i32) {
    %c0_i32 = arith.constant 0 : i32
    %c0_i32_0 = arith.constant 0 : i32
    return %arg0, %c0_i32 : i32, i32
  }
  func.func @transform_1(%arg0: i32) -> (i32, i32) {
    %c0_i32 = arith.constant 0 : i32
    %c0_i32_0 = arith.constant 0 : i32
    %c0_i32_1 = arith.constant 0 : i32
    return %c0_i32, %c0_i32_0 : i32, i32
  }
  func.func @transform_2(%arg0: i32) -> (i32, i32) {
    %c0_i32 = arith.constant 0 : i32
    %c0_i32_0 = arith.constant 0 : i32
    %c0_i32_1 = arith.constant 0 : i32
    return %c0_i32, %c0_i32_0 : i32, i32
  }
  func.func @transform_3(%arg0: i32) -> (i32, i32) {
    %c0_i32 = arith.constant 0 : i32
    %c0_i32_0 = arith.constant 0 : i32
    %c0_i32_1 = arith.constant 0 : i32
    return %c0_i32, %c0_i32_0 : i32, i32
  }
  func.func @transform_4(%arg0: i32) -> (i32, i32) {
    %c0_i32 = arith.constant 0 : i32
    %c0_i32_0 = arith.constant 0 : i32
    %c0_i32_1 = arith.constant 0 : i32
    return %c0_i32, %c0_i32_0 : i32, i32
  }
  func.func @transform_5(%arg0: i32) -> (i32, i32) {
    %c0_i32 = arith.constant 0 : i32
    %c0_i32_0 = arith.constant 0 : i32
    %c0_i32_1 = arith.constant 0 : i32
    return %c0_i32, %c0_i32_0 : i32, i32
  }
  func.func @transform_6(%arg0: i32) -> (i32, i32) {
    %c0_i32 = arith.constant 0 : i32
    %c0_i32_0 = arith.constant 0 : i32
    %c0_i32_1 = arith.constant 0 : i32
    return %c0_i32, %c0_i32_0 : i32, i32
  }
  func.func @transform_7(%arg0: i32) -> (i32, i32) {
    %c0_i32 = arith.constant 0 : i32
    %c0_i32_0 = arith.constant 0 : i32
    %c0_i32_1 = arith.constant 0 : i32
    return %c0_i32, %c0_i32_0 : i32, i32
  }
  func.func @transform_8(%arg0: i32) -> (i32, i32) {
    %c0_i32 = arith.constant 0 : i32
    %c0_i32_0 = arith.constant 0 : i32
    %c0_i32_1 = arith.constant 0 : i32
    return %c0_i32, %c0_i32_0 : i32, i32
  }
  func.func @transform_9(%arg0: i32) -> (i32, i32) {
    %c0_i32 = arith.constant 0 : i32
    %c0_i32_0 = arith.constant 0 : i32
    %c0_i32_1 = arith.constant 0 : i32
    return %c0_i32, %c0_i32_0 : i32, i32
  }
  func.func @transform_10(%arg0: i32) -> (i32, i32) {
    %c0_i32 = arith.constant 0 : i32
    %c0_i32_0 = arith.constant 0 : i32
    %c0_i32_1 = arith.constant 0 : i32
    return %c0_i32, %c0_i32_0 : i32, i32
  }
  func.func @transform_11(%arg0: i32) -> (i32, i32) {
    %c0_i32 = arith.constant 0 : i32
    %c0_i32_0 = arith.constant 0 : i32
    %c0_i32_1 = arith.constant 0 : i32
    return %c0_i32, %c0_i32_0 : i32, i32
  }
  func.func @transform_12(%arg0: i32) -> (i32, i32) {
    %c0_i32 = arith.constant 0 : i32
    %c0_i32_0 = arith.constant 0 : i32
    %c0_i32_1 = arith.constant 0 : i32
    return %c0_i32, %c0_i32_0 : i32, i32
  }
  func.func @transform_13(%arg0: i32) -> (i32, i32) {
    %c0_i32 = arith.constant 0 : i32
    %c0_i32_0 = arith.constant 0 : i32
    %c0_i32_1 = arith.constant 0 : i32
    return %c0_i32, %c0_i32_0 : i32, i32
  }
  func.func @transform_14(%arg0: i32) -> (i32, i32) {
    %c0_i32 = arith.constant 0 : i32
    %c0_i32_0 = arith.constant 0 : i32
    %c0_i32_1 = arith.constant 0 : i32
    return %c0_i32, %c0_i32_0 : i32, i32
  }
  func.func @transform_15(%arg0: i32) -> (i32, i32) {
    %c0_i32 = arith.constant 0 : i32
    %c0_i32_0 = arith.constant 0 : i32
    return %arg0, %c0_i32 : i32, i32
  }
}

</mosaic_0001>

<llo_original>
// kernel: tpu_custom_call.1
$region0: #{tpu_custom_call.1}
  #allocation0 [shape = 'u32[]', space=smem, size = 0x4, offset = 0x4, fixed_abs, tag = 'smem constant byte address 0x4 - core index']
  #allocation1 [shape = 'u32[144,128]{1,0:T(1,128)}', space=vmem, size = 0x12000, scoped, tag = 'internal scratch']
  %s0 = inlined_call_operand.hbm [shape: f32[8,128], index: 0, kind: input, shape index: {}]
  %s1 = inlined_call_operand.hbm [shape: bf16[128,128], index: 1, kind: input, shape index: {}]
  %s2 = inlined_call_operand.vmem [shape: f32[1,128], index: 2, kind: input, shape index: {}]
  %s3 = inlined_call_operand.hbm [shape: bf16[128,1024], index: 3, kind: input, shape index: {}]
  %s4 = inlined_call_operand.vmem [shape: f32[1,1024], index: 4, kind: input, shape index: {}]
  %s5 = inlined_call_operand.hbm [shape: bf16[1024,512], index: 5, kind: input, shape index: {}]
  %s6 = inlined_call_operand.vmem [shape: f32[1,512], index: 6, kind: input, shape index: {}]
  %s7 = inlined_call_operand.hbm [shape: bf16[512,256], index: 7, kind: input, shape index: {}]
  %s8 = inlined_call_operand.vmem [shape: f32[1,256], index: 8, kind: input, shape index: {}]
  %s9 = inlined_call_operand.hbm [shape: bf16[256,128], index: 9, kind: input, shape index: {}]
  %s10 = inlined_call_operand.vmem [shape: f32[1,128], index: 10, kind: input, shape index: {}]
  %s11 = inlined_call_operand.hbm [shape: bf16[128,128], index: 11, kind: input, shape index: {}]
  %s12 = inlined_call_operand.vmem [shape: f32[1,128], index: 12, kind: input, shape index: {}]
  %s13 = inlined_call_operand.hbm [shape: bf16[128,128], index: 13, kind: input, shape index: {}]
  %s14 = inlined_call_operand.vmem [shape: f32[1,128], index: 14, kind: input, shape index: {}]
  %s15 = inlined_call_operand.hbm [shape: f32[8,128], index: 15, kind: output, shape index: {}]
  %s16 = sld [smem:[#allocation0]]
  $region102: #{tpu_custom_call.1} parent=0
    _
  %s18 = ssub.s32 1, %s16
  %s19 = scalar_select 0, %s18, %s16
  $region1: #{tpu_custom_call.1} parent=0
    #allocation2 [shape = 'u8[4096]{0}', space=vmem, size = 0x1000, scoped, tag = 'input window, operand 0, single buffered']
    #allocation3 [shape = 's32[1]{0}', space=sflag, size = 0x4, scoped, tag = 'scoped memory for tpu_custom_call.1']
    #allocation4 [shape = 's32[1]{0}', space=sflag, size = 0x4, scoped, tag = 'scoped memory for tpu_custom_call.1']
    #allocation5 [shape = 'u8[32768]{0}', space=vmem, size = 0x8000, scoped, tag = 'input window, operand 1, single buffered']
    #allocation6 [shape = 's32[1]{0}', space=sflag, size = 0x4, scoped, tag = 'scoped memory for tpu_custom_call.1']
    #allocation7 [shape = 'u8[262144]{0}', space=vmem, size = 0x40000, scoped, tag = 'input window, operand 3, single buffered']
    #allocation8 [shape = 'u8[1048576]{0}', space=vmem, size = 0x100000, scoped, tag = 'input window, operand 5, single buffered']
    #allocation9 [shape = 's32[1]{0}', space=sflag, size = 0x4, scoped, tag = 'scoped memory for tpu_custom_call.1']
    #allocation10 [shape = 'u8[262144]{0}', space=vmem, size = 0x40000, scoped, tag = 'input window, operand 7, single buffered']
    #allocation11 [shape = 'u8[65536]{0}', space=vmem, size = 0x10000, scoped, tag = 'input window, operand 9, single buffered']
    #allocation12 [shape = 's32[1]{0}', space=sflag, size = 0x4, scoped, tag = 'scoped memory for tpu_custom_call.1']
    #allocation13 [shape = 'u8[32768]{0}', space=vmem, size = 0x8000, scoped, tag = 'input window, operand 11, single buffered']
    #allocation14 [shape = 'u8[32768]{0}', space=vmem, size = 0x8000, scoped, tag = 'input window, operand 13, single buffered']
    #allocation15 [shape = 's32[1]{0}', space=sflag, size = 0x4, scoped, tag = 'scoped memory for tpu_custom_call.1']
    #allocation16 [shape = 'u8[4096]{0}', space=vmem, size = 0x1000, scoped, tag = 'output window, operand 0, single buffered']
    %20 = vsyncpa [#allocation3], 0
    %21 = vsyncpa [#allocation6], 0
    %22 = vsyncpa [#allocation9], 0
    %23 = vsyncpa [#allocation12], 0
    %24 = vsyncpa [#allocation15], 0
    %25 = vsyncpa [#allocation4], 0
    // Predicated region
    $region2: #{tpu_custom_call.1} parent=1 // pred_check
      _
    $region3: #{tpu_custom_call.1} parent=1 // pred_check_branch
      %27 = sbr.rel (0) target = $region5
    $region4: #{tpu_custom_call.1} parent=1 // pred_region
      %s29 = ssub.s32 128, 128
      %30 = vsyncadd [#allocation3], %s29
      %s32 = sshll.u32 [#allocation2], 4
      %s33 = int_to_ptr.vmem [resolvable:$true] %s32
      %35 = dma.hbm_to_vmem [thread:$0]  %s0, 128, %s33, [#allocation3]
    $region5: #{tpu_custom_call.1} parent=1 // pred_fallthru
      _
    // Predicated region
    $region6: #{tpu_custom_call.1} parent=1 // pred_check
      _
    $region7: #{tpu_custom_call.1} parent=1 // pred_check_branch
      %37 = sbr.rel (0) target = $region9
    $region8: #{tpu_custom_call.1} parent=1 // pred_region
      %s39 = ssub.s32 1024, 1024
      %40 = vsyncadd [#allocation6], %s39
      %s41 = sshll.u32 [#allocation5], 4
      %s42 = int_to_ptr.vmem [resolvable:$true] %s41
      %47 = dma.hbm_to_vmem [thread:$0]  %s1, 1024, %s42, [#allocation6], 64, 64, 4
    $region9: #{tpu_custom_call.1} parent=1 // pred_fallthru
      _
    // Predicated region
    $region10: #{tpu_custom_call.1} parent=1 // pred_check
      _
    $region11: #{tpu_custom_call.1} parent=1 // pred_check_branch
      %49 = sbr.rel (0) target = $region13
    $region12: #{tpu_custom_call.1} parent=1 // pred_region
      _
    $region13: #{tpu_custom_call.1} parent=1 // pred_fallthru
      _
    // Predicated region
    $region14: #{tpu_custom_call.1} parent=1 // pred_check
      _
    $region15: #{tpu_custom_call.1} parent=1 // pred_check_branch
      %51 = sbr.rel (0) target = $region17
    $region16: #{tpu_custom_call.1} parent=1 // pred_region
      %s53 = ssub.s32 8192, 8192
      %54 = vsyncadd [#allocation6], %s53
      %s55 = sshll.u32 [#allocation7], 4
      %s56 = int_to_ptr.vmem [resolvable:$true] %s55
      %61 = dma.hbm_to_vmem [thread:$0]  %s3, 8192, %s56, [#allocation6], 512, 512, 32
    $region17: #{tpu_custom_call.1} parent=1 // pred_fallthru
      _
    // Predicated region
    $region18: #{tpu_custom_call.1} parent=1 // pred_check
      _
    $region19: #{tpu_custom_call.1} parent=1 // pred_check_branch
      %63 = sbr.rel (0) target = $region21
    $region20: #{tpu_custom_call.1} parent=1 // pred_region
      _
    $region21: #{tpu_custom_call.1} parent=1 // pred_fallthru
      _
    // Predicated region
    $region22: #{tpu_custom_call.1} parent=1 // pred_check
      _
    $region23: #{tpu_custom_call.1} parent=1 // pred_check_branch
      %65 = sbr.rel (0) target = $region25
    $region24: #{tpu_custom_call.1} parent=1 // pred_region
      %s67 = ssub.s32 32768, 32768
      %68 = vsyncadd [#allocation9], %s67
      %s69 = sshll.u32 [#allocation8], 4
      %s70 = int_to_ptr.vmem [resolvable:$true] %s69
      %75 = dma.hbm_to_vmem [thread:$0]  %s5, 32768, %s70, [#allocation9], 256, 256, 16
    $region25: #{tpu_custom_call.1} parent=1 // pred_fallthru
      _
    // Predicated region
    $region26: #{tpu_custom_call.1} parent=1 // pred_check
      _
    $region27: #{tpu_custom_call.1} parent=1 // pred_check_branch
      %77 = sbr.rel (0) target = $region29
    $region28: #{tpu_custom_call.1} parent=1 // pred_region
      _
    $region29: #{tpu_custom_call.1} parent=1 // pred_fallthru
      _
    // Predicated region
    $region30: #{tpu_custom_call.1} parent=1 // pred_check
      _
    $region31: #{tpu_custom_call.1} parent=1 // pred_check_branch
      %79 = sbr.rel (0) target = $region33
    $region32: #{tpu_custom_call.1} parent=1 // pred_region
      %s81 = ssub.s32 8192, 8192
      %82 = vsyncadd [#allocation9], %s81
      %s83 = sshll.u32 [#allocation10], 4
      %s84 = int_to_ptr.vmem [resolvable:$true] %s83
      %89 = dma.hbm_to_vmem [thread:$0]  %s7, 8192, %s84, [#allocation9], 128, 128, 8
    $region33: #{tpu_custom_call.1} parent=1 // pred_fallthru
      _
    // Predicated region
    $region34: #{tpu_custom_call.1} parent=1 // pred_check
      _
    $region35: #{tpu_custom_call.1} parent=1 // pred_check_branch
      %91 = sbr.rel (0) target = $region37
    $region36: #{tpu_custom_call.1} parent=1 // pred_region
      _
    $region37: #{tpu_custom_call.1} parent=1 // pred_fallthru
      _
    // Predicated region
    $region38: #{tpu_custom_call.1} parent=1 // pred_check
      _
    $region39: #{tpu_custom_call.1} parent=1 // pred_check_branch
      %93 = sbr.rel (0) target = $region41
    $region40: #{tpu_custom_call.1} parent=1 // pred_region
      %s95 = ssub.s32 2048, 2048
      %96 = vsyncadd [#allocation12], %s95
      %s97 = sshll.u32 [#allocation11], 4
      %s98 = int_to_ptr.vmem [resolvable:$true] %s97
      %103 = dma.hbm_to_vmem [thread:$0]  %s9, 2048, %s98, [#allocation12], 64, 64, 4
    $region41: #{tpu_custom_call.1} parent=1 // pred_fallthru
      _
    // Predicated region
    $region42: #{tpu_custom_call.1} parent=1 // pred_check
      _
    $region43: #{tpu_custom_call.1} parent=1 // pred_check_branch
      %105 = sbr.rel (0) target = $region45
    $region44: #{tpu_custom_call.1} parent=1 // pred_region
      _
    $region45: #{tpu_custom_call.1} parent=1 // pred_fallthru
      _
    // Predicated region
    $region46: #{tpu_custom_call.1} parent=1 // pred_check
      _
    $region47: #{tpu_custom_call.1} parent=1 // pred_check_branch
      %107 = sbr.rel (0) target = $region49
    $region48: #{tpu_custom_call.1} parent=1 // pred_region
      %s109 = ssub.s32 1024, 1024
      %110 = vsyncadd [#allocation12], %s109
      %s111 = sshll.u32 [#allocation13], 4
      %s112 = int_to_ptr.vmem [resolvable:$true] %s111
      %117 = dma.hbm_to_vmem [thread:$0]  %s11, 1024, %s112, [#allocation12], 64, 64, 4
    $region49: #{tpu_custom_call.1} parent=1 // pred_fallthru
      _
    // Predicated region
    $region50: #{tpu_custom_call.1} parent=1 // pred_check
      _
    $region51: #{tpu_custom_call.1} parent=1 // pred_check_branch
      %119 = sbr.rel (0) target = $region53
    $region52: #{tpu_custom_call.1} parent=1 // pred_region
      _
    $region53: #{tpu_custom_call.1} parent=1 // pred_fallthru
      _
    // Predicated region
    $region54: #{tpu_custom_call.1} parent=1 // pred_check
      _
    $region55: #{tpu_custom_call.1} parent=1 // pred_check_branch
      %121 = sbr.rel (0) target = $region57
    $region56: #{tpu_custom_call.1} parent=1 // pred_region
      %s123 = ssub.s32 1024, 1024
      %124 = vsyncadd [#allocation15], %s123
      %s125 = sshll.u32 [#allocation14], 4
      %s126 = int_to_ptr.vmem [resolvable:$true] %s125
      %131 = dma.hbm_to_vmem [thread:$0]  %s13, 1024, %s126, [#allocation15], 64, 64, 4
    $region57: #{tpu_custom_call.1} parent=1 // pred_fallthru
      _
    // Predicated region
    $region58: #{tpu_custom_call.1} parent=1 // pred_check
      _
    $region59: #{tpu_custom_call.1} parent=1 // pred_check_branch
      %133 = sbr.rel (0) target = $region61
    $region60: #{tpu_custom_call.1} parent=1 // pred_region
      _
    $region61: #{tpu_custom_call.1} parent=1 // pred_fallthru
      _
    // Predicated region
    $region62: #{tpu_custom_call.1} parent=1 // pred_check
      _
    $region63: #{tpu_custom_call.1} parent=1 // pred_check_branch
      %135 = sbr.rel (0) target = $region65
    $region64: #{tpu_custom_call.1} parent=1 // pred_region
      %136 = dma.done [#allocation3], 128
    $region65: #{tpu_custom_call.1} parent=1 // pred_fallthru
      _
    // Predicated region
    $region66: #{tpu_custom_call.1} parent=1 // pred_check
      _
    $region67: #{tpu_custom_call.1} parent=1 // pred_check_branch
      %138 = sbr.rel (0) target = $region69
    $region68: #{tpu_custom_call.1} parent=1 // pred_region
      %139 = dma.done [#allocation6], 1024
    $region69: #{tpu_custom_call.1} parent=1 // pred_fallthru
      _
    // Predicated region
    $region70: #{tpu_custom_call.1} parent=1 // pred_check
      _
    $region71: #{tpu_custom_call.1} parent=1 // pred_check_branch
      %141 = sbr.rel (0) target = $region73
    $region72: #{tpu_custom_call.1} parent=1 // pred_region
      %142 = dma.done [#allocation6], 8192
    $region73: #{tpu_custom_call.1} parent=1 // pred_fallthru
      _
    // Predicated region
    $region74: #{tpu_custom_call.1} parent=1 // pred_check
      _
    $region75: #{tpu_custom_call.1} parent=1 // pred_check_branch
      %144 = sbr.rel (0) target = $region77
    $region76: #{tpu_custom_call.1} parent=1 // pred_region
      %145 = dma.done [#allocation9], 32768
    $region77: #{tpu_custom_call.1} parent=1 // pred_fallthru
      _
    // Predicated region
    $region78: #{tpu_custom_call.1} parent=1 // pred_check
      _
    $region79: #{tpu_custom_call.1} parent=1 // pred_check_branch
      %147 = sbr.rel (0) target = $region81
    $region80: #{tpu_custom_call.1} parent=1 // pred_region
      %148 = dma.done [#allocation9], 8192
    $region81: #{tpu_custom_call.1} parent=1 // pred_fallthru
      _
    // Predicated region
    $region82: #{tpu_custom_call.1} parent=1 // pred_check
      _
    $region83: #{tpu_custom_call.1} parent=1 // pred_check_branch
      %150 = sbr.rel (0) target = $region85
    $region84: #{tpu_custom_call.1} parent=1 // pred_region
      %151 = dma.done [#allocation12], 2048
    $region85: #{tpu_custom_call.1} parent=1 // pred_fallthru
      _
    // Predicated region
    $region86: #{tpu_custom_call.1} parent=1 // pred_check
      _
    $region87: #{tpu_custom_call.1} parent=1 // pred_check_branch
      %153 = sbr.rel (0) target = $region89
    $region88: #{tpu_custom_call.1} parent=1 // pred_region
      %154 = dma.done [#allocation12], 1024
    $region89: #{tpu_custom_call.1} parent=1 // pred_fallthru
      _
    // Predicated region
    $region90: #{tpu_custom_call.1} parent=1 // pred_check
      _
    $region91: #{tpu_custom_call.1} parent=1 // pred_check_branch
      %156 = sbr.rel (0) target = $region93
    $region92: #{tpu_custom_call.1} parent=1 // pred_region
      %157 = dma.done [#allocation15], 1024
    $region93: #{tpu_custom_call.1} parent=1 // pred_fallthru
      _
    %v159 = vld [vmem:[#allocation2] sm:$0xff]
    %v160 = vpack.c.bf16 %v159, %v159
    %v161 = vld [vmem:[#allocation5] sm:$0xf]
    %v162 = vld [vmem:[#allocation5 + $0x4] sm:$0xf]
    %v163 = vld [vmem:[#allocation5 + $0x8] sm:$0xf]
    %v164 = vld [vmem:[#allocation5 + $0xc] sm:$0xf]
    %v165 = vld [vmem:[#allocation5 + $0x10] sm:$0xf]
    %v166 = vld [vmem:[#allocation5 + $0x14] sm:$0xf]
    %v167 = vld [vmem:[#allocation5 + $0x18] sm:$0xf]
    %v168 = vld [vmem:[#allocation5 + $0x1c] sm:$0xf]
    %v169 = vld [vmem:[#allocation5 + $0x20] sm:$0xf]
    %v170 = vld [vmem:[#allocation5 + $0x24] sm:$0xf]
    %v171 = vld [vmem:[#allocation5 + $0x28] sm:$0xf]
    %v172 = vld [vmem:[#allocation5 + $0x2c] sm:$0xf]
    %v173 = vld [vmem:[#allocation5 + $0x30] sm:$0xf]
    %v174 = vld [vmem:[#allocation5 + $0x34] sm:$0xf]
    %v175 = vld [vmem:[#allocation5 + $0x38] sm:$0xf]
    %v176 = vld [vmem:[#allocation5 + $0x3c] sm:$0xf]
    %v177 = vld [vmem:[%s2] sm:$0x1]
    %v179 = vlaneseq
    %v180 = vshrl.u32 %v179, 7
    %v181 = vsub.s32 0, %v180
    %v182 = vrot.slane %v177, %v181
    %v200 = vunpack.c.l.b16 %v161
    %v201 = vunpack.c.l.b16 %v162
    %v202 = vunpack.c.l.b16 %v163
    %v203 = vunpack.c.l.b16 %v164
    %v204 = vunpack.c.l.b16 %v165
    %v205 = vunpack.c.l.b16 %v166
    %v206 = vunpack.c.l.b16 %v167
    %v207 = vunpack.c.l.b16 %v168
    %v208 = vunpack.c.l.b16 %v169
    %v209 = vunpack.c.l.b16 %v170
    %v210 = vunpack.c.l.b16 %v171
    %v211 = vunpack.c.l.b16 %v172
    %v212 = vunpack.c.l.b16 %v173
    %v213 = vunpack.c.l.b16 %v174
    %v214 = vunpack.c.l.b16 %v175
    %v215 = vunpack.c.l.b16 %v176
    %v216 = vpack.c.b16 %v201, %v200
    %v217 = vpack.c.b16 %v203, %v202
    %v218 = vpack.c.b16 %v205, %v204
    %v219 = vpack.c.b16 %v207, %v206
    %v220 = vpack.c.b16 %v209, %v208
    %v221 = vpack.c.b16 %v211, %v210
    %v222 = vpack.c.b16 %v213, %v212
    %v223 = vpack.c.b16 %v215, %v214
    %232 = vmatprep.subr.bf16.mxu0 0
    %233 = vmatpush1.bf16.msra.mxu0 %v216
    %234 = vmatprep.subr.bf16.mxu0 0
    %235 = vmatpush1.bf16.msra.mxu0 %v217
    %236 = vmatprep.subr.bf16.mxu0 0
    %237 = vmatpush1.bf16.msra.mxu0 %v218
    %238 = vmatprep.subr.bf16.mxu0 0
    %239 = vmatpush1.bf16.msra.mxu0 %v219
    %240 = vmatprep.subr.bf16.mxu0 0
    %241 = vmatpush1.bf16.msra.mxu0 %v220
    %242 = vmatprep.subr.bf16.mxu0 0
    %243 = vmatpush1.bf16.msra.mxu0 %v221
    %244 = vmatprep.subr.bf16.mxu0 0
    %245 = vmatpush1.bf16.msra.mxu0 %v222
    %246 = vmatprep.subr.bf16.mxu0 0
    %247 = vmatpush1.bf16.msra.mxu0 %v223
    %248 = vmatprep.subr.bf16.mxu0 0
    %249 = vmatpush1.bf16.msra.mxu0 0
    %250 = vmatprep.subr.bf16.mxu0 0
    %251 = vmatpush1.bf16.msra.mxu0 0
    %252 = vmatprep.subr.bf16.mxu0 0
    %253 = vmatpush1.bf16.msra.mxu0 0
    %254 = vmatprep.subr.bf16.mxu0 0
    %255 = vmatpush1.bf16.msra.mxu0 0
    %256 = vmatprep.subr.bf16.mxu0 0
    %257 = vmatpush1.bf16.msra.mxu0 0
    %258 = vmatprep.subr.bf16.mxu0 0
    %259 = vmatpush1.bf16.msra.mxu0 0
    %260 = vmatprep.subr.bf16.mxu0 0
    %261 = vmatpush1.bf16.msra.mxu0 0
    %262 = vmatprep.subr.bf16.mxu0 0
    %263 = vmatpush1.bf16.msra.mxu0 0
    %264 = vmatprep.mubr.bf16.mxu0 0
    %265 = vmatmul.mubr.bf16.gmra.mrb[0].mxu0 %v160
    %v266 = vpop.f32.mrb[0].mxu0
    %v267 = vadd.f32 %v182, %v266
    %v268 = vpop.f32.mrb[0].mxu0
    %v269 = vpop.f32.mrb[0].mxu0
    %v270 = vpop.f32.mrb[0].mxu0
    %271 = vdwg.mxu0
    %v272 = vmax.f32 %v267, 0.0
    %v273 = vpack.c.bf16 %v272, %v272
    %v274 = vld [vmem:[#allocation7] sm:$0xff]
    %v275 = vld [vmem:[#allocation7 + $0x8] sm:$0xff]
    %v276 = vld [vmem:[#allocation7 + $0x10] sm:$0xff]
    %v277 = vld [vmem:[#allocation7 + $0x18] sm:$0xff]
    %v278 = vld [vmem:[#allocation7 + $0x20] sm:$0xff]
    %v279 = vld [vmem:[#allocation7 + $0x28] sm:$0xff]
    %v280 = vld [vmem:[#allocation7 + $0x30] sm:$0xff]
    %v281 = vld [vmem:[#allocation7 + $0x38] sm:$0xff]
    %v282 = vld [vmem:[#allocation7 + $0x40] sm:$0xff]
    %v283 = vld [vmem:[#allocation7 + $0x48] sm:$0xff]
    %v284 = vld [vmem:[#allocation7 + $0x50] sm:$0xff]
    %v285 = vld [vmem:[#allocation7 + $0x58] sm:$0xff]
    %v286 = vld [vmem:[#allocation7 + $0x60] sm:$0xff]
    %v287 = vld [vmem:[#allocation7 + $0x68] sm:$0xff]
    %v288 = vld [vmem:[#allocation7 + $0x70] sm:$0xff]
    %v289 = vld [vmem:[#allocation7 + $0x78] sm:$0xff]
    %v290 = vld [vmem:[#allocation7 + $0x80] sm:$0xff]
    %v291 = vld [vmem:[#allocation7 + $0x88] sm:$0xff]
    %v292 = vld [vmem:[#allocation7 + $0x90] sm:$0xff]
    %v293 = vld [vmem:[#allocation7 + $0x98] sm:$0xff]
    %v294 = vld [vmem:[#allocation7 + $0xa0] sm:$0xff]
    %v295 = vld [vmem:[#allocation7 + $0xa8] sm:$0xff]
    %v296 = vld [vmem:[#allocation7 + $0xb0] sm:$0xff]
    %v297 = vld [vmem:[#allocation7 + $0xb8] sm:$0xff]
    %v298 = vld [vmem:[#allocation7 + $0xc0] sm:$0xff]
    %v299 = vld [vmem:[#allocation7 + $0xc8] sm:$0xff]
    %v300 = vld [vmem:[#allocation7 + $0xd0] sm:$0xff]
    %v301 = vld [vmem:[#allocation7 + $0xd8] sm:$0xff]
    %v302 = vld [vmem:[#allocation7 + $0xe0] sm:$0xff]
    %v303 = vld [vmem:[#allocation7 + $0xe8] sm:$0xff]
    %v304 = vld [vmem:[#allocation7 + $0xf0] sm:$0xff]
    %v305 = vld [vmem:[#allocation7 + $0xf8] sm:$0xff]
    %v306 = vld [vmem:[#allocation7 + $0x100] sm:$0xff]
    %v307 = vld [vmem:[#allocation7 + $0x108] sm:$0xff]
    %v308 = vld [vmem:[#allocation7 + $0x110] sm:$0xff]
    %v309 = vld [vmem:[#allocation7 + $0x118] sm:$0xff]
    %v310 = vld [vmem:[#allocation7 + $0x120] sm:$0xff]
    %v311 = vld [vmem:[#allocation7 + $0x128] sm:$0xff]
    %v312 = vld [vmem:[#allocation7 + $0x130] sm:$0xff]
    %v313 = vld [vmem:[#allocation7 + $0x138] sm:$0xff]
    %v314 = vld [vmem:[#allocation7 + $0x140] sm:$0xff]
    %v315 = vld [vmem:[#allocation7 + $0x148] sm:$0xff]
    %v316 = vld [vmem:[#allocation7 + $0x150] sm:$0xff]
    %v317 = vld [vmem:[#allocation7 + $0x158] sm:$0xff]
    %v318 = vld [vmem:[#allocation7 + $0x160] sm:$0xff]
    %v319 = vld [vmem:[#allocation7 + $0x168] sm:$0xff]
    %v320 = vld [vmem:[#allocation7 + $0x170] sm:$0xff]
    %v321 = vld [vmem:[#allocation7 + $0x178] sm:$0xff]
    %v322 = vld [vmem:[#allocation7 + $0x180] sm:$0xff]
    %v323 = vld [vmem:[#allocation7 + $0x188] sm:$0xff]
    %v324 = vld [vmem:[#allocation7 + $0x190] sm:$0xff]
    %v325 = vld [vmem:[#allocation7 + $0x198] sm:$0xff]
    %v326 = vld [vmem:[#allocation7 + $0x1a0] sm:$0xff]
    %v327 = vld [vmem:[#allocation7 + $0x1a8] sm:$0xff]
    %v328 = vld [vmem:[#allocation7 + $0x1b0] sm:$0xff]
    %v329 = vld [vmem:[#allocation7 + $0x1b8] sm:$0xff]
    %v330 = vld [vmem:[#allocation7 + $0x1c0] sm:$0xff]
    %v331 = vld [vmem:[#allocation7 + $0x1c8] sm:$0xff]
    %v332 = vld [vmem:[#allocation7 + $0x1d0] sm:$0xff]
    %v333 = vld [vmem:[#allocation7 + $0x1d8] sm:$0xff]
    %v334 = vld [vmem:[#allocation7 + $0x1e0] sm:$0xff]
    %v335 = vld [vmem:[#allocation7 + $0x1e8] sm:$0xff]
    %v336 = vld [vmem:[#allocation7 + $0x1f0] sm:$0xff]
    %v337 = vld [vmem:[#allocation7 + $0x1f8] sm:$0xff]
    %v338 = vld [vmem:[%s4] sm:$0xff]
    %v340 = vlaneseq
    %v341 = vshrl.u32 %v340, 7
    %v342 = vsub.s32 0, %v341
    %v343 = vrot.slane %v338, %v342
    %v344 = vlaneseq
    %v345 = vshrl.u32 %v344, 7
    %v346 = vsub.s32 1, %v345
    %v347 = vrot.slane %v338, %v346
    %v348 = vlaneseq
    %v349 = vshrl.u32 %v348, 7
    %v350 = vsub.s32 2, %v349
    %v351 = vrot.slane %v338, %v350
    %v352 = vlaneseq
    %v353 = vshrl.u32 %v352, 7
    %v354 = vsub.s32 3, %v353
    %v355 = vrot.slane %v338, %v354
    %v356 = vlaneseq
    %v357 = vshrl.u32 %v356, 7
    %v358 = vsub.s32 4, %v357
    %v359 = vrot.slane %v338, %v358
    %v360 = vlaneseq
    %v361 = vshrl.u32 %v360, 7
    %v362 = vsub.s32 5, %v361
    %v363 = vrot.slane %v338, %v362
    %v364 = vlaneseq
    %v365 = vshrl.u32 %v364, 7
    %v366 = vsub.s32 6, %v365
    %v367 = vrot.slane %v338, %v366
    %v368 = vlaneseq
    %v369 = vshrl.u32 %v368, 7
    %v370 = vsub.s32 7, %v369
    %v371 = vrot.slane %v338, %v370
    %v444 = vunpack.c.l.b16 %v274
    %v445 = vunpack.c.h.b16 %v274
    %v446 = vunpack.c.l.b16 %v275
    %v447 = vunpack.c.h.b16 %v275
    %v448 = vunpack.c.l.b16 %v276
    %v449 = vunpack.c.h.b16 %v276
    %v450 = vunpack.c.l.b16 %v277
    %v451 = vunpack.c.h.b16 %v277
    %v452 = vunpack.c.l.b16 %v278
    %v453 = vunpack.c.h.b16 %v278
    %v454 = vunpack.c.l.b16 %v279
    %v455 = vunpack.c.h.b16 %v279
    %v456 = vunpack.c.l.b16 %v280
    %v457 = vunpack.c.h.b16 %v280
    %v458 = vunpack.c.l.b16 %v281
    %v459 = vunpack.c.h.b16 %v281
    %v460 = vunpack.c.l.b16 %v282
    %v461 = vunpack.c.h.b16 %v282
    %v462 = vunpack.c.l.b16 %v283
    %v463 = vunpack.c.h.b16 %v283
    %v464 = vunpack.c.l.b16 %v284
    %v465 = vunpack.c.h.b16 %v284
    %v466 = vunpack.c.l.b16 %v285
    %v467 = vunpack.c.h.b16 %v285
    %v468 = vunpack.c.l.b16 %v286
    %v469 = vunpack.c.h.b16 %v286
    %v470 = vunpack.c.l.b16 %v287
    %v471 = vunpack.c.h.b16 %v287
    %v472 = vunpack.c.l.b16 %v288
    %v473 = vunpack.c.h.b16 %v288
    %v474 = vunpack.c.l.b16 %v289
    %v475 = vunpack.c.h.b16 %v289
    %v476 = vunpack.c.l.b16 %v290
    %v477 = vunpack.c.h.b16 %v290
    %v478 = vunpack.c.l.b16 %v291
    %v479 = vunpack.c.h.b16 %v291
    %v480 = vunpack.c.l.b16 %v292
    %v481 = vunpack.c.h.b16 %v292
    %v482 = vunpack.c.l.b16 %v293
    %v483 = vunpack.c.h.b16 %v293
    %v484 = vunpack.c.l.b16 %v294
    %v485 = vunpack.c.h.b16 %v294
    %v486 = vunpack.c.l.b16 %v295
    %v487 = vunpack.c.h.b16 %v295
    %v488 = vunpack.c.l.b16 %v296
    %v489 = vunpack.c.h.b16 %v296
    %v490 = vunpack.c.l.b16 %v297
    %v491 = vunpack.c.h.b16 %v297
    %v492 = vunpack.c.l.b16 %v298
    %v493 = vunpack.c.h.b16 %v298
    %v494 = vunpack.c.l.b16 %v299
    %v495 = vunpack.c.h.b16 %v299
    %v496 = vunpack.c.l.b16 %v300
    %v497 = vunpack.c.h.b16 %v300
    %v498 = vunpack.c.l.b16 %v301
    %v499 = vunpack.c.h.b16 %v301
    %v500 = vunpack.c.l.b16 %v302
    %v501 = vunpack.c.h.b16 %v302
    %v502 = vunpack.c.l.b16 %v303
    %v503 = vunpack.c.h.b16 %v303
    %v504 = vunpack.c.l.b16 %v304
    %v505 = vunpack.c.h.b16 %v304
    %v506 = vunpack.c.l.b16 %v305
    %v507 = vunpack.c.h.b16 %v305
    %v508 = vunpack.c.l.b16 %v306
    %v509 = vunpack.c.h.b16 %v306
    %v510 = vunpack.c.l.b16 %v307
    %v511 = vunpack.c.h.b16 %v307
    %v512 = vunpack.c.l.b16 %v308
    %v513 = vunpack.c.h.b16 %v308
    %v514 = vunpack.c.l.b16 %v309
    %v515 = vunpack.c.h.b16 %v309
    %v516 = vunpack.c.l.b16 %v310
    %v517 = vunpack.c.h.b16 %v310
    %v518 = vunpack.c.l.b16 %v311
    %v519 = vunpack.c.h.b16 %v311
    %v520 = vunpack.c.l.b16 %v312
    %v521 = vunpack.c.h.b16 %v312
    %v522 = vunpack.c.l.b16 %v313
    %v523 = vunpack.c.h.b16 %v313
    %v524 = vunpack.c.l.b16 %v314
    %v525 = vunpack.c.h.b16 %v314
    %v526 = vunpack.c.l.b16 %v315
    %v527 = vunpack.c.h.b16 %v315
    %v528 = vunpack.c.l.b16 %v316
    %v529 = vunpack.c.h.b16 %v316
    %v530 = vunpack.c.l.b16 %v317
    %v531 = vunpack.c.h.b16 %v317
    %v532 = vunpack.c.l.b16 %v318
    %v533 = vunpack.c.h.b16 %v318
    %v534 = vunpack.c.l.b16 %v319
    %v535 = vunpack.c.h.b16 %v319
    %v536 = vunpack.c.l.b16 %v320
    %v537 = vunpack.c.h.b16 %v320
    %v538 = vunpack.c.l.b16 %v321
    %v539 = vunpack.c.h.b16 %v321
    %v540 = vunpack.c.l.b16 %v322
    %v541 = vunpack.c.h.b16 %v322
    %v542 = vunpack.c.l.b16 %v323
    %v543 = vunpack.c.h.b16 %v323
    %v544 = vunpack.c.l.b16 %v324
    %v545 = vunpack.c.h.b16 %v324
    %v546 = vunpack.c.l.b16 %v325
    %v547 = vunpack.c.h.b16 %v325
    %v548 = vunpack.c.l.b16 %v326
    %v549 = vunpack.c.h.b16 %v326
    %v550 = vunpack.c.l.b16 %v327
    %v551 = vunpack.c.h.b16 %v327
    %v552 = vunpack.c.l.b16 %v328
    %v553 = vunpack.c.h.b16 %v328
    %v554 = vunpack.c.l.b16 %v329
    %v555 = vunpack.c.h.b16 %v329
    %v556 = vunpack.c.l.b16 %v330
    %v557 = vunpack.c.h.b16 %v330
    %v558 = vunpack.c.l.b16 %v331
    %v559 = vunpack.c.h.b16 %v331
    %v560 = vunpack.c.l.b16 %v332
    %v561 = vunpack.c.h.b16 %v332
    %v562 = vunpack.c.l.b16 %v333
    %v563 = vunpack.c.h.b16 %v333
    %v564 = vunpack.c.l.b16 %v334
    %v565 = vunpack.c.h.b16 %v334
    %v566 = vunpack.c.l.b16 %v335
    %v567 = vunpack.c.h.b16 %v335
    %v568 = vunpack.c.l.b16 %v336
    %v569 = vunpack.c.h.b16 %v336
    %v570 = vunpack.c.l.b16 %v337
    %v571 = vunpack.c.h.b16 %v337
    %v572 = vpack.c.b16 %v452, %v444
    %v573 = vpack.c.b16 %v453, %v445
    %v574 = vpack.c.b16 %v454, %v446
    %v575 = vpack.c.b16 %v455, %v447
    %v576 = vpack.c.b16 %v456, %v448
    %v577 = vpack.c.b16 %v457, %v449
    %v578 = vpack.c.b16 %v458, %v450
    %v579 = vpack.c.b16 %v459, %v451
    %v580 = vpack.c.b16 %v468, %v460
    %v581 = vpack.c.b16 %v469, %v461
    %v582 = vpack.c.b16 %v470, %v462
    %v583 = vpack.c.b16 %v471, %v463
    %v584 = vpack.c.b16 %v472, %v464
    %v585 = vpack.c.b16 %v473, %v465
    %v586 = vpack.c.b16 %v474, %v466
    %v587 = vpack.c.b16 %v475, %v467
    %v588 = vpack.c.b16 %v484, %v476
    %v589 = vpack.c.b16 %v485, %v477
    %v590 = vpack.c.b16 %v486, %v478
    %v591 = vpack.c.b16 %v487, %v479
    %v592 = vpack.c.b16 %v488, %v480
    %v593 = vpack.c.b16 %v489, %v481
    %v594 = vpack.c.b16 %v490, %v482
    %v595 = vpack.c.b16 %v491, %v483
    %v596 = vpack.c.b16 %v500, %v492
    %v597 = vpack.c.b16 %v501, %v493
    %v598 = vpack.c.b16 %v502, %v494
    %v599 = vpack.c.b16 %v503, %v495
    %v600 = vpack.c.b16 %v504, %v496
    %v601 = vpack.c.b16 %v505, %v497
    %v602 = vpack.c.b16 %v506, %v498
    %v603 = vpack.c.b16 %v507, %v499
    %v604 = vpack.c.b16 %v516, %v508
    %v605 = vpack.c.b16 %v517, %v509
    %v606 = vpack.c.b16 %v518, %v510
    %v607 = vpack.c.b16 %v519, %v511
    %v608 = vpack.c.b16 %v520, %v512
    %v609 = vpack.c.b16 %v521, %v513
    %v610 = vpack.c.b16 %v522, %v514
    %v611 = vpack.c.b16 %v523, %v515
    %v612 = vpack.c.b16 %v532, %v524
    %v613 = vpack.c.b16 %v533, %v525
    %v614 = vpack.c.b16 %v534, %v526
    %v615 = vpack.c.b16 %v535, %v527
    %v616 = vpack.c.b16 %v536, %v528
    %v617 = vpack.c.b16 %v537, %v529
    %v618 = vpack.c.b16 %v538, %v530
    %v619 = vpack.c.b16 %v539, %v531
    %v620 = vpack.c.b16 %v548, %v540
    %v621 = vpack.c.b16 %v549, %v541
    %v622 = vpack.c.b16 %v550, %v542
    %v623 = vpack.c.b16 %v551, %v543
    %v624 = vpack.c.b16 %v552, %v544
    %v625 = vpack.c.b16 %v553, %v545
    %v626 = vpack.c.b16 %v554, %v546
    %v627 = vpack.c.b16 %v555, %v547
    %v628 = vpack.c.b16 %v564, %v556
    %v629 = vpack.c.b16 %v565, %v557
    %v630 = vpack.c.b16 %v566, %v558
    %v631 = vpack.c.b16 %v567, %v559
    %v632 = vpack.c.b16 %v568, %v560
    %v633 = vpack.c.b16 %v569, %v561
    %v634 = vpack.c.b16 %v570, %v562
    %v635 = vpack.c.b16 %v571, %v563
    %700 = vmatprep.subr.bf16.mxu0 %v573
    %701 = vmatpush1.bf16.msra.mxu0 %v572
    %702 = vmatprep.subr.bf16.mxu0 %v581
    %703 = vmatpush1.bf16.msra.mxu0 %v580
    %704 = vmatprep.subr.bf16.mxu0 %v589
    %705 = vmatpush1.bf16.msra.mxu0 %v588
    %706 = vmatprep.subr.bf16.mxu0 %v597
    %707 = vmatpush1.bf16.msra.mxu0 %v596
    %708 = vmatprep.subr.bf16.mxu0 %v605
    %709 = vmatpush1.bf16.msra.mxu0 %v604
    %710 = vmatprep.subr.bf16.mxu0 %v613
    %711 = vmatpush1.bf16.msra.mxu0 %v612
    %712 = vmatprep.subr.bf16.mxu0 %v621
    %713 = vmatpush1.bf16.msra.mxu0 %v620
    %714 = vmatprep.subr.bf16.mxu0 %v629
    %715 = vmatpush1.bf16.msra.mxu0 %v628
    %716 = vmatprep.subr.bf16.mxu0 0
    %717 = vmatpush1.bf16.msra.mxu0 0
    %718 = vmatprep.subr.bf16.mxu0 0
    %719 = vmatpush1.bf16.msra.mxu0 0
    %720 = vmatprep.subr.bf16.mxu0 0
    %721 = vmatpush1.bf16.msra.mxu0 0
    %722 = vmatprep.subr.bf16.mxu0 0
    %723 = vmatpush1.bf16.msra.mxu0 0
    %724 = vmatprep.subr.bf16.mxu0 0
    %725 = vmatpush1.bf16.msra.mxu0 0
    %726 = vmatprep.subr.bf16.mxu0 0
    %727 = vmatpush1.bf16.msra.mxu0 0
    %728 = vmatprep.subr.bf16.mxu0 0
    %729 = vmatpush1.bf16.msra.mxu0 0
    %730 = vmatprep.subr.bf16.mxu0 0
    %731 = vmatpush1.bf16.msra.mxu0 0
    %732 = vmatprep.mubr.bf16.mxu0 0
    %733 = vmatmul.mubr.bf16.gmra.mrb[0].mxu0 %v273
    %v734 = vpop.f32.mrb[0].mxu0
    %v735 = vadd.f32 %v343, %v734
    %v736 = vpop.f32.mrb[0].mxu0
    %v737 = vadd.f32 %v347, %v736
    %v738 = vpop.f32.mrb[0].mxu0
    %v739 = vpop.f32.mrb[0].mxu0
    %740 = vdwg.mxu0
    %741 = vmatprep.subr.bf16.mxu0 %v575
    %742 = vmatpush1.bf16.msra.mxu0 %v574
    %743 = vmatprep.subr.bf16.mxu0 %v583
    %744 = vmatpush1.bf16.msra.mxu0 %v582
    %745 = vmatprep.subr.bf16.mxu0 %v591
    %746 = vmatpush1.bf16.msra.mxu0 %v590
    %747 = vmatprep.subr.bf16.mxu0 %v599
    %748 = vmatpush1.bf16.msra.mxu0 %v598
    %749 = vmatprep.subr.bf16.mxu0 %v607
    %750 = vmatpush1.bf16.msra.mxu0 %v606
    %751 = vmatprep.subr.bf16.mxu0 %v615
    %752 = vmatpush1.bf16.msra.mxu0 %v614
    %753 = vmatprep.subr.bf16.mxu0 %v623
    %754 = vmatpush1.bf16.msra.mxu0 %v622
    %755 = vmatprep.subr.bf16.mxu0 %v631
    %756 = vmatpush1.bf16.msra.mxu0 %v630
    %757 = vmatprep.subr.bf16.mxu0 0
    %758 = vmatpush1.bf16.msra.mxu0 0
    %759 = vmatprep.subr.bf16.mxu0 0
    %760 = vmatpush1.bf16.msra.mxu0 0
    %761 = vmatprep.subr.bf16.mxu0 0
    %762 = vmatpush1.bf16.msra.mxu0 0
    %763 = vmatprep.subr.bf16.mxu0 0
    %764 = vmatpush1.bf16.msra.mxu0 0
    %765 = vmatprep.subr.bf16.mxu0 0
    %766 = vmatpush1.bf16.msra.mxu0 0
    %767 = vmatprep.subr.bf16.mxu0 0
    %768 = vmatpush1.bf16.msra.mxu0 0
    %769 = vmatprep.subr.bf16.mxu0 0
    %770 = vmatpush1.bf16.msra.mxu0 0
    %771 = vmatprep.subr.bf16.mxu0 0
    %772 = vmatpush1.bf16.msra.mxu0 0
    %773 = vmatprep.mubr.bf16.mxu0 0
    %774 = vmatmul.mubr.bf16.gmra.mrb[0].mxu0 %v273
    %v775 = vpop.f32.mrb[0].mxu0
    %v776 = vadd.f32 %v351, %v775
    %v777 = vpop.f32.mrb[0].mxu0
    %v778 = vadd.f32 %v355, %v777
    %v779 = vpop.f32.mrb[0].mxu0
    %v780 = vpop.f32.mrb[0].mxu0
    %781 = vdwg.mxu0
    %782 = vmatprep.subr.bf16.mxu0 %v577
    %783 = vmatpush1.bf16.msra.mxu0 %v576
    %784 = vmatprep.subr.bf16.mxu0 %v585
    %785 = vmatpush1.bf16.msra.mxu0 %v584
    %786 = vmatprep.subr.bf16.mxu0 %v593
    %787 = vmatpush1.bf16.msra.mxu0 %v592
    %788 = vmatprep.subr.bf16.mxu0 %v601
    %789 = vmatpush1.bf16.msra.mxu0 %v600
    %790 = vmatprep.subr.bf16.mxu0 %v609
    %791 = vmatpush1.bf16.msra.mxu0 %v608
    %792 = vmatprep.subr.bf16.mxu0 %v617
    %793 = vmatpush1.bf16.msra.mxu0 %v616
    %794 = vmatprep.subr.bf16.mxu0 %v625
    %795 = vmatpush1.bf16.msra.mxu0 %v624
    %796 = vmatprep.subr.bf16.mxu0 %v633
    %797 = vmatpush1.bf16.msra.mxu0 %v632
    %798 = vmatprep.subr.bf16.mxu0 0
    %799 = vmatpush1.bf16.msra.mxu0 0
    %800 = vmatprep.subr.bf16.mxu0 0
    %801 = vmatpush1.bf16.msra.mxu0 0
    %802 = vmatprep.subr.bf16.mxu0 0
    %803 = vmatpush1.bf16.msra.mxu0 0
    %804 = vmatprep.subr.bf16.mxu0 0
    %805 = vmatpush1.bf16.msra.mxu0 0
    %806 = vmatprep.subr.bf16.mxu0 0
    %807 = vmatpush1.bf16.msra.mxu0 0
    %808 = vmatprep.subr.bf16.mxu0 0
    %809 = vmatpush1.bf16.msra.mxu0 0
    %810 = vmatprep.subr.bf16.mxu0 0
    %811 = vmatpush1.bf16.msra.mxu0 0
    %812 = vmatprep.subr.bf16.mxu0 0
    %813 = vmatpush1.bf16.msra.mxu0 0
    %814 = vmatprep.mubr.bf16.mxu0 0
    %815 = vmatmul.mubr.bf16.gmra.mrb[0].mxu0 %v273
    %v816 = vpop.f32.mrb[0].mxu0
    %v817 = vadd.f32 %v359, %v816
    %v818 = vpop.f32.mrb[0].mxu0
    %v819 = vadd.f32 %v363, %v818
    %v820 = vpop.f32.mrb[0].mxu0
    %v821 = vpop.f32.mrb[0].mxu0
    %822 = vdwg.mxu0
    %823 = vmatprep.subr.bf16.mxu0 %v579
    %824 = vmatpush1.bf16.msra.mxu0 %v578
    %825 = vmatprep.subr.bf16.mxu0 %v587
    %826 = vmatpush1.bf16.msra.mxu0 %v586
    %827 = vmatprep.subr.bf16.mxu0 %v595
    %828 = vmatpush1.bf16.msra.mxu0 %v594
    %829 = vmatprep.subr.bf16.mxu0 %v603
    %830 = vmatpush1.bf16.msra.mxu0 %v602
    %831 = vmatprep.subr.bf16.mxu0 %v611
    %832 = vmatpush1.bf16.msra.mxu0 %v610
    %833 = vmatprep.subr.bf16.mxu0 %v619
    %834 = vmatpush1.bf16.msra.mxu0 %v618
    %835 = vmatprep.subr.bf16.mxu0 %v627
    %836 = vmatpush1.bf16.msra.mxu0 %v626
    %837 = vmatprep.subr.bf16.mxu0 %v635
    %838 = vmatpush1.bf16.msra.mxu0 %v634
    %839 = vmatprep.subr.bf16.mxu0 0
    %840 = vmatpush1.bf16.msra.mxu0 0
    %841 = vmatprep.subr.bf16.mxu0 0
    %842 = vmatpush1.bf16.msra.mxu0 0
    %843 = vmatprep.subr.bf16.mxu0 0
    %844 = vmatpush1.bf16.msra.mxu0 0
    %845 = vmatprep.subr.bf16.mxu0 0
    %846 = vmatpush1.bf16.msra.mxu0 0
    %847 = vmatprep.subr.bf16.mxu0 0
    %848 = vmatpush1.bf16.msra.mxu0 0
    %849 = vmatprep.subr.bf16.mxu0 0
    %850 = vmatpush1.bf16.msra.mxu0 0
    %851 = vmatprep.subr.bf16.mxu0 0
    %852 = vmatpush1.bf16.msra.mxu0 0
    %853 = vmatprep.subr.bf16.mxu0 0
    %854 = vmatpush1.bf16.msra.mxu0 0
    %855 = vmatprep.mubr.bf16.mxu0 0
    %856 = vmatmul.mubr.bf16.gmra.mrb[0].mxu0 %v273
    %v857 = vpop.f32.mrb[0].mxu0
    %v858 = vadd.f32 %v367, %v857
    %v859 = vpop.f32.mrb[0].mxu0
    %v860 = vadd.f32 %v371, %v859
    %v861 = vpop.f32.mrb[0].mxu0
    %v862 = vpop.f32.mrb[0].mxu0
    %863 = vdwg.mxu0
    %v864 = vmax.f32 %v735, 0.0
    %v865 = vmax.f32 %v737, 0.0
    %v866 = vmax.f32 %v776, 0.0
    %v867 = vmax.f32 %v778, 0.0
    %v868 = vmax.f32 %v817, 0.0
    %v869 = vmax.f32 %v819, 0.0
    %v870 = vmax.f32 %v858, 0.0
    %v871 = vmax.f32 %v860, 0.0
    %v872 = vpack.c.bf16 %v864, %v864
    %v873 = vpack.c.bf16 %v865, %v865
    %v874 = vpack.c.bf16 %v866, %v866
    %v875 = vpack.c.bf16 %v867, %v867
    %v876 = vpack.c.bf16 %v868, %v868
    %v877 = vpack.c.bf16 %v869, %v869
    %v878 = vpack.c.bf16 %v870, %v870
    %v879 = vpack.c.bf16 %v871, %v871
    %v880 = vld [vmem:[#allocation8] sm:$0xff]
    %v881 = vld [vmem:[#allocation8 + $0x8] sm:$0xff]
    %v882 = vld [vmem:[#allocation8 + $0x10] sm:$0xff]
    %v883 = vld [vmem:[#allocation8 + $0x18] sm:$0xff]
    %v884 = vld [vmem:[#allocation8 + $0x20] sm:$0xff]
    %v885 = vld [vmem:[#allocation8 + $0x28] sm:$0xff]
    %v886 = vld [vmem:[#allocation8 + $0x30] sm:$0xff]
    %v887 = vld [vmem:[#allocation8 + $0x38] sm:$0xff]
    %v888 = vld [vmem:[#allocation8 + $0x40] sm:$0xff]
    %v889 = vld [vmem:[#allocation8 + $0x48] sm:$0xff]
    %v890 = vld [vmem:[#allocation8 + $0x50] sm:$0xff]
    %v891 = vld [vmem:[#allocation8 + $0x58] sm:$0xff]
    %v892 = vld [vmem:[#allocation8 + $0x60] sm:$0xff]
    %v893 = vld [vmem:[#allocation8 + $0x68] sm:$0xff]
    %v894 = vld [vmem:[#allocation8 + $0x70] sm:$0xff]
    %v895 = vld [vmem:[#allocation8 + $0x78] sm:$0xff]
    %v896 = vld [vmem:[#allocation8 + $0x80] sm:$0xff]
    %v897 = vld [vmem:[#allocation8 + $0x88] sm:$0xff]
    %v898 = vld [vmem:[#allocation8 + $0x90] sm:$0xff]
    %v899 = vld [vmem:[#allocation8 + $0x98] sm:$0xff]
    %v900 = vld [vmem:[#allocation8 + $0xa0] sm:$0xff]
    %v901 = vld [vmem:[#allocation8 + $0xa8] sm:$0xff]
    %v902 = vld [vmem:[#allocation8 + $0xb0] sm:$0xff]
    %v903 = vld [vmem:[#allocation8 + $0xb8] sm:$0xff]
    %v904 = vld [vmem:[#allocation8 + $0xc0] sm:$0xff]
    %v905 = vld [vmem:[#allocation8 + $0xc8] sm:$0xff]
    %v906 = vld [vmem:[#allocation8 + $0xd0] sm:$0xff]
    %v907 = vld [vmem:[#allocation8 + $0xd8] sm:$0xff]
    %v908 = vld [vmem:[#allocation8 + $0xe0] sm:$0xff]
    %v909 = vld [vmem:[#allocation8 + $0xe8] sm:$0xff]
    %v910 = vld [vmem:[#allocation8 + $0xf0] sm:$0xff]
    %v911 = vld [vmem:[#allocation8 + $0xf8] sm:$0xff]
    %v912 = vld [vmem:[#allocation8 + $0x100] sm:$0xff]
    %v913 = vld [vmem:[#allocation8 + $0x108] sm:$0xff]
    %v914 = vld [vmem:[#allocation8 + $0x110] sm:$0xff]
    %v915 = vld [vmem:[#allocation8 + $0x118] sm:$0xff]
    %v916 = vld [vmem:[#allocation8 + $0x120] sm:$0xff]
    %v917 = vld [vmem:[#allocation8 + $0x128] sm:$0xff]
    %v918 = vld [vmem:[#allocation8 + $0x130] sm:$0xff]
    %v919 = vld [vmem:[#allocation8 + $0x138] sm:$0xff]
    %v920 = vld [vmem:[#allocation8 + $0x140] sm:$0xff]
    %v921 = vld [vmem:[#allocation8 + $0x148] sm:$0xff]
    %v922 = vld [vmem:[#allocation8 + $0x150] sm:$0xff]
    %v923 = vld [vmem:[#allocation8 + $0x158] sm:$0xff]
    %v924 = vld [vmem:[#allocation8 + $0x160] sm:$0xff]
    %v925 = vld [vmem:[#allocation8 + $0x168] sm:$0xff]
    %v926 = vld [vmem:[#allocation8 + $0x170] sm:$0xff]
    %v927 = vld [vmem:[#allocation8 + $0x178] sm:$0xff]
    %v928 = vld [vmem:[#allocation8 + $0x180] sm:$0xff]
    %v929 = vld [vmem:[#allocation8 + $0x188] sm:$0xff]
    %v930 = vld [vmem:[#allocation8 + $0x190] sm:$0xff]
    %v931 = vld [vmem:[#allocation8 + $0x198] sm:$0xff]
    %v932 = vld [vmem:[#allocation8 + $0x1a0] sm:$0xff]
    %v933 = vld [vmem:[#allocation8 + $0x1a8] sm:$0xff]
    %v934 = vld [vmem:[#allocation8 + $0x1b0] sm:$0xff]
    %v935 = vld [vmem:[#allocation8 + $0x1b8] sm:$0xff]
    %v936 = vld [vmem:[#allocation8 + $0x1c0] sm:$0xff]
    %v937 = vld [vmem:[#allocation8 + $0x1c8] sm:$0xff]
    %v938 = vld [vmem:[#allocation8 + $0x1d0] sm:$0xff]
    %v939 = vld [vmem:[#allocation8 + $0x1d8] sm:$0xff]
    %v940 = vld [vmem:[#allocation8 + $0x1e0] sm:$0xff]
    %v941 = vld [vmem:[#allocation8 + $0x1e8] sm:$0xff]
    %v942 = vld [vmem:[#allocation8 + $0x1f0] sm:$0xff]
    %v943 = vld [vmem:[#allocation8 + $0x1f8] sm:$0xff]
    %v944 = vld [vmem:[#allocation8 + $0x200] sm:$0xff]
    %v945 = vld [vmem:[#allocation8 + $0x208] sm:$0xff]
    %v946 = vld [vmem:[#allocation8 + $0x210] sm:$0xff]
    %v947 = vld [vmem:[#allocation8 + $0x218] sm:$0xff]
    %v948 = vld [vmem:[#allocation8 + $0x220] sm:$0xff]
    %v949 = vld [vmem:[#allocation8 + $0x228] sm:$0xff]
    %v950 = vld [vmem:[#allocation8 + $0x230] sm:$0xff]
    %v951 = vld [vmem:[#allocation8 + $0x238] sm:$0xff]
    %v952 = vld [vmem:[#allocation8 + $0x240] sm:$0xff]
    %v953 = vld [vmem:[#allocation8 + $0x248] sm:$0xff]
    %v954 = vld [vmem:[#allocation8 + $0x250] sm:$0xff]
    %v955 = vld [vmem:[#allocation8 + $0x258] sm:$0xff]
    %v956 = vld [vmem:[#allocation8 + $0x260] sm:$0xff]
    %v957 = vld [vmem:[#allocation8 + $0x268] sm:$0xff]
    %v958 = vld [vmem:[#allocation8 + $0x270] sm:$0xff]
    %v959 = vld [vmem:[#allocation8 + $0x278] sm:$0xff]
    %v960 = vld [vmem:[#allocation8 + $0x280] sm:$0xff]
    %v961 = vld [vmem:[#allocation8 + $0x288] sm:$0xff]
    %v962 = vld [vmem:[#allocation8 + $0x290] sm:$0xff]
    %v963 = vld [vmem:[#allocation8 + $0x298] sm:$0xff]
    %v964 = vld [vmem:[#allocation8 + $0x2a0] sm:$0xff]
    %v965 = vld [vmem:[#allocation8 + $0x2a8] sm:$0xff]
    %v966 = vld [vmem:[#allocation8 + $0x2b0] sm:$0xff]
    %v967 = vld [vmem:[#allocation8 + $0x2b8] sm:$0xff]
    %v968 = vld [vmem:[#allocation8 + $0x2c0] sm:$0xff]
    %v969 = vld [vmem:[#allocation8 + $0x2c8] sm:$0xff]
    %v970 = vld [vmem:[#allocation8 + $0x2d0] sm:$0xff]
    %v971 = vld [vmem:[#allocation8 + $0x2d8] sm:$0xff]
    %v972 = vld [vmem:[#allocation8 + $0x2e0] sm:$0xff]
    %v973 = vld [vmem:[#allocation8 + $0x2e8] sm:$0xff]
    %v974 = vld [vmem:[#allocation8 + $0x2f0] sm:$0xff]
    %v975 = vld [vmem:[#allocation8 + $0x2f8] sm:$0xff]
    %v976 = vld [vmem:[#allocation8 + $0x300] sm:$0xff]
    %v977 = vld [vmem:[#allocation8 + $0x308] sm:$0xff]
    %v978 = vld [vmem:[#allocation8 + $0x310] sm:$0xff]
    %v979 = vld [vmem:[#allocation8 + $0x318] sm:$0xff]
    %v980 = vld [vmem:[#allocation8 + $0x320] sm:$0xff]
    %v981 = vld [vmem:[#allocation8 + $0x328] sm:$0xff]
    %v982 = vld [vmem:[#allocation8 + $0x330] sm:$0xff]
    %v983 = vld [vmem:[#allocation8 + $0x338] sm:$0xff]
    %v984 = vld [vmem:[#allocation8 + $0x340] sm:$0xff]
    %v985 = vld [vmem:[#allocation8 + $0x348] sm:$0xff]
    %v986 = vld [vmem:[#allocation8 + $0x350] sm:$0xff]
    %v987 = vld [vmem:[#allocation8 + $0x358] sm:$0xff]
    %v988 = vld [vmem:[#allocation8 + $0x360] sm:$0xff]
    %v989 = vld [vmem:[#allocation8 + $0x368] sm:$0xff]
    %v990 = vld [vmem:[#allocation8 + $0x370] sm:$0xff]
    %v991 = vld [vmem:[#allocation8 + $0x378] sm:$0xff]
    %v992 = vld [vmem:[#allocation8 + $0x380] sm:$0xff]
    %v993 = vld [vmem:[#allocation8 + $0x388] sm:$0xff]
    %v994 = vld [vmem:[#allocation8 + $0x390] sm:$0xff]
    %v995 = vld [vmem:[#allocation8 + $0x398] sm:$0xff]
    %v996 = vld [vmem:[#allocation8 + $0x3a0] sm:$0xff]
    %v997 = vld [vmem:[#allocation8 + $0x3a8] sm:$0xff]
    %v998 = vld [vmem:[#allocation8 + $0x3b0] sm:$0xff]
    %v999 = vld [vmem:[#allocation8 + $0x3b8] sm:$0xff]
    %v1000 = vld [vmem:[#allocation8 + $0x3c0] sm:$0xff]
    %v1001 = vld [vmem:[#allocation8 + $0x3c8] sm:$0xff]
    %v1002 = vld [vmem:[#allocation8 + $0x3d0] sm:$0xff]
    %v1003 = vld [vmem:[#allocation8 + $0x3d8] sm:$0xff]
    %v1004 = vld [vmem:[#allocation8 + $0x3e0] sm:$0xff]
    %v1005 = vld [vmem:[#allocation8 + $0x3e8] sm:$0xff]
    %v1006 = vld [vmem:[#allocation8 + $0x3f0] sm:$0xff]
    %v1007 = vld [vmem:[#allocation8 + $0x3f8] sm:$0xff]
    %v1008 = vld [vmem:[#allocation8 + $0x400] sm:$0xff]
    %v1009 = vld [vmem:[#allocation8 + $0x408] sm:$0xff]
    %v1010 = vld [vmem:[#allocation8 + $0x410] sm:$0xff]
    %v1011 = vld [vmem:[#allocation8 + $0x418] sm:$0xff]
    %v1012 = vld [vmem:[#allocation8 + $0x420] sm:$0xff]
    %v1013 = vld [vmem:[#allocation8 + $0x428] sm:$0xff]
    %v1014 = vld [vmem:[#allocation8 + $0x430] sm:$0xff]
    %v1015 = vld [vmem:[#allocation8 + $0x438] sm:$0xff]
    %v1016 = vld [vmem:[#allocation8 + $0x440] sm:$0xff]
    %v1017 = vld [vmem:[#allocation8 + $0x448] sm:$0xff]
    %v1018 = vld [vmem:[#allocation8 + $0x450] sm:$0xff]
    %v1019 = vld [vmem:[#allocation8 + $0x458] sm:$0xff]
    %v1020 = vld [vmem:[#allocation8 + $0x460] sm:$0xff]
    %v1021 = vld [vmem:[#allocation8 + $0x468] sm:$0xff]
    %v1022 = vld [vmem:[#allocation8 + $0x470] sm:$0xff]
    %v1023 = vld [vmem:[#allocation8 + $0x478] sm:$0xff]
    %v1024 = vld [vmem:[#allocation8 + $0x480] sm:$0xff]
    %v1025 = vld [vmem:[#allocation8 + $0x488] sm:$0xff]
    %v1026 = vld [vmem:[#allocation8 + $0x490] sm:$0xff]
    %v1027 = vld [vmem:[#allocation8 + $0x498] sm:$0xff]
    %v1028 = vld [vmem:[#allocation8 + $0x4a0] sm:$0xff]
    %v1029 = vld [vmem:[#allocation8 + $0x4a8] sm:$0xff]
    %v1030 = vld [vmem:[#allocation8 + $0x4b0] sm:$0xff]
    %v1031 = vld [vmem:[#allocation8 + $0x4b8] sm:$0xff]
    %v1032 = vld [vmem:[#allocation8 + $0x4c0] sm:$0xff]
    %v1033 = vld [vmem:[#allocation8 + $0x4c8] sm:$0xff]
    %v1034 = vld [vmem:[#allocation8 + $0x4d0] sm:$0xff]
    %v1035 = vld [vmem:[#allocation8 + $0x4d8] sm:$0xff]
    %v1036 = vld [vmem:[#allocation8 + $0x4e0] sm:$0xff]
    %v1037 = vld [vmem:[#allocation8 + $0x4e8] sm:$0xff]
    %v1038 = vld [vmem:[#allocation8 + $0x4f0] sm:$0xff]
    %v1039 = vld [vmem:[#allocation8 + $0x4f8] sm:$0xff]
    %v1040 = vld [vmem:[#allocation8 + $0x500] sm:$0xff]
    %v1041 = vld [vmem:[#allocation8 + $0x508] sm:$0xff]
    %v1042 = vld [vmem:[#allocation8 + $0x510] sm:$0xff]
    %v1043 = vld [vmem:[#allocation8 + $0x518] sm:$0xff]
    %v1044 = vld [vmem:[#allocation8 + $0x520] sm:$0xff]
    %v1045 = vld [vmem:[#allocation8 + $0x528] sm:$0xff]
    %v1046 = vld [vmem:[#allocation8 + $0x530] sm:$0xff]
    %v1047 = vld [vmem:[#allocation8 + $0x538] sm:$0xff]
    %v1048 = vld [vmem:[#allocation8 + $0x540] sm:$0xff]
    %v1049 = vld [vmem:[#allocation8 + $0x548] sm:$0xff]
    %v1050 = vld [vmem:[#allocation8 + $0x550] sm:$0xff]
    %v1051 = vld [vmem:[#allocation8 + $0x558] sm:$0xff]
    %v1052 = vld [vmem:[#allocation8 + $0x560] sm:$0xff]
    %v1053 = vld [vmem:[#allocation8 + $0x568] sm:$0xff]
    %v1054 = vld [vmem:[#allocation8 + $0x570] sm:$0xff]
    %v1055 = vld [vmem:[#allocation8 + $0x578] sm:$0xff]
    %v1056 = vld [vmem:[#allocation8 + $0x580] sm:$0xff]
    %v1057 = vld [vmem:[#allocation8 + $0x588] sm:$0xff]
    %v1058 = vld [vmem:[#allocation8 + $0x590] sm:$0xff]
    %v1059 = vld [vmem:[#allocation8 + $0x598] sm:$0xff]
    %v1060 = vld [vmem:[#allocation8 + $0x5a0] sm:$0xff]
    %v1061 = vld [vmem:[#allocation8 + $0x5a8] sm:$0xff]
    %v1062 = vld [vmem:[#allocation8 + $0x5b0] sm:$0xff]
    %v1063 = vld [vmem:[#allocation8 + $0x5b8] sm:$0xff]
    %v1064 = vld [vmem:[#allocation8 + $0x5c0] sm:$0xff]
    %v1065 = vld [vmem:[#allocation8 + $0x5c8] sm:$0xff]
    %v1066 = vld [vmem:[#allocation8 + $0x5d0] sm:$0xff]
    %v1067 = vld [vmem:[#allocation8 + $0x5d8] sm:$0xff]
    %v1068 = vld [vmem:[#allocation8 + $0x5e0] sm:$0xff]
    %v1069 = vld [vmem:[#allocation8 + $0x5e8] sm:$0xff]
    %v1070 = vld [vmem:[#allocation8 + $0x5f0] sm:$0xff]
    %v1071 = vld [vmem:[#allocation8 + $0x5f8] sm:$0xff]
    %v1072 = vld [vmem:[#allocation8 + $0x600] sm:$0xff]
    %v1073 = vld [vmem:[#allocation8 + $0x608] sm:$0xff]
    %v1074 = vld [vmem:[#allocation8 + $0x610] sm:$0xff]
    %v1075 = vld [vmem:[#allocation8 + $0x618] sm:$0xff]
    %v1076 = vld [vmem:[#allocation8 + $0x620] sm:$0xff]
    %v1077 = vld [vmem:[#allocation8 + $0x628] sm:$0xff]
    %v1078 = vld [vmem:[#allocation8 + $0x630] sm:$0xff]
    %v1079 = vld [vmem:[#allocation8 + $0x638] sm:$0xff]
    %v1080 = vld [vmem:[#allocation8 + $0x640] sm:$0xff]
    %v1081 = vld [vmem:[#allocation8 + $0x648] sm:$0xff]
    %v1082 = vld [vmem:[#allocation8 + $0x650] sm:$0xff]
    %v1083 = vld [vmem:[#allocation8 + $0x658] sm:$0xff]
    %v1084 = vld [vmem:[#allocation8 + $0x660] sm:$0xff]
    %v1085 = vld [vmem:[#allocation8 + $0x668] sm:$0xff]
    %v1086 = vld [vmem:[#allocation8 + $0x670] sm:$0xff]
    %v1087 = vld [vmem:[#allocation8 + $0x678] sm:$0xff]
    %v1088 = vld [vmem:[#allocation8 + $0x680] sm:$0xff]
    %v1089 = vld [vmem:[#allocation8 + $0x688] sm:$0xff]
    %v1090 = vld [vmem:[#allocation8 + $0x690] sm:$0xff]
    %v1091 = vld [vmem:[#allocation8 + $0x698] sm:$0xff]
    %v1092 = vld [vmem:[#allocation8 + $0x6a0] sm:$0xff]
    %v1093 = vld [vmem:[#allocation8 + $0x6a8] sm:$0xff]
    %v1094 = vld [vmem:[#allocation8 + $0x6b0] sm:$0xff]
    %v1095 = vld [vmem:[#allocation8 + $0x6b8] sm:$0xff]
    %v1096 = vld [vmem:[#allocation8 + $0x6c0] sm:$0xff]
    %v1097 = vld [vmem:[#allocation8 + $0x6c8] sm:$0xff]
    %v1098 = vld [vmem:[#allocation8 + $0x6d0] sm:$0xff]
    %v1099 = vld [vmem:[#allocation8 + $0x6d8] sm:$0xff]
    %v1100 = vld [vmem:[#allocation8 + $0x6e0] sm:$0xff]
    %v1101 = vld [vmem:[#allocation8 + $0x6e8] sm:$0xff]
    %v1102 = vld [vmem:[#allocation8 + $0x6f0] sm:$0xff]
    %v1103 = vld [vmem:[#allocation8 + $0x6f8] sm:$0xff]
    %v1104 = vld [vmem:[#allocation8 + $0x700] sm:$0xff]
    %v1105 = vld [vmem:[#allocation8 + $0x708] sm:$0xff]
    %v1106 = vld [vmem:[#allocation8 + $0x710] sm:$0xff]
    %v1107 = vld [vmem:[#allocation8 + $0x718] sm:$0xff]
    %v1108 = vld [vmem:[#allocation8 + $0x720] sm:$0xff]
    %v1109 = vld [vmem:[#allocation8 + $0x728] sm:$0xff]
    %v1110 = vld [vmem:[#allocation8 + $0x730] sm:$0xff]
    %v1111 = vld [vmem:[#allocation8 + $0x738] sm:$0xff]
    %v1112 = vld [vmem:[#allocation8 + $0x740] sm:$0xff]
    %v1113 = vld [vmem:[#allocation8 + $0x748] sm:$0xff]
    %v1114 = vld [vmem:[#allocation8 + $0x750] sm:$0xff]
    %v1115 = vld [vmem:[#allocation8 + $0x758] sm:$0xff]
    %v1116 = vld [vmem:[#allocation8 + $0x760] sm:$0xff]
    %v1117 = vld [vmem:[#allocation8 + $0x768] sm:$0xff]
    %v1118 = vld [vmem:[#allocation8 + $0x770] sm:$0xff]
    %v1119 = vld [vmem:[#allocation8 + $0x778] sm:$0xff]
    %v1120 = vld [vmem:[#allocation8 + $0x780] sm:$0xff]
    %v1121 = vld [vmem:[#allocation8 + $0x788] sm:$0xff]
    %v1122 = vld [vmem:[#allocation8 + $0x790] sm:$0xff]
    %v1123 = vld [vmem:[#allocation8 + $0x798] sm:$0xff]
    %v1124 = vld [vmem:[#allocation8 + $0x7a0] sm:$0xff]
    %v1125 = vld [vmem:[#allocation8 + $0x7a8] sm:$0xff]
    %v1126 = vld [vmem:[#allocation8 + $0x7b0] sm:$0xff]
    %v1127 = vld [vmem:[#allocation8 + $0x7b8] sm:$0xff]
    %v1128 = vld [vmem:[#allocation8 + $0x7c0] sm:$0xff]
    %v1129 = vld [vmem:[#allocation8 + $0x7c8] sm:$0xff]
    %v1130 = vld [vmem:[#allocation8 + $0x7d0] sm:$0xff]
    %v1131 = vld [vmem:[#allocation8 + $0x7d8] sm:$0xff]
    %v1132 = vld [vmem:[#allocation8 + $0x7e0] sm:$0xff]
    %v1133 = vld [vmem:[#allocation8 + $0x7e8] sm:$0xff]
    %v1134 = vld [vmem:[#allocation8 + $0x7f0] sm:$0xff]
    %v1135 = vld [vmem:[#allocation8 + $0x7f8] sm:$0xff]
    %v1136 = vld [vmem:[%s6] sm:$0xf]
    %v1138 = vlaneseq
    %v1139 = vshrl.u32 %v1138, 7
    %v1140 = vsub.s32 0, %v1139
    %v1141 = vrot.slane %v1136, %v1140
    %v1142 = vlaneseq
    %v1143 = vshrl.u32 %v1142, 7
    %v1144 = vsub.s32 1, %v1143
    %v1145 = vrot.slane %v1136, %v1144
    %v1146 = vlaneseq
    %v1147 = vshrl.u32 %v1146, 7
    %v1148 = vsub.s32 2, %v1147
    %v1149 = vrot.slane %v1136, %v1148
    %v1150 = vlaneseq
    %v1151 = vshrl.u32 %v1150, 7
    %v1152 = vsub.s32 3, %v1151
    %v1153 = vrot.slane %v1136, %v1152
    %v1414 = vunpack.c.l.b16 %v880
    %v1415 = vunpack.c.h.b16 %v880
    %v1416 = vunpack.c.l.b16 %v881
    %v1417 = vunpack.c.h.b16 %v881
    %v1418 = vunpack.c.l.b16 %v882
    %v1419 = vunpack.c.h.b16 %v882
    %v1420 = vunpack.c.l.b16 %v883
    %v1421 = vunpack.c.h.b16 %v883
    %v1422 = vunpack.c.l.b16 %v884
    %v1423 = vunpack.c.h.b16 %v884
    %v1424 = vunpack.c.l.b16 %v885
    %v1425 = vunpack.c.h.b16 %v885
    %v1426 = vunpack.c.l.b16 %v886
    %v1427 = vunpack.c.h.b16 %v886
    %v1428 = vunpack.c.l.b16 %v887
    %v1429 = vunpack.c.h.b16 %v887
    %v1430 = vunpack.c.l.b16 %v888
    %v1431 = vunpack.c.h.b16 %v888
    %v1432 = vunpack.c.l.b16 %v889
    %v1433 = vunpack.c.h.b16 %v889
    %v1434 = vunpack.c.l.b16 %v890
    %v1435 = vunpack.c.h.b16 %v890
    %v1436 = vunpack.c.l.b16 %v891
    %v1437 = vunpack.c.h.b16 %v891
    %v1438 = vunpack.c.l.b16 %v892
    %v1439 = vunpack.c.h.b16 %v892
    %v1440 = vunpack.c.l.b16 %v893
    %v1441 = vunpack.c.h.b16 %v893
    %v1442 = vunpack.c.l.b16 %v894
    %v1443 = vunpack.c.h.b16 %v894
    %v1444 = vunpack.c.l.b16 %v895
    %v1445 = vunpack.c.h.b16 %v895
    %v1446 = vunpack.c.l.b16 %v896
    %v1447 = vunpack.c.h.b16 %v896
    %v1448 = vunpack.c.l.b16 %v897
    %v1449 = vunpack.c.h.b16 %v897
    %v1450 = vunpack.c.l.b16 %v898
    %v1451 = vunpack.c.h.b16 %v898
    %v1452 = vunpack.c.l.b16 %v899
    %v1453 = vunpack.c.h.b16 %v899
    %v1454 = vunpack.c.l.b16 %v900
    %v1455 = vunpack.c.h.b16 %v900
    %v1456 = vunpack.c.l.b16 %v901
    %v1457 = vunpack.c.h.b16 %v901
    %v1458 = vunpack.c.l.b16 %v902
    %v1459 = vunpack.c.h.b16 %v902
    %v1460 = vunpack.c.l.b16 %v903
    %v1461 = vunpack.c.h.b16 %v903
    %v1462 = vunpack.c.l.b16 %v904
    %v1463 = vunpack.c.h.b16 %v904
    %v1464 = vunpack.c.l.b16 %v905
    %v1465 = vunpack.c.h.b16 %v905
    %v1466 = vunpack.c.l.b16 %v906
    %v1467 = vunpack.c.h.b16 %v906
    %v1468 = vunpack.c.l.b16 %v907
    %v1469 = vunpack.c.h.b16 %v907
    %v1470 = vunpack.c.l.b16 %v908
    %v1471 = vunpack.c.h.b16 %v908
    %v1472 = vunpack.c.l.b16 %v909
    %v1473 = vunpack.c.h.b16 %v909
    %v1474 = vunpack.c.l.b16 %v910
    %v1475 = vunpack.c.h.b16 %v910
    %v1476 = vunpack.c.l.b16 %v911
    %v1477 = vunpack.c.h.b16 %v911
    %v1478 = vunpack.c.l.b16 %v912
    %v1479 = vunpack.c.h.b16 %v912
    %v1480 = vunpack.c.l.b16 %v913
    %v1481 = vunpack.c.h.b16 %v913
    %v1482 = vunpack.c.l.b16 %v914
    %v1483 = vunpack.c.h.b16 %v914
    %v1484 = vunpack.c.l.b16 %v915
    %v1485 = vunpack.c.h.b16 %v915
    %v1486 = vunpack.c.l.b16 %v916
    %v1487 = vunpack.c.h.b16 %v916
    %v1488 = vunpack.c.l.b16 %v917
    %v1489 = vunpack.c.h.b16 %v917
    %v1490 = vunpack.c.l.b16 %v918
    %v1491 = vunpack.c.h.b16 %v918
    %v1492 = vunpack.c.l.b16 %v919
    %v1493 = vunpack.c.h.b16 %v919
    %v1494 = vunpack.c.l.b16 %v920
    %v1495 = vunpack.c.h.b16 %v920
    %v1496 = vunpack.c.l.b16 %v921
    %v1497 = vunpack.c.h.b16 %v921
    %v1498 = vunpack.c.l.b16 %v922
    %v1499 = vunpack.c.h.b16 %v922
    %v1500 = vunpack.c.l.b16 %v923
    %v1501 = vunpack.c.h.b16 %v923
    %v1502 = vunpack.c.l.b16 %v924
    %v1503 = vunpack.c.h.b16 %v924
    %v1504 = vunpack.c.l.b16 %v925
    %v1505 = vunpack.c.h.b16 %v925
    %v1506 = vunpack.c.l.b16 %v926
    %v1507 = vunpack.c.h.b16 %v926
    %v1508 = vunpack.c.l.b16 %v927
    %v1509 = vunpack.c.h.b16 %v927
    %v1510 = vunpack.c.l.b16 %v928
    %v1511 = vunpack.c.h.b16 %v928
    %v1512 = vunpack.c.l.b16 %v929
    %v1513 = vunpack.c.h.b16 %v929
    %v1514 = vunpack.c.l.b16 %v930
    %v1515 = vunpack.c.h.b16 %v930
    %v1516 = vunpack.c.l.b16 %v931
    %v1517 = vunpack.c.h.b16 %v931
    %v1518 = vunpack.c.l.b16 %v932
    %v1519 = vunpack.c.h.b16 %v932
    %v1520 = vunpack.c.l.b16 %v933
    %v1521 = vunpack.c.h.b16 %v933
    %v1522 = vunpack.c.l.b16 %v934
    %v1523 = vunpack.c.h.b16 %v934
    %v1524 = vunpack.c.l.b16 %v935
    %v1525 = vunpack.c.h.b16 %v935
    %v1526 = vunpack.c.l.b16 %v936
    %v1527 = vunpack.c.h.b16 %v936
    %v1528 = vunpack.c.l.b16 %v937
    %v1529 = vunpack.c.h.b16 %v937
    %v1530 = vunpack.c.l.b16 %v938
    %v1531 = vunpack.c.h.b16 %v938
    %v1532 = vunpack.c.l.b16 %v939
    %v1533 = vunpack.c.h.b16 %v939
    %v1534 = vunpack.c.l.b16 %v940
    %v1535 = vunpack.c.h.b16 %v940
    %v1536 = vunpack.c.l.b16 %v941
    %v1537 = vunpack.c.h.b16 %v941
    %v1538 = vunpack.c.l.b16 %v942
    %v1539 = vunpack.c.h.b16 %v942
    %v1540 = vunpack.c.l.b16 %v943
    %v1541 = vunpack.c.h.b16 %v943
    %v1542 = vunpack.c.l.b16 %v944
    %v1543 = vunpack.c.h.b16 %v944
    %v1544 = vunpack.c.l.b16 %v945
    %v1545 = vunpack.c.h.b16 %v945
    %v1546 = vunpack.c.l.b16 %v946
    %v1547 = vunpack.c.h.b16 %v946
    %v1548 = vunpack.c.l.b16 %v947
    %v1549 = vunpack.c.h.b16 %v947
    %v1550 = vunpack.c.l.b16 %v948
    %v1551 = vunpack.c.h.b16 %v948
    %v1552 = vunpack.c.l.b16 %v949
    %v1553 = vunpack.c.h.b16 %v949
    %v1554 = vunpack.c.l.b16 %v950
    %v1555 = vunpack.c.h.b16 %v950
    %v1556 = vunpack.c.l.b16 %v951
    %v1557 = vunpack.c.h.b16 %v951
    %v1558 = vunpack.c.l.b16 %v952
    %v1559 = vunpack.c.h.b16 %v952
    %v1560 = vunpack.c.l.b16 %v953
    %v1561 = vunpack.c.h.b16 %v953
    %v1562 = vunpack.c.l.b16 %v954
    %v1563 = vunpack.c.h.b16 %v954
    %v1564 = vunpack.c.l.b16 %v955
    %v1565 = vunpack.c.h.b16 %v955
    %v1566 = vunpack.c.l.b16 %v956
    %v1567 = vunpack.c.h.b16 %v956
    %v1568 = vunpack.c.l.b16 %v957
    %v1569 = vunpack.c.h.b16 %v957
    %v1570 = vunpack.c.l.b16 %v958
    %v1571 = vunpack.c.h.b16 %v958
    %v1572 = vunpack.c.l.b16 %v959
    %v1573 = vunpack.c.h.b16 %v959
    %v1574 = vunpack.c.l.b16 %v960
    %v1575 = vunpack.c.h.b16 %v960
    %v1576 = vunpack.c.l.b16 %v961
    %v1577 = vunpack.c.h.b16 %v961
    %v1578 = vunpack.c.l.b16 %v962
    %v1579 = vunpack.c.h.b16 %v962
    %v1580 = vunpack.c.l.b16 %v963
    %v1581 = vunpack.c.h.b16 %v963
    %v1582 = vunpack.c.l.b16 %v964
    %v1583 = vunpack.c.h.b16 %v964
    %v1584 = vunpack.c.l.b16 %v965
    %v1585 = vunpack.c.h.b16 %v965
    %v1586 = vunpack.c.l.b16 %v966
    %v1587 = vunpack.c.h.b16 %v966
    %v1588 = vunpack.c.l.b16 %v967
    %v1589 = vunpack.c.h.b16 %v967
    %v1590 = vunpack.c.l.b16 %v968
    %v1591 = vunpack.c.h.b16 %v968
    %v1592 = vunpack.c.l.b16 %v969
    %v1593 = vunpack.c.h.b16 %v969
    %v1594 = vunpack.c.l.b16 %v970
    %v1595 = vunpack.c.h.b16 %v970
    %v1596 = vunpack.c.l.b16 %v971
    %v1597 = vunpack.c.h.b16 %v971
    %v1598 = vunpack.c.l.b16 %v972
    %v1599 = vunpack.c.h.b16 %v972
    %v1600 = vunpack.c.l.b16 %v973
    %v1601 = vunpack.c.h.b16 %v973
    %v1602 = vunpack.c.l.b16 %v974
    %v1603 = vunpack.c.h.b16 %v974
    %v1604 = vunpack.c.l.b16 %v975
    %v1605 = vunpack.c.h.b16 %v975
    %v1606 = vunpack.c.l.b16 %v976
    %v1607 = vunpack.c.h.b16 %v976
    %v1608 = vunpack.c.l.b16 %v977
    %v1609 = vunpack.c.h.b16 %v977
    %v1610 = vunpack.c.l.b16 %v978
    %v1611 = vunpack.c.h.b16 %v978
    %v1612 = vunpack.c.l.b16 %v979
    %v1613 = vunpack.c.h.b16 %v979
    %v1614 = vunpack.c.l.b16 %v980
    %v1615 = vunpack.c.h.b16 %v980
    %v1616 = vunpack.c.l.b16 %v981
    %v1617 = vunpack.c.h.b16 %v981
    %v1618 = vunpack.c.l.b16 %v982
    %v1619 = vunpack.c.h.b16 %v982
    %v1620 = vunpack.c.l.b16 %v983
    %v1621 = vunpack.c.h.b16 %v983
    %v1622 = vunpack.c.l.b16 %v984
    %v1623 = vunpack.c.h.b16 %v984
    %v1624 = vunpack.c.l.b16 %v985
    %v1625 = vunpack.c.h.b16 %v985
    %v1626 = vunpack.c.l.b16 %v986
    %v1627 = vunpack.c.h.b16 %v986
    %v1628 = vunpack.c.l.b16 %v987
    %v1629 = vunpack.c.h.b16 %v987
    %v1630 = vunpack.c.l.b16 %v988
    %v1631 = vunpack.c.h.b16 %v988
    %v1632 = vunpack.c.l.b16 %v989
    %v1633 = vunpack.c.h.b16 %v989
    %v1634 = vunpack.c.l.b16 %v990
    %v1635 = vunpack.c.h.b16 %v990
    %v1636 = vunpack.c.l.b16 %v991
    %v1637 = vunpack.c.h.b16 %v991
    %v1638 = vunpack.c.l.b16 %v992
    %v1639 = vunpack.c.h.b16 %v992
    %v1640 = vunpack.c.l.b16 %v993
    %v1641 = vunpack.c.h.b16 %v993
    %v1642 = vunpack.c.l.b16 %v994
    %v1643 = vunpack.c.h.b16 %v994
    %v1644 = vunpack.c.l.b16 %v995
    %v1645 = vunpack.c.h.b16 %v995
    %v1646 = vunpack.c.l.b16 %v996
    %v1647 = vunpack.c.h.b16 %v996
    %v1648 = vunpack.c.l.b16 %v997
    %v1649 = vunpack.c.h.b16 %v997
    %v1650 = vunpack.c.l.b16 %v998
    %v1651 = vunpack.c.h.b16 %v998
    %v1652 = vunpack.c.l.b16 %v999
    %v1653 = vunpack.c.h.b16 %v999
    %v1654 = vunpack.c.l.b16 %v1000
    %v1655 = vunpack.c.h.b16 %v1000
    %v1656 = vunpack.c.l.b16 %v1001
    %v1657 = vunpack.c.h.b16 %v1001
    %v1658 = vunpack.c.l.b16 %v1002
    %v1659 = vunpack.c.h.b16 %v1002
    %v1660 = vunpack.c.l.b16 %v1003
    %v1661 = vunpack.c.h.b16 %v1003
    %v1662 = vunpack.c.l.b16 %v1004
    %v1663 = vunpack.c.h.b16 %v1004
    %v1664 = vunpack.c.l.b16 %v1005
    %v1665 = vunpack.c.h.b16 %v1005
    %v1666 = vunpack.c.l.b16 %v1006
    %v1667 = vunpack.c.h.b16 %v1006
    %v1668 = vunpack.c.l.b16 %v1007
    %v1669 = vunpack.c.h.b16 %v1007
    %v1670 = vunpack.c.l.b16 %v1008
    %v1671 = vunpack.c.h.b16 %v1008
    %v1672 = vunpack.c.l.b16 %v1009
    %v1673 = vunpack.c.h.b16 %v1009
    %v1674 = vunpack.c.l.b16 %v1010
    %v1675 = vunpack.c.h.b16 %v1010
    %v1676 = vunpack.c.l.b16 %v1011
    %v1677 = vunpack.c.h.b16 %v1011
    %v1678 = vunpack.c.l.b16 %v1012
    %v1679 = vunpack.c.h.b16 %v1012
    %v1680 = vunpack.c.l.b16 %v1013
    %v1681 = vunpack.c.h.b16 %v1013
    %v1682 = vunpack.c.l.b16 %v1014
    %v1683 = vunpack.c.h.b16 %v1014
    %v1684 = vunpack.c.l.b16 %v1015
    %v1685 = vunpack.c.h.b16 %v1015
    %v1686 = vunpack.c.l.b16 %v1016
    %v1687 = vunpack.c.h.b16 %v1016
    %v1688 = vunpack.c.l.b16 %v1017
    %v1689 = vunpack.c.h.b16 %v1017
    %v1690 = vunpack.c.l.b16 %v1018
    %v1691 = vunpack.c.h.b16 %v1018
    %v1692 = vunpack.c.l.b16 %v1019
    %v1693 = vunpack.c.h.b16 %v1019
    %v1694 = vunpack.c.l.b16 %v1020
    %v1695 = vunpack.c.h.b16 %v1020
    %v1696 = vunpack.c.l.b16 %v1021
    %v1697 = vunpack.c.h.b16 %v1021
    %v1698 = vunpack.c.l.b16 %v1022
    %v1699 = vunpack.c.h.b16 %v1022
    %v1700 = vunpack.c.l.b16 %v1023
    %v1701 = vunpack.c.h.b16 %v1023
    %v1702 = vunpack.c.l.b16 %v1024
    %v1703 = vunpack.c.h.b16 %v1024
    %v1704 = vunpack.c.l.b16 %v1025
    %v1705 = vunpack.c.h.b16 %v1025
    %v1706 = vunpack.c.l.b16 %v1026
    %v1707 = vunpack.c.h.b16 %v1026
    %v1708 = vunpack.c.l.b16 %v1027
    %v1709 = vunpack.c.h.b16 %v1027
    %v1710 = vunpack.c.l.b16 %v1028
    %v1711 = vunpack.c.h.b16 %v1028
    %v1712 = vunpack.c.l.b16 %v1029
    %v1713 = vunpack.c.h.b16 %v1029
    %v1714 = vunpack.c.l.b16 %v1030
    %v1715 = vunpack.c.h.b16 %v1030
    %v1716 = vunpack.c.l.b16 %v1031
    %v1717 = vunpack.c.h.b16 %v1031
    %v1718 = vunpack.c.l.b16 %v1032
    %v1719 = vunpack.c.h.b16 %v1032
    %v1720 = vunpack.c.l.b16 %v1033
    %v1721 = vunpack.c.h.b16 %v1033
    %v1722 = vunpack.c.l.b16 %v1034
    %v1723 = vunpack.c.h.b16 %v1034
    %v1724 = vunpack.c.l.b16 %v1035
    %v1725 = vunpack.c.h.b16 %v1035
    %v1726 = vunpack.c.l.b16 %v1036
    %v1727 = vunpack.c.h.b16 %v1036
    %v1728 = vunpack.c.l.b16 %v1037
    %v1729 = vunpack.c.h.b16 %v1037
    %v1730 = vunpack.c.l.b16 %v1038
    %v1731 = vunpack.c.h.b16 %v1038
    %v1732 = vunpack.c.l.b16 %v1039
    %v1733 = vunpack.c.h.b16 %v1039
    %v1734 = vunpack.c.l.b16 %v1040
    %v1735 = vunpack.c.h.b16 %v1040
    %v1736 = vunpack.c.l.b16 %v1041
    %v1737 = vunpack.c.h.b16 %v1041
    %v1738 = vunpack.c.l.b16 %v1042
    %v1739 = vunpack.c.h.b16 %v1042
    %v1740 = vunpack.c.l.b16 %v1043
    %v1741 = vunpack.c.h.b16 %v1043
    %v1742 = vunpack.c.l.b16 %v1044
    %v1743 = vunpack.c.h.b16 %v1044
    %v1744 = vunpack.c.l.b16 %v1045
    %v1745 = vunpack.c.h.b16 %v1045
    %v1746 = vunpack.c.l.b16 %v1046
    %v1747 = vunpack.c.h.b16 %v1046
    %v1748 = vunpack.c.l.b16 %v1047
    %v1749 = vunpack.c.h.b16 %v1047
    %v1750 = vunpack.c.l.b16 %v1048
    %v1751 = vunpack.c.h.b16 %v1048
    %v1752 = vunpack.c.l.b16 %v1049
    %v1753 = vunpack.c.h.b16 %v1049
    %v1754 = vunpack.c.l.b16 %v1050
    %v1755 = vunpack.c.h.b16 %v1050
    %v1756 = vunpack.c.l.b16 %v1051
    %v1757 = vunpack.c.h.b16 %v1051
    %v1758 = vunpack.c.l.b16 %v1052
    %v1759 = vunpack.c.h.b16 %v1052
    %v1760 = vunpack.c.l.b16 %v1053
    %v1761 = vunpack.c.h.b16 %v1053
    %v1762 = vunpack.c.l.b16 %v1054
    %v1763 = vunpack.c.h.b16 %v1054
    %v1764 = vunpack.c.l.b16 %v1055
    %v1765 = vunpack.c.h.b16 %v1055
    %v1766 = vunpack.c.l.b16 %v1056
    %v1767 = vunpack.c.h.b16 %v1056
    %v1768 = vunpack.c.l.b16 %v1057
    %v1769 = vunpack.c.h.b16 %v1057
    %v1770 = vunpack.c.l.b16 %v1058
    %v1771 = vunpack.c.h.b16 %v1058
    %v1772 = vunpack.c.l.b16 %v1059
    %v1773 = vunpack.c.h.b16 %v1059
    %v1774 = vunpack.c.l.b16 %v1060
    %v1775 = vunpack.c.h.b16 %v1060
    %v1776 = vunpack.c.l.b16 %v1061
    %v1777 = vunpack.c.h.b16 %v1061
    %v1778 = vunpack.c.l.b16 %v1062
    %v1779 = vunpack.c.h.b16 %v1062
    %v1780 = vunpack.c.l.b16 %v1063
    %v1781 = vunpack.c.h.b16 %v1063
    %v1782 = vunpack.c.l.b16 %v1064
    %v1783 = vunpack.c.h.b16 %v1064
    %v1784 = vunpack.c.l.b16 %v1065
    %v1785 = vunpack.c.h.b16 %v1065
    %v1786 = vunpack.c.l.b16 %v1066
    %v1787 = vunpack.c.h.b16 %v1066
    %v1788 = vunpack.c.l.b16 %v1067
    %v1789 = vunpack.c.h.b16 %v1067
    %v1790 = vunpack.c.l.b16 %v1068
    %v1791 = vunpack.c.h.b16 %v1068
    %v1792 = vunpack.c.l.b16 %v1069
    %v1793 = vunpack.c.h.b16 %v1069
    %v1794 = vunpack.c.l.b16 %v1070
    %v1795 = vunpack.c.h.b16 %v1070
    %v1796 = vunpack.c.l.b16 %v1071
    %v1797 = vunpack.c.h.b16 %v1071
    %v1798 = vunpack.c.l.b16 %v1072
    %v1799 = vunpack.c.h.b16 %v1072
    %v1800 = vunpack.c.l.b16 %v1073
    %v1801 = vunpack.c.h.b16 %v1073
    %v1802 = vunpack.c.l.b16 %v1074
    %v1803 = vunpack.c.h.b16 %v1074
    %v1804 = vunpack.c.l.b16 %v1075
    %v1805 = vunpack.c.h.b16 %v1075
    %v1806 = vunpack.c.l.b16 %v1076
    %v1807 = vunpack.c.h.b16 %v1076
    %v1808 = vunpack.c.l.b16 %v1077
    %v1809 = vunpack.c.h.b16 %v1077
    %v1810 = vunpack.c.l.b16 %v1078
    %v1811 = vunpack.c.h.b16 %v1078
    %v1812 = vunpack.c.l.b16 %v1079
    %v1813 = vunpack.c.h.b16 %v1079
    %v1814 = vunpack.c.l.b16 %v1080
    %v1815 = vunpack.c.h.b16 %v1080
    %v1816 = vunpack.c.l.b16 %v1081
    %v1817 = vunpack.c.h.b16 %v1081
    %v1818 = vunpack.c.l.b16 %v1082
    %v1819 = vunpack.c.h.b16 %v1082
    %v1820 = vunpack.c.l.b16 %v1083
    %v1821 = vunpack.c.h.b16 %v1083
    %v1822 = vunpack.c.l.b16 %v1084
    %v1823 = vunpack.c.h.b16 %v1084
    %v1824 = vunpack.c.l.b16 %v1085
    %v1825 = vunpack.c.h.b16 %v1085
    %v1826 = vunpack.c.l.b16 %v1086
    %v1827 = vunpack.c.h.b16 %v1086
    %v1828 = vunpack.c.l.b16 %v1087
    %v1829 = vunpack.c.h.b16 %v1087
    %v1830 = vunpack.c.l.b16 %v1088
    %v1831 = vunpack.c.h.b16 %v1088
    %v1832 = vunpack.c.l.b16 %v1089
    %v1833 = vunpack.c.h.b16 %v1089
    %v1834 = vunpack.c.l.b16 %v1090
    %v1835 = vunpack.c.h.b16 %v1090
    %v1836 = vunpack.c.l.b16 %v1091
    %v1837 = vunpack.c.h.b16 %v1091
    %v1838 = vunpack.c.l.b16 %v1092
    %v1839 = vunpack.c.h.b16 %v1092
    %v1840 = vunpack.c.l.b16 %v1093
    %v1841 = vunpack.c.h.b16 %v1093
    %v1842 = vunpack.c.l.b16 %v1094
    %v1843 = vunpack.c.h.b16 %v1094
    %v1844 = vunpack.c.l.b16 %v1095
    %v1845 = vunpack.c.h.b16 %v1095
    %v1846 = vunpack.c.l.b16 %v1096
    %v1847 = vunpack.c.h.b16 %v1096
    %v1848 = vunpack.c.l.b16 %v1097
    %v1849 = vunpack.c.h.b16 %v1097
    %v1850 = vunpack.c.l.b16 %v1098
    %v1851 = vunpack.c.h.b16 %v1098
    %v1852 = vunpack.c.l.b16 %v1099
    %v1853 = vunpack.c.h.b16 %v1099
    %v1854 = vunpack.c.l.b16 %v1100
    %v1855 = vunpack.c.h.b16 %v1100
    %v1856 = vunpack.c.l.b16 %v1101
    %v1857 = vunpack.c.h.b16 %v1101
    %v1858 = vunpack.c.l.b16 %v1102
    %v1859 = vunpack.c.h.b16 %v1102
    %v1860 = vunpack.c.l.b16 %v1103
    %v1861 = vunpack.c.h.b16 %v1103
    %v1862 = vunpack.c.l.b16 %v1104
    %v1863 = vunpack.c.h.b16 %v1104
    %v1864 = vunpack.c.l.b16 %v1105
    %v1865 = vunpack.c.h.b16 %v1105
    %v1866 = vunpack.c.l.b16 %v1106
    %v1867 = vunpack.c.h.b16 %v1106
    %v1868 = vunpack.c.l.b16 %v1107
    %v1869 = vunpack.c.h.b16 %v1107
    %v1870 = vunpack.c.l.b16 %v1108
    %v1871 = vunpack.c.h.b16 %v1108
    %v1872 = vunpack.c.l.b16 %v1109
    %v1873 = vunpack.c.h.b16 %v1109
    %v1874 = vunpack.c.l.b16 %v1110
    %v1875 = vunpack.c.h.b16 %v1110
    %v1876 = vunpack.c.l.b16 %v1111
    %v1877 = vunpack.c.h.b16 %v1111
    %v1878 = vunpack.c.l.b16 %v1112
    %v1879 = vunpack.c.h.b16 %v1112
    %v1880 = vunpack.c.l.b16 %v1113
    %v1881 = vunpack.c.h.b16 %v1113
    %v1882 = vunpack.c.l.b16 %v1114
    %v1883 = vunpack.c.h.b16 %v1114
    %v1884 = vunpack.c.l.b16 %v1115
    %v1885 = vunpack.c.h.b16 %v1115
    %v1886 = vunpack.c.l.b16 %v1116
    %v1887 = vunpack.c.h.b16 %v1116
    %v1888 = vunpack.c.l.b16 %v1117
    %v1889 = vunpack.c.h.b16 %v1117
    %v1890 = vunpack.c.l.b16 %v1118
    %v1891 = vunpack.c.h.b16 %v1118
    %v1892 = vunpack.c.l.b16 %v1119
    %v1893 = vunpack.c.h.b16 %v1119
    %v1894 = vunpack.c.l.b16 %v1120
    %v1895 = vunpack.c.h.b16 %v1120
    %v1896 = vunpack.c.l.b16 %v1121
    %v1897 = vunpack.c.h.b16 %v1121
    %v1898 = vunpack.c.l.b16 %v1122
    %v1899 = vunpack.c.h.b16 %v1122
    %v1900 = vunpack.c.l.b16 %v1123
    %v1901 = vunpack.c.h.b16 %v1123
    %v1902 = vunpack.c.l.b16 %v1124
    %v1903 = vunpack.c.h.b16 %v1124
    %v1904 = vunpack.c.l.b16 %v1125
    %v1905 = vunpack.c.h.b16 %v1125
    %v1906 = vunpack.c.l.b16 %v1126
    %v1907 = vunpack.c.h.b16 %v1126
    %v1908 = vunpack.c.l.b16 %v1127
    %v1909 = vunpack.c.h.b16 %v1127
    %v1910 = vunpack.c.l.b16 %v1128
    %v1911 = vunpack.c.h.b16 %v1128
    %v1912 = vunpack.c.l.b16 %v1129
    %v1913 = vunpack.c.h.b16 %v1129
    %v1914 = vunpack.c.l.b16 %v1130
    %v1915 = vunpack.c.h.b16 %v1130
    %v1916 = vunpack.c.l.b16 %v1131
    %v1917 = vunpack.c.h.b16 %v1131
    %v1918 = vunpack.c.l.b16 %v1132
    %v1919 = vunpack.c.h.b16 %v1132
    %v1920 = vunpack.c.l.b16 %v1133
    %v1921 = vunpack.c.h.b16 %v1133
    %v1922 = vunpack.c.l.b16 %v1134
    %v1923 = vunpack.c.h.b16 %v1134
    %v1924 = vunpack.c.l.b16 %v1135
    %v1925 = vunpack.c.h.b16 %v1135
    %v1926 = vpack.c.b16 %v1418, %v1414
    %v1927 = vpack.c.b16 %v1419, %v1415
    %v1928 = vpack.c.b16 %v1420, %v1416
    %v1929 = vpack.c.b16 %v1421, %v1417
    %v1930 = vpack.c.b16 %v1426, %v1422
    %v1931 = vpack.c.b16 %v1427, %v1423
    %v1932 = vpack.c.b16 %v1428, %v1424
    %v1933 = vpack.c.b16 %v1429, %v1425
    %v1934 = vpack.c.b16 %v1434, %v1430
    %v1935 = vpack.c.b16 %v1435, %v1431
    %v1936 = vpack.c.b16 %v1436, %v1432
    %v1937 = vpack.c.b16 %v1437, %v1433
    %v1938 = vpack.c.b16 %v1442, %v1438
    %v1939 = vpack.c.b16 %v1443, %v1439
    %v1940 = vpack.c.b16 %v1444, %v1440
    %v1941 = vpack.c.b16 %v1445, %v1441
    %v1942 = vpack.c.b16 %v1450, %v1446
    %v1943 = vpack.c.b16 %v1451, %v1447
    %v1944 = vpack.c.b16 %v1452, %v1448
    %v1945 = vpack.c.b16 %v1453, %v1449
    %v1946 = vpack.c.b16 %v1458, %v1454
    %v1947 = vpack.c.b16 %v1459, %v1455
    %v1948 = vpack.c.b16 %v1460, %v1456
    %v1949 = vpack.c.b16 %v1461, %v1457
    %v1950 = vpack.c.b16 %v1466, %v1462
    %v1951 = vpack.c.b16 %v1467, %v1463
    %v1952 = vpack.c.b16 %v1468, %v1464
    %v1953 = vpack.c.b16 %v1469, %v1465
    %v1954 = vpack.c.b16 %v1474, %v1470
    %v1955 = vpack.c.b16 %v1475, %v1471
    %v1956 = vpack.c.b16 %v1476, %v1472
    %v1957 = vpack.c.b16 %v1477, %v1473
    %v1958 = vpack.c.b16 %v1482, %v1478
    %v1959 = vpack.c.b16 %v1483, %v1479
    %v1960 = vpack.c.b16 %v1484, %v1480
    %v1961 = vpack.c.b16 %v1485, %v1481
    %v1962 = vpack.c.b16 %v1490, %v1486
    %v1963 = vpack.c.b16 %v1491, %v1487
    %v1964 = vpack.c.b16 %v1492, %v1488
    %v1965 = vpack.c.b16 %v1493, %v1489
    %v1966 = vpack.c.b16 %v1498, %v1494
    %v1967 = vpack.c.b16 %v1499, %v1495
    %v1968 = vpack.c.b16 %v1500, %v1496
    %v1969 = vpack.c.b16 %v1501, %v1497
    %v1970 = vpack.c.b16 %v1506, %v1502
    %v1971 = vpack.c.b16 %v1507, %v1503
    %v1972 = vpack.c.b16 %v1508, %v1504
    %v1973 = vpack.c.b16 %v1509, %v1505
    %v1974 = vpack.c.b16 %v1514, %v1510
    %v1975 = vpack.c.b16 %v1515, %v1511
    %v1976 = vpack.c.b16 %v1516, %v1512
    %v1977 = vpack.c.b16 %v1517, %v1513
    %v1978 = vpack.c.b16 %v1522, %v1518
    %v1979 = vpack.c.b16 %v1523, %v1519
    %v1980 = vpack.c.b16 %v1524, %v1520
    %v1981 = vpack.c.b16 %v1525, %v1521
    %v1982 = vpack.c.b16 %v1530, %v1526
    %v1983 = vpack.c.b16 %v1531, %v1527
    %v1984 = vpack.c.b16 %v1532, %v1528
    %v1985 = vpack.c.b16 %v1533, %v1529
    %v1986 = vpack.c.b16 %v1538, %v1534
    %v1987 = vpack.c.b16 %v1539, %v1535
    %v1988 = vpack.c.b16 %v1540, %v1536
    %v1989 = vpack.c.b16 %v1541, %v1537
    %v1990 = vpack.c.b16 %v1546, %v1542
    %v1991 = vpack.c.b16 %v1547, %v1543
    %v1992 = vpack.c.b16 %v1548, %v1544
    %v1993 = vpack.c.b16 %v1549, %v1545
    %v1994 = vpack.c.b16 %v1554, %v1550
    %v1995 = vpack.c.b16 %v1555, %v1551
    %v1996 = vpack.c.b16 %v1556, %v1552
    %v1997 = vpack.c.b16 %v1557, %v1553
    %v1998 = vpack.c.b16 %v1562, %v1558
    %v1999 = vpack.c.b16 %v1563, %v1559
    %v2000 = vpack.c.b16 %v1564, %v1560
    %v2001 = vpack.c.b16 %v1565, %v1561
    %v2002 = vpack.c.b16 %v1570, %v1566
    %v2003 = vpack.c.b16 %v1571, %v1567
    %v2004 = vpack.c.b16 %v1572, %v1568
    %v2005 = vpack.c.b16 %v1573, %v1569
    %v2006 = vpack.c.b16 %v1578, %v1574
    %v2007 = vpack.c.b16 %v1579, %v1575
    %v2008 = vpack.c.b16 %v1580, %v1576
    %v2009 = vpack.c.b16 %v1581, %v1577
    %v2010 = vpack.c.b16 %v1586, %v1582
    %v2011 = vpack.c.b16 %v1587, %v1583
    %v2012 = vpack.c.b16 %v1588, %v1584
    %v2013 = vpack.c.b16 %v1589, %v1585
    %v2014 = vpack.c.b16 %v1594, %v1590
    %v2015 = vpack.c.b16 %v1595, %v1591
    %v2016 = vpack.c.b16 %v1596, %v1592
    %v2017 = vpack.c.b16 %v1597, %v1593
    %v2018 = vpack.c.b16 %v1602, %v1598
    %v2019 = vpack.c.b16 %v1603, %v1599
    %v2020 = vpack.c.b16 %v1604, %v1600
    %v2021 = vpack.c.b16 %v1605, %v1601
    %v2022 = vpack.c.b16 %v1610, %v1606
    %v2023 = vpack.c.b16 %v1611, %v1607
    %v2024 = vpack.c.b16 %v1612, %v1608
    %v2025 = vpack.c.b16 %v1613, %v1609
    %v2026 = vpack.c.b16 %v1618, %v1614
    %v2027 = vpack.c.b16 %v1619, %v1615
    %v2028 = vpack.c.b16 %v1620, %v1616
    %v2029 = vpack.c.b16 %v1621, %v1617
    %v2030 = vpack.c.b16 %v1626, %v1622
    %v2031 = vpack.c.b16 %v1627, %v1623
    %v2032 = vpack.c.b16 %v1628, %v1624
    %v2033 = vpack.c.b16 %v1629, %v1625
    %v2034 = vpack.c.b16 %v1634, %v1630
    %v2035 = vpack.c.b16 %v1635, %v1631
    %v2036 = vpack.c.b16 %v1636, %v1632
    %v2037 = vpack.c.b16 %v1637, %v1633
    %v2038 = vpack.c.b16 %v1642, %v1638
    %v2039 = vpack.c.b16 %v1643, %v1639
    %v2040 = vpack.c.b16 %v1644, %v1640
    %v2041 = vpack.c.b16 %v1645, %v1641
    %v2042 = vpack.c.b16 %v1650, %v1646
    %v2043 = vpack.c.b16 %v1651, %v1647
    %v2044 = vpack.c.b16 %v1652, %v1648
    %v2045 = vpack.c.b16 %v1653, %v1649
    %v2046 = vpack.c.b16 %v1658, %v1654
    %v2047 = vpack.c.b16 %v1659, %v1655
    %v2048 = vpack.c.b16 %v1660, %v1656
    %v2049 = vpack.c.b16 %v1661, %v1657
    %v2050 = vpack.c.b16 %v1666, %v1662
    %v2051 = vpack.c.b16 %v1667, %v1663
    %v2052 = vpack.c.b16 %v1668, %v1664
    %v2053 = vpack.c.b16 %v1669, %v1665
    %v2054 = vpack.c.b16 %v1674, %v1670
    %v2055 = vpack.c.b16 %v1675, %v1671
    %v2056 = vpack.c.b16 %v1676, %v1672
    %v2057 = vpack.c.b16 %v1677, %v1673
    %v2058 = vpack.c.b16 %v1682, %v1678
    %v2059 = vpack.c.b16 %v1683, %v1679
    %v2060 = vpack.c.b16 %v1684, %v1680
    %v2061 = vpack.c.b16 %v1685, %v1681
    %v2062 = vpack.c.b16 %v1690, %v1686
    %v2063 = vpack.c.b16 %v1691, %v1687
    %v2064 = vpack.c.b16 %v1692, %v1688
    %v2065 = vpack.c.b16 %v1693, %v1689
    %v2066 = vpack.c.b16 %v1698, %v1694
    %v2067 = vpack.c.b16 %v1699, %v1695
    %v2068 = vpack.c.b16 %v1700, %v1696
    %v2069 = vpack.c.b16 %v1701, %v1697
    %v2070 = vpack.c.b16 %v1706, %v1702
    %v2071 = vpack.c.b16 %v1707, %v1703
    %v2072 = vpack.c.b16 %v1708, %v1704
    %v2073 = vpack.c.b16 %v1709, %v1705
    %v2074 = vpack.c.b16 %v1714, %v1710
    %v2075 = vpack.c.b16 %v1715, %v1711
    %v2076 = vpack.c.b16 %v1716, %v1712
    %v2077 = vpack.c.b16 %v1717, %v1713
    %v2078 = vpack.c.b16 %v1722, %v1718
    %v2079 = vpack.c.b16 %v1723, %v1719
    %v2080 = vpack.c.b16 %v1724, %v1720
    %v2081 = vpack.c.b16 %v1725, %v1721
    %v2082 = vpack.c.b16 %v1730, %v1726
    %v2083 = vpack.c.b16 %v1731, %v1727
    %v2084 = vpack.c.b16 %v1732, %v1728
    %v2085 = vpack.c.b16 %v1733, %v1729
    %v2086 = vpack.c.b16 %v1738, %v1734
    %v2087 = vpack.c.b16 %v1739, %v1735
    %v2088 = vpack.c.b16 %v1740, %v1736
    %v2089 = vpack.c.b16 %v1741, %v1737
    %v2090 = vpack.c.b16 %v1746, %v1742
    %v2091 = vpack.c.b16 %v1747, %v1743
    %v2092 = vpack.c.b16 %v1748, %v1744
    %v2093 = vpack.c.b16 %v1749, %v1745
    %v2094 = vpack.c.b16 %v1754, %v1750
    %v2095 = vpack.c.b16 %v1755, %v1751
    %v2096 = vpack.c.b16 %v1756, %v1752
    %v2097 = vpack.c.b16 %v1757, %v1753
    %v2098 = vpack.c.b16 %v1762, %v1758
    %v2099 = vpack.c.b16 %v1763, %v1759
    %v2100 = vpack.c.b16 %v1764, %v1760
    %v2101 = vpack.c.b16 %v1765, %v1761
    %v2102 = vpack.c.b16 %v1770, %v1766
    %v2103 = vpack.c.b16 %v1771, %v1767
    %v2104 = vpack.c.b16 %v1772, %v1768
    %v2105 = vpack.c.b16 %v1773, %v1769
    %v2106 = vpack.c.b16 %v1778, %v1774
    %v2107 = vpack.c.b16 %v1779, %v1775
    %v2108 = vpack.c.b16 %v1780, %v1776
    %v2109 = vpack.c.b16 %v1781, %v1777
    %v2110 = vpack.c.b16 %v1786, %v1782
    %v2111 = vpack.c.b16 %v1787, %v1783
    %v2112 = vpack.c.b16 %v1788, %v1784
    %v2113 = vpack.c.b16 %v1789, %v1785
    %v2114 = vpack.c.b16 %v1794, %v1790
    %v2115 = vpack.c.b16 %v1795, %v1791
    %v2116 = vpack.c.b16 %v1796, %v1792
    %v2117 = vpack.c.b16 %v1797, %v1793
    %v2118 = vpack.c.b16 %v1802, %v1798
    %v2119 = vpack.c.b16 %v1803, %v1799
    %v2120 = vpack.c.b16 %v1804, %v1800
    %v2121 = vpack.c.b16 %v1805, %v1801
    %v2122 = vpack.c.b16 %v1810, %v1806
    %v2123 = vpack.c.b16 %v1811, %v1807
    %v2124 = vpack.c.b16 %v1812, %v1808
    %v2125 = vpack.c.b16 %v1813, %v1809
    %v2126 = vpack.c.b16 %v1818, %v1814
    %v2127 = vpack.c.b16 %v1819, %v1815
    %v2128 = vpack.c.b16 %v1820, %v1816
    %v2129 = vpack.c.b16 %v1821, %v1817
    %v2130 = vpack.c.b16 %v1826, %v1822
    %v2131 = vpack.c.b16 %v1827, %v1823
    %v2132 = vpack.c.b16 %v1828, %v1824
    %v2133 = vpack.c.b16 %v1829, %v1825
    %v2134 = vpack.c.b16 %v1834, %v1830
    %v2135 = vpack.c.b16 %v1835, %v1831
    %v2136 = vpack.c.b16 %v1836, %v1832
    %v2137 = vpack.c.b16 %v1837, %v1833
    %v2138 = vpack.c.b16 %v1842, %v1838
    %v2139 = vpack.c.b16 %v1843, %v1839
    %v2140 = vpack.c.b16 %v1844, %v1840
    %v2141 = vpack.c.b16 %v1845, %v1841
    %v2142 = vpack.c.b16 %v1850, %v1846
    %v2143 = vpack.c.b16 %v1851, %v1847
    %v2144 = vpack.c.b16 %v1852, %v1848
    %v2145 = vpack.c.b16 %v1853, %v1849
    %v2146 = vpack.c.b16 %v1858, %v1854
    %v2147 = vpack.c.b16 %v1859, %v1855
    %v2148 = vpack.c.b16 %v1860, %v1856
    %v2149 = vpack.c.b16 %v1861, %v1857
    %v2150 = vpack.c.b16 %v1866, %v1862
    %v2151 = vpack.c.b16 %v1867, %v1863
    %v2152 = vpack.c.b16 %v1868, %v1864
    %v2153 = vpack.c.b16 %v1869, %v1865
    %v2154 = vpack.c.b16 %v1874, %v1870
    %v2155 = vpack.c.b16 %v1875, %v1871
    %v2156 = vpack.c.b16 %v1876, %v1872
    %v2157 = vpack.c.b16 %v1877, %v1873
    %v2158 = vpack.c.b16 %v1882, %v1878
    %v2159 = vpack.c.b16 %v1883, %v1879
    %v2160 = vpack.c.b16 %v1884, %v1880
    %v2161 = vpack.c.b16 %v1885, %v1881
    %v2162 = vpack.c.b16 %v1890, %v1886
    %v2163 = vpack.c.b16 %v1891, %v1887
    %v2164 = vpack.c.b16 %v1892, %v1888
    %v2165 = vpack.c.b16 %v1893, %v1889
    %v2166 = vpack.c.b16 %v1898, %v1894
    %v2167 = vpack.c.b16 %v1899, %v1895
    %v2168 = vpack.c.b16 %v1900, %v1896
    %v2169 = vpack.c.b16 %v1901, %v1897
    %v2170 = vpack.c.b16 %v1906, %v1902
    %v2171 = vpack.c.b16 %v1907, %v1903
    %v2172 = vpack.c.b16 %v1908, %v1904
    %v2173 = vpack.c.b16 %v1909, %v1905
    %v2174 = vpack.c.b16 %v1914, %v1910
    %v2175 = vpack.c.b16 %v1915, %v1911
    %v2176 = vpack.c.b16 %v1916, %v1912
    %v2177 = vpack.c.b16 %v1917, %v1913
    %v2178 = vpack.c.b16 %v1922, %v1918
    %v2179 = vpack.c.b16 %v1923, %v1919
    %v2180 = vpack.c.b16 %v1924, %v1920
    %v2181 = vpack.c.b16 %v1925, %v1921
    %2438 = vmatprep.subr.bf16.mxu0 %v1927
    %2439 = vmatpush1.bf16.msra.mxu0 %v1926
    %2440 = vmatprep.subr.bf16.mxu0 %v1931
    %2441 = vmatpush1.bf16.msra.mxu0 %v1930
    %2442 = vmatprep.subr.bf16.mxu0 %v1935
    %2443 = vmatpush1.bf16.msra.mxu0 %v1934
    %2444 = vmatprep.subr.bf16.mxu0 %v1939
    %2445 = vmatpush1.bf16.msra.mxu0 %v1938
    %2446 = vmatprep.subr.bf16.mxu0 %v1943
    %2447 = vmatpush1.bf16.msra.mxu0 %v1942
    %2448 = vmatprep.subr.bf16.mxu0 %v1947
    %2449 = vmatpush1.bf16.msra.mxu0 %v1946
    %2450 = vmatprep.subr.bf16.mxu0 %v1951
    %2451 = vmatpush1.bf16.msra.mxu0 %v1950
    %2452 = vmatprep.subr.bf16.mxu0 %v1955
    %2453 = vmatpush1.bf16.msra.mxu0 %v1954
    %2454 = vmatprep.subr.bf16.mxu0 %v1959
    %2455 = vmatpush1.bf16.msra.mxu0 %v1958
    %2456 = vmatprep.subr.bf16.mxu0 %v1963
    %2457 = vmatpush1.bf16.msra.mxu0 %v1962
    %2458 = vmatprep.subr.bf16.mxu0 %v1967
    %2459 = vmatpush1.bf16.msra.mxu0 %v1966
    %2460 = vmatprep.subr.bf16.mxu0 %v1971
    %2461 = vmatpush1.bf16.msra.mxu0 %v1970
    %2462 = vmatprep.subr.bf16.mxu0 %v1975
    %2463 = vmatpush1.bf16.msra.mxu0 %v1974
    %2464 = vmatprep.subr.bf16.mxu0 %v1979
    %2465 = vmatpush1.bf16.msra.mxu0 %v1978
    %2466 = vmatprep.subr.bf16.mxu0 %v1983
    %2467 = vmatpush1.bf16.msra.mxu0 %v1982
    %2468 = vmatprep.subr.bf16.mxu0 %v1987
    %2469 = vmatpush1.bf16.msra.mxu0 %v1986
    %2470 = vmatprep.mubr.bf16.mxu0 %v873
    %2471 = vmatmul.mubr.bf16.gmra.mrb[0].mxu0 %v872
    %v2472 = vpop.f32.mrb[0].mxu0
    %v2473 = vadd.f32 %v1141, %v2472
    %v2474 = vpop.f32.mrb[0].mxu0
    %v2475 = vadd.f32 %v1145, %v2474
    %v2476 = vpop.f32.mrb[0].mxu0
    %v2477 = vpop.f32.mrb[0].mxu0
    %2478 = vdwg.mxu0
    %2479 = vmatprep.subr.bf16.mxu0 %v1991
    %2480 = vmatpush1.bf16.msra.mxu0 %v1990
    %2481 = vmatprep.subr.bf16.mxu0 %v1995
    %2482 = vmatpush1.bf16.msra.mxu0 %v1994
    %2483 = vmatprep.subr.bf16.mxu0 %v1999
    %2484 = vmatpush1.bf16.msra.mxu0 %v1998
    %2485 = vmatprep.subr.bf16.mxu0 %v2003
    %2486 = vmatpush1.bf16.msra.mxu0 %v2002
    %2487 = vmatprep.subr.bf16.mxu0 %v2007
    %2488 = vmatpush1.bf16.msra.mxu0 %v2006
    %2489 = vmatprep.subr.bf16.mxu0 %v2011
    %2490 = vmatpush1.bf16.msra.mxu0 %v2010
    %2491 = vmatprep.subr.bf16.mxu0 %v2015
    %2492 = vmatpush1.bf16.msra.mxu0 %v2014
    %2493 = vmatprep.subr.bf16.mxu0 %v2019
    %2494 = vmatpush1.bf16.msra.mxu0 %v2018
    %2495 = vmatprep.subr.bf16.mxu0 %v2023
    %2496 = vmatpush1.bf16.msra.mxu0 %v2022
    %2497 = vmatprep.subr.bf16.mxu0 %v2027
    %2498 = vmatpush1.bf16.msra.mxu0 %v2026
    %2499 = vmatprep.subr.bf16.mxu0 %v2031
    %2500 = vmatpush1.bf16.msra.mxu0 %v2030
    %2501 = vmatprep.subr.bf16.mxu0 %v2035
    %2502 = vmatpush1.bf16.msra.mxu0 %v2034
    %2503 = vmatprep.subr.bf16.mxu0 %v2039
    %2504 = vmatpush1.bf16.msra.mxu0 %v2038
    %2505 = vmatprep.subr.bf16.mxu0 %v2043
    %2506 = vmatpush1.bf16.msra.mxu0 %v2042
    %2507 = vmatprep.subr.bf16.mxu0 %v2047
    %2508 = vmatpush1.bf16.msra.mxu0 %v2046
    %2509 = vmatprep.subr.bf16.mxu0 %v2051
    %2510 = vmatpush1.bf16.msra.mxu0 %v2050
    %2511 = vmatprep.mubr.bf16.mxu0 %v875
    %2512 = vmatmul.mubr.bf16.gmra.mrb[0].mxu0 %v874
    %v2513 = vpop.f32.mrb[0].mxu0
    %v2514 = vadd.f32 %v2473, %v2513
    %v2515 = vpop.f32.mrb[0].mxu0
    %v2516 = vadd.f32 %v2475, %v2515
    %v2517 = vpop.f32.mrb[0].mxu0
    %v2518 = vpop.f32.mrb[0].mxu0
    %2519 = vdwg.mxu0
    %2520 = vmatprep.subr.bf16.mxu0 %v2055
    %2521 = vmatpush1.bf16.msra.mxu0 %v2054
    %2522 = vmatprep.subr.bf16.mxu0 %v2059
    %2523 = vmatpush1.bf16.msra.mxu0 %v2058
    %2524 = vmatprep.subr.bf16.mxu0 %v2063
    %2525 = vmatpush1.bf16.msra.mxu0 %v2062
    %2526 = vmatprep.subr.bf16.mxu0 %v2067
    %2527 = vmatpush1.bf16.msra.mxu0 %v2066
    %2528 = vmatprep.subr.bf16.mxu0 %v2071
    %2529 = vmatpush1.bf16.msra.mxu0 %v2070
    %2530 = vmatprep.subr.bf16.mxu0 %v2075
    %2531 = vmatpush1.bf16.msra.mxu0 %v2074
    %2532 = vmatprep.subr.bf16.mxu0 %v2079
    %2533 = vmatpush1.bf16.msra.mxu0 %v2078
    %2534 = vmatprep.subr.bf16.mxu0 %v2083
    %2535 = vmatpush1.bf16.msra.mxu0 %v2082
    %2536 = vmatprep.subr.bf16.mxu0 %v2087
    %2537 = vmatpush1.bf16.msra.mxu0 %v2086
    %2538 = vmatprep.subr.bf16.mxu0 %v2091
    %2539 = vmatpush1.bf16.msra.mxu0 %v2090
    %2540 = vmatprep.subr.bf16.mxu0 %v2095
    %2541 = vmatpush1.bf16.msra.mxu0 %v2094
    %2542 = vmatprep.subr.bf16.mxu0 %v2099
    %2543 = vmatpush1.bf16.msra.mxu0 %v2098
    %2544 = vmatprep.subr.bf16.mxu0 %v2103
    %2545 = vmatpush1.bf16.msra.mxu0 %v2102
    %2546 = vmatprep.subr.bf16.mxu0 %v2107
    %2547 = vmatpush1.bf16.msra.mxu0 %v2106
    %2548 = vmatprep.subr.bf16.mxu0 %v2111
    %2549 = vmatpush1.bf16.msra.mxu0 %v2110
    %2550 = vmatprep.subr.bf16.mxu0 %v2115
    %2551 = vmatpush1.bf16.msra.mxu0 %v2114
    %2552 = vmatprep.mubr.bf16.mxu0 %v877
    %2553 = vmatmul.mubr.bf16.gmra.mrb[0].mxu0 %v876
    %v2554 = vpop.f32.mrb[0].mxu0
    %v2555 = vadd.f32 %v2514, %v2554
    %v2556 = vpop.f32.mrb[0].mxu0
    %v2557 = vadd.f32 %v2516, %v2556
    %v2558 = vpop.f32.mrb[0].mxu0
    %v2559 = vpop.f32.mrb[0].mxu0
    %2560 = vdwg.mxu0
    %2561 = vmatprep.subr.bf16.mxu0 %v2119
    %2562 = vmatpush1.bf16.msra.mxu0 %v2118
    %2563 = vmatprep.subr.bf16.mxu0 %v2123
    %2564 = vmatpush1.bf16.msra.mxu0 %v2122
    %2565 = vmatprep.subr.bf16.mxu0 %v2127
    %2566 = vmatpush1.bf16.msra.mxu0 %v2126
    %2567 = vmatprep.subr.bf16.mxu0 %v2131
    %2568 = vmatpush1.bf16.msra.mxu0 %v2130
    %2569 = vmatprep.subr.bf16.mxu0 %v2135
    %2570 = vmatpush1.bf16.msra.mxu0 %v2134
    %2571 = vmatprep.subr.bf16.mxu0 %v2139
    %2572 = vmatpush1.bf16.msra.mxu0 %v2138
    %2573 = vmatprep.subr.bf16.mxu0 %v2143
    %2574 = vmatpush1.bf16.msra.mxu0 %v2142
    %2575 = vmatprep.subr.bf16.mxu0 %v2147
    %2576 = vmatpush1.bf16.msra.mxu0 %v2146
    %2577 = vmatprep.subr.bf16.mxu0 %v2151
    %2578 = vmatpush1.bf16.msra.mxu0 %v2150
    %2579 = vmatprep.subr.bf16.mxu0 %v2155
    %2580 = vmatpush1.bf16.msra.mxu0 %v2154
    %2581 = vmatprep.subr.bf16.mxu0 %v2159
    %2582 = vmatpush1.bf16.msra.mxu0 %v2158
    %2583 = vmatprep.subr.bf16.mxu0 %v2163
    %2584 = vmatpush1.bf16.msra.mxu0 %v2162
    %2585 = vmatprep.subr.bf16.mxu0 %v2167
    %2586 = vmatpush1.bf16.msra.mxu0 %v2166
    %2587 = vmatprep.subr.bf16.mxu0 %v2171
    %2588 = vmatpush1.bf16.msra.mxu0 %v2170
    %2589 = vmatprep.subr.bf16.mxu0 %v2175
    %2590 = vmatpush1.bf16.msra.mxu0 %v2174
    %2591 = vmatprep.subr.bf16.mxu0 %v2179
    %2592 = vmatpush1.bf16.msra.mxu0 %v2178
    %2593 = vmatprep.mubr.bf16.mxu0 %v879
    %2594 = vmatmul.mubr.bf16.gmra.mrb[0].mxu0 %v878
    %v2595 = vpop.f32.mrb[0].mxu0
    %v2596 = vadd.f32 %v2555, %v2595
    %v2597 = vpop.f32.mrb[0].mxu0
    %v2598 = vadd.f32 %v2557, %v2597
    %v2599 = vpop.f32.mrb[0].mxu0
    %v2600 = vpop.f32.mrb[0].mxu0
    %2601 = vdwg.mxu0
    %2602 = vmatprep.subr.bf16.mxu0 %v1929
    %2603 = vmatpush1.bf16.msra.mxu0 %v1928
    %2604 = vmatprep.subr.bf16.mxu0 %v1933
    %2605 = vmatpush1.bf16.msra.mxu0 %v1932
    %2606 = vmatprep.subr.bf16.mxu0 %v1937
    %2607 = vmatpush1.bf16.msra.mxu0 %v1936
    %2608 = vmatprep.subr.bf16.mxu0 %v1941
    %2609 = vmatpush1.bf16.msra.mxu0 %v1940
    %2610 = vmatprep.subr.bf16.mxu0 %v1945
    %2611 = vmatpush1.bf16.msra.mxu0 %v1944
    %2612 = vmatprep.subr.bf16.mxu0 %v1949
    %2613 = vmatpush1.bf16.msra.mxu0 %v1948
    %2614 = vmatprep.subr.bf16.mxu0 %v1953
    %2615 = vmatpush1.bf16.msra.mxu0 %v1952
    %2616 = vmatprep.subr.bf16.mxu0 %v1957
    %2617 = vmatpush1.bf16.msra.mxu0 %v1956
    %2618 = vmatprep.subr.bf16.mxu0 %v1961
    %2619 = vmatpush1.bf16.msra.mxu0 %v1960
    %2620 = vmatprep.subr.bf16.mxu0 %v1965
    %2621 = vmatpush1.bf16.msra.mxu0 %v1964
    %2622 = vmatprep.subr.bf16.mxu0 %v1969
    %2623 = vmatpush1.bf16.msra.mxu0 %v1968
    %2624 = vmatprep.subr.bf16.mxu0 %v1973
    %2625 = vmatpush1.bf16.msra.mxu0 %v1972
    %2626 = vmatprep.subr.bf16.mxu0 %v1977
    %2627 = vmatpush1.bf16.msra.mxu0 %v1976
    %2628 = vmatprep.subr.bf16.mxu0 %v1981
    %2629 = vmatpush1.bf16.msra.mxu0 %v1980
    %2630 = vmatprep.subr.bf16.mxu0 %v1985
    %2631 = vmatpush1.bf16.msra.mxu0 %v1984
    %2632 = vmatprep.subr.bf16.mxu0 %v1989
    %2633 = vmatpush1.bf16.msra.mxu0 %v1988
    %2634 = vmatprep.mubr.bf16.mxu0 %v873
    %2635 = vmatmul.mubr.bf16.gmra.mrb[0].mxu0 %v872
    %v2636 = vpop.f32.mrb[0].mxu0
    %v2637 = vadd.f32 %v1149, %v2636
    %v2638 = vpop.f32.mrb[0].mxu0
    %v2639 = vadd.f32 %v1153, %v2638
    %v2640 = vpop.f32.mrb[0].mxu0
    %v2641 = vpop.f32.mrb[0].mxu0
    %2642 = vdwg.mxu0
    %2643 = vmatprep.subr.bf16.mxu0 %v1993
    %2644 = vmatpush1.bf16.msra.mxu0 %v1992
    %2645 = vmatprep.subr.bf16.mxu0 %v1997
    %2646 = vmatpush1.bf16.msra.mxu0 %v1996
    %2647 = vmatprep.subr.bf16.mxu0 %v2001
    %2648 = vmatpush1.bf16.msra.mxu0 %v2000
    %2649 = vmatprep.subr.bf16.mxu0 %v2005
    %2650 = vmatpush1.bf16.msra.mxu0 %v2004
    %2651 = vmatprep.subr.bf16.mxu0 %v2009
    %2652 = vmatpush1.bf16.msra.mxu0 %v2008
    %2653 = vmatprep.subr.bf16.mxu0 %v2013
    %2654 = vmatpush1.bf16.msra.mxu0 %v2012
    %2655 = vmatprep.subr.bf16.mxu0 %v2017
    %2656 = vmatpush1.bf16.msra.mxu0 %v2016
    %2657 = vmatprep.subr.bf16.mxu0 %v2021
    %2658 = vmatpush1.bf16.msra.mxu0 %v2020
    %2659 = vmatprep.subr.bf16.mxu0 %v2025
    %2660 = vmatpush1.bf16.msra.mxu0 %v2024
    %2661 = vmatprep.subr.bf16.mxu0 %v2029
    %2662 = vmatpush1.bf16.msra.mxu0 %v2028
    %2663 = vmatprep.subr.bf16.mxu0 %v2033
    %2664 = vmatpush1.bf16.msra.mxu0 %v2032
    %2665 = vmatprep.subr.bf16.mxu0 %v2037
    %2666 = vmatpush1.bf16.msra.mxu0 %v2036
    %2667 = vmatprep.subr.bf16.mxu0 %v2041
    %2668 = vmatpush1.bf16.msra.mxu0 %v2040
    %2669 = vmatprep.subr.bf16.mxu0 %v2045
    %2670 = vmatpush1.bf16.msra.mxu0 %v2044
    %2671 = vmatprep.subr.bf16.mxu0 %v2049
    %2672 = vmatpush1.bf16.msra.mxu0 %v2048
    %2673 = vmatprep.subr.bf16.mxu0 %v2053
    %2674 = vmatpush1.bf16.msra.mxu0 %v2052
    %2675 = vmatprep.mubr.bf16.mxu0 %v875
    %2676 = vmatmul.mubr.bf16.gmra.mrb[0].mxu0 %v874
    %v2677 = vpop.f32.mrb[0].mxu0
    %v2678 = vadd.f32 %v2637, %v2677
    %v2679 = vpop.f32.mrb[0].mxu0
    %v2680 = vadd.f32 %v2639, %v2679
    %v2681 = vpop.f32.mrb[0].mxu0
    %v2682 = vpop.f32.mrb[0].mxu0
    %2683 = vdwg.mxu0
    %2684 = vmatprep.subr.bf16.mxu0 %v2057
    %2685 = vmatpush1.bf16.msra.mxu0 %v2056
    %2686 = vmatprep.subr.bf16.mxu0 %v2061
    %2687 = vmatpush1.bf16.msra.mxu0 %v2060
    %2688 = vmatprep.subr.bf16.mxu0 %v2065
    %2689 = vmatpush1.bf16.msra.mxu0 %v2064
    %2690 = vmatprep.subr.bf16.mxu0 %v2069
    %2691 = vmatpush1.bf16.msra.mxu0 %v2068
    %2692 = vmatprep.subr.bf16.mxu0 %v2073
    %2693 = vmatpush1.bf16.msra.mxu0 %v2072
    %2694 = vmatprep.subr.bf16.mxu0 %v2077
    %2695 = vmatpush1.bf16.msra.mxu0 %v2076
    %2696 = vmatprep.subr.bf16.mxu0 %v2081
    %2697 = vmatpush1.bf16.msra.mxu0 %v2080
    %2698 = vmatprep.subr.bf16.mxu0 %v2085
    %2699 = vmatpush1.bf16.msra.mxu0 %v2084
    %2700 = vmatprep.subr.bf16.mxu0 %v2089
    %2701 = vmatpush1.bf16.msra.mxu0 %v2088
    %2702 = vmatprep.subr.bf16.mxu0 %v2093
    %2703 = vmatpush1.bf16.msra.mxu0 %v2092
    %2704 = vmatprep.subr.bf16.mxu0 %v2097
    %2705 = vmatpush1.bf16.msra.mxu0 %v2096
    %2706 = vmatprep.subr.bf16.mxu0 %v2101
    %2707 = vmatpush1.bf16.msra.mxu0 %v2100
    %2708 = vmatprep.subr.bf16.mxu0 %v2105
    %2709 = vmatpush1.bf16.msra.mxu0 %v2104
    %2710 = vmatprep.subr.bf16.mxu0 %v2109
    %2711 = vmatpush1.bf16.msra.mxu0 %v2108
    %2712 = vmatprep.subr.bf16.mxu0 %v2113
    %2713 = vmatpush1.bf16.msra.mxu0 %v2112
    %2714 = vmatprep.subr.bf16.mxu0 %v2117
    %2715 = vmatpush1.bf16.msra.mxu0 %v2116
    %2716 = vmatprep.mubr.bf16.mxu0 %v877
    %2717 = vmatmul.mubr.bf16.gmra.mrb[0].mxu0 %v876
    %v2718 = vpop.f32.mrb[0].mxu0
    %v2719 = vadd.f32 %v2678, %v2718
    %v2720 = vpop.f32.mrb[0].mxu0
    %v2721 = vadd.f32 %v2680, %v2720
    %v2722 = vpop.f32.mrb[0].mxu0
    %v2723 = vpop.f32.mrb[0].mxu0
    %2724 = vdwg.mxu0
    %2725 = vmatprep.subr.bf16.mxu0 %v2121
    %2726 = vmatpush1.bf16.msra.mxu0 %v2120
    %2727 = vmatprep.subr.bf16.mxu0 %v2125
    %2728 = vmatpush1.bf16.msra.mxu0 %v2124
    %2729 = vmatprep.subr.bf16.mxu0 %v2129
    %2730 = vmatpush1.bf16.msra.mxu0 %v2128
    %2731 = vmatprep.subr.bf16.mxu0 %v2133
    %2732 = vmatpush1.bf16.msra.mxu0 %v2132
    %2733 = vmatprep.subr.bf16.mxu0 %v2137
    %2734 = vmatpush1.bf16.msra.mxu0 %v2136
    %2735 = vmatprep.subr.bf16.mxu0 %v2141
    %2736 = vmatpush1.bf16.msra.mxu0 %v2140
    %2737 = vmatprep.subr.bf16.mxu0 %v2145
    %2738 = vmatpush1.bf16.msra.mxu0 %v2144
    %2739 = vmatprep.subr.bf16.mxu0 %v2149
    %2740 = vmatpush1.bf16.msra.mxu0 %v2148
    %2741 = vmatprep.subr.bf16.mxu0 %v2153
    %2742 = vmatpush1.bf16.msra.mxu0 %v2152
    %2743 = vmatprep.subr.bf16.mxu0 %v2157
    %2744 = vmatpush1.bf16.msra.mxu0 %v2156
    %2745 = vmatprep.subr.bf16.mxu0 %v2161
    %2746 = vmatpush1.bf16.msra.mxu0 %v2160
    %2747 = vmatprep.subr.bf16.mxu0 %v2165
    %2748 = vmatpush1.bf16.msra.mxu0 %v2164
    %2749 = vmatprep.subr.bf16.mxu0 %v2169
    %2750 = vmatpush1.bf16.msra.mxu0 %v2168
    %2751 = vmatprep.subr.bf16.mxu0 %v2173
    %2752 = vmatpush1.bf16.msra.mxu0 %v2172
    %2753 = vmatprep.subr.bf16.mxu0 %v2177
    %2754 = vmatpush1.bf16.msra.mxu0 %v2176
    %2755 = vmatprep.subr.bf16.mxu0 %v2181
    %2756 = vmatpush1.bf16.msra.mxu0 %v2180
    %2757 = vmatprep.mubr.bf16.mxu0 %v879
    %2758 = vmatmul.mubr.bf16.gmra.mrb[0].mxu0 %v878
    %v2759 = vpop.f32.mrb[0].mxu0
    %v2760 = vadd.f32 %v2719, %v2759
    %v2761 = vpop.f32.mrb[0].mxu0
    %v2762 = vadd.f32 %v2721, %v2761
    %v2763 = vpop.f32.mrb[0].mxu0
    %v2764 = vpop.f32.mrb[0].mxu0
    %2765 = vdwg.mxu0
    %v2766 = vmax.f32 %v2596, 0.0
    %v2767 = vmax.f32 %v2598, 0.0
    %v2768 = vmax.f32 %v2760, 0.0
    %v2769 = vmax.f32 %v2762, 0.0
    %v2770 = vpack.c.bf16 %v2766, %v2766
    %v2771 = vpack.c.bf16 %v2767, %v2767
    %v2772 = vpack.c.bf16 %v2768, %v2768
    %v2773 = vpack.c.bf16 %v2769, %v2769
    %v2774 = vld [vmem:[#allocation10] sm:$0xff]
    %v2775 = vld [vmem:[#allocation10 + $0x8] sm:$0xff]
    %v2776 = vld [vmem:[#allocation10 + $0x10] sm:$0xff]
    %v2777 = vld [vmem:[#allocation10 + $0x18] sm:$0xff]
    %v2778 = vld [vmem:[#allocation10 + $0x20] sm:$0xff]
    %v2779 = vld [vmem:[#allocation10 + $0x28] sm:$0xff]
    %v2780 = vld [vmem:[#allocation10 + $0x30] sm:$0xff]
    %v2781 = vld [vmem:[#allocation10 + $0x38] sm:$0xff]
    %v2782 = vld [vmem:[#allocation10 + $0x40] sm:$0xff]
    %v2783 = vld [vmem:[#allocation10 + $0x48] sm:$0xff]
    %v2784 = vld [vmem:[#allocation10 + $0x50] sm:$0xff]
    %v2785 = vld [vmem:[#allocation10 + $0x58] sm:$0xff]
    %v2786 = vld [vmem:[#allocation10 + $0x60] sm:$0xff]
    %v2787 = vld [vmem:[#allocation10 + $0x68] sm:$0xff]
    %v2788 = vld [vmem:[#allocation10 + $0x70] sm:$0xff]
    %v2789 = vld [vmem:[#allocation10 + $0x78] sm:$0xff]
    %v2790 = vld [vmem:[#allocation10 + $0x80] sm:$0xff]
    %v2791 = vld [vmem:[#allocation10 + $0x88] sm:$0xff]
    %v2792 = vld [vmem:[#allocation10 + $0x90] sm:$0xff]
    %v2793 = vld [vmem:[#allocation10 + $0x98] sm:$0xff]
    %v2794 = vld [vmem:[#allocation10 + $0xa0] sm:$0xff]
    %v2795 = vld [vmem:[#allocation10 + $0xa8] sm:$0xff]
    %v2796 = vld [vmem:[#allocation10 + $0xb0] sm:$0xff]
    %v2797 = vld [vmem:[#allocation10 + $0xb8] sm:$0xff]
    %v2798 = vld [vmem:[#allocation10 + $0xc0] sm:$0xff]
    %v2799 = vld [vmem:[#allocation10 + $0xc8] sm:$0xff]
    %v2800 = vld [vmem:[#allocation10 + $0xd0] sm:$0xff]
    %v2801 = vld [vmem:[#allocation10 + $0xd8] sm:$0xff]
    %v2802 = vld [vmem:[#allocation10 + $0xe0] sm:$0xff]
    %v2803 = vld [vmem:[#allocation10 + $0xe8] sm:$0xff]
    %v2804 = vld [vmem:[#allocation10 + $0xf0] sm:$0xff]
    %v2805 = vld [vmem:[#allocation10 + $0xf8] sm:$0xff]
    %v2806 = vld [vmem:[#allocation10 + $0x100] sm:$0xff]
    %v2807 = vld [vmem:[#allocation10 + $0x108] sm:$0xff]
    %v2808 = vld [vmem:[#allocation10 + $0x110] sm:$0xff]
    %v2809 = vld [vmem:[#allocation10 + $0x118] sm:$0xff]
    %v2810 = vld [vmem:[#allocation10 + $0x120] sm:$0xff]
    %v2811 = vld [vmem:[#allocation10 + $0x128] sm:$0xff]
    %v2812 = vld [vmem:[#allocation10 + $0x130] sm:$0xff]
    %v2813 = vld [vmem:[#allocation10 + $0x138] sm:$0xff]
    %v2814 = vld [vmem:[#allocation10 + $0x140] sm:$0xff]
    %v2815 = vld [vmem:[#allocation10 + $0x148] sm:$0xff]
    %v2816 = vld [vmem:[#allocation10 + $0x150] sm:$0xff]
    %v2817 = vld [vmem:[#allocation10 + $0x158] sm:$0xff]
    %v2818 = vld [vmem:[#allocation10 + $0x160] sm:$0xff]
    %v2819 = vld [vmem:[#allocation10 + $0x168] sm:$0xff]
    %v2820 = vld [vmem:[#allocation10 + $0x170] sm:$0xff]
    %v2821 = vld [vmem:[#allocation10 + $0x178] sm:$0xff]
    %v2822 = vld [vmem:[#allocation10 + $0x180] sm:$0xff]
    %v2823 = vld [vmem:[#allocation10 + $0x188] sm:$0xff]
    %v2824 = vld [vmem:[#allocation10 + $0x190] sm:$0xff]
    %v2825 = vld [vmem:[#allocation10 + $0x198] sm:$0xff]
    %v2826 = vld [vmem:[#allocation10 + $0x1a0] sm:$0xff]
    %v2827 = vld [vmem:[#allocation10 + $0x1a8] sm:$0xff]
    %v2828 = vld [vmem:[#allocation10 + $0x1b0] sm:$0xff]
    %v2829 = vld [vmem:[#allocation10 + $0x1b8] sm:$0xff]
    %v2830 = vld [vmem:[#allocation10 + $0x1c0] sm:$0xff]
    %v2831 = vld [vmem:[#allocation10 + $0x1c8] sm:$0xff]
    %v2832 = vld [vmem:[#allocation10 + $0x1d0] sm:$0xff]
    %v2833 = vld [vmem:[#allocation10 + $0x1d8] sm:$0xff]
    %v2834 = vld [vmem:[#allocation10 + $0x1e0] sm:$0xff]
    %v2835 = vld [vmem:[#allocation10 + $0x1e8] sm:$0xff]
    %v2836 = vld [vmem:[#allocation10 + $0x1f0] sm:$0xff]
    %v2837 = vld [vmem:[#allocation10 + $0x1f8] sm:$0xff]
    %v2838 = vld [vmem:[%s8] sm:$0x3]
    %v2840 = vlaneseq
    %v2841 = vshrl.u32 %v2840, 7
    %v2842 = vsub.s32 0, %v2841
    %v2843 = vrot.slane %v2838, %v2842
    %v2844 = vlaneseq
    %v2845 = vshrl.u32 %v2844, 7
    %v2846 = vsub.s32 1, %v2845
    %v2847 = vrot.slane %v2838, %v2846
    %v2914 = vunpack.c.l.b16 %v2774
    %v2915 = vunpack.c.h.b16 %v2774
    %v2916 = vunpack.c.l.b16 %v2775
    %v2917 = vunpack.c.h.b16 %v2775
    %v2918 = vunpack.c.l.b16 %v2776
    %v2919 = vunpack.c.h.b16 %v2776
    %v2920 = vunpack.c.l.b16 %v2777
    %v2921 = vunpack.c.h.b16 %v2777
    %v2922 = vunpack.c.l.b16 %v2778
    %v2923 = vunpack.c.h.b16 %v2778
    %v2924 = vunpack.c.l.b16 %v2779
    %v2925 = vunpack.c.h.b16 %v2779
    %v2926 = vunpack.c.l.b16 %v2780
    %v2927 = vunpack.c.h.b16 %v2780
    %v2928 = vunpack.c.l.b16 %v2781
    %v2929 = vunpack.c.h.b16 %v2781
    %v2930 = vunpack.c.l.b16 %v2782
    %v2931 = vunpack.c.h.b16 %v2782
    %v2932 = vunpack.c.l.b16 %v2783
    %v2933 = vunpack.c.h.b16 %v2783
    %v2934 = vunpack.c.l.b16 %v2784
    %v2935 = vunpack.c.h.b16 %v2784
    %v2936 = vunpack.c.l.b16 %v2785
    %v2937 = vunpack.c.h.b16 %v2785
    %v2938 = vunpack.c.l.b16 %v2786
    %v2939 = vunpack.c.h.b16 %v2786
    %v2940 = vunpack.c.l.b16 %v2787
    %v2941 = vunpack.c.h.b16 %v2787
    %v2942 = vunpack.c.l.b16 %v2788
    %v2943 = vunpack.c.h.b16 %v2788
    %v2944 = vunpack.c.l.b16 %v2789
    %v2945 = vunpack.c.h.b16 %v2789
    %v2946 = vunpack.c.l.b16 %v2790
    %v2947 = vunpack.c.h.b16 %v2790
    %v2948 = vunpack.c.l.b16 %v2791
    %v2949 = vunpack.c.h.b16 %v2791
    %v2950 = vunpack.c.l.b16 %v2792
    %v2951 = vunpack.c.h.b16 %v2792
    %v2952 = vunpack.c.l.b16 %v2793
    %v2953 = vunpack.c.h.b16 %v2793
    %v2954 = vunpack.c.l.b16 %v2794
    %v2955 = vunpack.c.h.b16 %v2794
    %v2956 = vunpack.c.l.b16 %v2795
    %v2957 = vunpack.c.h.b16 %v2795
    %v2958 = vunpack.c.l.b16 %v2796
    %v2959 = vunpack.c.h.b16 %v2796
    %v2960 = vunpack.c.l.b16 %v2797
    %v2961 = vunpack.c.h.b16 %v2797
    %v2962 = vunpack.c.l.b16 %v2798
    %v2963 = vunpack.c.h.b16 %v2798
    %v2964 = vunpack.c.l.b16 %v2799
    %v2965 = vunpack.c.h.b16 %v2799
    %v2966 = vunpack.c.l.b16 %v2800
    %v2967 = vunpack.c.h.b16 %v2800
    %v2968 = vunpack.c.l.b16 %v2801
    %v2969 = vunpack.c.h.b16 %v2801
    %v2970 = vunpack.c.l.b16 %v2802
    %v2971 = vunpack.c.h.b16 %v2802
    %v2972 = vunpack.c.l.b16 %v2803
    %v2973 = vunpack.c.h.b16 %v2803
    %v2974 = vunpack.c.l.b16 %v2804
    %v2975 = vunpack.c.h.b16 %v2804
    %v2976 = vunpack.c.l.b16 %v2805
    %v2977 = vunpack.c.h.b16 %v2805
    %v2978 = vunpack.c.l.b16 %v2806
    %v2979 = vunpack.c.h.b16 %v2806
    %v2980 = vunpack.c.l.b16 %v2807
    %v2981 = vunpack.c.h.b16 %v2807
    %v2982 = vunpack.c.l.b16 %v2808
    %v2983 = vunpack.c.h.b16 %v2808
    %v2984 = vunpack.c.l.b16 %v2809
    %v2985 = vunpack.c.h.b16 %v2809
    %v2986 = vunpack.c.l.b16 %v2810
    %v2987 = vunpack.c.h.b16 %v2810
    %v2988 = vunpack.c.l.b16 %v2811
    %v2989 = vunpack.c.h.b16 %v2811
    %v2990 = vunpack.c.l.b16 %v2812
    %v2991 = vunpack.c.h.b16 %v2812
    %v2992 = vunpack.c.l.b16 %v2813
    %v2993 = vunpack.c.h.b16 %v2813
    %v2994 = vunpack.c.l.b16 %v2814
    %v2995 = vunpack.c.h.b16 %v2814
    %v2996 = vunpack.c.l.b16 %v2815
    %v2997 = vunpack.c.h.b16 %v2815
    %v2998 = vunpack.c.l.b16 %v2816
    %v2999 = vunpack.c.h.b16 %v2816
    %v3000 = vunpack.c.l.b16 %v2817
    %v3001 = vunpack.c.h.b16 %v2817
    %v3002 = vunpack.c.l.b16 %v2818
    %v3003 = vunpack.c.h.b16 %v2818
    %v3004 = vunpack.c.l.b16 %v2819
    %v3005 = vunpack.c.h.b16 %v2819
    %v3006 = vunpack.c.l.b16 %v2820
    %v3007 = vunpack.c.h.b16 %v2820
    %v3008 = vunpack.c.l.b16 %v2821
    %v3009 = vunpack.c.h.b16 %v2821
    %v3010 = vunpack.c.l.b16 %v2822
    %v3011 = vunpack.c.h.b16 %v2822
    %v3012 = vunpack.c.l.b16 %v2823
    %v3013 = vunpack.c.h.b16 %v2823
    %v3014 = vunpack.c.l.b16 %v2824
    %v3015 = vunpack.c.h.b16 %v2824
    %v3016 = vunpack.c.l.b16 %v2825
    %v3017 = vunpack.c.h.b16 %v2825
    %v3018 = vunpack.c.l.b16 %v2826
    %v3019 = vunpack.c.h.b16 %v2826
    %v3020 = vunpack.c.l.b16 %v2827
    %v3021 = vunpack.c.h.b16 %v2827
    %v3022 = vunpack.c.l.b16 %v2828
    %v3023 = vunpack.c.h.b16 %v2828
    %v3024 = vunpack.c.l.b16 %v2829
    %v3025 = vunpack.c.h.b16 %v2829
    %v3026 = vunpack.c.l.b16 %v2830
    %v3027 = vunpack.c.h.b16 %v2830
    %v3028 = vunpack.c.l.b16 %v2831
    %v3029 = vunpack.c.h.b16 %v2831
    %v3030 = vunpack.c.l.b16 %v2832
    %v3031 = vunpack.c.h.b16 %v2832
    %v3032 = vunpack.c.l.b16 %v2833
    %v3033 = vunpack.c.h.b16 %v2833
    %v3034 = vunpack.c.l.b16 %v2834
    %v3035 = vunpack.c.h.b16 %v2834
    %v3036 = vunpack.c.l.b16 %v2835
    %v3037 = vunpack.c.h.b16 %v2835
    %v3038 = vunpack.c.l.b16 %v2836
    %v3039 = vunpack.c.h.b16 %v2836
    %v3040 = vunpack.c.l.b16 %v2837
    %v3041 = vunpack.c.h.b16 %v2837
    %v3042 = vpack.c.b16 %v2916, %v2914
    %v3043 = vpack.c.b16 %v2917, %v2915
    %v3044 = vpack.c.b16 %v2920, %v2918
    %v3045 = vpack.c.b16 %v2921, %v2919
    %v3046 = vpack.c.b16 %v2924, %v2922
    %v3047 = vpack.c.b16 %v2925, %v2923
    %v3048 = vpack.c.b16 %v2928, %v2926
    %v3049 = vpack.c.b16 %v2929, %v2927
    %v3050 = vpack.c.b16 %v2932, %v2930
    %v3051 = vpack.c.b16 %v2933, %v2931
    %v3052 = vpack.c.b16 %v2936, %v2934
    %v3053 = vpack.c.b16 %v2937, %v2935
    %v3054 = vpack.c.b16 %v2940, %v2938
    %v3055 = vpack.c.b16 %v2941, %v2939
    %v3056 = vpack.c.b16 %v2944, %v2942
    %v3057 = vpack.c.b16 %v2945, %v2943
    %v3058 = vpack.c.b16 %v2948, %v2946
    %v3059 = vpack.c.b16 %v2949, %v2947
    %v3060 = vpack.c.b16 %v2952, %v2950
    %v3061 = vpack.c.b16 %v2953, %v2951
    %v3062 = vpack.c.b16 %v2956, %v2954
    %v3063 = vpack.c.b16 %v2957, %v2955
    %v3064 = vpack.c.b16 %v2960, %v2958
    %v3065 = vpack.c.b16 %v2961, %v2959
    %v3066 = vpack.c.b16 %v2964, %v2962
    %v3067 = vpack.c.b16 %v2965, %v2963
    %v3068 = vpack.c.b16 %v2968, %v2966
    %v3069 = vpack.c.b16 %v2969, %v2967
    %v3070 = vpack.c.b16 %v2972, %v2970
    %v3071 = vpack.c.b16 %v2973, %v2971
    %v3072 = vpack.c.b16 %v2976, %v2974
    %v3073 = vpack.c.b16 %v2977, %v2975
    %v3074 = vpack.c.b16 %v2980, %v2978
    %v3075 = vpack.c.b16 %v2981, %v2979
    %v3076 = vpack.c.b16 %v2984, %v2982
    %v3077 = vpack.c.b16 %v2985, %v2983
    %v3078 = vpack.c.b16 %v2988, %v2986
    %v3079 = vpack.c.b16 %v2989, %v2987
    %v3080 = vpack.c.b16 %v2992, %v2990
    %v3081 = vpack.c.b16 %v2993, %v2991
    %v3082 = vpack.c.b16 %v2996, %v2994
    %v3083 = vpack.c.b16 %v2997, %v2995
    %v3084 = vpack.c.b16 %v3000, %v2998
    %v3085 = vpack.c.b16 %v3001, %v2999
    %v3086 = vpack.c.b16 %v3004, %v3002
    %v3087 = vpack.c.b16 %v3005, %v3003
    %v3088 = vpack.c.b16 %v3008, %v3006
    %v3089 = vpack.c.b16 %v3009, %v3007
    %v3090 = vpack.c.b16 %v3012, %v3010
    %v3091 = vpack.c.b16 %v3013, %v3011
    %v3092 = vpack.c.b16 %v3016, %v3014
    %v3093 = vpack.c.b16 %v3017, %v3015
    %v3094 = vpack.c.b16 %v3020, %v3018
    %v3095 = vpack.c.b16 %v3021, %v3019
    %v3096 = vpack.c.b16 %v3024, %v3022
    %v3097 = vpack.c.b16 %v3025, %v3023
    %v3098 = vpack.c.b16 %v3028, %v3026
    %v3099 = vpack.c.b16 %v3029, %v3027
    %v3100 = vpack.c.b16 %v3032, %v3030
    %v3101 = vpack.c.b16 %v3033, %v3031
    %v3102 = vpack.c.b16 %v3036, %v3034
    %v3103 = vpack.c.b16 %v3037, %v3035
    %v3104 = vpack.c.b16 %v3040, %v3038
    %v3105 = vpack.c.b16 %v3041, %v3039
    %3170 = vmatprep.subr.bf16.mxu0 %v3043
    %3171 = vmatpush1.bf16.msra.mxu0 %v3042
    %3172 = vmatprep.subr.bf16.mxu0 %v3045
    %3173 = vmatpush1.bf16.msra.mxu0 %v3044
    %3174 = vmatprep.subr.bf16.mxu0 %v3047
    %3175 = vmatpush1.bf16.msra.mxu0 %v3046
    %3176 = vmatprep.subr.bf16.mxu0 %v3049
    %3177 = vmatpush1.bf16.msra.mxu0 %v3048
    %3178 = vmatprep.subr.bf16.mxu0 %v3051
    %3179 = vmatpush1.bf16.msra.mxu0 %v3050
    %3180 = vmatprep.subr.bf16.mxu0 %v3053
    %3181 = vmatpush1.bf16.msra.mxu0 %v3052
    %3182 = vmatprep.subr.bf16.mxu0 %v3055
    %3183 = vmatpush1.bf16.msra.mxu0 %v3054
    %3184 = vmatprep.subr.bf16.mxu0 %v3057
    %3185 = vmatpush1.bf16.msra.mxu0 %v3056
    %3186 = vmatprep.subr.bf16.mxu0 %v3059
    %3187 = vmatpush1.bf16.msra.mxu0 %v3058
    %3188 = vmatprep.subr.bf16.mxu0 %v3061
    %3189 = vmatpush1.bf16.msra.mxu0 %v3060
    %3190 = vmatprep.subr.bf16.mxu0 %v3063
    %3191 = vmatpush1.bf16.msra.mxu0 %v3062
    %3192 = vmatprep.subr.bf16.mxu0 %v3065
    %3193 = vmatpush1.bf16.msra.mxu0 %v3064
    %3194 = vmatprep.subr.bf16.mxu0 %v3067
    %3195 = vmatpush1.bf16.msra.mxu0 %v3066
    %3196 = vmatprep.subr.bf16.mxu0 %v3069
    %3197 = vmatpush1.bf16.msra.mxu0 %v3068
    %3198 = vmatprep.subr.bf16.mxu0 %v3071
    %3199 = vmatpush1.bf16.msra.mxu0 %v3070
    %3200 = vmatprep.subr.bf16.mxu0 %v3073
    %3201 = vmatpush1.bf16.msra.mxu0 %v3072
    %3202 = vmatprep.mubr.bf16.mxu0 %v2771
    %3203 = vmatmul.mubr.bf16.gmra.mrb[0].mxu0 %v2770
    %v3204 = vpop.f32.mrb[0].mxu0
    %v3205 = vadd.f32 %v2843, %v3204
    %v3206 = vpop.f32.mrb[0].mxu0
    %v3207 = vadd.f32 %v2847, %v3206
    %v3208 = vpop.f32.mrb[0].mxu0
    %v3209 = vpop.f32.mrb[0].mxu0
    %3210 = vdwg.mxu0
    %3211 = vmatprep.subr.bf16.mxu0 %v3075
    %3212 = vmatpush1.bf16.msra.mxu0 %v3074
    %3213 = vmatprep.subr.bf16.mxu0 %v3077
    %3214 = vmatpush1.bf16.msra.mxu0 %v3076
    %3215 = vmatprep.subr.bf16.mxu0 %v3079
    %3216 = vmatpush1.bf16.msra.mxu0 %v3078
    %3217 = vmatprep.subr.bf16.mxu0 %v3081
    %3218 = vmatpush1.bf16.msra.mxu0 %v3080
    %3219 = vmatprep.subr.bf16.mxu0 %v3083
    %3220 = vmatpush1.bf16.msra.mxu0 %v3082
    %3221 = vmatprep.subr.bf16.mxu0 %v3085
    %3222 = vmatpush1.bf16.msra.mxu0 %v3084
    %3223 = vmatprep.subr.bf16.mxu0 %v3087
    %3224 = vmatpush1.bf16.msra.mxu0 %v3086
    %3225 = vmatprep.subr.bf16.mxu0 %v3089
    %3226 = vmatpush1.bf16.msra.mxu0 %v3088
    %3227 = vmatprep.subr.bf16.mxu0 %v3091
    %3228 = vmatpush1.bf16.msra.mxu0 %v3090
    %3229 = vmatprep.subr.bf16.mxu0 %v3093
    %3230 = vmatpush1.bf16.msra.mxu0 %v3092
    %3231 = vmatprep.subr.bf16.mxu0 %v3095
    %3232 = vmatpush1.bf16.msra.mxu0 %v3094
    %3233 = vmatprep.subr.bf16.mxu0 %v3097
    %3234 = vmatpush1.bf16.msra.mxu0 %v3096
    %3235 = vmatprep.subr.bf16.mxu0 %v3099
    %3236 = vmatpush1.bf16.msra.mxu0 %v3098
    %3237 = vmatprep.subr.bf16.mxu0 %v3101
    %3238 = vmatpush1.bf16.msra.mxu0 %v3100
    %3239 = vmatprep.subr.bf16.mxu0 %v3103
    %3240 = vmatpush1.bf16.msra.mxu0 %v3102
    %3241 = vmatprep.subr.bf16.mxu0 %v3105
    %3242 = vmatpush1.bf16.msra.mxu0 %v3104
    %3243 = vmatprep.mubr.bf16.mxu0 %v2773
    %3244 = vmatmul.mubr.bf16.gmra.mrb[0].mxu0 %v2772
    %v3245 = vpop.f32.mrb[0].mxu0
    %v3246 = vadd.f32 %v3205, %v3245
    %v3247 = vpop.f32.mrb[0].mxu0
    %v3248 = vadd.f32 %v3207, %v3247
    %v3249 = vpop.f32.mrb[0].mxu0
    %v3250 = vpop.f32.mrb[0].mxu0
    %3251 = vdwg.mxu0
    %v3252 = vmax.f32 %v3246, 0.0
    %v3253 = vmax.f32 %v3248, 0.0
    %v3254 = vpack.c.bf16 %v3252, %v3252
    %v3255 = vpack.c.bf16 %v3253, %v3253
    %v3256 = vld [vmem:[#allocation11] sm:$0xf]
    %v3257 = vld [vmem:[#allocation11 + $0x4] sm:$0xf]
    %v3258 = vld [vmem:[#allocation11 + $0x8] sm:$0xf]
    %v3259 = vld [vmem:[#allocation11 + $0xc] sm:$0xf]
    %v3260 = vld [vmem:[#allocation11 + $0x10] sm:$0xf]
    %v3261 = vld [vmem:[#allocation11 + $0x14] sm:$0xf]
    %v3262 = vld [vmem:[#allocation11 + $0x18] sm:$0xf]
    %v3263 = vld [vmem:[#allocation11 + $0x1c] sm:$0xf]
    %v3264 = vld [vmem:[#allocation11 + $0x20] sm:$0xf]
    %v3265 = vld [vmem:[#allocation11 + $0x24] sm:$0xf]
    %v3266 = vld [vmem:[#allocation11 + $0x28] sm:$0xf]
    %v3267 = vld [vmem:[#allocation11 + $0x2c] sm:$0xf]
    %v3268 = vld [vmem:[#allocation11 + $0x30] sm:$0xf]
    %v3269 = vld [vmem:[#allocation11 + $0x34] sm:$0xf]
    %v3270 = vld [vmem:[#allocation11 + $0x38] sm:$0xf]
    %v3271 = vld [vmem:[#allocation11 + $0x3c] sm:$0xf]
    %v3272 = vld [vmem:[#allocation11 + $0x40] sm:$0xf]
    %v3273 = vld [vmem:[#allocation11 + $0x44] sm:$0xf]
    %v3274 = vld [vmem:[#allocation11 + $0x48] sm:$0xf]
    %v3275 = vld [vmem:[#allocation11 + $0x4c] sm:$0xf]
    %v3276 = vld [vmem:[#allocation11 + $0x50] sm:$0xf]
    %v3277 = vld [vmem:[#allocation11 + $0x54] sm:$0xf]
    %v3278 = vld [vmem:[#allocation11 + $0x58] sm:$0xf]
    %v3279 = vld [vmem:[#allocation11 + $0x5c] sm:$0xf]
    %v3280 = vld [vmem:[#allocation11 + $0x60] sm:$0xf]
    %v3281 = vld [vmem:[#allocation11 + $0x64] sm:$0xf]
    %v3282 = vld [vmem:[#allocation11 + $0x68] sm:$0xf]
    %v3283 = vld [vmem:[#allocation11 + $0x6c] sm:$0xf]
    %v3284 = vld [vmem:[#allocation11 + $0x70] sm:$0xf]
    %v3285 = vld [vmem:[#allocation11 + $0x74] sm:$0xf]
    %v3286 = vld [vmem:[#allocation11 + $0x78] sm:$0xf]
    %v3287 = vld [vmem:[#allocation11 + $0x7c] sm:$0xf]
    %v3288 = vld [vmem:[%s10] sm:$0x1]
    %v3290 = vlaneseq
    %v3291 = vshrl.u32 %v3290, 7
    %v3292 = vsub.s32 0, %v3291
    %v3293 = vrot.slane %v3288, %v3292
    %v3327 = vunpack.c.l.b16 %v3256
    %v3328 = vunpack.c.l.b16 %v3257
    %v3329 = vunpack.c.l.b16 %v3258
    %v3330 = vunpack.c.l.b16 %v3259
    %v3331 = vunpack.c.l.b16 %v3260
    %v3332 = vunpack.c.l.b16 %v3261
    %v3333 = vunpack.c.l.b16 %v3262
    %v3334 = vunpack.c.l.b16 %v3263
    %v3335 = vunpack.c.l.b16 %v3264
    %v3336 = vunpack.c.l.b16 %v3265
    %v3337 = vunpack.c.l.b16 %v3266
    %v3338 = vunpack.c.l.b16 %v3267
    %v3339 = vunpack.c.l.b16 %v3268
    %v3340 = vunpack.c.l.b16 %v3269
    %v3341 = vunpack.c.l.b16 %v3270
    %v3342 = vunpack.c.l.b16 %v3271
    %v3343 = vunpack.c.l.b16 %v3272
    %v3344 = vunpack.c.l.b16 %v3273
    %v3345 = vunpack.c.l.b16 %v3274
    %v3346 = vunpack.c.l.b16 %v3275
    %v3347 = vunpack.c.l.b16 %v3276
    %v3348 = vunpack.c.l.b16 %v3277
    %v3349 = vunpack.c.l.b16 %v3278
    %v3350 = vunpack.c.l.b16 %v3279
    %v3351 = vunpack.c.l.b16 %v3280
    %v3352 = vunpack.c.l.b16 %v3281
    %v3353 = vunpack.c.l.b16 %v3282
    %v3354 = vunpack.c.l.b16 %v3283
    %v3355 = vunpack.c.l.b16 %v3284
    %v3356 = vunpack.c.l.b16 %v3285
    %v3357 = vunpack.c.l.b16 %v3286
    %v3358 = vunpack.c.l.b16 %v3287
    %v3359 = vpack.c.b16 %v3328, %v3327
    %v3360 = vpack.c.b16 %v3330, %v3329
    %v3361 = vpack.c.b16 %v3332, %v3331
    %v3362 = vpack.c.b16 %v3334, %v3333
    %v3363 = vpack.c.b16 %v3336, %v3335
    %v3364 = vpack.c.b16 %v3338, %v3337
    %v3365 = vpack.c.b16 %v3340, %v3339
    %v3366 = vpack.c.b16 %v3342, %v3341
    %v3367 = vpack.c.b16 %v3344, %v3343
    %v3368 = vpack.c.b16 %v3346, %v3345
    %v3369 = vpack.c.b16 %v3348, %v3347
    %v3370 = vpack.c.b16 %v3350, %v3349
    %v3371 = vpack.c.b16 %v3352, %v3351
    %v3372 = vpack.c.b16 %v3354, %v3353
    %v3373 = vpack.c.b16 %v3356, %v3355
    %v3374 = vpack.c.b16 %v3358, %v3357
    %3391 = vmatprep.subr.bf16.mxu0 0
    %3392 = vmatpush1.bf16.msra.mxu0 %v3359
    %3393 = vmatprep.subr.bf16.mxu0 0
    %3394 = vmatpush1.bf16.msra.mxu0 %v3360
    %3395 = vmatprep.subr.bf16.mxu0 0
    %3396 = vmatpush1.bf16.msra.mxu0 %v3361
    %3397 = vmatprep.subr.bf16.mxu0 0
    %3398 = vmatpush1.bf16.msra.mxu0 %v3362
    %3399 = vmatprep.subr.bf16.mxu0 0
    %3400 = vmatpush1.bf16.msra.mxu0 %v3363
    %3401 = vmatprep.subr.bf16.mxu0 0
    %3402 = vmatpush1.bf16.msra.mxu0 %v3364
    %3403 = vmatprep.subr.bf16.mxu0 0
    %3404 = vmatpush1.bf16.msra.mxu0 %v3365
    %3405 = vmatprep.subr.bf16.mxu0 0
    %3406 = vmatpush1.bf16.msra.mxu0 %v3366
    %3407 = vmatprep.subr.bf16.mxu0 0
    %3408 = vmatpush1.bf16.msra.mxu0 %v3367
    %3409 = vmatprep.subr.bf16.mxu0 0
    %3410 = vmatpush1.bf16.msra.mxu0 %v3368
    %3411 = vmatprep.subr.bf16.mxu0 0
    %3412 = vmatpush1.bf16.msra.mxu0 %v3369
    %3413 = vmatprep.subr.bf16.mxu0 0
    %3414 = vmatpush1.bf16.msra.mxu0 %v3370
    %3415 = vmatprep.subr.bf16.mxu0 0
    %3416 = vmatpush1.bf16.msra.mxu0 %v3371
    %3417 = vmatprep.subr.bf16.mxu0 0
    %3418 = vmatpush1.bf16.msra.mxu0 %v3372
    %3419 = vmatprep.subr.bf16.mxu0 0
    %3420 = vmatpush1.bf16.msra.mxu0 %v3373
    %3421 = vmatprep.subr.bf16.mxu0 0
    %3422 = vmatpush1.bf16.msra.mxu0 %v3374
    %3423 = vmatprep.mubr.bf16.mxu0 %v3255
    %3424 = vmatmul.mubr.bf16.gmra.mrb[0].mxu0 %v3254
    %v3425 = vpop.f32.mrb[0].mxu0
    %v3426 = vadd.f32 %v3293, %v3425
    %v3427 = vpop.f32.mrb[0].mxu0
    %v3428 = vpop.f32.mrb[0].mxu0
    %v3429 = vpop.f32.mrb[0].mxu0
    %3430 = vdwg.mxu0
    %v3431 = vmax.f32 %v3426, 0.0
    %v3432 = vpack.c.bf16 %v3431, %v3431
    %v3433 = vld [vmem:[#allocation13] sm:$0xf]
    %v3434 = vld [vmem:[#allocation13 + $0x4] sm:$0xf]
    %v3435 = vld [vmem:[#allocation13 + $0x8] sm:$0xf]
    %v3436 = vld [vmem:[#allocation13 + $0xc] sm:$0xf]
    %v3437 = vld [vmem:[#allocation13 + $0x10] sm:$0xf]
    %v3438 = vld [vmem:[#allocation13 + $0x14] sm:$0xf]
    %v3439 = vld [vmem:[#allocation13 + $0x18] sm:$0xf]
    %v3440 = vld [vmem:[#allocation13 + $0x1c] sm:$0xf]
    %v3441 = vld [vmem:[#allocation13 + $0x20] sm:$0xf]
    %v3442 = vld [vmem:[#allocation13 + $0x24] sm:$0xf]
    %v3443 = vld [vmem:[#allocation13 + $0x28] sm:$0xf]
    %v3444 = vld [vmem:[#allocation13 + $0x2c] sm:$0xf]
    %v3445 = vld [vmem:[#allocation13 + $0x30] sm:$0xf]
    %v3446 = vld [vmem:[#allocation13 + $0x34] sm:$0xf]
    %v3447 = vld [vmem:[#allocation13 + $0x38] sm:$0xf]
    %v3448 = vld [vmem:[#allocation13 + $0x3c] sm:$0xf]
    %v3449 = vld [vmem:[%s12] sm:$0x1]
    %v3451 = vlaneseq
    %v3452 = vshrl.u32 %v3451, 7
    %v3453 = vsub.s32 0, %v3452
    %v3454 = vrot.slane %v3449, %v3453
    %v3472 = vunpack.c.l.b16 %v3433
    %v3473 = vunpack.c.l.b16 %v3434
    %v3474 = vunpack.c.l.b16 %v3435
    %v3475 = vunpack.c.l.b16 %v3436
    %v3476 = vunpack.c.l.b16 %v3437
    %v3477 = vunpack.c.l.b16 %v3438
    %v3478 = vunpack.c.l.b16 %v3439
    %v3479 = vunpack.c.l.b16 %v3440
    %v3480 = vunpack.c.l.b16 %v3441
    %v3481 = vunpack.c.l.b16 %v3442
    %v3482 = vunpack.c.l.b16 %v3443
    %v3483 = vunpack.c.l.b16 %v3444
    %v3484 = vunpack.c.l.b16 %v3445
    %v3485 = vunpack.c.l.b16 %v3446
    %v3486 = vunpack.c.l.b16 %v3447
    %v3487 = vunpack.c.l.b16 %v3448
    %v3488 = vpack.c.b16 %v3473, %v3472
    %v3489 = vpack.c.b16 %v3475, %v3474
    %v3490 = vpack.c.b16 %v3477, %v3476
    %v3491 = vpack.c.b16 %v3479, %v3478
    %v3492 = vpack.c.b16 %v3481, %v3480
    %v3493 = vpack.c.b16 %v3483, %v3482
    %v3494 = vpack.c.b16 %v3485, %v3484
    %v3495 = vpack.c.b16 %v3487, %v3486
    %3504 = vmatprep.subr.bf16.mxu0 0
    %3505 = vmatpush1.bf16.msra.mxu0 %v3488
    %3506 = vmatprep.subr.bf16.mxu0 0
    %3507 = vmatpush1.bf16.msra.mxu0 %v3489
    %3508 = vmatprep.subr.bf16.mxu0 0
    %3509 = vmatpush1.bf16.msra.mxu0 %v3490
    %3510 = vmatprep.subr.bf16.mxu0 0
    %3511 = vmatpush1.bf16.msra.mxu0 %v3491
    %3512 = vmatprep.subr.bf16.mxu0 0
    %3513 = vmatpush1.bf16.msra.mxu0 %v3492
    %3514 = vmatprep.subr.bf16.mxu0 0
    %3515 = vmatpush1.bf16.msra.mxu0 %v3493
    %3516 = vmatprep.subr.bf16.mxu0 0
    %3517 = vmatpush1.bf16.msra.mxu0 %v3494
    %3518 = vmatprep.subr.bf16.mxu0 0
    %3519 = vmatpush1.bf16.msra.mxu0 %v3495
    %3520 = vmatprep.subr.bf16.mxu0 0
    %3521 = vmatpush1.bf16.msra.mxu0 0
    %3522 = vmatprep.subr.bf16.mxu0 0
    %3523 = vmatpush1.bf16.msra.mxu0 0
    %3524 = vmatprep.subr.bf16.mxu0 0
    %3525 = vmatpush1.bf16.msra.mxu0 0
    %3526 = vmatprep.subr.bf16.mxu0 0
    %3527 = vmatpush1.bf16.msra.mxu0 0
    %3528 = vmatprep.subr.bf16.mxu0 0
    %3529 = vmatpush1.bf16.msra.mxu0 0
    %3530 = vmatprep.subr.bf16.mxu0 0
    %3531 = vmatpush1.bf16.msra.mxu0 0
    %3532 = vmatprep.subr.bf16.mxu0 0
    %3533 = vmatpush1.bf16.msra.mxu0 0
    %3534 = vmatprep.subr.bf16.mxu0 0
    %3535 = vmatpush1.bf16.msra.mxu0 0
    %3536 = vmatprep.mubr.bf16.mxu0 0
    %3537 = vmatmul.mubr.bf16.gmra.mrb[0].mxu0 %v3432
    %v3538 = vpop.f32.mrb[0].mxu0
    %v3539 = vadd.f32 %v3454, %v3538
    %v3540 = vpop.f32.mrb[0].mxu0
    %v3541 = vpop.f32.mrb[0].mxu0
    %v3542 = vpop.f32.mrb[0].mxu0
    %3543 = vdwg.mxu0
    %v3544 = vmax.f32 %v3539, 0.0
    %v3545 = vpack.c.bf16 %v3544, %v3544
    %v3546 = vld [vmem:[#allocation14] sm:$0xf]
    %v3547 = vld [vmem:[#allocation14 + $0x4] sm:$0xf]
    %v3548 = vld [vmem:[#allocation14 + $0x8] sm:$0xf]
    %v3549 = vld [vmem:[#allocation14 + $0xc] sm:$0xf]
    %v3550 = vld [vmem:[#allocation14 + $0x10] sm:$0xf]
    %v3551 = vld [vmem:[#allocation14 + $0x14] sm:$0xf]
    %v3552 = vld [vmem:[#allocation14 + $0x18] sm:$0xf]
    %v3553 = vld [vmem:[#allocation14 + $0x1c] sm:$0xf]
    %v3554 = vld [vmem:[#allocation14 + $0x20] sm:$0xf]
    %v3555 = vld [vmem:[#allocation14 + $0x24] sm:$0xf]
    %v3556 = vld [vmem:[#allocation14 + $0x28] sm:$0xf]
    %v3557 = vld [vmem:[#allocation14 + $0x2c] sm:$0xf]
    %v3558 = vld [vmem:[#allocation14 + $0x30] sm:$0xf]
    %v3559 = vld [vmem:[#allocation14 + $0x34] sm:$0xf]
    %v3560 = vld [vmem:[#allocation14 + $0x38] sm:$0xf]
    %v3561 = vld [vmem:[#allocation14 + $0x3c] sm:$0xf]
    %v3562 = vld [vmem:[%s14] sm:$0x1]
    %v3564 = vlaneseq
    %v3565 = vshrl.u32 %v3564, 7
    %v3566 = vsub.s32 0, %v3565
    %v3567 = vrot.slane %v3562, %v3566
    %v3585 = vunpack.c.l.b16 %v3546
    %v3586 = vunpack.c.l.b16 %v3547
    %v3587 = vunpack.c.l.b16 %v3548
    %v3588 = vunpack.c.l.b16 %v3549
    %v3589 = vunpack.c.l.b16 %v3550
    %v3590 = vunpack.c.l.b16 %v3551
    %v3591 = vunpack.c.l.b16 %v3552
    %v3592 = vunpack.c.l.b16 %v3553
    %v3593 = vunpack.c.l.b16 %v3554
    %v3594 = vunpack.c.l.b16 %v3555
    %v3595 = vunpack.c.l.b16 %v3556
    %v3596 = vunpack.c.l.b16 %v3557
    %v3597 = vunpack.c.l.b16 %v3558
    %v3598 = vunpack.c.l.b16 %v3559
    %v3599 = vunpack.c.l.b16 %v3560
    %v3600 = vunpack.c.l.b16 %v3561
    %v3601 = vpack.c.b16 %v3586, %v3585
    %v3602 = vpack.c.b16 %v3588, %v3587
    %v3603 = vpack.c.b16 %v3590, %v3589
    %v3604 = vpack.c.b16 %v3592, %v3591
    %v3605 = vpack.c.b16 %v3594, %v3593
    %v3606 = vpack.c.b16 %v3596, %v3595
    %v3607 = vpack.c.b16 %v3598, %v3597
    %v3608 = vpack.c.b16 %v3600, %v3599
    %3617 = vmatprep.subr.bf16.mxu0 0
    %3618 = vmatpush1.bf16.msra.mxu0 %v3601
    %3619 = vmatprep.subr.bf16.mxu0 0
    %3620 = vmatpush1.bf16.msra.mxu0 %v3602
    %3621 = vmatprep.subr.bf16.mxu0 0
    %3622 = vmatpush1.bf16.msra.mxu0 %v3603
    %3623 = vmatprep.subr.bf16.mxu0 0
    %3624 = vmatpush1.bf16.msra.mxu0 %v3604
    %3625 = vmatprep.subr.bf16.mxu0 0
    %3626 = vmatpush1.bf16.msra.mxu0 %v3605
    %3627 = vmatprep.subr.bf16.mxu0 0
    %3628 = vmatpush1.bf16.msra.mxu0 %v3606
    %3629 = vmatprep.subr.bf16.mxu0 0
    %3630 = vmatpush1.bf16.msra.mxu0 %v3607
    %3631 = vmatprep.subr.bf16.mxu0 0
    %3632 = vmatpush1.bf16.msra.mxu0 %v3608
    %3633 = vmatprep.subr.bf16.mxu0 0
    %3634 = vmatpush1.bf16.msra.mxu0 0
    %3635 = vmatprep.subr.bf16.mxu0 0
    %3636 = vmatpush1.bf16.msra.mxu0 0
    %3637 = vmatprep.subr.bf16.mxu0 0
    %3638 = vmatpush1.bf16.msra.mxu0 0
    %3639 = vmatprep.subr.bf16.mxu0 0
    %3640 = vmatpush1.bf16.msra.mxu0 0
    %3641 = vmatprep.subr.bf16.mxu0 0
    %3642 = vmatpush1.bf16.msra.mxu0 0
    %3643 = vmatprep.subr.bf16.mxu0 0
    %3644 = vmatpush1.bf16.msra.mxu0 0
    %3645 = vmatprep.subr.bf16.mxu0 0
    %3646 = vmatpush1.bf16.msra.mxu0 0
    %3647 = vmatprep.subr.bf16.mxu0 0
    %3648 = vmatpush1.bf16.msra.mxu0 0
    %3649 = vmatprep.mubr.bf16.mxu0 0
    %3650 = vmatmul.mubr.bf16.gmra.mrb[0].mxu0 %v3545
    %v3651 = vpop.f32.mrb[0].mxu0
    %v3652 = vadd.f32 %v3567, %v3651
    %v3653 = vpop.f32.mrb[0].mxu0
    %v3654 = vpop.f32.mrb[0].mxu0
    %v3655 = vpop.f32.mrb[0].mxu0
    %3656 = vdwg.mxu0
    %3657 = vst [vmem:[#allocation16] sm:$0xff] %v3652
    // Predicated region
    $region94: #{tpu_custom_call.1} parent=1 // pred_check
      _
    $region95: #{tpu_custom_call.1} parent=1 // pred_check_branch
      %3659 = sbr.rel (0) target = $region97
    $region96: #{tpu_custom_call.1} parent=1 // pred_region
      %s3661 = ssub.s32 128, 128
      %3662 = vsyncadd [#allocation4], %s3661
      %s3664 = sshll.u32 [#allocation16], 4
      %s3665 = int_to_ptr.vmem [resolvable:$true] %s3664
      %3667 = dma.vmem_to_hbm [thread:$0]  %s3665, 128, %s15, [#allocation4]
    $region97: #{tpu_custom_call.1} parent=1 // pred_fallthru
      _
    // Predicated region
    $region98: #{tpu_custom_call.1} parent=1 // pred_check
      _
    $region99: #{tpu_custom_call.1} parent=1 // pred_check_branch
      %3669 = sbr.rel (0) target = $region101
    $region100: #{tpu_custom_call.1} parent=1 // pred_region
      %3670 = dma.done [#allocation4], 128
    $region101: #{tpu_custom_call.1} parent=1 // pred_fallthru
      _
    %3671 = vsyncpa [#allocation3], 1
    %3672 = vsyncpa [#allocation6], 1
    %3673 = vsyncpa [#allocation9], 1
    %3674 = vsyncpa [#allocation12], 1
    %3675 = vsyncpa [#allocation15], 1
    %3676 = vsyncpa [#allocation4], 1

// kernel: tpu_custom_call.1
$region0: #{tpu_custom_call.1}
  #allocation0 [shape = 'u32[]', space=smem, size = 0x4, offset = 0x4, fixed_abs, tag = 'smem constant byte address 0x4 - core index']
  #allocation1 [shape = 'u32[144,128]{1,0:T(1,128)}', space=vmem, size = 0x12000, scoped, tag = 'internal scratch']
  %s0 = inlined_call_operand.hbm [shape: f32[8,128], index: 0, kind: input, shape index: {}]
  %s1 = inlined_call_operand.hbm [shape: bf16[128,128], index: 1, kind: input, shape index: {}]
  %s2 = inlined_call_operand.vmem [shape: f32[1,128], index: 2, kind: input, shape index: {}]
  %s3 = inlined_call_operand.hbm [shape: bf16[128,1024], index: 3, kind: input, shape index: {}]
  %s4 = inlined_call_operand.vmem [shape: f32[1,1024], index: 4, kind: input, shape index: {}]
  %s5 = inlined_call_operand.hbm [shape: bf16[1024,512], index: 5, kind: input, shape index: {}]
  %s6 = inlined_call_operand.vmem [shape: f32[1,512], index: 6, kind: input, shape index: {}]
  %s7 = inlined_call_operand.hbm [shape: bf16[512,256], index: 7, kind: input, shape index: {}]
  %s8 = inlined_call_operand.vmem [shape: f32[1,256], index: 8, kind: input, shape index: {}]
  %s9 = inlined_call_operand.hbm [shape: bf16[256,128], index: 9, kind: input, shape index: {}]
  %s10 = inlined_call_operand.vmem [shape: f32[1,128], index: 10, kind: input, shape index: {}]
  %s11 = inlined_call_operand.hbm [shape: bf16[128,128], index: 11, kind: input, shape index: {}]
  %s12 = inlined_call_operand.vmem [shape: f32[1,128], index: 12, kind: input, shape index: {}]
  %s13 = inlined_call_operand.hbm [shape: bf16[128,128], index: 13, kind: input, shape index: {}]
  %s14 = inlined_call_operand.vmem [shape: f32[1,128], index: 14, kind: input, shape index: {}]
  %s15 = inlined_call_operand.hbm [shape: f32[8,128], index: 15, kind: output, shape index: {}]
  %s16 = sld [smem:[#allocation0]]
  $region102: #{tpu_custom_call.1} parent=0
    _
  %s18 = ssub.s32 1, %s16
  %s19 = scalar_select 0, %s18, %s16
  $region1: #{tpu_custom_call.1} parent=0
    #allocation2 [shape = 'u8[4096]{0}', space=vmem, size = 0x1000, scoped, tag = 'input window, operand 0, single buffered']
    #allocation3 [shape = 's32[1]{0}', space=sflag, size = 0x4, scoped, tag = 'scoped memory for tpu_custom_call.1']
    #allocation4 [shape = 's32[1]{0}', space=sflag, size = 0x4, scoped, tag = 'scoped memory for tpu_custom_call.1']
    #allocation5 [shape = 'u8[32768]{0}', space=vmem, size = 0x8000, scoped, tag = 'input window, operand 1, single buffered']
    #allocation6 [shape = 's32[1]{0}', space=sflag, size = 0x4, scoped, tag = 'scoped memory for tpu_custom_call.1']
    #allocation7 [shape = 'u8[262144]{0}', space=vmem, size = 0x40000, scoped, tag = 'input window, operand 3, single buffered']
    #allocation8 [shape = 'u8[1048576]{0}', space=vmem, size = 0x100000, scoped, tag = 'input window, operand 5, single buffered']
    #allocation9 [shape = 's32[1]{0}', space=sflag, size = 0x4, scoped, tag = 'scoped memory for tpu_custom_call.1']
    #allocation10 [shape = 'u8[262144]{0}', space=vmem, size = 0x40000, scoped, tag = 'input window, operand 7, single buffered']
    #allocation11 [shape = 'u8[65536]{0}', space=vmem, size = 0x10000, scoped, tag = 'input window, operand 9, single buffered']
    #allocation12 [shape = 's32[1]{0}', space=sflag, size = 0x4, scoped, tag = 'scoped memory for tpu_custom_call.1']
    #allocation13 [shape = 'u8[32768]{0}', space=vmem, size = 0x8000, scoped, tag = 'input window, operand 11, single buffered']
    #allocation14 [shape = 'u8[32768]{0}', space=vmem, size = 0x8000, scoped, tag = 'input window, operand 13, single buffered']
    #allocation15 [shape = 's32[1]{0}', space=sflag, size = 0x4, scoped, tag = 'scoped memory for tpu_custom_call.1']
    #allocation16 [shape = 'u8[4096]{0}', space=vmem, size = 0x1000, scoped, tag = 'output window, operand 0, single buffered']
    %20 = vsyncpa [#allocation3], 0
    %21 = vsyncpa [#allocation6], 0
    %22 = vsyncpa [#allocation9], 0
    %23 = vsyncpa [#allocation12], 0
    %24 = vsyncpa [#allocation15], 0
    %25 = vsyncpa [#allocation4], 0
    // Predicated region
    $region2: #{tpu_custom_call.1} parent=1 // pred_check
      _
    $region3: #{tpu_custom_call.1} parent=1 // pred_check_branch
      %27 = sbr.rel (0) target = $region5
    $region4: #{tpu_custom_call.1} parent=1 // pred_region
      %s29 = ssub.s32 128, 128
      %30 = vsyncadd [#allocation3], %s29
      %s32 = sshll.u32 [#allocation2], 4
      %s33 = int_to_ptr.vmem [resolvable:$true] %s32
      %35 = dma.hbm_to_vmem [thread:$0]  %s0, 128, %s33, [#allocation3]
    $region5: #{tpu_custom_call.1} parent=1 // pred_fallthru
      _
    // Predicated region
    $region6: #{tpu_custom_call.1} parent=1 // pred_check
      _
    $region7: #{tpu_custom_call.1} parent=1 // pred_check_branch
      %37 = sbr.rel (0) target = $region9
    $region8: #{tpu_custom_call.1} parent=1 // pred_region
      %s39 = ssub.s32 1024, 1024
      %40 = vsyncadd [#allocation6], %s39
      %s41 = sshll.u32 [#allocation5], 4
      %s42 = int_to_ptr.vmem [resolvable:$true] %s41
      %47 = dma.hbm_to_vmem [thread:$0]  %s1, 1024, %s42, [#allocation6], 64, 64, 4
    $region9: #{tpu_custom_call.1} parent=1 // pred_fallthru
      _
    // Predicated region
    $region10: #{tpu_custom_call.1} parent=1 // pred_check
      _
    $region11: #{tpu_custom_call.1} parent=1 // pred_check_branch
      %49 = sbr.rel (0) target = $region13
    $region12: #{tpu_custom_call.1} parent=1 // pred_region
      _
    $region13: #{tpu_custom_call.1} parent=1 // pred_fallthru
      _
    // Predicated region
    $region14: #{tpu_custom_call.1} parent=1 // pred_check
      _
    $region15: #{tpu_custom_call.1} parent=1 // pred_check_branch
      %51 = sbr.rel (0) target = $region17
    $region16: #{tpu_custom_call.1} parent=1 // pred_region
      %s53 = ssub.s32 8192, 8192
      %54 = vsyncadd [#allocation6], %s53
      %s55 = sshll.u32 [#allocation7], 4
      %s56 = int_to_ptr.vmem [resolvable:$true] %s55
      %61 = dma.hbm_to_vmem [thread:$0]  %s3, 8192, %s56, [#allocation6], 512, 512, 32
    $region17: #{tpu_custom_call.1} parent=1 // pred_fallthru
      _
    // Predicated region
    $region18: #{tpu_custom_call.1} parent=1 // pred_check
      _
    $region19: #{tpu_custom_call.1} parent=1 // pred_check_branch
      %63 = sbr.rel (0) target = $region21
    $region20: #{tpu_custom_call.1} parent=1 // pred_region
      _
    $region21: #{tpu_custom_call.1} parent=1 // pred_fallthru
      _
    // Predicated region
    $region22: #{tpu_custom_call.1} parent=1 // pred_check
      _
    $region23: #{tpu_custom_call.1} parent=1 // pred_check_branch
      %65 = sbr.rel (0) target = $region25
    $region24: #{tpu_custom_call.1} parent=1 // pred_region
      %s67 = ssub.s32 32768, 32768
      %68 = vsyncadd [#allocation9], %s67
      %s69 = sshll.u32 [#allocation8], 4
      %s70 = int_to_ptr.vmem [resolvable:$true] %s69
      %75 = dma.hbm_to_vmem [thread:$0]  %s5, 32768, %s70, [#allocation9], 256, 256, 16
    $region25: #{tpu_custom_call.1} parent=1 // pred_fallthru
      _
    // Predicated region
    $region26: #{tpu_custom_call.1} parent=1 // pred_check
      _
    $region27: #{tpu_custom_call.1} parent=1 // pred_check_branch
      %77 = sbr.rel (0) target = $region29
    $region28: #{tpu_custom_call.1} parent=1 // pred_region
      _
    $region29: #{tpu_custom_call.1} parent=1 // pred_fallthru
      _
    // Predicated region
    $region30: #{tpu_custom_call.1} parent=1 // pred_check
      _
    $region31: #{tpu_custom_call.1} parent=1 // pred_check_branch
      %79 = sbr.rel (0) target = $region33
    $region32: #{tpu_custom_call.1} parent=1 // pred_region
      %s81 = ssub.s32 8192, 8192
      %82 = vsyncadd [#allocation9], %s81
      %s83 = sshll.u32 [#allocation10], 4
      %s84 = int_to_ptr.vmem [resolvable:$true] %s83
      %89 = dma.hbm_to_vmem [thread:$0]  %s7, 8192, %s84, [#allocation9], 128, 128, 8
    $region33: #{tpu_custom_call.1} parent=1 // pred_fallthru
      _
    // Predicated region
    $region34: #{tpu_custom_call.1} parent=1 // pred_check
      _
    $region35: #{tpu_custom_call.1} parent=1 // pred_check_branch
      %91 = sbr.rel (0) target = $region37
    $region36: #{tpu_custom_call.1} parent=1 // pred_region
      _
    $region37: #{tpu_custom_call.1} parent=1 // pred_fallthru
      _
    // Predicated region
    $region38: #{tpu_custom_call.1} parent=1 // pred_check
      _
    $region39: #{tpu_custom_call.1} parent=1 // pred_check_branch
      %93 = sbr.rel (0) target = $region41
    $region40: #{tpu_custom_call.1} parent=1 // pred_region
      %s95 = ssub.s32 2048, 2048
      %96 = vsyncadd [#allocation12], %s95
      %s97 = sshll.u32 [#allocation11], 4
      %s98 = int_to_ptr.vmem [resolvable:$true] %s97
      %103 = dma.hbm_to_vmem [thread:$0]  %s9, 2048, %s98, [#allocation12], 64, 64, 4
    $region41: #{tpu_custom_call.1} parent=1 // pred_fallthru
      _
    // Predicated region
    $region42: #{tpu_custom_call.1} parent=1 // pred_check
      _
    $region43: #{tpu_custom_call.1} parent=1 // pred_check_branch
      %105 = sbr.rel (0) target = $region45
    $region44: #{tpu_custom_call.1} parent=1 // pred_region
      _
    $region45: #{tpu_custom_call.1} parent=1 // pred_fallthru
      _
    // Predicated region
    $region46: #{tpu_custom_call.1} parent=1 // pred_check
      _
    $region47: #{tpu_custom_call.1} parent=1 // pred_check_branch
      %107 = sbr.rel (0) target = $region49
    $region48: #{tpu_custom_call.1} parent=1 // pred_region
      %s109 = ssub.s32 1024, 1024
      %110 = vsyncadd [#allocation12], %s109
      %s111 = sshll.u32 [#allocation13], 4
      %s112 = int_to_ptr.vmem [resolvable:$true] %s111
      %117 = dma.hbm_to_vmem [thread:$0]  %s11, 1024, %s112, [#allocation12], 64, 64, 4
    $region49: #{tpu_custom_call.1} parent=1 // pred_fallthru
      _
    // Predicated region
    $region50: #{tpu_custom_call.1} parent=1 // pred_check
      _
    $region51: #{tpu_custom_call.1} parent=1 // pred_check_branch
      %119 = sbr.rel (0) target = $region53
    $region52: #{tpu_custom_call.1} parent=1 // pred_region
      _
    $region53: #{tpu_custom_call.1} parent=1 // pred_fallthru
      _
    // Predicated region
    $region54: #{tpu_custom_call.1} parent=1 // pred_check
      _
    $region55: #{tpu_custom_call.1} parent=1 // pred_check_branch
      %121 = sbr.rel (0) target = $region57
    $region56: #{tpu_custom_call.1} parent=1 // pred_region
      %s123 = ssub.s32 1024, 1024
      %124 = vsyncadd [#allocation15], %s123
      %s125 = sshll.u32 [#allocation14], 4
      %s126 = int_to_ptr.vmem [resolvable:$true] %s125
      %131 = dma.hbm_to_vmem [thread:$0]  %s13, 1024, %s126, [#allocation15], 64, 64, 4
    $region57: #{tpu_custom_call.1} parent=1 // pred_fallthru
      _
    // Predicated region
    $region58: #{tpu_custom_call.1} parent=1 // pred_check
      _
    $region59: #{tpu_custom_call.1} parent=1 // pred_check_branch
      %133 = sbr.rel (0) target = $region61
    $region60: #{tpu_custom_call.1} parent=1 // pred_region
      _
    $region61: #{tpu_custom_call.1} parent=1 // pred_fallthru
      _
    // Predicated region
    $region62: #{tpu_custom_call.1} parent=1 // pred_check
      _
    $region63: #{tpu_custom_call.1} parent=1 // pred_check_branch
      %135 = sbr.rel (0) target = $region65
    $region64: #{tpu_custom_call.1} parent=1 // pred_region
      %136 = dma.done [#allocation3], 128
    $region65: #{tpu_custom_call.1} parent=1 // pred_fallthru
      _
    // Predicated region
    $region66: #{tpu_custom_call.1} parent=1 // pred_check
      _
    $region67: #{tpu_custom_call.1} parent=1 // pred_check_branch
      %138 = sbr.rel (0) target = $region69
    $region68: #{tpu_custom_call.1} parent=1 // pred_region
      %139 = dma.done [#allocation6], 1024
    $region69: #{tpu_custom_call.1} parent=1 // pred_fallthru
      _
    // Predicated region
    $region70: #{tpu_custom_call.1} parent=1 // pred_check
      _
    $region71: #{tpu_custom_call.1} parent=1 // pred_check_branch
      %141 = sbr.rel (0) target = $region73
    $region72: #{tpu_custom_call.1} parent=1 // pred_region
      %142 = dma.done [#allocation6], 8192
    $region73: #{tpu_custom_call.1} parent=1 // pred_fallthru
      _
    // Predicated region
    $region74: #{tpu_custom_call.1} parent=1 // pred_check
      _
    $region75: #{tpu_custom_call.1} parent=1 // pred_check_branch
      %144 = sbr.rel (0) target = $region77
    $region76: #{tpu_custom_call.1} parent=1 // pred_region
      %145 = dma.done [#allocation9], 32768
    $region77: #{tpu_custom_call.1} parent=1 // pred_fallthru
      _
    // Predicated region
    $region78: #{tpu_custom_call.1} parent=1 // pred_check
      _
    $region79: #{tpu_custom_call.1} parent=1 // pred_check_branch
      %147 = sbr.rel (0) target = $region81
    $region80: #{tpu_custom_call.1} parent=1 // pred_region
      %148 = dma.done [#allocation9], 8192
    $region81: #{tpu_custom_call.1} parent=1 // pred_fallthru
      _
    // Predicated region
    $region82: #{tpu_custom_call.1} parent=1 // pred_check
      _
    $region83: #{tpu_custom_call.1} parent=1 // pred_check_branch
      %150 = sbr.rel (0) target = $region85
    $region84: #{tpu_custom_call.1} parent=1 // pred_region
      %151 = dma.done [#allocation12], 2048
    $region85: #{tpu_custom_call.1} parent=1 // pred_fallthru
      _
    // Predicated region
    $region86: #{tpu_custom_call.1} parent=1 // pred_check
      _
    $region87: #{tpu_custom_call.1} parent=1 // pred_check_branch
      %153 = sbr.rel (0) target = $region89
    $region88: #{tpu_custom_call.1} parent=1 // pred_region
      %154 = dma.done [#allocation12], 1024
    $region89: #{tpu_custom_call.1} parent=1 // pred_fallthru
      _
    // Predicated region
    $region90: #{tpu_custom_call.1} parent=1 // pred_check
      _
    $region91: #{tpu_custom_call.1} parent=1 // pred_check_branch
      %156 = sbr.rel (0) target = $region93
    $region92: #{tpu_custom_call.1} parent=1 // pred_region
      %157 = dma.done [#allocation15], 1024
    $region93: #{tpu_custom_call.1} parent=1 // pred_fallthru
      _
    %v159 = vld [vmem:[#allocation2] sm:$0xff]
    %v160 = vpack.c.bf16 %v159, %v159
    %v161 = vld [vmem:[#allocation5] sm:$0xf]
    %v162 = vld [vmem:[#allocation5 + $0x4] sm:$0xf]
    %v163 = vld [vmem:[#allocation5 + $0x8] sm:$0xf]
    %v164 = vld [vmem:[#allocation5 + $0xc] sm:$0xf]
    %v165 = vld [vmem:[#allocation5 + $0x10] sm:$0xf]
    %v166 = vld [vmem:[#allocation5 + $0x14] sm:$0xf]
    %v167 = vld [vmem:[#allocation5 + $0x18] sm:$0xf]
    %v168 = vld [vmem:[#allocation5 + $0x1c] sm:$0xf]
    %v169 = vld [vmem:[#allocation5 + $0x20] sm:$0xf]
    %v170 = vld [vmem:[#allocation5 + $0x24] sm:$0xf]
    %v171 = vld [vmem:[#allocation5 + $0x28] sm:$0xf]
    %v172 = vld [vmem:[#allocation5 + $0x2c] sm:$0xf]
    %v173 = vld [vmem:[#allocation5 + $0x30] sm:$0xf]
    %v174 = vld [vmem:[#allocation5 + $0x34] sm:$0xf]
    %v175 = vld [vmem:[#allocation5 + $0x38] sm:$0xf]
    %v176 = vld [vmem:[#allocation5 + $0x3c] sm:$0xf]
    %v177 = vld [vmem:[%s2] sm:$0x1]
    %v179 = vlaneseq
    %v180 = vshrl.u32 %v179, 7
    %v181 = vsub.s32 0, %v180
    %v182 = vrot.slane %v177, %v181
    %v200 = vunpack.c.l.b16 %v161
    %v201 = vunpack.c.l.b16 %v162
    %v202 = vunpack.c.l.b16 %v163
    %v203 = vunpack.c.l.b16 %v164
    %v204 = vunpack.c.l.b16 %v165
    %v205 = vunpack.c.l.b16 %v166
    %v206 = vunpack.c.l.b16 %v167
    %v207 = vunpack.c.l.b16 %v168
    %v208 = vunpack.c.l.b16 %v169
    %v209 = vunpack.c.l.b16 %v170
    %v210 = vunpack.c.l.b16 %v171
    %v211 = vunpack.c.l.b16 %v172
    %v212 = vunpack.c.l.b16 %v173
    %v213 = vunpack.c.l.b16 %v174
    %v214 = vunpack.c.l.b16 %v175
    %v215 = vunpack.c.l.b16 %v176
    %v216 = vpack.c.b16 %v201, %v200
    %v217 = vpack.c.b16 %v203, %v202
    %v218 = vpack.c.b16 %v205, %v204
    %v219 = vpack.c.b16 %v207, %v206
    %v220 = vpack.c.b16 %v209, %v208
    %v221 = vpack.c.b16 %v211, %v210
    %v222 = vpack.c.b16 %v213, %v212
    %v223 = vpack.c.b16 %v215, %v214
    %232 = vmatprep.subr.bf16.mxu0 0
    %233 = vmatpush1.bf16.msra.mxu0 %v216
    %234 = vmatprep.subr.bf16.mxu0 0
    %235 = vmatpush1.bf16.msra.mxu0 %v217
    %236 = vmatprep.subr.bf16.mxu0 0
    %237 = vmatpush1.bf16.msra.mxu0 %v218
    %238 = vmatprep.subr.bf16.mxu0 0
    %239 = vmatpush1.bf16.msra.mxu0 %v219
    %240 = vmatprep.subr.bf16.mxu0 0
    %241 = vmatpush1.bf16.msra.mxu0 %v220
    %242 = vmatprep.subr.bf16.mxu0 0
    %243 = vmatpush1.bf16.msra.mxu0 %v221
    %244 = vmatprep.subr.bf16.mxu0 0
    %245 = vmatpush1.bf16.msra.mxu0 %v222
    %246 = vmatprep.subr.bf16.mxu0 0
    %247 = vmatpush1.bf16.msra.mxu0 %v223
    %248 = vmatprep.subr.bf16.mxu0 0
    %249 = vmatpush1.bf16.msra.mxu0 0
    %250 = vmatprep.subr.bf16.mxu0 0
    %251 = vmatpush1.bf16.msra.mxu0 0
    %252 = vmatprep.subr.bf16.mxu0 0
    %253 = vmatpush1.bf16.msra.mxu0 0
    %254 = vmatprep.subr.bf16.mxu0 0
    %255 = vmatpush1.bf16.msra.mxu0 0
    %256 = vmatprep.subr.bf16.mxu0 0
    %257 = vmatpush1.bf16.msra.mxu0 0
    %258 = vmatprep.subr.bf16.mxu0 0
    %259 = vmatpush1.bf16.msra.mxu0 0
    %260 = vmatprep.subr.bf16.mxu0 0
    %261 = vmatpush1.bf16.msra.mxu0 0
    %262 = vmatprep.subr.bf16.mxu0 0
    %263 = vmatpush1.bf16.msra.mxu0 0
    %264 = vmatprep.mubr.bf16.mxu0 0
    %265 = vmatmul.mubr.bf16.gmra.mrb[0].mxu0 %v160
    %v266 = vpop.f32.mrb[0].mxu0
    %v267 = vadd.f32 %v182, %v266
    %v268 = vpop.f32.mrb[0].mxu0
    %v269 = vpop.f32.mrb[0].mxu0
    %v270 = vpop.f32.mrb[0].mxu0
    %271 = vdwg.mxu0
    %v272 = vmax.f32 %v267, 0.0
    %v273 = vpack.c.bf16 %v272, %v272
    %v274 = vld [vmem:[#allocation7] sm:$0xff]
    %v275 = vld [vmem:[#allocation7 + $0x8] sm:$0xff]
    %v276 = vld [vmem:[#allocation7 + $0x10] sm:$0xff]
    %v277 = vld [vmem:[#allocation7 + $0x18] sm:$0xff]
    %v278 = vld [vmem:[#allocation7 + $0x20] sm:$0xff]
    %v279 = vld [vmem:[#allocation7 + $0x28] sm:$0xff]
    %v280 = vld [vmem:[#allocation7 + $0x30] sm:$0xff]
    %v281 = vld [vmem:[#allocation7 + $0x38] sm:$0xff]
    %v282 = vld [vmem:[#allocation7 + $0x40] sm:$0xff]
    %v283 = vld [vmem:[#allocation7 + $0x48] sm:$0xff]
    %v284 = vld [vmem:[#allocation7 + $0x50] sm:$0xff]
    %v285 = vld [vmem:[#allocation7 + $0x58] sm:$0xff]
    %v286 = vld [vmem:[#allocation7 + $0x60] sm:$0xff]
    %v287 = vld [vmem:[#allocation7 + $0x68] sm:$0xff]
    %v288 = vld [vmem:[#allocation7 + $0x70] sm:$0xff]
    %v289 = vld [vmem:[#allocation7 + $0x78] sm:$0xff]
    %v290 = vld [vmem:[#allocation7 + $0x80] sm:$0xff]
    %v291 = vld [vmem:[#allocation7 + $0x88] sm:$0xff]
    %v292 = vld [vmem:[#allocation7 + $0x90] sm:$0xff]
    %v293 = vld [vmem:[#allocation7 + $0x98] sm:$0xff]
    %v294 = vld [vmem:[#allocation7 + $0xa0] sm:$0xff]
    %v295 = vld [vmem:[#allocation7 + $0xa8] sm:$0xff]
    %v296 = vld [vmem:[#allocation7 + $0xb0] sm:$0xff]
    %v297 = vld [vmem:[#allocation7 + $0xb8] sm:$0xff]
    %v298 = vld [vmem:[#allocation7 + $0xc0] sm:$0xff]
    %v299 = vld [vmem:[#allocation7 + $0xc8] sm:$0xff]
    %v300 = vld [vmem:[#allocation7 + $0xd0] sm:$0xff]
    %v301 = vld [vmem:[#allocation7 + $0xd8] sm:$0xff]
    %v302 = vld [vmem:[#allocation7 + $0xe0] sm:$0xff]
    %v303 = vld [vmem:[#allocation7 + $0xe8] sm:$0xff]
    %v304 = vld [vmem:[#allocation7 + $0xf0] sm:$0xff]
    %v305 = vld [vmem:[#allocation7 + $0xf8] sm:$0xff]
    %v306 = vld [vmem:[#allocation7 + $0x100] sm:$0xff]
    %v307 = vld [vmem:[#allocation7 + $0x108] sm:$0xff]
    %v308 = vld [vmem:[#allocation7 + $0x110] sm:$0xff]
    %v309 = vld [vmem:[#allocation7 + $0x118] sm:$0xff]
    %v310 = vld [vmem:[#allocation7 + $0x120] sm:$0xff]
    %v311 = vld [vmem:[#allocation7 + $0x128] sm:$0xff]
    %v312 = vld [vmem:[#allocation7 + $0x130] sm:$0xff]
    %v313 = vld [vmem:[#allocation7 + $0x138] sm:$0xff]
    %v314 = vld [vmem:[#allocation7 + $0x140] sm:$0xff]
    %v315 = vld [vmem:[#allocation7 + $0x148] sm:$0xff]
    %v316 = vld [vmem:[#allocation7 + $0x150] sm:$0xff]
    %v317 = vld [vmem:[#allocation7 + $0x158] sm:$0xff]
    %v318 = vld [vmem:[#allocation7 + $0x160] sm:$0xff]
    %v319 = vld [vmem:[#allocation7 + $0x168] sm:$0xff]
    %v320 = vld [vmem:[#allocation7 + $0x170] sm:$0xff]
    %v321 = vld [vmem:[#allocation7 + $0x178] sm:$0xff]
    %v322 = vld [vmem:[#allocation7 + $0x180] sm:$0xff]
    %v323 = vld [vmem:[#allocation7 + $0x188] sm:$0xff]
    %v324 = vld [vmem:[#allocation7 + $0x190] sm:$0xff]
    %v325 = vld [vmem:[#allocation7 + $0x198] sm:$0xff]
    %v326 = vld [vmem:[#allocation7 + $0x1a0] sm:$0xff]
    %v327 = vld [vmem:[#allocation7 + $0x1a8] sm:$0xff]
    %v328 = vld [vmem:[#allocation7 + $0x1b0] sm:$0xff]
    %v329 = vld [vmem:[#allocation7 + $0x1b8] sm:$0xff]
    %v330 = vld [vmem:[#allocation7 + $0x1c0] sm:$0xff]
    %v331 = vld [vmem:[#allocation7 + $0x1c8] sm:$0xff]
    %v332 = vld [vmem:[#allocation7 + $0x1d0] sm:$0xff]
    %v333 = vld [vmem:[#allocation7 + $0x1d8] sm:$0xff]
    %v334 = vld [vmem:[#allocation7 + $0x1e0] sm:$0xff]
    %v335 = vld [vmem:[#allocation7 + $0x1e8] sm:$0xff]
    %v336 = vld [vmem:[#allocation7 + $0x1f0] sm:$0xff]
    %v337 = vld [vmem:[#allocation7 + $0x1f8] sm:$0xff]
    %v338 = vld [vmem:[%s4] sm:$0xff]
    %v340 = vlaneseq
    %v341 = vshrl.u32 %v340, 7
    %v342 = vsub.s32 0, %v341
    %v343 = vrot.slane %v338, %v342
    %v344 = vlaneseq
    %v345 = vshrl.u32 %v344, 7
    %v346 = vsub.s32 1, %v345
    %v347 = vrot.slane %v338, %v346
    %v348 = vlaneseq
    %v349 = vshrl.u32 %v348, 7
    %v350 = vsub.s32 2, %v349
    %v351 = vrot.slane %v338, %v350
    %v352 = vlaneseq
    %v353 = vshrl.u32 %v352, 7
    %v354 = vsub.s32 3, %v353
    %v355 = vrot.slane %v338, %v354
    %v356 = vlaneseq
    %v357 = vshrl.u32 %v356, 7
    %v358 = vsub.s32 4, %v357
    %v359 = vrot.slane %v338, %v358
    %v360 = vlaneseq
    %v361 = vshrl.u32 %v360, 7
    %v362 = vsub.s32 5, %v361
    %v363 = vrot.slane %v338, %v362
    %v364 = vlaneseq
    %v365 = vshrl.u32 %v364, 7
    %v366 = vsub.s32 6, %v365
    %v367 = vrot.slane %v338, %v366
    %v368 = vlaneseq
    %v369 = vshrl.u32 %v368, 7
    %v370 = vsub.s32 7, %v369
    %v371 = vrot.slane %v338, %v370
    %v444 = vunpack.c.l.b16 %v274
    %v445 = vunpack.c.h.b16 %v274
    %v446 = vunpack.c.l.b16 %v275
    %v447 = vunpack.c.h.b16 %v275
    %v448 = vunpack.c.l.b16 %v276
    %v449 = vunpack.c.h.b16 %v276
    %v450 = vunpack.c.l.b16 %v277
    %v451 = vunpack.c.h.b16 %v277
    %v452 = vunpack.c.l.b16 %v278
    %v453 = vunpack.c.h.b16 %v278
    %v454 = vunpack.c.l.b16 %v279
    %v455 = vunpack.c.h.b16 %v279
    %v456 = vunpack.c.l.b16 %v280
    %v457 = vunpack.c.h.b16 %v280
    %v458 = vunpack.c.l.b16 %v281
    %v459 = vunpack.c.h.b16 %v281
    %v460 = vunpack.c.l.b16 %v282
    %v461 = vunpack.c.h.b16 %v282
    %v462 = vunpack.c.l.b16 %v283
    %v463 = vunpack.c.h.b16 %v283
    %v464 = vunpack.c.l.b16 %v284
    %v465 = vunpack.c.h.b16 %v284
    %v466 = vunpack.c.l.b16 %v285
    %v467 = vunpack.c.h.b16 %v285
    %v468 = vunpack.c.l.b16 %v286
    %v469 = vunpack.c.h.b16 %v286
    %v470 = vunpack.c.l.b16 %v287
    %v471 = vunpack.c.h.b16 %v287
    %v472 = vunpack.c.l.b16 %v288
    %v473 = vunpack.c.h.b16 %v288
    %v474 = vunpack.c.l.b16 %v289
    %v475 = vunpack.c.h.b16 %v289
    %v476 = vunpack.c.l.b16 %v290
    %v477 = vunpack.c.h.b16 %v290
    %v478 = vunpack.c.l.b16 %v291
    %v479 = vunpack.c.h.b16 %v291
    %v480 = vunpack.c.l.b16 %v292
    %v481 = vunpack.c.h.b16 %v292
    %v482 = vunpack.c.l.b16 %v293
    %v483 = vunpack.c.h.b16 %v293
    %v484 = vunpack.c.l.b16 %v294
    %v485 = vunpack.c.h.b16 %v294
    %v486 = vunpack.c.l.b16 %v295
    %v487 = vunpack.c.h.b16 %v295
    %v488 = vunpack.c.l.b16 %v296
    %v489 = vunpack.c.h.b16 %v296
    %v490 = vunpack.c.l.b16 %v297
    %v491 = vunpack.c.h.b16 %v297
    %v492 = vunpack.c.l.b16 %v298
    %v493 = vunpack.c.h.b16 %v298
    %v494 = vunpack.c.l.b16 %v299
    %v495 = vunpack.c.h.b16 %v299
    %v496 = vunpack.c.l.b16 %v300
    %v497 = vunpack.c.h.b16 %v300
    %v498 = vunpack.c.l.b16 %v301
    %v499 = vunpack.c.h.b16 %v301
    %v500 = vunpack.c.l.b16 %v302
    %v501 = vunpack.c.h.b16 %v302
    %v502 = vunpack.c.l.b16 %v303
    %v503 = vunpack.c.h.b16 %v303
    %v504 = vunpack.c.l.b16 %v304
    %v505 = vunpack.c.h.b16 %v304
    %v506 = vunpack.c.l.b16 %v305
    %v507 = vunpack.c.h.b16 %v305
    %v508 = vunpack.c.l.b16 %v306
    %v509 = vunpack.c.h.b16 %v306
    %v510 = vunpack.c.l.b16 %v307
    %v511 = vunpack.c.h.b16 %v307
    %v512 = vunpack.c.l.b16 %v308
    %v513 = vunpack.c.h.b16 %v308
    %v514 = vunpack.c.l.b16 %v309
    %v515 = vunpack.c.h.b16 %v309
    %v516 = vunpack.c.l.b16 %v310
    %v517 = vunpack.c.h.b16 %v310
    %v518 = vunpack.c.l.b16 %v311
    %v519 = vunpack.c.h.b16 %v311
    %v520 = vunpack.c.l.b16 %v312
    %v521 = vunpack.c.h.b16 %v312
    %v522 = vunpack.c.l.b16 %v313
    %v523 = vunpack.c.h.b16 %v313
    %v524 = vunpack.c.l.b16 %v314
    %v525 = vunpack.c.h.b16 %v314
    %v526 = vunpack.c.l.b16 %v315
    %v527 = vunpack.c.h.b16 %v315
    %v528 = vunpack.c.l.b16 %v316
    %v529 = vunpack.c.h.b16 %v316
    %v530 = vunpack.c.l.b16 %v317
    %v531 = vunpack.c.h.b16 %v317
    %v532 = vunpack.c.l.b16 %v318
    %v533 = vunpack.c.h.b16 %v318
    %v534 = vunpack.c.l.b16 %v319
    %v535 = vunpack.c.h.b16 %v319
    %v536 = vunpack.c.l.b16 %v320
    %v537 = vunpack.c.h.b16 %v320
    %v538 = vunpack.c.l.b16 %v321
    %v539 = vunpack.c.h.b16 %v321
    %v540 = vunpack.c.l.b16 %v322
    %v541 = vunpack.c.h.b16 %v322
    %v542 = vunpack.c.l.b16 %v323
    %v543 = vunpack.c.h.b16 %v323
    %v544 = vunpack.c.l.b16 %v324
    %v545 = vunpack.c.h.b16 %v324
    %v546 = vunpack.c.l.b16 %v325
    %v547 = vunpack.c.h.b16 %v325
    %v548 = vunpack.c.l.b16 %v326
    %v549 = vunpack.c.h.b16 %v326
    %v550 = vunpack.c.l.b16 %v327
    %v551 = vunpack.c.h.b16 %v327
    %v552 = vunpack.c.l.b16 %v328
    %v553 = vunpack.c.h.b16 %v328
    %v554 = vunpack.c.l.b16 %v329
    %v555 = vunpack.c.h.b16 %v329
    %v556 = vunpack.c.l.b16 %v330
    %v557 = vunpack.c.h.b16 %v330
    %v558 = vunpack.c.l.b16 %v331
    %v559 = vunpack.c.h.b16 %v331
    %v560 = vunpack.c.l.b16 %v332
    %v561 = vunpack.c.h.b16 %v332
    %v562 = vunpack.c.l.b16 %v333
    %v563 = vunpack.c.h.b16 %v333
    %v564 = vunpack.c.l.b16 %v334
    %v565 = vunpack.c.h.b16 %v334
    %v566 = vunpack.c.l.b16 %v335
    %v567 = vunpack.c.h.b16 %v335
    %v568 = vunpack.c.l.b16 %v336
    %v569 = vunpack.c.h.b16 %v336
    %v570 = vunpack.c.l.b16 %v337
    %v571 = vunpack.c.h.b16 %v337
    %v572 = vpack.c.b16 %v452, %v444
    %v573 = vpack.c.b16 %v453, %v445
    %v574 = vpack.c.b16 %v454, %v446
    %v575 = vpack.c.b16 %v455, %v447
    %v576 = vpack.c.b16 %v456, %v448
    %v577 = vpack.c.b16 %v457, %v449
    %v578 = vpack.c.b16 %v458, %v450
    %v579 = vpack.c.b16 %v459, %v451
    %v580 = vpack.c.b16 %v468, %v460
    %v581 = vpack.c.b16 %v469, %v461
    %v582 = vpack.c.b16 %v470, %v462
    %v583 = vpack.c.b16 %v471, %v463
    %v584 = vpack.c.b16 %v472, %v464
    %v585 = vpack.c.b16 %v473, %v465
    %v586 = vpack.c.b16 %v474, %v466
    %v587 = vpack.c.b16 %v475, %v467
    %v588 = vpack.c.b16 %v484, %v476
    %v589 = vpack.c.b16 %v485, %v477
    %v590 = vpack.c.b16 %v486, %v478
    %v591 = vpack.c.b16 %v487, %v479
    %v592 = vpack.c.b16 %v488, %v480
    %v593 = vpack.c.b16 %v489, %v481
    %v594 = vpack.c.b16 %v490, %v482
    %v595 = vpack.c.b16 %v491, %v483
    %v596 = vpack.c.b16 %v500, %v492
    %v597 = vpack.c.b16 %v501, %v493
    %v598 = vpack.c.b16 %v502, %v494
    %v599 = vpack.c.b16 %v503, %v495
    %v600 = vpack.c.b16 %v504, %v496
    %v601 = vpack.c.b16 %v505, %v497
    %v602 = vpack.c.b16 %v506, %v498
    %v603 = vpack.c.b16 %v507, %v499
    %v604 = vpack.c.b16 %v516, %v508
    %v605 = vpack.c.b16 %v517, %v509
    %v606 = vpack.c.b16 %v518, %v510
    %v607 = vpack.c.b16 %v519, %v511
    %v608 = vpack.c.b16 %v520, %v512
    %v609 = vpack.c.b16 %v521, %v513
    %v610 = vpack.c.b16 %v522, %v514
    %v611 = vpack.c.b16 %v523, %v515
    %v612 = vpack.c.b16 %v532, %v524
    %v613 = vpack.c.b16 %v533, %v525
    %v614 = vpack.c.b16 %v534, %v526
    %v615 = vpack.c.b16 %v535, %v527
    %v616 = vpack.c.b16 %v536, %v528
    %v617 = vpack.c.b16 %v537, %v529
    %v618 = vpack.c.b16 %v538, %v530
    %v619 = vpack.c.b16 %v539, %v531
    %v620 = vpack.c.b16 %v548, %v540
    %v621 = vpack.c.b16 %v549, %v541
    %v622 = vpack.c.b16 %v550, %v542
    %v623 = vpack.c.b16 %v551, %v543
    %v624 = vpack.c.b16 %v552, %v544
    %v625 = vpack.c.b16 %v553, %v545
    %v626 = vpack.c.b16 %v554, %v546
    %v627 = vpack.c.b16 %v555, %v547
    %v628 = vpack.c.b16 %v564, %v556
    %v629 = vpack.c.b16 %v565, %v557
    %v630 = vpack.c.b16 %v566, %v558
    %v631 = vpack.c.b16 %v567, %v559
    %v632 = vpack.c.b16 %v568, %v560
    %v633 = vpack.c.b16 %v569, %v561
    %v634 = vpack.c.b16 %v570, %v562
    %v635 = vpack.c.b16 %v571, %v563
    %700 = vmatprep.subr.bf16.mxu0 %v573
    %701 = vmatpush1.bf16.msra.mxu0 %v572
    %702 = vmatprep.subr.bf16.mxu0 %v581
    %703 = vmatpush1.bf16.msra.mxu0 %v580
    %704 = vmatprep.subr.bf16.mxu0 %v589
    %705 = vmatpush1.bf16.msra.mxu0 %v588
    %706 = vmatprep.subr.bf16.mxu0 %v597
    %707 = vmatpush1.bf16.msra.mxu0 %v596
    %708 = vmatprep.subr.bf16.mxu0 %v605
    %709 = vmatpush1.bf16.msra.mxu0 %v604
    %710 = vmatprep.subr.bf16.mxu0 %v613
    %711 = vmatpush1.bf16.msra.mxu0 %v612
    %712 = vmatprep.subr.bf16.mxu0 %v621
    %713 = vmatpush1.bf16.msra.mxu0 %v620
    %714 = vmatprep.subr.bf16.mxu0 %v629
    %715 = vmatpush1.bf16.msra.mxu0 %v628
    %716 = vmatprep.subr.bf16.mxu0 0
    %717 = vmatpush1.bf16.msra.mxu0 0
    %718 = vmatprep.subr.bf16.mxu0 0
    %719 = vmatpush1.bf16.msra.mxu0 0
    %720 = vmatprep.subr.bf16.mxu0 0
    %721 = vmatpush1.bf16.msra.mxu0 0
    %722 = vmatprep.subr.bf16.mxu0 0
    %723 = vmatpush1.bf16.msra.mxu0 0
    %724 = vmatprep.subr.bf16.mxu0 0
    %725 = vmatpush1.bf16.msra.mxu0 0
    %726 = vmatprep.subr.bf16.mxu0 0
    %727 = vmatpush1.bf16.msra.mxu0 0
    %728 = vmatprep.subr.bf16.mxu0 0
    %729 = vmatpush1.bf16.msra.mxu0 0
    %730 = vmatprep.subr.bf16.mxu0 0
    %731 = vmatpush1.bf16.msra.mxu0 0
    %732 = vmatprep.mubr.bf16.mxu0 0
    %733 = vmatmul.mubr.bf16.gmra.mrb[0].mxu0 %v273
    %v734 = vpop.f32.mrb[0].mxu0
    %v735 = vadd.f32 %v343, %v734
    %v736 = vpop.f32.mrb[0].mxu0
    %v737 = vadd.f32 %v347, %v736
    %v738 = vpop.f32.mrb[0].mxu0
    %v739 = vpop.f32.mrb[0].mxu0
    %740 = vdwg.mxu0
    %741 = vmatprep.subr.bf16.mxu0 %v575
    %742 = vmatpush1.bf16.msra.mxu0 %v574
    %743 = vmatprep.subr.bf16.mxu0 %v583
    %744 = vmatpush1.bf16.msra.mxu0 %v582
    %745 = vmatprep.subr.bf16.mxu0 %v591
    %746 = vmatpush1.bf16.msra.mxu0 %v590
    %747 = vmatprep.subr.bf16.mxu0 %v599
    %748 = vmatpush1.bf16.msra.mxu0 %v598
    %749 = vmatprep.subr.bf16.mxu0 %v607
    %750 = vmatpush1.bf16.msra.mxu0 %v606
    %751 = vmatprep.subr.bf16.mxu0 %v615
    %752 = vmatpush1.bf16.msra.mxu0 %v614
    %753 = vmatprep.subr.bf16.mxu0 %v623
    %754 = vmatpush1.bf16.msra.mxu0 %v622
    %755 = vmatprep.subr.bf16.mxu0 %v631
    %756 = vmatpush1.bf16.msra.mxu0 %v630
    %757 = vmatprep.subr.bf16.mxu0 0
    %758 = vmatpush1.bf16.msra.mxu0 0
    %759 = vmatprep.subr.bf16.mxu0 0
    %760 = vmatpush1.bf16.msra.mxu0 0
    %761 = vmatprep.subr.bf16.mxu0 0
    %762 = vmatpush1.bf16.msra.mxu0 0
    %763 = vmatprep.subr.bf16.mxu0 0
    %764 = vmatpush1.bf16.msra.mxu0 0
    %765 = vmatprep.subr.bf16.mxu0 0
    %766 = vmatpush1.bf16.msra.mxu0 0
    %767 = vmatprep.subr.bf16.mxu0 0
    %768 = vmatpush1.bf16.msra.mxu0 0
    %769 = vmatprep.subr.bf16.mxu0 0
    %770 = vmatpush1.bf16.msra.mxu0 0
    %771 = vmatprep.subr.bf16.mxu0 0
    %772 = vmatpush1.bf16.msra.mxu0 0
    %773 = vmatprep.mubr.bf16.mxu0 0
    %774 = vmatmul.mubr.bf16.gmra.mrb[0].mxu0 %v273
    %v775 = vpop.f32.mrb[0].mxu0
    %v776 = vadd.f32 %v351, %v775
    %v777 = vpop.f32.mrb[0].mxu0
    %v778 = vadd.f32 %v355, %v777
    %v779 = vpop.f32.mrb[0].mxu0
    %v780 = vpop.f32.mrb[0].mxu0
    %781 = vdwg.mxu0
    %782 = vmatprep.subr.bf16.mxu0 %v577
    %783 = vmatpush1.bf16.msra.mxu0 %v576
    %784 = vmatprep.subr.bf16.mxu0 %v585
    %785 = vmatpush1.bf16.msra.mxu0 %v584
    %786 = vmatprep.subr.bf16.mxu0 %v593
    %787 = vmatpush1.bf16.msra.mxu0 %v592
    %788 = vmatprep.subr.bf16.mxu0 %v601
    %789 = vmatpush1.bf16.msra.mxu0 %v600
    %790 = vmatprep.subr.bf16.mxu0 %v609
    %791 = vmatpush1.bf16.msra.mxu0 %v608
    %792 = vmatprep.subr.bf16.mxu0 %v617
    %793 = vmatpush1.bf16.msra.mxu0 %v616
    %794 = vmatprep.subr.bf16.mxu0 %v625
    %795 = vmatpush1.bf16.msra.mxu0 %v624
    %796 = vmatprep.subr.bf16.mxu0 %v633
    %797 = vmatpush1.bf16.msra.mxu0 %v632
    %798 = vmatprep.subr.bf16.mxu0 0
    %799 = vmatpush1.bf16.msra.mxu0 0
    %800 = vmatprep.subr.bf16.mxu0 0
    %801 = vmatpush1.bf16.msra.mxu0 0
    %802 = vmatprep.subr.bf16.mxu0 0
    %803 = vmatpush1.bf16.msra.mxu0 0
    %804 = vmatprep.subr.bf16.mxu0 0
    %805 = vmatpush1.bf16.msra.mxu0 0
    %806 = vmatprep.subr.bf16.mxu0 0
    %807 = vmatpush1.bf16.msra.mxu0 0
    %808 = vmatprep.subr.bf16.mxu0 0
    %809 = vmatpush1.bf16.msra.mxu0 0
    %810 = vmatprep.subr.bf16.mxu0 0
    %811 = vmatpush1.bf16.msra.mxu0 0
    %812 = vmatprep.subr.bf16.mxu0 0
    %813 = vmatpush1.bf16.msra.mxu0 0
    %814 = vmatprep.mubr.bf16.mxu0 0
    %815 = vmatmul.mubr.bf16.gmra.mrb[0].mxu0 %v273
    %v816 = vpop.f32.mrb[0].mxu0
    %v817 = vadd.f32 %v359, %v816
    %v818 = vpop.f32.mrb[0].mxu0
    %v819 = vadd.f32 %v363, %v818
    %v820 = vpop.f32.mrb[0].mxu0
    %v821 = vpop.f32.mrb[0].mxu0
    %822 = vdwg.mxu0
    %823 = vmatprep.subr.bf16.mxu0 %v579
    %824 = vmatpush1.bf16.msra.mxu0 %v578
    %825 = vmatprep.subr.bf16.mxu0 %v587
    %826 = vmatpush1.bf16.msra.mxu0 %v586
    %827 = vmatprep.subr.bf16.mxu0 %v595
    %828 = vmatpush1.bf16.msra.mxu0 %v594
    %829 = vmatprep.subr.bf16.mxu0 %v603
    %830 = vmatpush1.bf16.msra.mxu0 %v602
    %831 = vmatprep.subr.bf16.mxu0 %v611
    %832 = vmatpush1.bf16.msra.mxu0 %v610
    %833 = vmatprep.subr.bf16.mxu0 %v619
    %834 = vmatpush1.bf16.msra.mxu0 %v618
    %835 = vmatprep.subr.bf16.mxu0 %v627
    %836 = vmatpush1.bf16.msra.mxu0 %v626
    %837 = vmatprep.subr.bf16.mxu0 %v635
    %838 = vmatpush1.bf16.msra.mxu0 %v634
    %839 = vmatprep.subr.bf16.mxu0 0
    %840 = vmatpush1.bf16.msra.mxu0 0
    %841 = vmatprep.subr.bf16.mxu0 0
    %842 = vmatpush1.bf16.msra.mxu0 0
    %843 = vmatprep.subr.bf16.mxu0 0
    %844 = vmatpush1.bf16.msra.mxu0 0
    %845 = vmatprep.subr.bf16.mxu0 0
    %846 = vmatpush1.bf16.msra.mxu0 0
    %847 = vmatprep.subr.bf16.mxu0 0
    %848 = vmatpush1.bf16.msra.mxu0 0
    %849 = vmatprep.subr.bf16.mxu0 0
    %850 = vmatpush1.bf16.msra.mxu0 0
    %851 = vmatprep.subr.bf16.mxu0 0
    %852 = vmatpush1.bf16.msra.mxu0 0
    %853 = vmatprep.subr.bf16.mxu0 0
    %854 = vmatpush1.bf16.msra.mxu0 0
    %855 = vmatprep.mubr.bf16.mxu0 0
    %856 = vmatmul.mubr.bf16.gmra.mrb[0].mxu0 %v273
    %v857 = vpop.f32.mrb[0].mxu0
    %v858 = vadd.f32 %v367, %v857
    %v859 = vpop.f32.mrb[0].mxu0
    %v860 = vadd.f32 %v371, %v859
    %v861 = vpop.f32.mrb[0].mxu0
    %v862 = vpop.f32.mrb[0].mxu0
    %863 = vdwg.mxu0
    %v864 = vmax.f32 %v735, 0.0
    %v865 = vmax.f32 %v737, 0.0
    %v866 = vmax.f32 %v776, 0.0
    %v867 = vmax.f32 %v778, 0.0
    %v868 = vmax.f32 %v817, 0.0
    %v869 = vmax.f32 %v819, 0.0
    %v870 = vmax.f32 %v858, 0.0
    %v871 = vmax.f32 %v860, 0.0
    %v872 = vpack.c.bf16 %v864, %v864
    %v873 = vpack.c.bf16 %v865, %v865
    %v874 = vpack.c.bf16 %v866, %v866
    %v875 = vpack.c.bf16 %v867, %v867
    %v876 = vpack.c.bf16 %v868, %v868
    %v877 = vpack.c.bf16 %v869, %v869
    %v878 = vpack.c.bf16 %v870, %v870
    %v879 = vpack.c.bf16 %v871, %v871
    %v880 = vld [vmem:[#allocation8] sm:$0xff]
    %v881 = vld [vmem:[#allocation8 + $0x8] sm:$0xff]
    %v882 = vld [vmem:[#allocation8 + $0x10] sm:$0xff]
    %v883 = vld [vmem:[#allocation8 + $0x18] sm:$0xff]
    %v884 = vld [vmem:[#allocation8 + $0x20] sm:$0xff]
    %v885 = vld [vmem:[#allocation8 + $0x28] sm:$0xff]
    %v886 = vld [vmem:[#allocation8 + $0x30] sm:$0xff]
    %v887 = vld [vmem:[#allocation8 + $0x38] sm:$0xff]
    %v888 = vld [vmem:[#allocation8 + $0x40] sm:$0xff]
    %v889 = vld [vmem:[#allocation8 + $0x48] sm:$0xff]
    %v890 = vld [vmem:[#allocation8 + $0x50] sm:$0xff]
    %v891 = vld [vmem:[#allocation8 + $0x58] sm:$0xff]
    %v892 = vld [vmem:[#allocation8 + $0x60] sm:$0xff]
    %v893 = vld [vmem:[#allocation8 + $0x68] sm:$0xff]
    %v894 = vld [vmem:[#allocation8 + $0x70] sm:$0xff]
    %v895 = vld [vmem:[#allocation8 + $0x78] sm:$0xff]
    %v896 = vld [vmem:[#allocation8 + $0x80] sm:$0xff]
    %v897 = vld [vmem:[#allocation8 + $0x88] sm:$0xff]
    %v898 = vld [vmem:[#allocation8 + $0x90] sm:$0xff]
    %v899 = vld [vmem:[#allocation8 + $0x98] sm:$0xff]
    %v900 = vld [vmem:[#allocation8 + $0xa0] sm:$0xff]
    %v901 = vld [vmem:[#allocation8 + $0xa8] sm:$0xff]
    %v902 = vld [vmem:[#allocation8 + $0xb0] sm:$0xff]
    %v903 = vld [vmem:[#allocation8 + $0xb8] sm:$0xff]
    %v904 = vld [vmem:[#allocation8 + $0xc0] sm:$0xff]
    %v905 = vld [vmem:[#allocation8 + $0xc8] sm:$0xff]
    %v906 = vld [vmem:[#allocation8 + $0xd0] sm:$0xff]
    %v907 = vld [vmem:[#allocation8 + $0xd8] sm:$0xff]
    %v908 = vld [vmem:[#allocation8 + $0xe0] sm:$0xff]
    %v909 = vld [vmem:[#allocation8 + $0xe8] sm:$0xff]
    %v910 = vld [vmem:[#allocation8 + $0xf0] sm:$0xff]
    %v911 = vld [vmem:[#allocation8 + $0xf8] sm:$0xff]
    %v912 = vld [vmem:[#allocation8 + $0x100] sm:$0xff]
    %v913 = vld [vmem:[#allocation8 + $0x108] sm:$0xff]
    %v914 = vld [vmem:[#allocation8 + $0x110] sm:$0xff]
    %v915 = vld [vmem:[#allocation8 + $0x118] sm:$0xff]
    %v916 = vld [vmem:[#allocation8 + $0x120] sm:$0xff]
    %v917 = vld [vmem:[#allocation8 + $0x128] sm:$0xff]
    %v918 = vld [vmem:[#allocation8 + $0x130] sm:$0xff]
    %v919 = vld [vmem:[#allocation8 + $0x138] sm:$0xff]
    %v920 = vld [vmem:[#allocation8 + $0x140] sm:$0xff]
    %v921 = vld [vmem:[#allocation8 + $0x148] sm:$0xff]
    %v922 = vld [vmem:[#allocation8 + $0x150] sm:$0xff]
    %v923 = vld [vmem:[#allocation8 + $0x158] sm:$0xff]
    %v924 = vld [vmem:[#allocation8 + $0x160] sm:$0xff]
    %v925 = vld [vmem:[#allocation8 + $0x168] sm:$0xff]
    %v926 = vld [vmem:[#allocation8 + $0x170] sm:$0xff]
    %v927 = vld [vmem:[#allocation8 + $0x178] sm:$0xff]
    %v928 = vld [vmem:[#allocation8 + $0x180] sm:$0xff]
    %v929 = vld [vmem:[#allocation8 + $0x188] sm:$0xff]
    %v930 = vld [vmem:[#allocation8 + $0x190] sm:$0xff]
    %v931 = vld [vmem:[#allocation8 + $0x198] sm:$0xff]
    %v932 = vld [vmem:[#allocation8 + $0x1a0] sm:$0xff]
    %v933 = vld [vmem:[#allocation8 + $0x1a8] sm:$0xff]
    %v934 = vld [vmem:[#allocation8 + $0x1b0] sm:$0xff]
    %v935 = vld [vmem:[#allocation8 + $0x1b8] sm:$0xff]
    %v936 = vld [vmem:[#allocation8 + $0x1c0] sm:$0xff]
    %v937 = vld [vmem:[#allocation8 + $0x1c8] sm:$0xff]
    %v938 = vld [vmem:[#allocation8 + $0x1d0] sm:$0xff]
    %v939 = vld [vmem:[#allocation8 + $0x1d8] sm:$0xff]
    %v940 = vld [vmem:[#allocation8 + $0x1e0] sm:$0xff]
    %v941 = vld [vmem:[#allocation8 + $0x1e8] sm:$0xff]
    %v942 = vld [vmem:[#allocation8 + $0x1f0] sm:$0xff]
    %v943 = vld [vmem:[#allocation8 + $0x1f8] sm:$0xff]
    %v944 = vld [vmem:[#allocation8 + $0x200] sm:$0xff]
    %v945 = vld [vmem:[#allocation8 + $0x208] sm:$0xff]
    %v946 = vld [vmem:[#allocation8 + $0x210] sm:$0xff]
    %v947 = vld [vmem:[#allocation8 + $0x218] sm:$0xff]
    %v948 = vld [vmem:[#allocation8 + $0x220] sm:$0xff]
    %v949 = vld [vmem:[#allocation8 + $0x228] sm:$0xff]
    %v950 = vld [vmem:[#allocation8 + $0x230] sm:$0xff]
    %v951 = vld [vmem:[#allocation8 + $0x238] sm:$0xff]
    %v952 = vld [vmem:[#allocation8 + $0x240] sm:$0xff]
    %v953 = vld [vmem:[#allocation8 + $0x248] sm:$0xff]
    %v954 = vld [vmem:[#allocation8 + $0x250] sm:$0xff]
    %v955 = vld [vmem:[#allocation8 + $0x258] sm:$0xff]
    %v956 = vld [vmem:[#allocation8 + $0x260] sm:$0xff]
    %v957 = vld [vmem:[#allocation8 + $0x268] sm:$0xff]
    %v958 = vld [vmem:[#allocation8 + $0x270] sm:$0xff]
    %v959 = vld [vmem:[#allocation8 + $0x278] sm:$0xff]
    %v960 = vld [vmem:[#allocation8 + $0x280] sm:$0xff]
    %v961 = vld [vmem:[#allocation8 + $0x288] sm:$0xff]
    %v962 = vld [vmem:[#allocation8 + $0x290] sm:$0xff]
    %v963 = vld [vmem:[#allocation8 + $0x298] sm:$0xff]
    %v964 = vld [vmem:[#allocation8 + $0x2a0] sm:$0xff]
    %v965 = vld [vmem:[#allocation8 + $0x2a8] sm:$0xff]
    %v966 = vld [vmem:[#allocation8 + $0x2b0] sm:$0xff]
    %v967 = vld [vmem:[#allocation8 + $0x2b8] sm:$0xff]
    %v968 = vld [vmem:[#allocation8 + $0x2c0] sm:$0xff]
    %v969 = vld [vmem:[#allocation8 + $0x2c8] sm:$0xff]
    %v970 = vld [vmem:[#allocation8 + $0x2d0] sm:$0xff]
    %v971 = vld [vmem:[#allocation8 + $0x2d8] sm:$0xff]
    %v972 = vld [vmem:[#allocation8 + $0x2e0] sm:$0xff]
    %v973 = vld [vmem:[#allocation8 + $0x2e8] sm:$0xff]
    %v974 = vld [vmem:[#allocation8 + $0x2f0] sm:$0xff]
    %v975 = vld [vmem:[#allocation8 + $0x2f8] sm:$0xff]
    %v976 = vld [vmem:[#allocation8 + $0x300] sm:$0xff]
    %v977 = vld [vmem:[#allocation8 + $0x308] sm:$0xff]
    %v978 = vld [vmem:[#allocation8 + $0x310] sm:$0xff]
    %v979 = vld [vmem:[#allocation8 + $0x318] sm:$0xff]
    %v980 = vld [vmem:[#allocation8 + $0x320] sm:$0xff]
    %v981 = vld [vmem:[#allocation8 + $0x328] sm:$0xff]
    %v982 = vld [vmem:[#allocation8 + $0x330] sm:$0xff]
    %v983 = vld [vmem:[#allocation8 + $0x338] sm:$0xff]
    %v984 = vld [vmem:[#allocation8 + $0x340] sm:$0xff]
    %v985 = vld [vmem:[#allocation8 + $0x348] sm:$0xff]
    %v986 = vld [vmem:[#allocation8 + $0x350] sm:$0xff]
    %v987 = vld [vmem:[#allocation8 + $0x358] sm:$0xff]
    %v988 = vld [vmem:[#allocation8 + $0x360] sm:$0xff]
    %v989 = vld [vmem:[#allocation8 + $0x368] sm:$0xff]
    %v990 = vld [vmem:[#allocation8 + $0x370] sm:$0xff]
    %v991 = vld [vmem:[#allocation8 + $0x378] sm:$0xff]
    %v992 = vld [vmem:[#allocation8 + $0x380] sm:$0xff]
    %v993 = vld [vmem:[#allocation8 + $0x388] sm:$0xff]
    %v994 = vld [vmem:[#allocation8 + $0x390] sm:$0xff]
    %v995 = vld [vmem:[#allocation8 + $0x398] sm:$0xff]
    %v996 = vld [vmem:[#allocation8 + $0x3a0] sm:$0xff]
    %v997 = vld [vmem:[#allocation8 + $0x3a8] sm:$0xff]
    %v998 = vld [vmem:[#allocation8 + $0x3b0] sm:$0xff]
    %v999 = vld [vmem:[#allocation8 + $0x3b8] sm:$0xff]
    %v1000 = vld [vmem:[#allocation8 + $0x3c0] sm:$0xff]
    %v1001 = vld [vmem:[#allocation8 + $0x3c8] sm:$0xff]
    %v1002 = vld [vmem:[#allocation8 + $0x3d0] sm:$0xff]
    %v1003 = vld [vmem:[#allocation8 + $0x3d8] sm:$0xff]
    %v1004 = vld [vmem:[#allocation8 + $0x3e0] sm:$0xff]
    %v1005 = vld [vmem:[#allocation8 + $0x3e8] sm:$0xff]
    %v1006 = vld [vmem:[#allocation8 + $0x3f0] sm:$0xff]
    %v1007 = vld [vmem:[#allocation8 + $0x3f8] sm:$0xff]
    %v1008 = vld [vmem:[#allocation8 + $0x400] sm:$0xff]
    %v1009 = vld [vmem:[#allocation8 + $0x408] sm:$0xff]
    %v1010 = vld [vmem:[#allocation8 + $0x410] sm:$0xff]
    %v1011 = vld [vmem:[#allocation8 + $0x418] sm:$0xff]
    %v1012 = vld [vmem:[#allocation8 + $0x420] sm:$0xff]
    %v1013 = vld [vmem:[#allocation8 + $0x428] sm:$0xff]
    %v1014 = vld [vmem:[#allocation8 + $0x430] sm:$0xff]
    %v1015 = vld [vmem:[#allocation8 + $0x438] sm:$0xff]
    %v1016 = vld [vmem:[#allocation8 + $0x440] sm:$0xff]
    %v1017 = vld [vmem:[#allocation8 + $0x448] sm:$0xff]
    %v1018 = vld [vmem:[#allocation8 + $0x450] sm:$0xff]
    %v1019 = vld [vmem:[#allocation8 + $0x458] sm:$0xff]
    %v1020 = vld [vmem:[#allocation8 + $0x460] sm:$0xff]
    %v1021 = vld [vmem:[#allocation8 + $0x468] sm:$0xff]
    %v1022 = vld [vmem:[#allocation8 + $0x470] sm:$0xff]
    %v1023 = vld [vmem:[#allocation8 + $0x478] sm:$0xff]
    %v1024 = vld [vmem:[#allocation8 + $0x480] sm:$0xff]
    %v1025 = vld [vmem:[#allocation8 + $0x488] sm:$0xff]
    %v1026 = vld [vmem:[#allocation8 + $0x490] sm:$0xff]
    %v1027 = vld [vmem:[#allocation8 + $0x498] sm:$0xff]
    %v1028 = vld [vmem:[#allocation8 + $0x4a0] sm:$0xff]
    %v1029 = vld [vmem:[#allocation8 + $0x4a8] sm:$0xff]
    %v1030 = vld [vmem:[#allocation8 + $0x4b0] sm:$0xff]
    %v1031 = vld [vmem:[#allocation8 + $0x4b8] sm:$0xff]
    %v1032 = vld [vmem:[#allocation8 + $0x4c0] sm:$0xff]
    %v1033 = vld [vmem:[#allocation8 + $0x4c8] sm:$0xff]
    %v1034 = vld [vmem:[#allocation8 + $0x4d0] sm:$0xff]
    %v1035 = vld [vmem:[#allocation8 + $0x4d8] sm:$0xff]
    %v1036 = vld [vmem:[#allocation8 + $0x4e0] sm:$0xff]
    %v1037 = vld [vmem:[#allocation8 + $0x4e8] sm:$0xff]
    %v1038 = vld [vmem:[#allocation8 + $0x4f0] sm:$0xff]
    %v1039 = vld [vmem:[#allocation8 + $0x4f8] sm:$0xff]
    %v1040 = vld [vmem:[#allocation8 + $0x500] sm:$0xff]
    %v1041 = vld [vmem:[#allocation8 + $0x508] sm:$0xff]
    %v1042 = vld [vmem:[#allocation8 + $0x510] sm:$0xff]
    %v1043 = vld [vmem:[#allocation8 + $0x518] sm:$0xff]
    %v1044 = vld [vmem:[#allocation8 + $0x520] sm:$0xff]
    %v1045 = vld [vmem:[#allocation8 + $0x528] sm:$0xff]
    %v1046 = vld [vmem:[#allocation8 + $0x530] sm:$0xff]
    %v1047 = vld [vmem:[#allocation8 + $0x538] sm:$0xff]
    %v1048 = vld [vmem:[#allocation8 + $0x540] sm:$0xff]
    %v1049 = vld [vmem:[#allocation8 + $0x548] sm:$0xff]
    %v1050 = vld [vmem:[#allocation8 + $0x550] sm:$0xff]
    %v1051 = vld [vmem:[#allocation8 + $0x558] sm:$0xff]
    %v1052 = vld [vmem:[#allocation8 + $0x560] sm:$0xff]
    %v1053 = vld [vmem:[#allocation8 + $0x568] sm:$0xff]
    %v1054 = vld [vmem:[#allocation8 + $0x570] sm:$0xff]
    %v1055 = vld [vmem:[#allocation8 + $0x578] sm:$0xff]
    %v1056 = vld [vmem:[#allocation8 + $0x580] sm:$0xff]
    %v1057 = vld [vmem:[#allocation8 + $0x588] sm:$0xff]
    %v1058 = vld [vmem:[#allocation8 + $0x590] sm:$0xff]
    %v1059 = vld [vmem:[#allocation8 + $0x598] sm:$0xff]
    %v1060 = vld [vmem:[#allocation8 + $0x5a0] sm:$0xff]
    %v1061 = vld [vmem:[#allocation8 + $0x5a8] sm:$0xff]
    %v1062 = vld [vmem:[#allocation8 + $0x5b0] sm:$0xff]
    %v1063 = vld [vmem:[#allocation8 + $0x5b8] sm:$0xff]
    %v1064 = vld [vmem:[#allocation8 + $0x5c0] sm:$0xff]
    %v1065 = vld [vmem:[#allocation8 + $0x5c8] sm:$0xff]
    %v1066 = vld [vmem:[#allocation8 + $0x5d0] sm:$0xff]
    %v1067 = vld [vmem:[#allocation8 + $0x5d8] sm:$0xff]
    %v1068 = vld [vmem:[#allocation8 + $0x5e0] sm:$0xff]
    %v1069 = vld [vmem:[#allocation8 + $0x5e8] sm:$0xff]
    %v1070 = vld [vmem:[#allocation8 + $0x5f0] sm:$0xff]
    %v1071 = vld [vmem:[#allocation8 + $0x5f8] sm:$0xff]
    %v1072 = vld [vmem:[#allocation8 + $0x600] sm:$0xff]
    %v1073 = vld [vmem:[#allocation8 + $0x608] sm:$0xff]
    %v1074 = vld [vmem:[#allocation8 + $0x610] sm:$0xff]
    %v1075 = vld [vmem:[#allocation8 + $0x618] sm:$0xff]
    %v1076 = vld [vmem:[#allocation8 + $0x620] sm:$0xff]
    %v1077 = vld [vmem:[#allocation8 + $0x628] sm:$0xff]
    %v1078 = vld [vmem:[#allocation8 + $0x630] sm:$0xff]
    %v1079 = vld [vmem:[#allocation8 + $0x638] sm:$0xff]
    %v1080 = vld [vmem:[#allocation8 + $0x640] sm:$0xff]
    %v1081 = vld [vmem:[#allocation8 + $0x648] sm:$0xff]
    %v1082 = vld [vmem:[#allocation8 + $0x650] sm:$0xff]
    %v1083 = vld [vmem:[#allocation8 + $0x658] sm:$0xff]
    %v1084 = vld [vmem:[#allocation8 + $0x660] sm:$0xff]
    %v1085 = vld [vmem:[#allocation8 + $0x668] sm:$0xff]
    %v1086 = vld [vmem:[#allocation8 + $0x670] sm:$0xff]
    %v1087 = vld [vmem:[#allocation8 + $0x678] sm:$0xff]
    %v1088 = vld [vmem:[#allocation8 + $0x680] sm:$0xff]
    %v1089 = vld [vmem:[#allocation8 + $0x688] sm:$0xff]
    %v1090 = vld [vmem:[#allocation8 + $0x690] sm:$0xff]
    %v1091 = vld [vmem:[#allocation8 + $0x698] sm:$0xff]
    %v1092 = vld [vmem:[#allocation8 + $0x6a0] sm:$0xff]
    %v1093 = vld [vmem:[#allocation8 + $0x6a8] sm:$0xff]
    %v1094 = vld [vmem:[#allocation8 + $0x6b0] sm:$0xff]
    %v1095 = vld [vmem:[#allocation8 + $0x6b8] sm:$0xff]
    %v1096 = vld [vmem:[#allocation8 + $0x6c0] sm:$0xff]
    %v1097 = vld [vmem:[#allocation8 + $0x6c8] sm:$0xff]
    %v1098 = vld [vmem:[#allocation8 + $0x6d0] sm:$0xff]
    %v1099 = vld [vmem:[#allocation8 + $0x6d8] sm:$0xff]
    %v1100 = vld [vmem:[#allocation8 + $0x6e0] sm:$0xff]
    %v1101 = vld [vmem:[#allocation8 + $0x6e8] sm:$0xff]
    %v1102 = vld [vmem:[#allocation8 + $0x6f0] sm:$0xff]
    %v1103 = vld [vmem:[#allocation8 + $0x6f8] sm:$0xff]
    %v1104 = vld [vmem:[#allocation8 + $0x700] sm:$0xff]
    %v1105 = vld [vmem:[#allocation8 + $0x708] sm:$0xff]
    %v1106 = vld [vmem:[#allocation8 + $0x710] sm:$0xff]
    %v1107 = vld [vmem:[#allocation8 + $0x718] sm:$0xff]
    %v1108 = vld [vmem:[#allocation8 + $0x720] sm:$0xff]
    %v1109 = vld [vmem:[#allocation8 + $0x728] sm:$0xff]
    %v1110 = vld [vmem:[#allocation8 + $0x730] sm:$0xff]
    %v1111 = vld [vmem:[#allocation8 + $0x738] sm:$0xff]
    %v1112 = vld [vmem:[#allocation8 + $0x740] sm:$0xff]
    %v1113 = vld [vmem:[#allocation8 + $0x748] sm:$0xff]
    %v1114 = vld [vmem:[#allocation8 + $0x750] sm:$0xff]
    %v1115 = vld [vmem:[#allocation8 + $0x758] sm:$0xff]
    %v1116 = vld [vmem:[#allocation8 + $0x760] sm:$0xff]
    %v1117 = vld [vmem:[#allocation8 + $0x768] sm:$0xff]
    %v1118 = vld [vmem:[#allocation8 + $0x770] sm:$0xff]
    %v1119 = vld [vmem:[#allocation8 + $0x778] sm:$0xff]
    %v1120 = vld [vmem:[#allocation8 + $0x780] sm:$0xff]
    %v1121 = vld [vmem:[#allocation8 + $0x788] sm:$0xff]
    %v1122 = vld [vmem:[#allocation8 + $0x790] sm:$0xff]
    %v1123 = vld [vmem:[#allocation8 + $0x798] sm:$0xff]
    %v1124 = vld [vmem:[#allocation8 + $0x7a0] sm:$0xff]
    %v1125 = vld [vmem:[#allocation8 + $0x7a8] sm:$0xff]
    %v1126 = vld [vmem:[#allocation8 + $0x7b0] sm:$0xff]
    %v1127 = vld [vmem:[#allocation8 + $0x7b8] sm:$0xff]
    %v1128 = vld [vmem:[#allocation8 + $0x7c0] sm:$0xff]
    %v1129 = vld [vmem:[#allocation8 + $0x7c8] sm:$0xff]
    %v1130 = vld [vmem:[#allocation8 + $0x7d0] sm:$0xff]
    %v1131 = vld [vmem:[#allocation8 + $0x7d8] sm:$0xff]
    %v1132 = vld [vmem:[#allocation8 + $0x7e0] sm:$0xff]
    %v1133 = vld [vmem:[#allocation8 + $0x7e8] sm:$0xff]
    %v1134 = vld [vmem:[#allocation8 + $0x7f0] sm:$0xff]
    %v1135 = vld [vmem:[#allocation8 + $0x7f8] sm:$0xff]
    %v1136 = vld [vmem:[%s6] sm:$0xf]
    %v1138 = vlaneseq
    %v1139 = vshrl.u32 %v1138, 7
    %v1140 = vsub.s32 0, %v1139
    %v1141 = vrot.slane %v1136, %v1140
    %v1142 = vlaneseq
    %v1143 = vshrl.u32 %v1142, 7
    %v1144 = vsub.s32 1, %v1143
    %v1145 = vrot.slane %v1136, %v1144
    %v1146 = vlaneseq
    %v1147 = vshrl.u32 %v1146, 7
    %v1148 = vsub.s32 2, %v1147
    %v1149 = vrot.slane %v1136, %v1148
    %v1150 = vlaneseq
    %v1151 = vshrl.u32 %v1150, 7
    %v1152 = vsub.s32 3, %v1151
    %v1153 = vrot.slane %v1136, %v1152
    %v1414 = vunpack.c.l.b16 %v880
    %v1415 = vunpack.c.h.b16 %v880
    %v1416 = vunpack.c.l.b16 %v881
    %v1417 = vunpack.c.h.b16 %v881
    %v1418 = vunpack.c.l.b16 %v882
    %v1419 = vunpack.c.h.b16 %v882
    %v1420 = vunpack.c.l.b16 %v883
    %v1421 = vunpack.c.h.b16 %v883
    %v1422 = vunpack.c.l.b16 %v884
    %v1423 = vunpack.c.h.b16 %v884
    %v1424 = vunpack.c.l.b16 %v885
    %v1425 = vunpack.c.h.b16 %v885
    %v1426 = vunpack.c.l.b16 %v886
    %v1427 = vunpack.c.h.b16 %v886
    %v1428 = vunpack.c.l.b16 %v887
    %v1429 = vunpack.c.h.b16 %v887
    %v1430 = vunpack.c.l.b16 %v888
    %v1431 = vunpack.c.h.b16 %v888
    %v1432 = vunpack.c.l.b16 %v889
    %v1433 = vunpack.c.h.b16 %v889
    %v1434 = vunpack.c.l.b16 %v890
    %v1435 = vunpack.c.h.b16 %v890
    %v1436 = vunpack.c.l.b16 %v891
    %v1437 = vunpack.c.h.b16 %v891
    %v1438 = vunpack.c.l.b16 %v892
    %v1439 = vunpack.c.h.b16 %v892
    %v1440 = vunpack.c.l.b16 %v893
    %v1441 = vunpack.c.h.b16 %v893
    %v1442 = vunpack.c.l.b16 %v894
    %v1443 = vunpack.c.h.b16 %v894
    %v1444 = vunpack.c.l.b16 %v895
    %v1445 = vunpack.c.h.b16 %v895
    %v1446 = vunpack.c.l.b16 %v896
    %v1447 = vunpack.c.h.b16 %v896
    %v1448 = vunpack.c.l.b16 %v897
    %v1449 = vunpack.c.h.b16 %v897
    %v1450 = vunpack.c.l.b16 %v898
    %v1451 = vunpack.c.h.b16 %v898
    %v1452 = vunpack.c.l.b16 %v899
    %v1453 = vunpack.c.h.b16 %v899
    %v1454 = vunpack.c.l.b16 %v900
    %v1455 = vunpack.c.h.b16 %v900
    %v1456 = vunpack.c.l.b16 %v901
    %v1457 = vunpack.c.h.b16 %v901
    %v1458 = vunpack.c.l.b16 %v902
    %v1459 = vunpack.c.h.b16 %v902
    %v1460 = vunpack.c.l.b16 %v903
    %v1461 = vunpack.c.h.b16 %v903
    %v1462 = vunpack.c.l.b16 %v904
    %v1463 = vunpack.c.h.b16 %v904
    %v1464 = vunpack.c.l.b16 %v905
    %v1465 = vunpack.c.h.b16 %v905
    %v1466 = vunpack.c.l.b16 %v906
    %v1467 = vunpack.c.h.b16 %v906
    %v1468 = vunpack.c.l.b16 %v907
    %v1469 = vunpack.c.h.b16 %v907
    %v1470 = vunpack.c.l.b16 %v908
    %v1471 = vunpack.c.h.b16 %v908
    %v1472 = vunpack.c.l.b16 %v909
    %v1473 = vunpack.c.h.b16 %v909
    %v1474 = vunpack.c.l.b16 %v910
    %v1475 = vunpack.c.h.b16 %v910
    %v1476 = vunpack.c.l.b16 %v911
    %v1477 = vunpack.c.h.b16 %v911
    %v1478 = vunpack.c.l.b16 %v912
    %v1479 = vunpack.c.h.b16 %v912
    %v1480 = vunpack.c.l.b16 %v913
    %v1481 = vunpack.c.h.b16 %v913
    %v1482 = vunpack.c.l.b16 %v914
    %v1483 = vunpack.c.h.b16 %v914
    %v1484 = vunpack.c.l.b16 %v915
    %v1485 = vunpack.c.h.b16 %v915
    %v1486 = vunpack.c.l.b16 %v916
    %v1487 = vunpack.c.h.b16 %v916
    %v1488 = vunpack.c.l.b16 %v917
    %v1489 = vunpack.c.h.b16 %v917
    %v1490 = vunpack.c.l.b16 %v918
    %v1491 = vunpack.c.h.b16 %v918
    %v1492 = vunpack.c.l.b16 %v919
    %v1493 = vunpack.c.h.b16 %v919
    %v1494 = vunpack.c.l.b16 %v920
    %v1495 = vunpack.c.h.b16 %v920
    %v1496 = vunpack.c.l.b16 %v921
    %v1497 = vunpack.c.h.b16 %v921
    %v1498 = vunpack.c.l.b16 %v922
    %v1499 = vunpack.c.h.b16 %v922
    %v1500 = vunpack.c.l.b16 %v923
    %v1501 = vunpack.c.h.b16 %v923
    %v1502 = vunpack.c.l.b16 %v924
    %v1503 = vunpack.c.h.b16 %v924
    %v1504 = vunpack.c.l.b16 %v925
    %v1505 = vunpack.c.h.b16 %v925
    %v1506 = vunpack.c.l.b16 %v926
    %v1507 = vunpack.c.h.b16 %v926
    %v1508 = vunpack.c.l.b16 %v927
    %v1509 = vunpack.c.h.b16 %v927
    %v1510 = vunpack.c.l.b16 %v928
    %v1511 = vunpack.c.h.b16 %v928
    %v1512 = vunpack.c.l.b16 %v929
    %v1513 = vunpack.c.h.b16 %v929
    %v1514 = vunpack.c.l.b16 %v930
    %v1515 = vunpack.c.h.b16 %v930
    %v1516 = vunpack.c.l.b16 %v931
    %v1517 = vunpack.c.h.b16 %v931
    %v1518 = vunpack.c.l.b16 %v932
    %v1519 = vunpack.c.h.b16 %v932
    %v1520 = vunpack.c.l.b16 %v933
    %v1521 = vunpack.c.h.b16 %v933
    %v1522 = vunpack.c.l.b16 %v934
    %v1523 = vunpack.c.h.b16 %v934
    %v1524 = vunpack.c.l.b16 %v935
    %v1525 = vunpack.c.h.b16 %v935
    %v1526 = vunpack.c.l.b16 %v936
    %v1527 = vunpack.c.h.b16 %v936
    %v1528 = vunpack.c.l.b16 %v937
    %v1529 = vunpack.c.h.b16 %v937
    %v1530 = vunpack.c.l.b16 %v938
    %v1531 = vunpack.c.h.b16 %v938
    %v1532 = vunpack.c.l.b16 %v939
    %v1533 = vunpack.c.h.b16 %v939
    %v1534 = vunpack.c.l.b16 %v940
    %v1535 = vunpack.c.h.b16 %v940
    %v1536 = vunpack.c.l.b16 %v941
    %v1537 = vunpack.c.h.b16 %v941
    %v1538 = vunpack.c.l.b16 %v942
    %v1539 = vunpack.c.h.b16 %v942
    %v1540 = vunpack.c.l.b16 %v943
    %v1541 = vunpack.c.h.b16 %v943
    %v1542 = vunpack.c.l.b16 %v944
    %v1543 = vunpack.c.h.b16 %v944
    %v1544 = vunpack.c.l.b16 %v945
    %v1545 = vunpack.c.h.b16 %v945
    %v1546 = vunpack.c.l.b16 %v946
    %v1547 = vunpack.c.h.b16 %v946
    %v1548 = vunpack.c.l.b16 %v947
    %v1549 = vunpack.c.h.b16 %v947
    %v1550 = vunpack.c.l.b16 %v948
    %v1551 = vunpack.c.h.b16 %v948
    %v1552 = vunpack.c.l.b16 %v949
    %v1553 = vunpack.c.h.b16 %v949
    %v1554 = vunpack.c.l.b16 %v950
    %v1555 = vunpack.c.h.b16 %v950
    %v1556 = vunpack.c.l.b16 %v951
    %v1557 = vunpack.c.h.b16 %v951
    %v1558 = vunpack.c.l.b16 %v952
    %v1559 = vunpack.c.h.b16 %v952
    %v1560 = vunpack.c.l.b16 %v953
    %v1561 = vunpack.c.h.b16 %v953
    %v1562 = vunpack.c.l.b16 %v954
    %v1563 = vunpack.c.h.b16 %v954
    %v1564 = vunpack.c.l.b16 %v955
    %v1565 = vunpack.c.h.b16 %v955
    %v1566 = vunpack.c.l.b16 %v956
    %v1567 = vunpack.c.h.b16 %v956
    %v1568 = vunpack.c.l.b16 %v957
    %v1569 = vunpack.c.h.b16 %v957
    %v1570 = vunpack.c.l.b16 %v958
    %v1571 = vunpack.c.h.b16 %v958
    %v1572 = vunpack.c.l.b16 %v959
    %v1573 = vunpack.c.h.b16 %v959
    %v1574 = vunpack.c.l.b16 %v960
    %v1575 = vunpack.c.h.b16 %v960
    %v1576 = vunpack.c.l.b16 %v961
    %v1577 = vunpack.c.h.b16 %v961
    %v1578 = vunpack.c.l.b16 %v962
    %v1579 = vunpack.c.h.b16 %v962
    %v1580 = vunpack.c.l.b16 %v963
    %v1581 = vunpack.c.h.b16 %v963
    %v1582 = vunpack.c.l.b16 %v964
    %v1583 = vunpack.c.h.b16 %v964
    %v1584 = vunpack.c.l.b16 %v965
    %v1585 = vunpack.c.h.b16 %v965
    %v1586 = vunpack.c.l.b16 %v966
    %v1587 = vunpack.c.h.b16 %v966
    %v1588 = vunpack.c.l.b16 %v967
    %v1589 = vunpack.c.h.b16 %v967
    %v1590 = vunpack.c.l.b16 %v968
    %v1591 = vunpack.c.h.b16 %v968
    %v1592 = vunpack.c.l.b16 %v969
    %v1593 = vunpack.c.h.b16 %v969
    %v1594 = vunpack.c.l.b16 %v970
    %v1595 = vunpack.c.h.b16 %v970
    %v1596 = vunpack.c.l.b16 %v971
    %v1597 = vunpack.c.h.b16 %v971
    %v1598 = vunpack.c.l.b16 %v972
    %v1599 = vunpack.c.h.b16 %v972
    %v1600 = vunpack.c.l.b16 %v973
    %v1601 = vunpack.c.h.b16 %v973
    %v1602 = vunpack.c.l.b16 %v974
    %v1603 = vunpack.c.h.b16 %v974
    %v1604 = vunpack.c.l.b16 %v975
    %v1605 = vunpack.c.h.b16 %v975
    %v1606 = vunpack.c.l.b16 %v976
    %v1607 = vunpack.c.h.b16 %v976
    %v1608 = vunpack.c.l.b16 %v977
    %v1609 = vunpack.c.h.b16 %v977
    %v1610 = vunpack.c.l.b16 %v978
    %v1611 = vunpack.c.h.b16 %v978
    %v1612 = vunpack.c.l.b16 %v979
    %v1613 = vunpack.c.h.b16 %v979
    %v1614 = vunpack.c.l.b16 %v980
    %v1615 = vunpack.c.h.b16 %v980
    %v1616 = vunpack.c.l.b16 %v981
    %v1617 = vunpack.c.h.b16 %v981
    %v1618 = vunpack.c.l.b16 %v982
    %v1619 = vunpack.c.h.b16 %v982
    %v1620 = vunpack.c.l.b16 %v983
    %v1621 = vunpack.c.h.b16 %v983
    %v1622 = vunpack.c.l.b16 %v984
    %v1623 = vunpack.c.h.b16 %v984
    %v1624 = vunpack.c.l.b16 %v985
    %v1625 = vunpack.c.h.b16 %v985
    %v1626 = vunpack.c.l.b16 %v986
    %v1627 = vunpack.c.h.b16 %v986
    %v1628 = vunpack.c.l.b16 %v987
    %v1629 = vunpack.c.h.b16 %v987
    %v1630 = vunpack.c.l.b16 %v988
    %v1631 = vunpack.c.h.b16 %v988
    %v1632 = vunpack.c.l.b16 %v989
    %v1633 = vunpack.c.h.b16 %v989
    %v1634 = vunpack.c.l.b16 %v990
    %v1635 = vunpack.c.h.b16 %v990
    %v1636 = vunpack.c.l.b16 %v991
    %v1637 = vunpack.c.h.b16 %v991
    %v1638 = vunpack.c.l.b16 %v992
    %v1639 = vunpack.c.h.b16 %v992
    %v1640 = vunpack.c.l.b16 %v993
    %v1641 = vunpack.c.h.b16 %v993
    %v1642 = vunpack.c.l.b16 %v994
    %v1643 = vunpack.c.h.b16 %v994
    %v1644 = vunpack.c.l.b16 %v995
    %v1645 = vunpack.c.h.b16 %v995
    %v1646 = vunpack.c.l.b16 %v996
    %v1647 = vunpack.c.h.b16 %v996
    %v1648 = vunpack.c.l.b16 %v997
    %v1649 = vunpack.c.h.b16 %v997
    %v1650 = vunpack.c.l.b16 %v998
    %v1651 = vunpack.c.h.b16 %v998
    %v1652 = vunpack.c.l.b16 %v999
    %v1653 = vunpack.c.h.b16 %v999
    %v1654 = vunpack.c.l.b16 %v1000
    %v1655 = vunpack.c.h.b16 %v1000
    %v1656 = vunpack.c.l.b16 %v1001
    %v1657 = vunpack.c.h.b16 %v1001
    %v1658 = vunpack.c.l.b16 %v1002
    %v1659 = vunpack.c.h.b16 %v1002
    %v1660 = vunpack.c.l.b16 %v1003
    %v1661 = vunpack.c.h.b16 %v1003
    %v1662 = vunpack.c.l.b16 %v1004
    %v1663 = vunpack.c.h.b16 %v1004
    %v1664 = vunpack.c.l.b16 %v1005
    %v1665 = vunpack.c.h.b16 %v1005
    %v1666 = vunpack.c.l.b16 %v1006
    %v1667 = vunpack.c.h.b16 %v1006
    %v1668 = vunpack.c.l.b16 %v1007
    %v1669 = vunpack.c.h.b16 %v1007
    %v1670 = vunpack.c.l.b16 %v1008
    %v1671 = vunpack.c.h.b16 %v1008
    %v1672 = vunpack.c.l.b16 %v1009
    %v1673 = vunpack.c.h.b16 %v1009
    %v1674 = vunpack.c.l.b16 %v1010
    %v1675 = vunpack.c.h.b16 %v1010
    %v1676 = vunpack.c.l.b16 %v1011
    %v1677 = vunpack.c.h.b16 %v1011
    %v1678 = vunpack.c.l.b16 %v1012
    %v1679 = vunpack.c.h.b16 %v1012
    %v1680 = vunpack.c.l.b16 %v1013
    %v1681 = vunpack.c.h.b16 %v1013
    %v1682 = vunpack.c.l.b16 %v1014
    %v1683 = vunpack.c.h.b16 %v1014
    %v1684 = vunpack.c.l.b16 %v1015
    %v1685 = vunpack.c.h.b16 %v1015
    %v1686 = vunpack.c.l.b16 %v1016
    %v1687 = vunpack.c.h.b16 %v1016
    %v1688 = vunpack.c.l.b16 %v1017
    %v1689 = vunpack.c.h.b16 %v1017
    %v1690 = vunpack.c.l.b16 %v1018
    %v1691 = vunpack.c.h.b16 %v1018
    %v1692 = vunpack.c.l.b16 %v1019
    %v1693 = vunpack.c.h.b16 %v1019
    %v1694 = vunpack.c.l.b16 %v1020
    %v1695 = vunpack.c.h.b16 %v1020
    %v1696 = vunpack.c.l.b16 %v1021
    %v1697 = vunpack.c.h.b16 %v1021
    %v1698 = vunpack.c.l.b16 %v1022
    %v1699 = vunpack.c.h.b16 %v1022
    %v1700 = vunpack.c.l.b16 %v1023
    %v1701 = vunpack.c.h.b16 %v1023
    %v1702 = vunpack.c.l.b16 %v1024
    %v1703 = vunpack.c.h.b16 %v1024
    %v1704 = vunpack.c.l.b16 %v1025
    %v1705 = vunpack.c.h.b16 %v1025
    %v1706 = vunpack.c.l.b16 %v1026
    %v1707 = vunpack.c.h.b16 %v1026
    %v1708 = vunpack.c.l.b16 %v1027
    %v1709 = vunpack.c.h.b16 %v1027
    %v1710 = vunpack.c.l.b16 %v1028
    %v1711 = vunpack.c.h.b16 %v1028
    %v1712 = vunpack.c.l.b16 %v1029
    %v1713 = vunpack.c.h.b16 %v1029
    %v1714 = vunpack.c.l.b16 %v1030
    %v1715 = vunpack.c.h.b16 %v1030
    %v1716 = vunpack.c.l.b16 %v1031
    %v1717 = vunpack.c.h.b16 %v1031
    %v1718 = vunpack.c.l.b16 %v1032
    %v1719 = vunpack.c.h.b16 %v1032
    %v1720 = vunpack.c.l.b16 %v1033
    %v1721 = vunpack.c.h.b16 %v1033
    %v1722 = vunpack.c.l.b16 %v1034
    %v1723 = vunpack.c.h.b16 %v1034
    %v1724 = vunpack.c.l.b16 %v1035
    %v1725 = vunpack.c.h.b16 %v1035
    %v1726 = vunpack.c.l.b16 %v1036
    %v1727 = vunpack.c.h.b16 %v1036
    %v1728 = vunpack.c.l.b16 %v1037
    %v1729 = vunpack.c.h.b16 %v1037
    %v1730 = vunpack.c.l.b16 %v1038
    %v1731 = vunpack.c.h.b16 %v1038
    %v1732 = vunpack.c.l.b16 %v1039
    %v1733 = vunpack.c.h.b16 %v1039
    %v1734 = vunpack.c.l.b16 %v1040
    %v1735 = vunpack.c.h.b16 %v1040
    %v1736 = vunpack.c.l.b16 %v1041
    %v1737 = vunpack.c.h.b16 %v1041
    %v1738 = vunpack.c.l.b16 %v1042
    %v1739 = vunpack.c.h.b16 %v1042
    %v1740 = vunpack.c.l.b16 %v1043
    %v1741 = vunpack.c.h.b16 %v1043
    %v1742 = vunpack.c.l.b16 %v1044
    %v1743 = vunpack.c.h.b16 %v1044
    %v1744 = vunpack.c.l.b16 %v1045
    %v1745 = vunpack.c.h.b16 %v1045
    %v1746 = vunpack.c.l.b16 %v1046
    %v1747 = vunpack.c.h.b16 %v1046
    %v1748 = vunpack.c.l.b16 %v1047
    %v1749 = vunpack.c.h.b16 %v1047
    %v1750 = vunpack.c.l.b16 %v1048
    %v1751 = vunpack.c.h.b16 %v1048
    %v1752 = vunpack.c.l.b16 %v1049
    %v1753 = vunpack.c.h.b16 %v1049
    %v1754 = vunpack.c.l.b16 %v1050
    %v1755 = vunpack.c.h.b16 %v1050
    %v1756 = vunpack.c.l.b16 %v1051
    %v1757 = vunpack.c.h.b16 %v1051
    %v1758 = vunpack.c.l.b16 %v1052
    %v1759 = vunpack.c.h.b16 %v1052
    %v1760 = vunpack.c.l.b16 %v1053
    %v1761 = vunpack.c.h.b16 %v1053
    %v1762 = vunpack.c.l.b16 %v1054
    %v1763 = vunpack.c.h.b16 %v1054
    %v1764 = vunpack.c.l.b16 %v1055
    %v1765 = vunpack.c.h.b16 %v1055
    %v1766 = vunpack.c.l.b16 %v1056
    %v1767 = vunpack.c.h.b16 %v1056
    %v1768 = vunpack.c.l.b16 %v1057
    %v1769 = vunpack.c.h.b16 %v1057
    %v1770 = vunpack.c.l.b16 %v1058
    %v1771 = vunpack.c.h.b16 %v1058
    %v1772 = vunpack.c.l.b16 %v1059
    %v1773 = vunpack.c.h.b16 %v1059
    %v1774 = vunpack.c.l.b16 %v1060
    %v1775 = vunpack.c.h.b16 %v1060
    %v1776 = vunpack.c.l.b16 %v1061
    %v1777 = vunpack.c.h.b16 %v1061
    %v1778 = vunpack.c.l.b16 %v1062
    %v1779 = vunpack.c.h.b16 %v1062
    %v1780 = vunpack.c.l.b16 %v1063
    %v1781 = vunpack.c.h.b16 %v1063
    %v1782 = vunpack.c.l.b16 %v1064
    %v1783 = vunpack.c.h.b16 %v1064
    %v1784 = vunpack.c.l.b16 %v1065
    %v1785 = vunpack.c.h.b16 %v1065
    %v1786 = vunpack.c.l.b16 %v1066
    %v1787 = vunpack.c.h.b16 %v1066
    %v1788 = vunpack.c.l.b16 %v1067
    %v1789 = vunpack.c.h.b16 %v1067
    %v1790 = vunpack.c.l.b16 %v1068
    %v1791 = vunpack.c.h.b16 %v1068
    %v1792 = vunpack.c.l.b16 %v1069
    %v1793 = vunpack.c.h.b16 %v1069
    %v1794 = vunpack.c.l.b16 %v1070
    %v1795 = vunpack.c.h.b16 %v1070
    %v1796 = vunpack.c.l.b16 %v1071
    %v1797 = vunpack.c.h.b16 %v1071
    %v1798 = vunpack.c.l.b16 %v1072
    %v1799 = vunpack.c.h.b16 %v1072
    %v1800 = vunpack.c.l.b16 %v1073
    %v1801 = vunpack.c.h.b16 %v1073
    %v1802 = vunpack.c.l.b16 %v1074
    %v1803 = vunpack.c.h.b16 %v1074
    %v1804 = vunpack.c.l.b16 %v1075
    %v1805 = vunpack.c.h.b16 %v1075
    %v1806 = vunpack.c.l.b16 %v1076
    %v1807 = vunpack.c.h.b16 %v1076
    %v1808 = vunpack.c.l.b16 %v1077
    %v1809 = vunpack.c.h.b16 %v1077
    %v1810 = vunpack.c.l.b16 %v1078
    %v1811 = vunpack.c.h.b16 %v1078
    %v1812 = vunpack.c.l.b16 %v1079
    %v1813 = vunpack.c.h.b16 %v1079
    %v1814 = vunpack.c.l.b16 %v1080
    %v1815 = vunpack.c.h.b16 %v1080
    %v1816 = vunpack.c.l.b16 %v1081
    %v1817 = vunpack.c.h.b16 %v1081
    %v1818 = vunpack.c.l.b16 %v1082
    %v1819 = vunpack.c.h.b16 %v1082
    %v1820 = vunpack.c.l.b16 %v1083
    %v1821 = vunpack.c.h.b16 %v1083
    %v1822 = vunpack.c.l.b16 %v1084
    %v1823 = vunpack.c.h.b16 %v1084
    %v1824 = vunpack.c.l.b16 %v1085
    %v1825 = vunpack.c.h.b16 %v1085
    %v1826 = vunpack.c.l.b16 %v1086
    %v1827 = vunpack.c.h.b16 %v1086
    %v1828 = vunpack.c.l.b16 %v1087
    %v1829 = vunpack.c.h.b16 %v1087
    %v1830 = vunpack.c.l.b16 %v1088
    %v1831 = vunpack.c.h.b16 %v1088
    %v1832 = vunpack.c.l.b16 %v1089
    %v1833 = vunpack.c.h.b16 %v1089
    %v1834 = vunpack.c.l.b16 %v1090
    %v1835 = vunpack.c.h.b16 %v1090
    %v1836 = vunpack.c.l.b16 %v1091
    %v1837 = vunpack.c.h.b16 %v1091
    %v1838 = vunpack.c.l.b16 %v1092
    %v1839 = vunpack.c.h.b16 %v1092
    %v1840 = vunpack.c.l.b16 %v1093
    %v1841 = vunpack.c.h.b16 %v1093
    %v1842 = vunpack.c.l.b16 %v1094
    %v1843 = vunpack.c.h.b16 %v1094
    %v1844 = vunpack.c.l.b16 %v1095
    %v1845 = vunpack.c.h.b16 %v1095
    %v1846 = vunpack.c.l.b16 %v1096
    %v1847 = vunpack.c.h.b16 %v1096
    %v1848 = vunpack.c.l.b16 %v1097
    %v1849 = vunpack.c.h.b16 %v1097
    %v1850 = vunpack.c.l.b16 %v1098
    %v1851 = vunpack.c.h.b16 %v1098
    %v1852 = vunpack.c.l.b16 %v1099
    %v1853 = vunpack.c.h.b16 %v1099
    %v1854 = vunpack.c.l.b16 %v1100
    %v1855 = vunpack.c.h.b16 %v1100
    %v1856 = vunpack.c.l.b16 %v1101
    %v1857 = vunpack.c.h.b16 %v1101
    %v1858 = vunpack.c.l.b16 %v1102
    %v1859 = vunpack.c.h.b16 %v1102
    %v1860 = vunpack.c.l.b16 %v1103
    %v1861 = vunpack.c.h.b16 %v1103
    %v1862 = vunpack.c.l.b16 %v1104
    %v1863 = vunpack.c.h.b16 %v1104
    %v1864 = vunpack.c.l.b16 %v1105
    %v1865 = vunpack.c.h.b16 %v1105
    %v1866 = vunpack.c.l.b16 %v1106
    %v1867 = vunpack.c.h.b16 %v1106
    %v1868 = vunpack.c.l.b16 %v1107
    %v1869 = vunpack.c.h.b16 %v1107
    %v1870 = vunpack.c.l.b16 %v1108
    %v1871 = vunpack.c.h.b16 %v1108
    %v1872 = vunpack.c.l.b16 %v1109
    %v1873 = vunpack.c.h.b16 %v1109
    %v1874 = vunpack.c.l.b16 %v1110
    %v1875 = vunpack.c.h.b16 %v1110
    %v1876 = vunpack.c.l.b16 %v1111
    %v1877 = vunpack.c.h.b16 %v1111
    %v1878 = vunpack.c.l.b16 %v1112
    %v1879 = vunpack.c.h.b16 %v1112
    %v1880 = vunpack.c.l.b16 %v1113
    %v1881 = vunpack.c.h.b16 %v1113
    %v1882 = vunpack.c.l.b16 %v1114
    %v1883 = vunpack.c.h.b16 %v1114
    %v1884 = vunpack.c.l.b16 %v1115
    %v1885 = vunpack.c.h.b16 %v1115
    %v1886 = vunpack.c.l.b16 %v1116
    %v1887 = vunpack.c.h.b16 %v1116
    %v1888 = vunpack.c.l.b16 %v1117
    %v1889 = vunpack.c.h.b16 %v1117
    %v1890 = vunpack.c.l.b16 %v1118
    %v1891 = vunpack.c.h.b16 %v1118
    %v1892 = vunpack.c.l.b16 %v1119
    %v1893 = vunpack.c.h.b16 %v1119
    %v1894 = vunpack.c.l.b16 %v1120
    %v1895 = vunpack.c.h.b16 %v1120
    %v1896 = vunpack.c.l.b16 %v1121
    %v1897 = vunpack.c.h.b16 %v1121
    %v1898 = vunpack.c.l.b16 %v1122
    %v1899 = vunpack.c.h.b16 %v1122
    %v1900 = vunpack.c.l.b16 %v1123
    %v1901 = vunpack.c.h.b16 %v1123
    %v1902 = vunpack.c.l.b16 %v1124
    %v1903 = vunpack.c.h.b16 %v1124
    %v1904 = vunpack.c.l.b16 %v1125
    %v1905 = vunpack.c.h.b16 %v1125
    %v1906 = vunpack.c.l.b16 %v1126
    %v1907 = vunpack.c.h.b16 %v1126
    %v1908 = vunpack.c.l.b16 %v1127
    %v1909 = vunpack.c.h.b16 %v1127
    %v1910 = vunpack.c.l.b16 %v1128
    %v1911 = vunpack.c.h.b16 %v1128
    %v1912 = vunpack.c.l.b16 %v1129
    %v1913 = vunpack.c.h.b16 %v1129
    %v1914 = vunpack.c.l.b16 %v1130
    %v1915 = vunpack.c.h.b16 %v1130
    %v1916 = vunpack.c.l.b16 %v1131
    %v1917 = vunpack.c.h.b16 %v1131
    %v1918 = vunpack.c.l.b16 %v1132
    %v1919 = vunpack.c.h.b16 %v1132
    %v1920 = vunpack.c.l.b16 %v1133
    %v1921 = vunpack.c.h.b16 %v1133
    %v1922 = vunpack.c.l.b16 %v1134
    %v1923 = vunpack.c.h.b16 %v1134
    %v1924 = vunpack.c.l.b16 %v1135
    %v1925 = vunpack.c.h.b16 %v1135
    %v1926 = vpack.c.b16 %v1418, %v1414
    %v1927 = vpack.c.b16 %v1419, %v1415
    %v1928 = vpack.c.b16 %v1420, %v1416
    %v1929 = vpack.c.b16 %v1421, %v1417
    %v1930 = vpack.c.b16 %v1426, %v1422
    %v1931 = vpack.c.b16 %v1427, %v1423
    %v1932 = vpack.c.b16 %v1428, %v1424
    %v1933 = vpack.c.b16 %v1429, %v1425
    %v1934 = vpack.c.b16 %v1434, %v1430
    %v1935 = vpack.c.b16 %v1435, %v1431
    %v1936 = vpack.c.b16 %v1436, %v1432
    %v1937 = vpack.c.b16 %v1437, %v1433
    %v1938 = vpack.c.b16 %v1442, %v1438
    %v1939 = vpack.c.b16 %v1443, %v1439
    %v1940 = vpack.c.b16 %v1444, %v1440
    %v1941 = vpack.c.b16 %v1445, %v1441
    %v1942 = vpack.c.b16 %v1450, %v1446
    %v1943 = vpack.c.b16 %v1451, %v1447
    %v1944 = vpack.c.b16 %v1452, %v1448
    %v1945 = vpack.c.b16 %v1453, %v1449
    %v1946 = vpack.c.b16 %v1458, %v1454
    %v1947 = vpack.c.b16 %v1459, %v1455
    %v1948 = vpack.c.b16 %v1460, %v1456
    %v1949 = vpack.c.b16 %v1461, %v1457
    %v1950 = vpack.c.b16 %v1466, %v1462
    %v1951 = vpack.c.b16 %v1467, %v1463
    %v1952 = vpack.c.b16 %v1468, %v1464
    %v1953 = vpack.c.b16 %v1469, %v1465
    %v1954 = vpack.c.b16 %v1474, %v1470
    %v1955 = vpack.c.b16 %v1475, %v1471
    %v1956 = vpack.c.b16 %v1476, %v1472
    %v1957 = vpack.c.b16 %v1477, %v1473
    %v1958 = vpack.c.b16 %v1482, %v1478
    %v1959 = vpack.c.b16 %v1483, %v1479
    %v1960 = vpack.c.b16 %v1484, %v1480
    %v1961 = vpack.c.b16 %v1485, %v1481
    %v1962 = vpack.c.b16 %v1490, %v1486
    %v1963 = vpack.c.b16 %v1491, %v1487
    %v1964 = vpack.c.b16 %v1492, %v1488
    %v1965 = vpack.c.b16 %v1493, %v1489
    %v1966 = vpack.c.b16 %v1498, %v1494
    %v1967 = vpack.c.b16 %v1499, %v1495
    %v1968 = vpack.c.b16 %v1500, %v1496
    %v1969 = vpack.c.b16 %v1501, %v1497
    %v1970 = vpack.c.b16 %v1506, %v1502
    %v1971 = vpack.c.b16 %v1507, %v1503
    %v1972 = vpack.c.b16 %v1508, %v1504
    %v1973 = vpack.c.b16 %v1509, %v1505
    %v1974 = vpack.c.b16 %v1514, %v1510
    %v1975 = vpack.c.b16 %v1515, %v1511
    %v1976 = vpack.c.b16 %v1516, %v1512
    %v1977 = vpack.c.b16 %v1517, %v1513
    %v1978 = vpack.c.b16 %v1522, %v1518
    %v1979 = vpack.c.b16 %v1523, %v1519
    %v1980 = vpack.c.b16 %v1524, %v1520
    %v1981 = vpack.c.b16 %v1525, %v1521
    %v1982 = vpack.c.b16 %v1530, %v1526
    %v1983 = vpack.c.b16 %v1531, %v1527
    %v1984 = vpack.c.b16 %v1532, %v1528
    %v1985 = vpack.c.b16 %v1533, %v1529
    %v1986 = vpack.c.b16 %v1538, %v1534
    %v1987 = vpack.c.b16 %v1539, %v1535
    %v1988 = vpack.c.b16 %v1540, %v1536
    %v1989 = vpack.c.b16 %v1541, %v1537
    %v1990 = vpack.c.b16 %v1546, %v1542
    %v1991 = vpack.c.b16 %v1547, %v1543
    %v1992 = vpack.c.b16 %v1548, %v1544
    %v1993 = vpack.c.b16 %v1549, %v1545
    %v1994 = vpack.c.b16 %v1554, %v1550
    %v1995 = vpack.c.b16 %v1555, %v1551
    %v1996 = vpack.c.b16 %v1556, %v1552
    %v1997 = vpack.c.b16 %v1557, %v1553
    %v1998 = vpack.c.b16 %v1562, %v1558
    %v1999 = vpack.c.b16 %v1563, %v1559
    %v2000 = vpack.c.b16 %v1564, %v1560
    %v2001 = vpack.c.b16 %v1565, %v1561
    %v2002 = vpack.c.b16 %v1570, %v1566
    %v2003 = vpack.c.b16 %v1571, %v1567
    %v2004 = vpack.c.b16 %v1572, %v1568
    %v2005 = vpack.c.b16 %v1573, %v1569
    %v2006 = vpack.c.b16 %v1578, %v1574
    %v2007 = vpack.c.b16 %v1579, %v1575
    %v2008 = vpack.c.b16 %v1580, %v1576
    %v2009 = vpack.c.b16 %v1581, %v1577
    %v2010 = vpack.c.b16 %v1586, %v1582
    %v2011 = vpack.c.b16 %v1587, %v1583
    %v2012 = vpack.c.b16 %v1588, %v1584
    %v2013 = vpack.c.b16 %v1589, %v1585
    %v2014 = vpack.c.b16 %v1594, %v1590
    %v2015 = vpack.c.b16 %v1595, %v1591
    %v2016 = vpack.c.b16 %v1596, %v1592
    %v2017 = vpack.c.b16 %v1597, %v1593
    %v2018 = vpack.c.b16 %v1602, %v1598
    %v2019 = vpack.c.b16 %v1603, %v1599
    %v2020 = vpack.c.b16 %v1604, %v1600
    %v2021 = vpack.c.b16 %v1605, %v1601
    %v2022 = vpack.c.b16 %v1610, %v1606
    %v2023 = vpack.c.b16 %v1611, %v1607
    %v2024 = vpack.c.b16 %v1612, %v1608
    %v2025 = vpack.c.b16 %v1613, %v1609
    %v2026 = vpack.c.b16 %v1618, %v1614
    %v2027 = vpack.c.b16 %v1619, %v1615
    %v2028 = vpack.c.b16 %v1620, %v1616
    %v2029 = vpack.c.b16 %v1621, %v1617
    %v2030 = vpack.c.b16 %v1626, %v1622
    %v2031 = vpack.c.b16 %v1627, %v1623
    %v2032 = vpack.c.b16 %v1628, %v1624
    %v2033 = vpack.c.b16 %v1629, %v1625
    %v2034 = vpack.c.b16 %v1634, %v1630
    %v2035 = vpack.c.b16 %v1635, %v1631
    %v2036 = vpack.c.b16 %v1636, %v1632
    %v2037 = vpack.c.b16 %v1637, %v1633
    %v2038 = vpack.c.b16 %v1642, %v1638
    %v2039 = vpack.c.b16 %v1643, %v1639
    %v2040 = vpack.c.b16 %v1644, %v1640
    %v2041 = vpack.c.b16 %v1645, %v1641
    %v2042 = vpack.c.b16 %v1650, %v1646
    %v2043 = vpack.c.b16 %v1651, %v1647
    %v2044 = vpack.c.b16 %v1652, %v1648
    %v2045 = vpack.c.b16 %v1653, %v1649
    %v2046 = vpack.c.b16 %v1658, %v1654
    %v2047 = vpack.c.b16 %v1659, %v1655
    %v2048 = vpack.c.b16 %v1660, %v1656
    %v2049 = vpack.c.b16 %v1661, %v1657
    %v2050 = vpack.c.b16 %v1666, %v1662
    %v2051 = vpack.c.b16 %v1667, %v1663
    %v2052 = vpack.c.b16 %v1668, %v1664
    %v2053 = vpack.c.b16 %v1669, %v1665
    %v2054 = vpack.c.b16 %v1674, %v1670
    %v2055 = vpack.c.b16 %v1675, %v1671
    %v2056 = vpack.c.b16 %v1676, %v1672
    %v2057 = vpack.c.b16 %v1677, %v1673
    %v2058 = vpack.c.b16 %v1682, %v1678
    %v2059 = vpack.c.b16 %v1683, %v1679
    %v2060 = vpack.c.b16 %v1684, %v1680
    %v2061 = vpack.c.b16 %v1685, %v1681
    %v2062 = vpack.c.b16 %v1690, %v1686
    %v2063 = vpack.c.b16 %v1691, %v1687
    %v2064 = vpack.c.b16 %v1692, %v1688
    %v2065 = vpack.c.b16 %v1693, %v1689
    %v2066 = vpack.c.b16 %v1698, %v1694
    %v2067 = vpack.c.b16 %v1699, %v1695
    %v2068 = vpack.c.b16 %v1700, %v1696
    %v2069 = vpack.c.b16 %v1701, %v1697
    %v2070 = vpack.c.b16 %v1706, %v1702
    %v2071 = vpack.c.b16 %v1707, %v1703
    %v2072 = vpack.c.b16 %v1708, %v1704
    %v2073 = vpack.c.b16 %v1709, %v1705
    %v2074 = vpack.c.b16 %v1714, %v1710
    %v2075 = vpack.c.b16 %v1715, %v1711
    %v2076 = vpack.c.b16 %v1716, %v1712
    %v2077 = vpack.c.b16 %v1717, %v1713
    %v2078 = vpack.c.b16 %v1722, %v1718
    %v2079 = vpack.c.b16 %v1723, %v1719
    %v2080 = vpack.c.b16 %v1724, %v1720
    %v2081 = vpack.c.b16 %v1725, %v1721
    %v2082 = vpack.c.b16 %v1730, %v1726
    %v2083 = vpack.c.b16 %v1731, %v1727
    %v2084 = vpack.c.b16 %v1732, %v1728
    %v2085 = vpack.c.b16 %v1733, %v1729
    %v2086 = vpack.c.b16 %v1738, %v1734
    %v2087 = vpack.c.b16 %v1739, %v1735
    %v2088 = vpack.c.b16 %v1740, %v1736
    %v2089 = vpack.c.b16 %v1741, %v1737
    %v2090 = vpack.c.b16 %v1746, %v1742
    %v2091 = vpack.c.b16 %v1747, %v1743
    %v2092 = vpack.c.b16 %v1748, %v1744
    %v2093 = vpack.c.b16 %v1749, %v1745
    %v2094 = vpack.c.b16 %v1754, %v1750
    %v2095 = vpack.c.b16 %v1755, %v1751
    %v2096 = vpack.c.b16 %v1756, %v1752
    %v2097 = vpack.c.b16 %v1757, %v1753
    %v2098 = vpack.c.b16 %v1762, %v1758
    %v2099 = vpack.c.b16 %v1763, %v1759
    %v2100 = vpack.c.b16 %v1764, %v1760
    %v2101 = vpack.c.b16 %v1765, %v1761
    %v2102 = vpack.c.b16 %v1770, %v1766
    %v2103 = vpack.c.b16 %v1771, %v1767
    %v2104 = vpack.c.b16 %v1772, %v1768
    %v2105 = vpack.c.b16 %v1773, %v1769
    %v2106 = vpack.c.b16 %v1778, %v1774
    %v2107 = vpack.c.b16 %v1779, %v1775
    %v2108 = vpack.c.b16 %v1780, %v1776
    %v2109 = vpack.c.b16 %v1781, %v1777
    %v2110 = vpack.c.b16 %v1786, %v1782
    %v2111 = vpack.c.b16 %v1787, %v1783
    %v2112 = vpack.c.b16 %v1788, %v1784
    %v2113 = vpack.c.b16 %v1789, %v1785
    %v2114 = vpack.c.b16 %v1794, %v1790
    %v2115 = vpack.c.b16 %v1795, %v1791
    %v2116 = vpack.c.b16 %v1796, %v1792
    %v2117 = vpack.c.b16 %v1797, %v1793
    %v2118 = vpack.c.b16 %v1802, %v1798
    %v2119 = vpack.c.b16 %v1803, %v1799
    %v2120 = vpack.c.b16 %v1804, %v1800
    %v2121 = vpack.c.b16 %v1805, %v1801
    %v2122 = vpack.c.b16 %v1810, %v1806
    %v2123 = vpack.c.b16 %v1811, %v1807
    %v2124 = vpack.c.b16 %v1812, %v1808
    %v2125 = vpack.c.b16 %v1813, %v1809
    %v2126 = vpack.c.b16 %v1818, %v1814
    %v2127 = vpack.c.b16 %v1819, %v1815
    %v2128 = vpack.c.b16 %v1820, %v1816
    %v2129 = vpack.c.b16 %v1821, %v1817
    %v2130 = vpack.c.b16 %v1826, %v1822
    %v2131 = vpack.c.b16 %v1827, %v1823
    %v2132 = vpack.c.b16 %v1828, %v1824
    %v2133 = vpack.c.b16 %v1829, %v1825
    %v2134 = vpack.c.b16 %v1834, %v1830
    %v2135 = vpack.c.b16 %v1835, %v1831
    %v2136 = vpack.c.b16 %v1836, %v1832
    %v2137 = vpack.c.b16 %v1837, %v1833
    %v2138 = vpack.c.b16 %v1842, %v1838
    %v2139 = vpack.c.b16 %v1843, %v1839
    %v2140 = vpack.c.b16 %v1844, %v1840
    %v2141 = vpack.c.b16 %v1845, %v1841
    %v2142 = vpack.c.b16 %v1850, %v1846
    %v2143 = vpack.c.b16 %v1851, %v1847
    %v2144 = vpack.c.b16 %v1852, %v1848
    %v2145 = vpack.c.b16 %v1853, %v1849
    %v2146 = vpack.c.b16 %v1858, %v1854
    %v2147 = vpack.c.b16 %v1859, %v1855
    %v2148 = vpack.c.b16 %v1860, %v1856
    %v2149 = vpack.c.b16 %v1861, %v1857
    %v2150 = vpack.c.b16 %v1866, %v1862
    %v2151 = vpack.c.b16 %v1867, %v1863
    %v2152 = vpack.c.b16 %v1868, %v1864
    %v2153 = vpack.c.b16 %v1869, %v1865
    %v2154 = vpack.c.b16 %v1874, %v1870
    %v2155 = vpack.c.b16 %v1875, %v1871
    %v2156 = vpack.c.b16 %v1876, %v1872
    %v2157 = vpack.c.b16 %v1877, %v1873
    %v2158 = vpack.c.b16 %v1882, %v1878
    %v2159 = vpack.c.b16 %v1883, %v1879
    %v2160 = vpack.c.b16 %v1884, %v1880
    %v2161 = vpack.c.b16 %v1885, %v1881
    %v2162 = vpack.c.b16 %v1890, %v1886
    %v2163 = vpack.c.b16 %v1891, %v1887
    %v2164 = vpack.c.b16 %v1892, %v1888
    %v2165 = vpack.c.b16 %v1893, %v1889
    %v2166 = vpack.c.b16 %v1898, %v1894
    %v2167 = vpack.c.b16 %v1899, %v1895
    %v2168 = vpack.c.b16 %v1900, %v1896
    %v2169 = vpack.c.b16 %v1901, %v1897
    %v2170 = vpack.c.b16 %v1906, %v1902
    %v2171 = vpack.c.b16 %v1907, %v1903
    %v2172 = vpack.c.b16 %v1908, %v1904
    %v2173 = vpack.c.b16 %v1909, %v1905
    %v2174 = vpack.c.b16 %v1914, %v1910
    %v2175 = vpack.c.b16 %v1915, %v1911
    %v2176 = vpack.c.b16 %v1916, %v1912
    %v2177 = vpack.c.b16 %v1917, %v1913
    %v2178 = vpack.c.b16 %v1922, %v1918
    %v2179 = vpack.c.b16 %v1923, %v1919
    %v2180 = vpack.c.b16 %v1924, %v1920
    %v2181 = vpack.c.b16 %v1925, %v1921
    %2438 = vmatprep.subr.bf16.mxu0 %v1927
    %2439 = vmatpush1.bf16.msra.mxu0 %v1926
    %2440 = vmatprep.subr.bf16.mxu0 %v1931
    %2441 = vmatpush1.bf16.msra.mxu0 %v1930
    %2442 = vmatprep.subr.bf16.mxu0 %v1935
    %2443 = vmatpush1.bf16.msra.mxu0 %v1934
    %2444 = vmatprep.subr.bf16.mxu0 %v1939
    %2445 = vmatpush1.bf16.msra.mxu0 %v1938
    %2446 = vmatprep.subr.bf16.mxu0 %v1943
    %2447 = vmatpush1.bf16.msra.mxu0 %v1942
    %2448 = vmatprep.subr.bf16.mxu0 %v1947
    %2449 = vmatpush1.bf16.msra.mxu0 %v1946
    %2450 = vmatprep.subr.bf16.mxu0 %v1951
    %2451 = vmatpush1.bf16.msra.mxu0 %v1950
    %2452 = vmatprep.subr.bf16.mxu0 %v1955
    %2453 = vmatpush1.bf16.msra.mxu0 %v1954
    %2454 = vmatprep.subr.bf16.mxu0 %v1959
    %2455 = vmatpush1.bf16.msra.mxu0 %v1958
    %2456 = vmatprep.subr.bf16.mxu0 %v1963
    %2457 = vmatpush1.bf16.msra.mxu0 %v1962
    %2458 = vmatprep.subr.bf16.mxu0 %v1967
    %2459 = vmatpush1.bf16.msra.mxu0 %v1966
    %2460 = vmatprep.subr.bf16.mxu0 %v1971
    %2461 = vmatpush1.bf16.msra.mxu0 %v1970
    %2462 = vmatprep.subr.bf16.mxu0 %v1975
    %2463 = vmatpush1.bf16.msra.mxu0 %v1974
    %2464 = vmatprep.subr.bf16.mxu0 %v1979
    %2465 = vmatpush1.bf16.msra.mxu0 %v1978
    %2466 = vmatprep.subr.bf16.mxu0 %v1983
    %2467 = vmatpush1.bf16.msra.mxu0 %v1982
    %2468 = vmatprep.subr.bf16.mxu0 %v1987
    %2469 = vmatpush1.bf16.msra.mxu0 %v1986
    %2470 = vmatprep.mubr.bf16.mxu0 %v873
    %2471 = vmatmul.mubr.bf16.gmra.mrb[0].mxu0 %v872
    %v2472 = vpop.f32.mrb[0].mxu0
    %v2473 = vadd.f32 %v1141, %v2472
    %v2474 = vpop.f32.mrb[0].mxu0
    %v2475 = vadd.f32 %v1145, %v2474
    %v2476 = vpop.f32.mrb[0].mxu0
    %v2477 = vpop.f32.mrb[0].mxu0
    %2478 = vdwg.mxu0
    %2479 = vmatprep.subr.bf16.mxu0 %v1991
    %2480 = vmatpush1.bf16.msra.mxu0 %v1990
    %2481 = vmatprep.subr.bf16.mxu0 %v1995
    %2482 = vmatpush1.bf16.msra.mxu0 %v1994
    %2483 = vmatprep.subr.bf16.mxu0 %v1999
    %2484 = vmatpush1.bf16.msra.mxu0 %v1998
    %2485 = vmatprep.subr.bf16.mxu0 %v2003
    %2486 = vmatpush1.bf16.msra.mxu0 %v2002
    %2487 = vmatprep.subr.bf16.mxu0 %v2007
    %2488 = vmatpush1.bf16.msra.mxu0 %v2006
    %2489 = vmatprep.subr.bf16.mxu0 %v2011
    %2490 = vmatpush1.bf16.msra.mxu0 %v2010
    %2491 = vmatprep.subr.bf16.mxu0 %v2015
    %2492 = vmatpush1.bf16.msra.mxu0 %v2014
    %2493 = vmatprep.subr.bf16.mxu0 %v2019
    %2494 = vmatpush1.bf16.msra.mxu0 %v2018
    %2495 = vmatprep.subr.bf16.mxu0 %v2023
    %2496 = vmatpush1.bf16.msra.mxu0 %v2022
    %2497 = vmatprep.subr.bf16.mxu0 %v2027
    %2498 = vmatpush1.bf16.msra.mxu0 %v2026
    %2499 = vmatprep.subr.bf16.mxu0 %v2031
    %2500 = vmatpush1.bf16.msra.mxu0 %v2030
    %2501 = vmatprep.subr.bf16.mxu0 %v2035
    %2502 = vmatpush1.bf16.msra.mxu0 %v2034
    %2503 = vmatprep.subr.bf16.mxu0 %v2039
    %2504 = vmatpush1.bf16.msra.mxu0 %v2038
    %2505 = vmatprep.subr.bf16.mxu0 %v2043
    %2506 = vmatpush1.bf16.msra.mxu0 %v2042
    %2507 = vmatprep.subr.bf16.mxu0 %v2047
    %2508 = vmatpush1.bf16.msra.mxu0 %v2046
    %2509 = vmatprep.subr.bf16.mxu0 %v2051
    %2510 = vmatpush1.bf16.msra.mxu0 %v2050
    %2511 = vmatprep.mubr.bf16.mxu0 %v875
    %2512 = vmatmul.mubr.bf16.gmra.mrb[0].mxu0 %v874
    %v2513 = vpop.f32.mrb[0].mxu0
    %v2514 = vadd.f32 %v2473, %v2513
    %v2515 = vpop.f32.mrb[0].mxu0
    %v2516 = vadd.f32 %v2475, %v2515
    %v2517 = vpop.f32.mrb[0].mxu0
    %v2518 = vpop.f32.mrb[0].mxu0
    %2519 = vdwg.mxu0
    %2520 = vmatprep.subr.bf16.mxu0 %v2055
    %2521 = vmatpush1.bf16.msra.mxu0 %v2054
    %2522 = vmatprep.subr.bf16.mxu0 %v2059
    %2523 = vmatpush1.bf16.msra.mxu0 %v2058
    %2524 = vmatprep.subr.bf16.mxu0 %v2063
    %2525 = vmatpush1.bf16.msra.mxu0 %v2062
    %2526 = vmatprep.subr.bf16.mxu0 %v2067
    %2527 = vmatpush1.bf16.msra.mxu0 %v2066
    %2528 = vmatprep.subr.bf16.mxu0 %v2071
    %2529 = vmatpush1.bf16.msra.mxu0 %v2070
    %2530 = vmatprep.subr.bf16.mxu0 %v2075
    %2531 = vmatpush1.bf16.msra.mxu0 %v2074
    %2532 = vmatprep.subr.bf16.mxu0 %v2079
    %2533 = vmatpush1.bf16.msra.mxu0 %v2078
    %2534 = vmatprep.subr.bf16.mxu0 %v2083
    %2535 = vmatpush1.bf16.msra.mxu0 %v2082
    %2536 = vmatprep.subr.bf16.mxu0 %v2087
    %2537 = vmatpush1.bf16.msra.mxu0 %v2086
    %2538 = vmatprep.subr.bf16.mxu0 %v2091
    %2539 = vmatpush1.bf16.msra.mxu0 %v2090
    %2540 = vmatprep.subr.bf16.mxu0 %v2095
    %2541 = vmatpush1.bf16.msra.mxu0 %v2094
    %2542 = vmatprep.subr.bf16.mxu0 %v2099
    %2543 = vmatpush1.bf16.msra.mxu0 %v2098
    %2544 = vmatprep.subr.bf16.mxu0 %v2103
    %2545 = vmatpush1.bf16.msra.mxu0 %v2102
    %2546 = vmatprep.subr.bf16.mxu0 %v2107
    %2547 = vmatpush1.bf16.msra.mxu0 %v2106
    %2548 = vmatprep.subr.bf16.mxu0 %v2111
    %2549 = vmatpush1.bf16.msra.mxu0 %v2110
    %2550 = vmatprep.subr.bf16.mxu0 %v2115
    %2551 = vmatpush1.bf16.msra.mxu0 %v2114
    %2552 = vmatprep.mubr.bf16.mxu0 %v877
    %2553 = vmatmul.mubr.bf16.gmra.mrb[0].mxu0 %v876
    %v2554 = vpop.f32.mrb[0].mxu0
    %v2555 = vadd.f32 %v2514, %v2554
    %v2556 = vpop.f32.mrb[0].mxu0
    %v2557 = vadd.f32 %v2516, %v2556
    %v2558 = vpop.f32.mrb[0].mxu0
    %v2559 = vpop.f32.mrb[0].mxu0
    %2560 = vdwg.mxu0
    %2561 = vmatprep.subr.bf16.mxu0 %v2119
    %2562 = vmatpush1.bf16.msra.mxu0 %v2118
    %2563 = vmatprep.subr.bf16.mxu0 %v2123
    %2564 = vmatpush1.bf16.msra.mxu0 %v2122
    %2565 = vmatprep.subr.bf16.mxu0 %v2127
    %2566 = vmatpush1.bf16.msra.mxu0 %v2126
    %2567 = vmatprep.subr.bf16.mxu0 %v2131
    %2568 = vmatpush1.bf16.msra.mxu0 %v2130
    %2569 = vmatprep.subr.bf16.mxu0 %v2135
    %2570 = vmatpush1.bf16.msra.mxu0 %v2134
    %2571 = vmatprep.subr.bf16.mxu0 %v2139
    %2572 = vmatpush1.bf16.msra.mxu0 %v2138
    %2573 = vmatprep.subr.bf16.mxu0 %v2143
    %2574 = vmatpush1.bf16.msra.mxu0 %v2142
    %2575 = vmatprep.subr.bf16.mxu0 %v2147
    %2576 = vmatpush1.bf16.msra.mxu0 %v2146
    %2577 = vmatprep.subr.bf16.mxu0 %v2151
    %2578 = vmatpush1.bf16.msra.mxu0 %v2150
    %2579 = vmatprep.subr.bf16.mxu0 %v2155
    %2580 = vmatpush1.bf16.msra.mxu0 %v2154
    %2581 = vmatprep.subr.bf16.mxu0 %v2159
    %2582 = vmatpush1.bf16.msra.mxu0 %v2158
    %2583 = vmatprep.subr.bf16.mxu0 %v2163
    %2584 = vmatpush1.bf16.msra.mxu0 %v2162
    %2585 = vmatprep.subr.bf16.mxu0 %v2167
    %2586 = vmatpush1.bf16.msra.mxu0 %v2166
    %2587 = vmatprep.subr.bf16.mxu0 %v2171
    %2588 = vmatpush1.bf16.msra.mxu0 %v2170
    %2589 = vmatprep.subr.bf16.mxu0 %v2175
    %2590 = vmatpush1.bf16.msra.mxu0 %v2174
    %2591 = vmatprep.subr.bf16.mxu0 %v2179
    %2592 = vmatpush1.bf16.msra.mxu0 %v2178
    %2593 = vmatprep.mubr.bf16.mxu0 %v879
    %2594 = vmatmul.mubr.bf16.gmra.mrb[0].mxu0 %v878
    %v2595 = vpop.f32.mrb[0].mxu0
    %v2596 = vadd.f32 %v2555, %v2595
    %v2597 = vpop.f32.mrb[0].mxu0
    %v2598 = vadd.f32 %v2557, %v2597
    %v2599 = vpop.f32.mrb[0].mxu0
    %v2600 = vpop.f32.mrb[0].mxu0
    %2601 = vdwg.mxu0
    %2602 = vmatprep.subr.bf16.mxu0 %v1929
    %2603 = vmatpush1.bf16.msra.mxu0 %v1928
    %2604 = vmatprep.subr.bf16.mxu0 %v1933
    %2605 = vmatpush1.bf16.msra.mxu0 %v1932
    %2606 = vmatprep.subr.bf16.mxu0 %v1937
    %2607 = vmatpush1.bf16.msra.mxu0 %v1936
    %2608 = vmatprep.subr.bf16.mxu0 %v1941
    %2609 = vmatpush1.bf16.msra.mxu0 %v1940
    %2610 = vmatprep.subr.bf16.mxu0 %v1945
    %2611 = vmatpush1.bf16.msra.mxu0 %v1944
    %2612 = vmatprep.subr.bf16.mxu0 %v1949
    %2613 = vmatpush1.bf16.msra.mxu0 %v1948
    %2614 = vmatprep.subr.bf16.mxu0 %v1953
    %2615 = vmatpush1.bf16.msra.mxu0 %v1952
    %2616 = vmatprep.subr.bf16.mxu0 %v1957
    %2617 = vmatpush1.bf16.msra.mxu0 %v1956
    %2618 = vmatprep.subr.bf16.mxu0 %v1961
    %2619 = vmatpush1.bf16.msra.mxu0 %v1960
    %2620 = vmatprep.subr.bf16.mxu0 %v1965
    %2621 = vmatpush1.bf16.msra.mxu0 %v1964
    %2622 = vmatprep.subr.bf16.mxu0 %v1969
    %2623 = vmatpush1.bf16.msra.mxu0 %v1968
    %2624 = vmatprep.subr.bf16.mxu0 %v1973
    %2625 = vmatpush1.bf16.msra.mxu0 %v1972
    %2626 = vmatprep.subr.bf16.mxu0 %v1977
    %2627 = vmatpush1.bf16.msra.mxu0 %v1976
    %2628 = vmatprep.subr.bf16.mxu0 %v1981
    %2629 = vmatpush1.bf16.msra.mxu0 %v1980
    %2630 = vmatprep.subr.bf16.mxu0 %v1985
    %2631 = vmatpush1.bf16.msra.mxu0 %v1984
    %2632 = vmatprep.subr.bf16.mxu0 %v1989
    %2633 = vmatpush1.bf16.msra.mxu0 %v1988
    %2634 = vmatprep.mubr.bf16.mxu0 %v873
    %2635 = vmatmul.mubr.bf16.gmra.mrb[0].mxu0 %v872
    %v2636 = vpop.f32.mrb[0].mxu0
    %v2637 = vadd.f32 %v1149, %v2636
    %v2638 = vpop.f32.mrb[0].mxu0
    %v2639 = vadd.f32 %v1153, %v2638
    %v2640 = vpop.f32.mrb[0].mxu0
    %v2641 = vpop.f32.mrb[0].mxu0
    %2642 = vdwg.mxu0
    %2643 = vmatprep.subr.bf16.mxu0 %v1993
    %2644 = vmatpush1.bf16.msra.mxu0 %v1992
    %2645 = vmatprep.subr.bf16.mxu0 %v1997
    %2646 = vmatpush1.bf16.msra.mxu0 %v1996
    %2647 = vmatprep.subr.bf16.mxu0 %v2001
    %2648 = vmatpush1.bf16.msra.mxu0 %v2000
    %2649 = vmatprep.subr.bf16.mxu0 %v2005
    %2650 = vmatpush1.bf16.msra.mxu0 %v2004
    %2651 = vmatprep.subr.bf16.mxu0 %v2009
    %2652 = vmatpush1.bf16.msra.mxu0 %v2008
    %2653 = vmatprep.subr.bf16.mxu0 %v2013
    %2654 = vmatpush1.bf16.msra.mxu0 %v2012
    %2655 = vmatprep.subr.bf16.mxu0 %v2017
    %2656 = vmatpush1.bf16.msra.mxu0 %v2016
    %2657 = vmatprep.subr.bf16.mxu0 %v2021
    %2658 = vmatpush1.bf16.msra.mxu0 %v2020
    %2659 = vmatprep.subr.bf16.mxu0 %v2025
    %2660 = vmatpush1.bf16.msra.mxu0 %v2024
    %2661 = vmatprep.subr.bf16.mxu0 %v2029
    %2662 = vmatpush1.bf16.msra.mxu0 %v2028
    %2663 = vmatprep.subr.bf16.mxu0 %v2033
    %2664 = vmatpush1.bf16.msra.mxu0 %v2032
    %2665 = vmatprep.subr.bf16.mxu0 %v2037
    %2666 = vmatpush1.bf16.msra.mxu0 %v2036
    %2667 = vmatprep.subr.bf16.mxu0 %v2041
    %2668 = vmatpush1.bf16.msra.mxu0 %v2040
    %2669 = vmatprep.subr.bf16.mxu0 %v2045
    %2670 = vmatpush1.bf16.msra.mxu0 %v2044
    %2671 = vmatprep.subr.bf16.mxu0 %v2049
    %2672 = vmatpush1.bf16.msra.mxu0 %v2048
    %2673 = vmatprep.subr.bf16.mxu0 %v2053
    %2674 = vmatpush1.bf16.msra.mxu0 %v2052
    %2675 = vmatprep.mubr.bf16.mxu0 %v875
    %2676 = vmatmul.mubr.bf16.gmra.mrb[0].mxu0 %v874
    %v2677 = vpop.f32.mrb[0].mxu0
    %v2678 = vadd.f32 %v2637, %v2677
    %v2679 = vpop.f32.mrb[0].mxu0
    %v2680 = vadd.f32 %v2639, %v2679
    %v2681 = vpop.f32.mrb[0].mxu0
    %v2682 = vpop.f32.mrb[0].mxu0
    %2683 = vdwg.mxu0
    %2684 = vmatprep.subr.bf16.mxu0 %v2057
    %2685 = vmatpush1.bf16.msra.mxu0 %v2056
    %2686 = vmatprep.subr.bf16.mxu0 %v2061
    %2687 = vmatpush1.bf16.msra.mxu0 %v2060
    %2688 = vmatprep.subr.bf16.mxu0 %v2065
    %2689 = vmatpush1.bf16.msra.mxu0 %v2064
    %2690 = vmatprep.subr.bf16.mxu0 %v2069
    %2691 = vmatpush1.bf16.msra.mxu0 %v2068
    %2692 = vmatprep.subr.bf16.mxu0 %v2073
    %2693 = vmatpush1.bf16.msra.mxu0 %v2072
    %2694 = vmatprep.subr.bf16.mxu0 %v2077
    %2695 = vmatpush1.bf16.msra.mxu0 %v2076
    %2696 = vmatprep.subr.bf16.mxu0 %v2081
    %2697 = vmatpush1.bf16.msra.mxu0 %v2080
    %2698 = vmatprep.subr.bf16.mxu0 %v2085
    %2699 = vmatpush1.bf16.msra.mxu0 %v2084
    %2700 = vmatprep.subr.bf16.mxu0 %v2089
    %2701 = vmatpush1.bf16.msra.mxu0 %v2088
    %2702 = vmatprep.subr.bf16.mxu0 %v2093
    %2703 = vmatpush1.bf16.msra.mxu0 %v2092
    %2704 = vmatprep.subr.bf16.mxu0 %v2097
    %2705 = vmatpush1.bf16.msra.mxu0 %v2096
    %2706 = vmatprep.subr.bf16.mxu0 %v2101
    %2707 = vmatpush1.bf16.msra.mxu0 %v2100
    %2708 = vmatprep.subr.bf16.mxu0 %v2105
    %2709 = vmatpush1.bf16.msra.mxu0 %v2104
    %2710 = vmatprep.subr.bf16.mxu0 %v2109
    %2711 = vmatpush1.bf16.msra.mxu0 %v2108
    %2712 = vmatprep.subr.bf16.mxu0 %v2113
    %2713 = vmatpush1.bf16.msra.mxu0 %v2112
    %2714 = vmatprep.subr.bf16.mxu0 %v2117
    %2715 = vmatpush1.bf16.msra.mxu0 %v2116
    %2716 = vmatprep.mubr.bf16.mxu0 %v877
    %2717 = vmatmul.mubr.bf16.gmra.mrb[0].mxu0 %v876
    %v2718 = vpop.f32.mrb[0].mxu0
    %v2719 = vadd.f32 %v2678, %v2718
    %v2720 = vpop.f32.mrb[0].mxu0
    %v2721 = vadd.f32 %v2680, %v2720
    %v2722 = vpop.f32.mrb[0].mxu0
    %v2723 = vpop.f32.mrb[0].mxu0
    %2724 = vdwg.mxu0
    %2725 = vmatprep.subr.bf16.mxu0 %v2121
    %2726 = vmatpush1.bf16.msra.mxu0 %v2120
    %2727 = vmatprep.subr.bf16.mxu0 %v2125
    %2728 = vmatpush1.bf16.msra.mxu0 %v2124
    %2729 = vmatprep.subr.bf16.mxu0 %v2129
    %2730 = vmatpush1.bf16.msra.mxu0 %v2128
    %2731 = vmatprep.subr.bf16.mxu0 %v2133
    %2732 = vmatpush1.bf16.msra.mxu0 %v2132
    %2733 = vmatprep.subr.bf16.mxu0 %v2137
    %2734 = vmatpush1.bf16.msra.mxu0 %v2136
    %2735 = vmatprep.subr.bf16.mxu0 %v2141
    %2736 = vmatpush1.bf16.msra.mxu0 %v2140
    %2737 = vmatprep.subr.bf16.mxu0 %v2145
    %2738 = vmatpush1.bf16.msra.mxu0 %v2144
    %2739 = vmatprep.subr.bf16.mxu0 %v2149
    %2740 = vmatpush1.bf16.msra.mxu0 %v2148
    %2741 = vmatprep.subr.bf16.mxu0 %v2153
    %2742 = vmatpush1.bf16.msra.mxu0 %v2152
    %2743 = vmatprep.subr.bf16.mxu0 %v2157
    %2744 = vmatpush1.bf16.msra.mxu0 %v2156
    %2745 = vmatprep.subr.bf16.mxu0 %v2161
    %2746 = vmatpush1.bf16.msra.mxu0 %v2160
    %2747 = vmatprep.subr.bf16.mxu0 %v2165
    %2748 = vmatpush1.bf16.msra.mxu0 %v2164
    %2749 = vmatprep.subr.bf16.mxu0 %v2169
    %2750 = vmatpush1.bf16.msra.mxu0 %v2168
    %2751 = vmatprep.subr.bf16.mxu0 %v2173
    %2752 = vmatpush1.bf16.msra.mxu0 %v2172
    %2753 = vmatprep.subr.bf16.mxu0 %v2177
    %2754 = vmatpush1.bf16.msra.mxu0 %v2176
    %2755 = vmatprep.subr.bf16.mxu0 %v2181
    %2756 = vmatpush1.bf16.msra.mxu0 %v2180
    %2757 = vmatprep.mubr.bf16.mxu0 %v879
    %2758 = vmatmul.mubr.bf16.gmra.mrb[0].mxu0 %v878
    %v2759 = vpop.f32.mrb[0].mxu0
    %v2760 = vadd.f32 %v2719, %v2759
    %v2761 = vpop.f32.mrb[0].mxu0
    %v2762 = vadd.f32 %v2721, %v2761
    %v2763 = vpop.f32.mrb[0].mxu0
    %v2764 = vpop.f32.mrb[0].mxu0
    %2765 = vdwg.mxu0
    %v2766 = vmax.f32 %v2596, 0.0
    %v2767 = vmax.f32 %v2598, 0.0
    %v2768 = vmax.f32 %v2760, 0.0
    %v2769 = vmax.f32 %v2762, 0.0
    %v2770 = vpack.c.bf16 %v2766, %v2766
    %v2771 = vpack.c.bf16 %v2767, %v2767
    %v2772 = vpack.c.bf16 %v2768, %v2768
    %v2773 = vpack.c.bf16 %v2769, %v2769
    %v2774 = vld [vmem:[#allocation10] sm:$0xff]
    %v2775 = vld [vmem:[#allocation10 + $0x8] sm:$0xff]
    %v2776 = vld [vmem:[#allocation10 + $0x10] sm:$0xff]
    %v2777 = vld [vmem:[#allocation10 + $0x18] sm:$0xff]
    %v2778 = vld [vmem:[#allocation10 + $0x20] sm:$0xff]
    %v2779 = vld [vmem:[#allocation10 + $0x28] sm:$0xff]
    %v2780 = vld [vmem:[#allocation10 + $0x30] sm:$0xff]
    %v2781 = vld [vmem:[#allocation10 + $0x38] sm:$0xff]
    %v2782 = vld [vmem:[#allocation10 + $0x40] sm:$0xff]
    %v2783 = vld [vmem:[#allocation10 + $0x48] sm:$0xff]
    %v2784 = vld [vmem:[#allocation10 + $0x50] sm:$0xff]
    %v2785 = vld [vmem:[#allocation10 + $0x58] sm:$0xff]
    %v2786 = vld [vmem:[#allocation10 + $0x60] sm:$0xff]
    %v2787 = vld [vmem:[#allocation10 + $0x68] sm:$0xff]
    %v2788 = vld [vmem:[#allocation10 + $0x70] sm:$0xff]
    %v2789 = vld [vmem:[#allocation10 + $0x78] sm:$0xff]
    %v2790 = vld [vmem:[#allocation10 + $0x80] sm:$0xff]
    %v2791 = vld [vmem:[#allocation10 + $0x88] sm:$0xff]
    %v2792 = vld [vmem:[#allocation10 + $0x90] sm:$0xff]
    %v2793 = vld [vmem:[#allocation10 + $0x98] sm:$0xff]
    %v2794 = vld [vmem:[#allocation10 + $0xa0] sm:$0xff]
    %v2795 = vld [vmem:[#allocation10 + $0xa8] sm:$0xff]
    %v2796 = vld [vmem:[#allocation10 + $0xb0] sm:$0xff]
    %v2797 = vld [vmem:[#allocation10 + $0xb8] sm:$0xff]
    %v2798 = vld [vmem:[#allocation10 + $0xc0] sm:$0xff]
    %v2799 = vld [vmem:[#allocation10 + $0xc8] sm:$0xff]
    %v2800 = vld [vmem:[#allocation10 + $0xd0] sm:$0xff]
    %v2801 = vld [vmem:[#allocation10 + $0xd8] sm:$0xff]
    %v2802 = vld [vmem:[#allocation10 + $0xe0] sm:$0xff]
    %v2803 = vld [vmem:[#allocation10 + $0xe8] sm:$0xff]
    %v2804 = vld [vmem:[#allocation10 + $0xf0] sm:$0xff]
    %v2805 = vld [vmem:[#allocation10 + $0xf8] sm:$0xff]
    %v2806 = vld [vmem:[#allocation10 + $0x100] sm:$0xff]
    %v2807 = vld [vmem:[#allocation10 + $0x108] sm:$0xff]
    %v2808 = vld [vmem:[#allocation10 + $0x110] sm:$0xff]
    %v2809 = vld [vmem:[#allocation10 + $0x118] sm:$0xff]
    %v2810 = vld [vmem:[#allocation10 + $0x120] sm:$0xff]
    %v2811 = vld [vmem:[#allocation10 + $0x128] sm:$0xff]
    %v2812 = vld [vmem:[#allocation10 + $0x130] sm:$0xff]
    %v2813 = vld [vmem:[#allocation10 + $0x138] sm:$0xff]
    %v2814 = vld [vmem:[#allocation10 + $0x140] sm:$0xff]
    %v2815 = vld [vmem:[#allocation10 + $0x148] sm:$0xff]
    %v2816 = vld [vmem:[#allocation10 + $0x150] sm:$0xff]
    %v2817 = vld [vmem:[#allocation10 + $0x158] sm:$0xff]
    %v2818 = vld [vmem:[#allocation10 + $0x160] sm:$0xff]
    %v2819 = vld [vmem:[#allocation10 + $0x168] sm:$0xff]
    %v2820 = vld [vmem:[#allocation10 + $0x170] sm:$0xff]
    %v2821 = vld [vmem:[#allocation10 + $0x178] sm:$0xff]
    %v2822 = vld [vmem:[#allocation10 + $0x180] sm:$0xff]
    %v2823 = vld [vmem:[#allocation10 + $0x188] sm:$0xff]
    %v2824 = vld [vmem:[#allocation10 + $0x190] sm:$0xff]
    %v2825 = vld [vmem:[#allocation10 + $0x198] sm:$0xff]
    %v2826 = vld [vmem:[#allocation10 + $0x1a0] sm:$0xff]
    %v2827 = vld [vmem:[#allocation10 + $0x1a8] sm:$0xff]
    %v2828 = vld [vmem:[#allocation10 + $0x1b0] sm:$0xff]
    %v2829 = vld [vmem:[#allocation10 + $0x1b8] sm:$0xff]
    %v2830 = vld [vmem:[#allocation10 + $0x1c0] sm:$0xff]
    %v2831 = vld [vmem:[#allocation10 + $0x1c8] sm:$0xff]
    %v2832 = vld [vmem:[#allocation10 + $0x1d0] sm:$0xff]
    %v2833 = vld [vmem:[#allocation10 + $0x1d8] sm:$0xff]
    %v2834 = vld [vmem:[#allocation10 + $0x1e0] sm:$0xff]
    %v2835 = vld [vmem:[#allocation10 + $0x1e8] sm:$0xff]
    %v2836 = vld [vmem:[#allocation10 + $0x1f0] sm:$0xff]
    %v2837 = vld [vmem:[#allocation10 + $0x1f8] sm:$0xff]
    %v2838 = vld [vmem:[%s8] sm:$0x3]
    %v2840 = vlaneseq
    %v2841 = vshrl.u32 %v2840, 7
    %v2842 = vsub.s32 0, %v2841
    %v2843 = vrot.slane %v2838, %v2842
    %v2844 = vlaneseq
    %v2845 = vshrl.u32 %v2844, 7
    %v2846 = vsub.s32 1, %v2845
    %v2847 = vrot.slane %v2838, %v2846
    %v2914 = vunpack.c.l.b16 %v2774
    %v2915 = vunpack.c.h.b16 %v2774
    %v2916 = vunpack.c.l.b16 %v2775
    %v2917 = vunpack.c.h.b16 %v2775
    %v2918 = vunpack.c.l.b16 %v2776
    %v2919 = vunpack.c.h.b16 %v2776
    %v2920 = vunpack.c.l.b16 %v2777
    %v2921 = vunpack.c.h.b16 %v2777
    %v2922 = vunpack.c.l.b16 %v2778
    %v2923 = vunpack.c.h.b16 %v2778
    %v2924 = vunpack.c.l.b16 %v2779
    %v2925 = vunpack.c.h.b16 %v2779
    %v2926 = vunpack.c.l.b16 %v2780
    %v2927 = vunpack.c.h.b16 %v2780
    %v2928 = vunpack.c.l.b16 %v2781
    %v2929 = vunpack.c.h.b16 %v2781
    %v2930 = vunpack.c.l.b16 %v2782
    %v2931 = vunpack.c.h.b16 %v2782
    %v2932 = vunpack.c.l.b16 %v2783
    %v2933 = vunpack.c.h.b16 %v2783
    %v2934 = vunpack.c.l.b16 %v2784
    %v2935 = vunpack.c.h.b16 %v2784
    %v2936 = vunpack.c.l.b16 %v2785
    %v2937 = vunpack.c.h.b16 %v2785
    %v2938 = vunpack.c.l.b16 %v2786
    %v2939 = vunpack.c.h.b16 %v2786
    %v2940 = vunpack.c.l.b16 %v2787
    %v2941 = vunpack.c.h.b16 %v2787
    %v2942 = vunpack.c.l.b16 %v2788
    %v2943 = vunpack.c.h.b16 %v2788
    %v2944 = vunpack.c.l.b16 %v2789
    %v2945 = vunpack.c.h.b16 %v2789
    %v2946 = vunpack.c.l.b16 %v2790
    %v2947 = vunpack.c.h.b16 %v2790
    %v2948 = vunpack.c.l.b16 %v2791
    %v2949 = vunpack.c.h.b16 %v2791
    %v2950 = vunpack.c.l.b16 %v2792
    %v2951 = vunpack.c.h.b16 %v2792
    %v2952 = vunpack.c.l.b16 %v2793
    %v2953 = vunpack.c.h.b16 %v2793
    %v2954 = vunpack.c.l.b16 %v2794
    %v2955 = vunpack.c.h.b16 %v2794
    %v2956 = vunpack.c.l.b16 %v2795
    %v2957 = vunpack.c.h.b16 %v2795
    %v2958 = vunpack.c.l.b16 %v2796
    %v2959 = vunpack.c.h.b16 %v2796
    %v2960 = vunpack.c.l.b16 %v2797
    %v2961 = vunpack.c.h.b16 %v2797
    %v2962 = vunpack.c.l.b16 %v2798
    %v2963 = vunpack.c.h.b16 %v2798
    %v2964 = vunpack.c.l.b16 %v2799
    %v2965 = vunpack.c.h.b16 %v2799
    %v2966 = vunpack.c.l.b16 %v2800
    %v2967 = vunpack.c.h.b16 %v2800
    %v2968 = vunpack.c.l.b16 %v2801
    %v2969 = vunpack.c.h.b16 %v2801
    %v2970 = vunpack.c.l.b16 %v2802
    %v2971 = vunpack.c.h.b16 %v2802
    %v2972 = vunpack.c.l.b16 %v2803
    %v2973 = vunpack.c.h.b16 %v2803
    %v2974 = vunpack.c.l.b16 %v2804
    %v2975 = vunpack.c.h.b16 %v2804
    %v2976 = vunpack.c.l.b16 %v2805
    %v2977 = vunpack.c.h.b16 %v2805
    %v2978 = vunpack.c.l.b16 %v2806
    %v2979 = vunpack.c.h.b16 %v2806
    %v2980 = vunpack.c.l.b16 %v2807
    %v2981 = vunpack.c.h.b16 %v2807
    %v2982 = vunpack.c.l.b16 %v2808
    %v2983 = vunpack.c.h.b16 %v2808
    %v2984 = vunpack.c.l.b16 %v2809
    %v2985 = vunpack.c.h.b16 %v2809
    %v2986 = vunpack.c.l.b16 %v2810
    %v2987 = vunpack.c.h.b16 %v2810
    %v2988 = vunpack.c.l.b16 %v2811
    %v2989 = vunpack.c.h.b16 %v2811
    %v2990 = vunpack.c.l.b16 %v2812
    %v2991 = vunpack.c.h.b16 %v2812
    %v2992 = vunpack.c.l.b16 %v2813
    %v2993 = vunpack.c.h.b16 %v2813
    %v2994 = vunpack.c.l.b16 %v2814
    %v2995 = vunpack.c.h.b16 %v2814
    %v2996 = vunpack.c.l.b16 %v2815
    %v2997 = vunpack.c.h.b16 %v2815
    %v2998 = vunpack.c.l.b16 %v2816
    %v2999 = vunpack.c.h.b16 %v2816
    %v3000 = vunpack.c.l.b16 %v2817
    %v3001 = vunpack.c.h.b16 %v2817
    %v3002 = vunpack.c.l.b16 %v2818
    %v3003 = vunpack.c.h.b16 %v2818
    %v3004 = vunpack.c.l.b16 %v2819
    %v3005 = vunpack.c.h.b16 %v2819
    %v3006 = vunpack.c.l.b16 %v2820
    %v3007 = vunpack.c.h.b16 %v2820
    %v3008 = vunpack.c.l.b16 %v2821
    %v3009 = vunpack.c.h.b16 %v2821
    %v3010 = vunpack.c.l.b16 %v2822
    %v3011 = vunpack.c.h.b16 %v2822
    %v3012 = vunpack.c.l.b16 %v2823
    %v3013 = vunpack.c.h.b16 %v2823
    %v3014 = vunpack.c.l.b16 %v2824
    %v3015 = vunpack.c.h.b16 %v2824
    %v3016 = vunpack.c.l.b16 %v2825
    %v3017 = vunpack.c.h.b16 %v2825
    %v3018 = vunpack.c.l.b16 %v2826
    %v3019 = vunpack.c.h.b16 %v2826
    %v3020 = vunpack.c.l.b16 %v2827
    %v3021 = vunpack.c.h.b16 %v2827
    %v3022 = vunpack.c.l.b16 %v2828
    %v3023 = vunpack.c.h.b16 %v2828
    %v3024 = vunpack.c.l.b16 %v2829
    %v3025 = vunpack.c.h.b16 %v2829
    %v3026 = vunpack.c.l.b16 %v2830
    %v3027 = vunpack.c.h.b16 %v2830
    %v3028 = vunpack.c.l.b16 %v2831
    %v3029 = vunpack.c.h.b16 %v2831
    %v3030 = vunpack.c.l.b16 %v2832
    %v3031 = vunpack.c.h.b16 %v2832
    %v3032 = vunpack.c.l.b16 %v2833
    %v3033 = vunpack.c.h.b16 %v2833
    %v3034 = vunpack.c.l.b16 %v2834
    %v3035 = vunpack.c.h.b16 %v2834
    %v3036 = vunpack.c.l.b16 %v2835
    %v3037 = vunpack.c.h.b16 %v2835
    %v3038 = vunpack.c.l.b16 %v2836
    %v3039 = vunpack.c.h.b16 %v2836
    %v3040 = vunpack.c.l.b16 %v2837
    %v3041 = vunpack.c.h.b16 %v2837
    %v3042 = vpack.c.b16 %v2916, %v2914
    %v3043 = vpack.c.b16 %v2917, %v2915
    %v3044 = vpack.c.b16 %v2920, %v2918
    %v3045 = vpack.c.b16 %v2921, %v2919
    %v3046 = vpack.c.b16 %v2924, %v2922
    %v3047 = vpack.c.b16 %v2925, %v2923
    %v3048 = vpack.c.b16 %v2928, %v2926
    %v3049 = vpack.c.b16 %v2929, %v2927
    %v3050 = vpack.c.b16 %v2932, %v2930
    %v3051 = vpack.c.b16 %v2933, %v2931
    %v3052 = vpack.c.b16 %v2936, %v2934
    %v3053 = vpack.c.b16 %v2937, %v2935
    %v3054 = vpack.c.b16 %v2940, %v2938
    %v3055 = vpack.c.b16 %v2941, %v2939
    %v3056 = vpack.c.b16 %v2944, %v2942
    %v3057 = vpack.c.b16 %v2945, %v2943
    %v3058 = vpack.c.b16 %v2948, %v2946
    %v3059 = vpack.c.b16 %v2949, %v2947
    %v3060 = vpack.c.b16 %v2952, %v2950
    %v3061 = vpack.c.b16 %v2953, %v2951
    %v3062 = vpack.c.b16 %v2956, %v2954
    %v3063 = vpack.c.b16 %v2957, %v2955
    %v3064 = vpack.c.b16 %v2960, %v2958
    %v3065 = vpack.c.b16 %v2961, %v2959
    %v3066 = vpack.c.b16 %v2964, %v2962
    %v3067 = vpack.c.b16 %v2965, %v2963
    %v3068 = vpack.c.b16 %v2968, %v2966
    %v3069 = vpack.c.b16 %v2969, %v2967
    %v3070 = vpack.c.b16 %v2972, %v2970
    %v3071 = vpack.c.b16 %v2973, %v2971
    %v3072 = vpack.c.b16 %v2976, %v2974
    %v3073 = vpack.c.b16 %v2977, %v2975
    %v3074 = vpack.c.b16 %v2980, %v2978
    %v3075 = vpack.c.b16 %v2981, %v2979
    %v3076 = vpack.c.b16 %v2984, %v2982
    %v3077 = vpack.c.b16 %v2985, %v2983
    %v3078 = vpack.c.b16 %v2988, %v2986
    %v3079 = vpack.c.b16 %v2989, %v2987
    %v3080 = vpack.c.b16 %v2992, %v2990
    %v3081 = vpack.c.b16 %v2993, %v2991
    %v3082 = vpack.c.b16 %v2996, %v2994
    %v3083 = vpack.c.b16 %v2997, %v2995
    %v3084 = vpack.c.b16 %v3000, %v2998
    %v3085 = vpack.c.b16 %v3001, %v2999
    %v3086 = vpack.c.b16 %v3004, %v3002
    %v3087 = vpack.c.b16 %v3005, %v3003
    %v3088 = vpack.c.b16 %v3008, %v3006
    %v3089 = vpack.c.b16 %v3009, %v3007
    %v3090 = vpack.c.b16 %v3012, %v3010
    %v3091 = vpack.c.b16 %v3013, %v3011
    %v3092 = vpack.c.b16 %v3016, %v3014
    %v3093 = vpack.c.b16 %v3017, %v3015
    %v3094 = vpack.c.b16 %v3020, %v3018
    %v3095 = vpack.c.b16 %v3021, %v3019
    %v3096 = vpack.c.b16 %v3024, %v3022
    %v3097 = vpack.c.b16 %v3025, %v3023
    %v3098 = vpack.c.b16 %v3028, %v3026
    %v3099 = vpack.c.b16 %v3029, %v3027
    %v3100 = vpack.c.b16 %v3032, %v3030
    %v3101 = vpack.c.b16 %v3033, %v3031
    %v3102 = vpack.c.b16 %v3036, %v3034
    %v3103 = vpack.c.b16 %v3037, %v3035
    %v3104 = vpack.c.b16 %v3040, %v3038
    %v3105 = vpack.c.b16 %v3041, %v3039
    %3170 = vmatprep.subr.bf16.mxu0 %v3043
    %3171 = vmatpush1.bf16.msra.mxu0 %v3042
    %3172 = vmatprep.subr.bf16.mxu0 %v3045
    %3173 = vmatpush1.bf16.msra.mxu0 %v3044
    %3174 = vmatprep.subr.bf16.mxu0 %v3047
    %3175 = vmatpush1.bf16.msra.mxu0 %v3046
    %3176 = vmatprep.subr.bf16.mxu0 %v3049
    %3177 = vmatpush1.bf16.msra.mxu0 %v3048
    %3178 = vmatprep.subr.bf16.mxu0 %v3051
    %3179 = vmatpush1.bf16.msra.mxu0 %v3050
    %3180 = vmatprep.subr.bf16.mxu0 %v3053
    %3181 = vmatpush1.bf16.msra.mxu0 %v3052
    %3182 = vmatprep.subr.bf16.mxu0 %v3055
    %3183 = vmatpush1.bf16.msra.mxu0 %v3054
    %3184 = vmatprep.subr.bf16.mxu0 %v3057
    %3185 = vmatpush1.bf16.msra.mxu0 %v3056
    %3186 = vmatprep.subr.bf16.mxu0 %v3059
    %3187 = vmatpush1.bf16.msra.mxu0 %v3058
    %3188 = vmatprep.subr.bf16.mxu0 %v3061
    %3189 = vmatpush1.bf16.msra.mxu0 %v3060
    %3190 = vmatprep.subr.bf16.mxu0 %v3063
    %3191 = vmatpush1.bf16.msra.mxu0 %v3062
    %3192 = vmatprep.subr.bf16.mxu0 %v3065
    %3193 = vmatpush1.bf16.msra.mxu0 %v3064
    %3194 = vmatprep.subr.bf16.mxu0 %v3067
    %3195 = vmatpush1.bf16.msra.mxu0 %v3066
    %3196 = vmatprep.subr.bf16.mxu0 %v3069
    %3197 = vmatpush1.bf16.msra.mxu0 %v3068
    %3198 = vmatprep.subr.bf16.mxu0 %v3071
    %3199 = vmatpush1.bf16.msra.mxu0 %v3070
    %3200 = vmatprep.subr.bf16.mxu0 %v3073
    %3201 = vmatpush1.bf16.msra.mxu0 %v3072
    %3202 = vmatprep.mubr.bf16.mxu0 %v2771
    %3203 = vmatmul.mubr.bf16.gmra.mrb[0].mxu0 %v2770
    %v3204 = vpop.f32.mrb[0].mxu0
    %v3205 = vadd.f32 %v2843, %v3204
    %v3206 = vpop.f32.mrb[0].mxu0
    %v3207 = vadd.f32 %v2847, %v3206
    %v3208 = vpop.f32.mrb[0].mxu0
    %v3209 = vpop.f32.mrb[0].mxu0
    %3210 = vdwg.mxu0
    %3211 = vmatprep.subr.bf16.mxu0 %v3075
    %3212 = vmatpush1.bf16.msra.mxu0 %v3074
    %3213 = vmatprep.subr.bf16.mxu0 %v3077
    %3214 = vmatpush1.bf16.msra.mxu0 %v3076
    %3215 = vmatprep.subr.bf16.mxu0 %v3079
    %3216 = vmatpush1.bf16.msra.mxu0 %v3078
    %3217 = vmatprep.subr.bf16.mxu0 %v3081
    %3218 = vmatpush1.bf16.msra.mxu0 %v3080
    %3219 = vmatprep.subr.bf16.mxu0 %v3083
    %3220 = vmatpush1.bf16.msra.mxu0 %v3082
    %3221 = vmatprep.subr.bf16.mxu0 %v3085
    %3222 = vmatpush1.bf16.msra.mxu0 %v3084
    %3223 = vmatprep.subr.bf16.mxu0 %v3087
    %3224 = vmatpush1.bf16.msra.mxu0 %v3086
    %3225 = vmatprep.subr.bf16.mxu0 %v3089
    %3226 = vmatpush1.bf16.msra.mxu0 %v3088
    %3227 = vmatprep.subr.bf16.mxu0 %v3091
    %3228 = vmatpush1.bf16.msra.mxu0 %v3090
    %3229 = vmatprep.subr.bf16.mxu0 %v3093
    %3230 = vmatpush1.bf16.msra.mxu0 %v3092
    %3231 = vmatprep.subr.bf16.mxu0 %v3095
    %3232 = vmatpush1.bf16.msra.mxu0 %v3094
    %3233 = vmatprep.subr.bf16.mxu0 %v3097
    %3234 = vmatpush1.bf16.msra.mxu0 %v3096
    %3235 = vmatprep.subr.bf16.mxu0 %v3099
    %3236 = vmatpush1.bf16.msra.mxu0 %v3098
    %3237 = vmatprep.subr.bf16.mxu0 %v3101
    %3238 = vmatpush1.bf16.msra.mxu0 %v3100
    %3239 = vmatprep.subr.bf16.mxu0 %v3103
    %3240 = vmatpush1.bf16.msra.mxu0 %v3102
    %3241 = vmatprep.subr.bf16.mxu0 %v3105
    %3242 = vmatpush1.bf16.msra.mxu0 %v3104
    %3243 = vmatprep.mubr.bf16.mxu0 %v2773
    %3244 = vmatmul.mubr.bf16.gmra.mrb[0].mxu0 %v2772
    %v3245 = vpop.f32.mrb[0].mxu0
    %v3246 = vadd.f32 %v3205, %v3245
    %v3247 = vpop.f32.mrb[0].mxu0
    %v3248 = vadd.f32 %v3207, %v3247
    %v3249 = vpop.f32.mrb[0].mxu0
    %v3250 = vpop.f32.mrb[0].mxu0
    %3251 = vdwg.mxu0
    %v3252 = vmax.f32 %v3246, 0.0
    %v3253 = vmax.f32 %v3248, 0.0
    %v3254 = vpack.c.bf16 %v3252, %v3252
    %v3255 = vpack.c.bf16 %v3253, %v3253
    %v3256 = vld [vmem:[#allocation11] sm:$0xf]
    %v3257 = vld [vmem:[#allocation11 + $0x4] sm:$0xf]
    %v3258 = vld [vmem:[#allocation11 + $0x8] sm:$0xf]
    %v3259 = vld [vmem:[#allocation11 + $0xc] sm:$0xf]
    %v3260 = vld [vmem:[#allocation11 + $0x10] sm:$0xf]
    %v3261 = vld [vmem:[#allocation11 + $0x14] sm:$0xf]
    %v3262 = vld [vmem:[#allocation11 + $0x18] sm:$0xf]
    %v3263 = vld [vmem:[#allocation11 + $0x1c] sm:$0xf]
    %v3264 = vld [vmem:[#allocation11 + $0x20] sm:$0xf]
    %v3265 = vld [vmem:[#allocation11 + $0x24] sm:$0xf]
    %v3266 = vld [vmem:[#allocation11 + $0x28] sm:$0xf]
    %v3267 = vld [vmem:[#allocation11 + $0x2c] sm:$0xf]
    %v3268 = vld [vmem:[#allocation11 + $0x30] sm:$0xf]
    %v3269 = vld [vmem:[#allocation11 + $0x34] sm:$0xf]
    %v3270 = vld [vmem:[#allocation11 + $0x38] sm:$0xf]
    %v3271 = vld [vmem:[#allocation11 + $0x3c] sm:$0xf]
    %v3272 = vld [vmem:[#allocation11 + $0x40] sm:$0xf]
    %v3273 = vld [vmem:[#allocation11 + $0x44] sm:$0xf]
    %v3274 = vld [vmem:[#allocation11 + $0x48] sm:$0xf]
    %v3275 = vld [vmem:[#allocation11 + $0x4c] sm:$0xf]
    %v3276 = vld [vmem:[#allocation11 + $0x50] sm:$0xf]
    %v3277 = vld [vmem:[#allocation11 + $0x54] sm:$0xf]
    %v3278 = vld [vmem:[#allocation11 + $0x58] sm:$0xf]
    %v3279 = vld [vmem:[#allocation11 + $0x5c] sm:$0xf]
    %v3280 = vld [vmem:[#allocation11 + $0x60] sm:$0xf]
    %v3281 = vld [vmem:[#allocation11 + $0x64] sm:$0xf]
    %v3282 = vld [vmem:[#allocation11 + $0x68] sm:$0xf]
    %v3283 = vld [vmem:[#allocation11 + $0x6c] sm:$0xf]
    %v3284 = vld [vmem:[#allocation11 + $0x70] sm:$0xf]
    %v3285 = vld [vmem:[#allocation11 + $0x74] sm:$0xf]
    %v3286 = vld [vmem:[#allocation11 + $0x78] sm:$0xf]
    %v3287 = vld [vmem:[#allocation11 + $0x7c] sm:$0xf]
    %v3288 = vld [vmem:[%s10] sm:$0x1]
    %v3290 = vlaneseq
    %v3291 = vshrl.u32 %v3290, 7
    %v3292 = vsub.s32 0, %v3291
    %v3293 = vrot.slane %v3288, %v3292
    %v3327 = vunpack.c.l.b16 %v3256
    %v3328 = vunpack.c.l.b16 %v3257
    %v3329 = vunpack.c.l.b16 %v3258
    %v3330 = vunpack.c.l.b16 %v3259
    %v3331 = vunpack.c.l.b16 %v3260
    %v3332 = vunpack.c.l.b16 %v3261
    %v3333 = vunpack.c.l.b16 %v3262
    %v3334 = vunpack.c.l.b16 %v3263
    %v3335 = vunpack.c.l.b16 %v3264
    %v3336 = vunpack.c.l.b16 %v3265
    %v3337 = vunpack.c.l.b16 %v3266
    %v3338 = vunpack.c.l.b16 %v3267
    %v3339 = vunpack.c.l.b16 %v3268
    %v3340 = vunpack.c.l.b16 %v3269
    %v3341 = vunpack.c.l.b16 %v3270
    %v3342 = vunpack.c.l.b16 %v3271
    %v3343 = vunpack.c.l.b16 %v3272
    %v3344 = vunpack.c.l.b16 %v3273
    %v3345 = vunpack.c.l.b16 %v3274
    %v3346 = vunpack.c.l.b16 %v3275
    %v3347 = vunpack.c.l.b16 %v3276
    %v3348 = vunpack.c.l.b16 %v3277
    %v3349 = vunpack.c.l.b16 %v3278
    %v3350 = vunpack.c.l.b16 %v3279
    %v3351 = vunpack.c.l.b16 %v3280
    %v3352 = vunpack.c.l.b16 %v3281
    %v3353 = vunpack.c.l.b16 %v3282
    %v3354 = vunpack.c.l.b16 %v3283
    %v3355 = vunpack.c.l.b16 %v3284
    %v3356 = vunpack.c.l.b16 %v3285
    %v3357 = vunpack.c.l.b16 %v3286
    %v3358 = vunpack.c.l.b16 %v3287
    %v3359 = vpack.c.b16 %v3328, %v3327
    %v3360 = vpack.c.b16 %v3330, %v3329
    %v3361 = vpack.c.b16 %v3332, %v3331
    %v3362 = vpack.c.b16 %v3334, %v3333
    %v3363 = vpack.c.b16 %v3336, %v3335
    %v3364 = vpack.c.b16 %v3338, %v3337
    %v3365 = vpack.c.b16 %v3340, %v3339
    %v3366 = vpack.c.b16 %v3342, %v3341
    %v3367 = vpack.c.b16 %v3344, %v3343
    %v3368 = vpack.c.b16 %v3346, %v3345
    %v3369 = vpack.c.b16 %v3348, %v3347
    %v3370 = vpack.c.b16 %v3350, %v3349
    %v3371 = vpack.c.b16 %v3352, %v3351
    %v3372 = vpack.c.b16 %v3354, %v3353
    %v3373 = vpack.c.b16 %v3356, %v3355
    %v3374 = vpack.c.b16 %v3358, %v3357
    %3391 = vmatprep.subr.bf16.mxu0 0
    %3392 = vmatpush1.bf16.msra.mxu0 %v3359
    %3393 = vmatprep.subr.bf16.mxu0 0
    %3394 = vmatpush1.bf16.msra.mxu0 %v3360
    %3395 = vmatprep.subr.bf16.mxu0 0
    %3396 = vmatpush1.bf16.msra.mxu0 %v3361
    %3397 = vmatprep.subr.bf16.mxu0 0
    %3398 = vmatpush1.bf16.msra.mxu0 %v3362
    %3399 = vmatprep.subr.bf16.mxu0 0
    %3400 = vmatpush1.bf16.msra.mxu0 %v3363
    %3401 = vmatprep.subr.bf16.mxu0 0
    %3402 = vmatpush1.bf16.msra.mxu0 %v3364
    %3403 = vmatprep.subr.bf16.mxu0 0
    %3404 = vmatpush1.bf16.msra.mxu0 %v3365
    %3405 = vmatprep.subr.bf16.mxu0 0
    %3406 = vmatpush1.bf16.msra.mxu0 %v3366
    %3407 = vmatprep.subr.bf16.mxu0 0
    %3408 = vmatpush1.bf16.msra.mxu0 %v3367
    %3409 = vmatprep.subr.bf16.mxu0 0
    %3410 = vmatpush1.bf16.msra.mxu0 %v3368
    %3411 = vmatprep.subr.bf16.mxu0 0
    %3412 = vmatpush1.bf16.msra.mxu0 %v3369
    %3413 = vmatprep.subr.bf16.mxu0 0
    %3414 = vmatpush1.bf16.msra.mxu0 %v3370
    %3415 = vmatprep.subr.bf16.mxu0 0
    %3416 = vmatpush1.bf16.msra.mxu0 %v3371
    %3417 = vmatprep.subr.bf16.mxu0 0
    %3418 = vmatpush1.bf16.msra.mxu0 %v3372
    %3419 = vmatprep.subr.bf16.mxu0 0
    %3420 = vmatpush1.bf16.msra.mxu0 %v3373
    %3421 = vmatprep.subr.bf16.mxu0 0
    %3422 = vmatpush1.bf16.msra.mxu0 %v3374
    %3423 = vmatprep.mubr.bf16.mxu0 %v3255
    %3424 = vmatmul.mubr.bf16.gmra.mrb[0].mxu0 %v3254
    %v3425 = vpop.f32.mrb[0].mxu0
    %v3426 = vadd.f32 %v3293, %v3425
    %v3427 = vpop.f32.mrb[0].mxu0
    %v3428 = vpop.f32.mrb[0].mxu0
    %v3429 = vpop.f32.mrb[0].mxu0
    %3430 = vdwg.mxu0
    %v3431 = vmax.f32 %v3426, 0.0
    %v3432 = vpack.c.bf16 %v3431, %v3431
    %v3433 = vld [vmem:[#allocation13] sm:$0xf]
    %v3434 = vld [vmem:[#allocation13 + $0x4] sm:$0xf]
    %v3435 = vld [vmem:[#allocation13 + $0x8] sm:$0xf]
    %v3436 = vld [vmem:[#allocation13 + $0xc] sm:$0xf]
    %v3437 = vld [vmem:[#allocation13 + $0x10] sm:$0xf]
    %v3438 = vld [vmem:[#allocation13 + $0x14] sm:$0xf]
    %v3439 = vld [vmem:[#allocation13 + $0x18] sm:$0xf]
    %v3440 = vld [vmem:[#allocation13 + $0x1c] sm:$0xf]
    %v3441 = vld [vmem:[#allocation13 + $0x20] sm:$0xf]
    %v3442 = vld [vmem:[#allocation13 + $0x24] sm:$0xf]
    %v3443 = vld [vmem:[#allocation13 + $0x28] sm:$0xf]
    %v3444 = vld [vmem:[#allocation13 + $0x2c] sm:$0xf]
    %v3445 = vld [vmem:[#allocation13 + $0x30] sm:$0xf]
    %v3446 = vld [vmem:[#allocation13 + $0x34] sm:$0xf]
    %v3447 = vld [vmem:[#allocation13 + $0x38] sm:$0xf]
    %v3448 = vld [vmem:[#allocation13 + $0x3c] sm:$0xf]
    %v3449 = vld [vmem:[%s12] sm:$0x1]
    %v3451 = vlaneseq
    %v3452 = vshrl.u32 %v3451, 7
    %v3453 = vsub.s32 0, %v3452
    %v3454 = vrot.slane %v3449, %v3453
    %v3472 = vunpack.c.l.b16 %v3433
    %v3473 = vunpack.c.l.b16 %v3434
    %v3474 = vunpack.c.l.b16 %v3435
    %v3475 = vunpack.c.l.b16 %v3436
    %v3476 = vunpack.c.l.b16 %v3437
    %v3477 = vunpack.c.l.b16 %v3438
    %v3478 = vunpack.c.l.b16 %v3439
    %v3479 = vunpack.c.l.b16 %v3440
    %v3480 = vunpack.c.l.b16 %v3441
    %v3481 = vunpack.c.l.b16 %v3442
    %v3482 = vunpack.c.l.b16 %v3443
    %v3483 = vunpack.c.l.b16 %v3444
    %v3484 = vunpack.c.l.b16 %v3445
    %v3485 = vunpack.c.l.b16 %v3446
    %v3486 = vunpack.c.l.b16 %v3447
    %v3487 = vunpack.c.l.b16 %v3448
    %v3488 = vpack.c.b16 %v3473, %v3472
    %v3489 = vpack.c.b16 %v3475, %v3474
    %v3490 = vpack.c.b16 %v3477, %v3476
    %v3491 = vpack.c.b16 %v3479, %v3478
    %v3492 = vpack.c.b16 %v3481, %v3480
    %v3493 = vpack.c.b16 %v3483, %v3482
    %v3494 = vpack.c.b16 %v3485, %v3484
    %v3495 = vpack.c.b16 %v3487, %v3486
    %3504 = vmatprep.subr.bf16.mxu0 0
    %3505 = vmatpush1.bf16.msra.mxu0 %v3488
    %3506 = vmatprep.subr.bf16.mxu0 0
    %3507 = vmatpush1.bf16.msra.mxu0 %v3489
    %3508 = vmatprep.subr.bf16.mxu0 0
    %3509 = vmatpush1.bf16.msra.mxu0 %v3490
    %3510 = vmatprep.subr.bf16.mxu0 0
    %3511 = vmatpush1.bf16.msra.mxu0 %v3491
    %3512 = vmatprep.subr.bf16.mxu0 0
    %3513 = vmatpush1.bf16.msra.mxu0 %v3492
    %3514 = vmatprep.subr.bf16.mxu0 0
    %3515 = vmatpush1.bf16.msra.mxu0 %v3493
    %3516 = vmatprep.subr.bf16.mxu0 0
    %3517 = vmatpush1.bf16.msra.mxu0 %v3494
    %3518 = vmatprep.subr.bf16.mxu0 0
    %3519 = vmatpush1.bf16.msra.mxu0 %v3495
    %3520 = vmatprep.subr.bf16.mxu0 0
    %3521 = vmatpush1.bf16.msra.mxu0 0
    %3522 = vmatprep.subr.bf16.mxu0 0
    %3523 = vmatpush1.bf16.msra.mxu0 0
    %3524 = vmatprep.subr.bf16.mxu0 0
    %3525 = vmatpush1.bf16.msra.mxu0 0
    %3526 = vmatprep.subr.bf16.mxu0 0
    %3527 = vmatpush1.bf16.msra.mxu0 0
    %3528 = vmatprep.subr.bf16.mxu0 0
    %3529 = vmatpush1.bf16.msra.mxu0 0
    %3530 = vmatprep.subr.bf16.mxu0 0
    %3531 = vmatpush1.bf16.msra.mxu0 0
    %3532 = vmatprep.subr.bf16.mxu0 0
    %3533 = vmatpush1.bf16.msra.mxu0 0
    %3534 = vmatprep.subr.bf16.mxu0 0
    %3535 = vmatpush1.bf16.msra.mxu0 0
    %3536 = vmatprep.mubr.bf16.mxu0 0
    %3537 = vmatmul.mubr.bf16.gmra.mrb[0].mxu0 %v3432
    %v3538 = vpop.f32.mrb[0].mxu0
    %v3539 = vadd.f32 %v3454, %v3538
    %v3540 = vpop.f32.mrb[0].mxu0
    %v3541 = vpop.f32.mrb[0].mxu0
    %v3542 = vpop.f32.mrb[0].mxu0
    %3543 = vdwg.mxu0
    %v3544 = vmax.f32 %v3539, 0.0
    %v3545 = vpack.c.bf16 %v3544, %v3544
    %v3546 = vld [vmem:[#allocation14] sm:$0xf]
    %v3547 = vld [vmem:[#allocation14 + $0x4] sm:$0xf]
    %v3548 = vld [vmem:[#allocation14 + $0x8] sm:$0xf]
    %v3549 = vld [vmem:[#allocation14 + $0xc] sm:$0xf]
    %v3550 = vld [vmem:[#allocation14 + $0x10] sm:$0xf]
    %v3551 = vld [vmem:[#allocation14 + $0x14] sm:$0xf]
    %v3552 = vld [vmem:[#allocation14 + $0x18] sm:$0xf]
    %v3553 = vld [vmem:[#allocation14 + $0x1c] sm:$0xf]
    %v3554 = vld [vmem:[#allocation14 + $0x20] sm:$0xf]
    %v3555 = vld [vmem:[#allocation14 + $0x24] sm:$0xf]
    %v3556 = vld [vmem:[#allocation14 + $0x28] sm:$0xf]
    %v3557 = vld [vmem:[#allocation14 + $0x2c] sm:$0xf]
    %v3558 = vld [vmem:[#allocation14 + $0x30] sm:$0xf]
    %v3559 = vld [vmem:[#allocation14 + $0x34] sm:$0xf]
    %v3560 = vld [vmem:[#allocation14 + $0x38] sm:$0xf]
    %v3561 = vld [vmem:[#allocation14 + $0x3c] sm:$0xf]
    %v3562 = vld [vmem:[%s14] sm:$0x1]
    %v3564 = vlaneseq
    %v3565 = vshrl.u32 %v3564, 7
    %v3566 = vsub.s32 0, %v3565
    %v3567 = vrot.slane %v3562, %v3566
    %v3585 = vunpack.c.l.b16 %v3546
    %v3586 = vunpack.c.l.b16 %v3547
    %v3587 = vunpack.c.l.b16 %v3548
    %v3588 = vunpack.c.l.b16 %v3549
    %v3589 = vunpack.c.l.b16 %v3550
    %v3590 = vunpack.c.l.b16 %v3551
    %v3591 = vunpack.c.l.b16 %v3552
    %v3592 = vunpack.c.l.b16 %v3553
    %v3593 = vunpack.c.l.b16 %v3554
    %v3594 = vunpack.c.l.b16 %v3555
    %v3595 = vunpack.c.l.b16 %v3556
    %v3596 = vunpack.c.l.b16 %v3557
    %v3597 = vunpack.c.l.b16 %v3558
    %v3598 = vunpack.c.l.b16 %v3559
    %v3599 = vunpack.c.l.b16 %v3560
    %v3600 = vunpack.c.l.b16 %v3561
    %v3601 = vpack.c.b16 %v3586, %v3585
    %v3602 = vpack.c.b16 %v3588, %v3587
    %v3603 = vpack.c.b16 %v3590, %v3589
    %v3604 = vpack.c.b16 %v3592, %v3591
    %v3605 = vpack.c.b16 %v3594, %v3593
    %v3606 = vpack.c.b16 %v3596, %v3595
    %v3607 = vpack.c.b16 %v3598, %v3597
    %v3608 = vpack.c.b16 %v3600, %v3599
    %3617 = vmatprep.subr.bf16.mxu0 0
    %3618 = vmatpush1.bf16.msra.mxu0 %v3601
    %3619 = vmatprep.subr.bf16.mxu0 0
    %3620 = vmatpush1.bf16.msra.mxu0 %v3602
    %3621 = vmatprep.subr.bf16.mxu0 0
    %3622 = vmatpush1.bf16.msra.mxu0 %v3603
    %3623 = vmatprep.subr.bf16.mxu0 0
    %3624 = vmatpush1.bf16.msra.mxu0 %v3604
    %3625 = vmatprep.subr.bf16.mxu0 0
    %3626 = vmatpush1.bf16.msra.mxu0 %v3605
    %3627 = vmatprep.subr.bf16.mxu0 0
    %3628 = vmatpush1.bf16.msra.mxu0 %v3606
    %3629 = vmatprep.subr.bf16.mxu0 0
    %3630 = vmatpush1.bf16.msra.mxu0 %v3607
    %3631 = vmatprep.subr.bf16.mxu0 0
    %3632 = vmatpush1.bf16.msra.mxu0 %v3608
    %3633 = vmatprep.subr.bf16.mxu0 0
    %3634 = vmatpush1.bf16.msra.mxu0 0
    %3635 = vmatprep.subr.bf16.mxu0 0
    %3636 = vmatpush1.bf16.msra.mxu0 0
    %3637 = vmatprep.subr.bf16.mxu0 0
    %3638 = vmatpush1.bf16.msra.mxu0 0
    %3639 = vmatprep.subr.bf16.mxu0 0
    %3640 = vmatpush1.bf16.msra.mxu0 0
    %3641 = vmatprep.subr.bf16.mxu0 0
    %3642 = vmatpush1.bf16.msra.mxu0 0
    %3643 = vmatprep.subr.bf16.mxu0 0
    %3644 = vmatpush1.bf16.msra.mxu0 0
    %3645 = vmatprep.subr.bf16.mxu0 0
    %3646 = vmatpush1.bf16.msra.mxu0 0
    %3647 = vmatprep.subr.bf16.mxu0 0
    %3648 = vmatpush1.bf16.msra.mxu0 0
    %3649 = vmatprep.mubr.bf16.mxu0 0
    %3650 = vmatmul.mubr.bf16.gmra.mrb[0].mxu0 %v3545
    %v3651 = vpop.f32.mrb[0].mxu0
    %v3652 = vadd.f32 %v3567, %v3651
    %v3653 = vpop.f32.mrb[0].mxu0
    %v3654 = vpop.f32.mrb[0].mxu0
    %v3655 = vpop.f32.mrb[0].mxu0
    %3656 = vdwg.mxu0
    %3657 = vst [vmem:[#allocation16] sm:$0xff] %v3652
    // Predicated region
    $region94: #{tpu_custom_call.1} parent=1 // pred_check
      _
    $region95: #{tpu_custom_call.1} parent=1 // pred_check_branch
      %3659 = sbr.rel (0) target = $region97
    $region96: #{tpu_custom_call.1} parent=1 // pred_region
      %s3661 = ssub.s32 128, 128
      %3662 = vsyncadd [#allocation4], %s3661
      %s3664 = sshll.u32 [#allocation16], 4
      %s3665 = int_to_ptr.vmem [resolvable:$true] %s3664
      %3667 = dma.vmem_to_hbm [thread:$0]  %s3665, 128, %s15, [#allocation4]
    $region97: #{tpu_custom_call.1} parent=1 // pred_fallthru
      _
    // Predicated region
    $region98: #{tpu_custom_call.1} parent=1 // pred_check
      _
    $region99: #{tpu_custom_call.1} parent=1 // pred_check_branch
      %3669 = sbr.rel (0) target = $region101
    $region100: #{tpu_custom_call.1} parent=1 // pred_region
      %3670 = dma.done [#allocation4], 128
    $region101: #{tpu_custom_call.1} parent=1 // pred_fallthru
      _
    %3671 = vsyncpa [#allocation3], 1
    %3672 = vsyncpa [#allocation6], 1
    %3673 = vsyncpa [#allocation9], 1
    %3674 = vsyncpa [#allocation12], 1
    %3675 = vsyncpa [#allocation15], 1
    %3676 = vsyncpa [#allocation4], 1

</llo_original>
